<compile_context>
chip_gen: v7x
topology: tpu7x:2x2x1
jax: 0.10.0
libtpu: 0.0.40
codegen_flags: <defaults>
</compile_context>

<pallas_src>
import functools
from typing import NamedTuple, Tuple

import numpy as np
import jax
import jax.numpy as jnp
from jax.experimental import pallas as pl
from jax.experimental.pallas import tpu as pltpu

F32 = jnp.float32
LEAKY_SLOPE = 0.01          # nn.LeakyReLU() default
LC = 16                     # lane width of the conv canvases (>= max W*C = 4*4)
OPAD = 128                  # lane-dense head output width


class Config(NamedTuple):
    row_size: int
    col_size: int
    history_size: int
    output_size: int
    channels: int
    direct_kh: Tuple[int, ...]
    history_kh: Tuple[int, ...]
    oh_d: int
    ow_d: int
    oh_h: int
    ow_h: int
    lc: int
    opad: int


def output_dimension(input_dim: int, kernel_size: int) -> int:
    return input_dim - kernel_size + 1


# ----------------------------------------------------------------------------
# The single fused kernel
# ----------------------------------------------------------------------------
def _fused_kernel(cd_ref, ch_ref, md_ref, bd_ref, mh_ref, bh_ref, wh_ref, bhd_ref,
                  o_ref, sd0, sd1, sh0, sh1, *, batch, cfg):
    lc = cfg.lc

    def run_branch(in_ref, m_ref, b_ref, kh_list, scratch):
        """Conv stack on a batch-interleaved canvas (row = h*B + b, lane = w*C + c)."""
        cur = in_ref
        r_in = in_ref.shape[0]
        m_off = 0
        for li, kh in enumerate(kh_list):
            r_out = r_in - batch * (kh - 1)
            acc = jnp.dot(cur[0:r_out, :],
                          m_ref[m_off * lc:(m_off + 1) * lc, :],
                          preferred_element_type=jnp.float32)
            for i in range(1, kh):
                acc = acc + jnp.dot(
                    cur[i * batch:i * batch + r_out, :],
                    m_ref[(m_off + i) * lc:(m_off + i + 1) * lc, :],
                    preferred_element_type=jnp.float32)
            m_off += kh
            y = acc + b_ref[li:li + 1, :]
            y = jnp.where(y >= 0, y, LEAKY_SLOPE * y)
            dst = scratch[li % 2]
            dst[0:r_out, :] = y
            cur = dst
            r_in = r_out
        return cur

    ad = run_branch(cd_ref, md_ref, bd_ref, cfg.direct_kh, (sd0, sd1))
    ah = run_branch(ch_ref, mh_ref, bh_ref, cfg.history_kh, (sh0, sh1))

    # Head: flatten (NCHW order) + hstack + Linear folded into wh_ref at init.
    opad = cfg.opad
    acc = jnp.zeros((batch, opad), jnp.float32)
    k = 0
    for r in range(cfg.oh_d):
        acc = acc + jnp.dot(ad[r * batch:(r + 1) * batch, :],
                            wh_ref[k * lc:(k + 1) * lc, :],
                            preferred_element_type=jnp.float32)
        k += 1
    for r in range(cfg.oh_h):
        acc = acc + jnp.dot(ah[r * batch:(r + 1) * batch, :],
                            wh_ref[k * lc:(k + 1) * lc, :],
                            preferred_element_type=jnp.float32)
        k += 1
    raw = acc + bhd_ref[...]
    raw = jnp.where(raw >= 0, raw, LEAKY_SLOPE * raw)

    # Column-wise softmax over the batch axis (dim=0 in the reference); the last
    # real column (output_size - 1) is passed through raw.  Batch is unpadded,
    # so the denominator sums only real rows.
    m = jnp.max(raw, axis=0, keepdims=True)
    e = jnp.exp(raw - m)
    denom = jnp.sum(e, axis=0, keepdims=True)
    sm = e * pl.reciprocal(denom, approx=True)
    col = jax.lax.broadcasted_iota(jnp.int32, raw.shape, 1)
    o_ref[...] = jnp.where(col == (cfg.output_size - 1), raw, sm)


# ----------------------------------------------------------------------------
# Parameter init: draw torch-layout weights, then pre-pack everything the
# kernel needs (structured lane matrices, bias rows, permuted head weight).
# ----------------------------------------------------------------------------
def init_params(key, channel_number, row_size, col_size, history_size, output_size):
    direct_kernels = ((2, 1), (2, 2), (2, 2))
    history_kernels = ((10, 1), (10, 1), (4, 2), (2, 2))
    keys = jax.random.split(key, 32)
    ki = 0

    raw = {"direct": [], "history": []}

    def build_branch(kernels, h0, w0, branch_name):
        nonlocal ki
        m_blocks, b_rows = [], []
        cin, h, wid = 1, h0, w0
        for (kh, kw) in kernels:
            wj = 0.1 * jax.random.normal(keys[ki], (channel_number, cin, kh, kw), F32); ki += 1
            bj = 0.01 * jax.random.normal(keys[ki], (channel_number,), F32); ki += 1
            raw[branch_name].append((wj, bj))
            wnp, bnp = np.asarray(wj), np.asarray(bj)
            w_out = wid - kw + 1
            m = np.zeros((kh, LC, LC), np.float32)
            for i in range(kh):
                for ow in range(w_out):
                    for co in range(channel_number):
                        for j in range(kw):
                            for ci in range(cin):
                                m[i, (ow + j) * cin + ci, ow * channel_number + co] = wnp[co, ci, i, j]
            br = np.zeros((LC,), np.float32)
            for ow in range(w_out):
                br[ow * channel_number:(ow + 1) * channel_number] = bnp
            m_blocks.append(m.reshape(kh * LC, LC))
            b_rows.append(br)
            cin, h, wid = channel_number, h - kh + 1, w_out
        return np.concatenate(m_blocks, 0), np.stack(b_rows, 0), h, wid

    md, bd, oh_d, ow_d = build_branch(direct_kernels, row_size, col_size, "direct")
    mh, bh, oh_h, ow_h = build_branch(history_kernels, history_size, col_size, "history")

    feats_d = channel_number * oh_d * ow_d
    feats_h = channel_number * oh_h * ow_h
    lw = 0.1 * jax.random.normal(keys[ki], (output_size, feats_d + feats_h), F32); ki += 1
    lb = 0.01 * jax.random.normal(keys[ki], (output_size,), F32); ki += 1
    raw["linear_w"], raw["linear_b"] = lw, lb
    lwn, lbn = np.asarray(lw), np.asarray(lb)

    # Head weight with NCHW flatten + hstack permutation baked in.
    wh = np.zeros(((oh_d + oh_h) * LC, OPAD), np.float32)
    for r in range(oh_d):
        for ow in range(ow_d):
            for co in range(channel_number):
                f = co * (oh_d * ow_d) + r * ow_d + ow
                wh[r * LC + ow * channel_number + co, :output_size] = lwn[:, f]
    for r in range(oh_h):
        for ow in range(ow_h):
            for co in range(channel_number):
                f = feats_d + co * (oh_h * ow_h) + r * ow_h + ow
                wh[(oh_d + r) * LC + ow * channel_number + co, :output_size] = lwn[:, f]
    bhd = np.zeros((1, OPAD), np.float32)
    bhd[0, :output_size] = lbn

    params = {
        "md": jnp.asarray(md), "bd": jnp.asarray(bd),
        "mh": jnp.asarray(mh), "bh": jnp.asarray(bh),
        "wh": jnp.asarray(wh), "bhd": jnp.asarray(bhd),
    }
    cfg = Config(row_size=row_size, col_size=col_size, history_size=history_size,
                 output_size=output_size, channels=channel_number,
                 direct_kh=tuple(k for k, _ in direct_kernels),
                 history_kh=tuple(k for k, _ in history_kernels),
                 oh_d=oh_d, ow_d=ow_d, oh_h=oh_h, ow_h=ow_h, lc=LC, opad=OPAD)
    return params, cfg, raw


# ----------------------------------------------------------------------------
# Forward: one tiny canvas-building prologue + ONE pallas_call + output slice.
# ----------------------------------------------------------------------------
@functools.partial(jax.jit, static_argnames=("cfg",))
def forward(params, x, *, cfg):
    b = x.shape[0]
    lc, opad = cfg.lc, cfg.opad
    r0_d = b * (cfg.row_size + sum(k - 1 for k in cfg.direct_kh))
    r0_h = b * (cfg.history_size + sum(k - 1 for k in cfg.history_kh))

    xd = x[:, 0, :cfg.row_size, :]          # (B, R, W)
    xh = x[:, 0, cfg.row_size:, :]          # (B, H, W)
    # batch-interleaved canvases: row = h*B + b, lane = w (Cin = 1)
    cd = jnp.zeros((r0_d, lc), F32).at[:b * cfg.row_size, :cfg.col_size].set(
        jnp.transpose(xd, (1, 0, 2)).reshape(b * cfg.row_size, cfg.col_size))
    ch = jnp.zeros((r0_h, lc), F32).at[:b * cfg.history_size, :cfg.col_size].set(
        jnp.transpose(xh, (1, 0, 2)).reshape(b * cfg.history_size, cfg.col_size))

    kern = functools.partial(_fused_kernel, batch=b, cfg=cfg)

    def spec(a):
        return pl.BlockSpec(a.shape, lambda i: (0, 0))

    args = (cd, ch, params["md"], params["bd"], params["mh"], params["bh"],
            params["wh"], params["bhd"])
    out = pl.pallas_call(
        kern,
        out_shape=jax.ShapeDtypeStruct((b, opad), F32),
        grid=(1,),
        in_specs=[spec(a) for a in args],
        out_specs=pl.BlockSpec((b, opad), lambda i: (0, 0)),
        scratch_shapes=[
            pltpu.VMEM((r0_d, lc), F32), pltpu.VMEM((r0_d, lc), F32),
            pltpu.VMEM((r0_h, lc), F32), pltpu.VMEM((r0_h, lc), F32),
        ],
        compiler_params=pltpu.CompilerParams(dimension_semantics=("arbitrary",)),
    )(*args)
    return out[:, :cfg.output_size]


# ----------------------------------------------------------------------------
# Pure-JAX reference (mirrors the PyTorch module) for a structural self-check.
# ----------------------------------------------------------------------------
def reference_forward(raw, x, cfg):
    def conv(t, w, b):
        y = jax.lax.conv_general_dilated(
            t, w, window_strides=(1, 1), padding="VALID",
            dimension_numbers=("NCHW", "OIHW", "NCHW"))
        return y + b[None, :, None, None]

    lrelu = lambda t: jnp.where(t >= 0, t, LEAKY_SLOPE * t)
    d = x[:, :, :cfg.row_size, :]
    for (w, b) in raw["direct"]:
        d = lrelu(conv(d, w, b))
    h = x[:, :, cfg.row_size:, :]
    for (w, b) in raw["history"]:
        h = lrelu(conv(h, w, b))
    bsz = x.shape[0]
    feat = jnp.concatenate([d.reshape(bsz, -1), h.reshape(bsz, -1)], axis=1)
    rw = lrelu(feat @ raw["linear_w"].T + raw["linear_b"])
    sm = jax.nn.softmax(rw[:, :-1], axis=0)
    return jnp.concatenate([sm, rw[:, -1:]], axis=1)


# ----------------------------------------------------------------------------
if __name__ == "__main__":
    CHANNELS = 4
    ROW_SIZE = 15
    COL_SIZE = 4
    HISTORY_SIZE = 24   # history conv stack needs >= 23 rows
    OUTPUT_SIZE = 16
    BATCH = 2

    key = jax.random.PRNGKey(0)
    pkey, xkey = jax.random.split(key)
    params, cfg, raw = init_params(pkey, CHANNELS, ROW_SIZE, COL_SIZE,
                                   HISTORY_SIZE, OUTPUT_SIZE)
    x = jax.random.normal(
        xkey, (BATCH, 1, ROW_SIZE + HISTORY_SIZE, COL_SIZE), dtype=F32)

    out = forward(params, x, cfg=cfg)
    out = jax.block_until_ready(out)
    assert out.shape == (BATCH, OUTPUT_SIZE), out.shape
    assert bool(jnp.all(jnp.isfinite(out)))

    ref = reference_forward(raw, x, cfg)
    assert bool(jnp.allclose(out, ref, rtol=2e-2, atol=2e-2)), (
        float(jnp.max(jnp.abs(out - ref))))

    print("KERNEL_OK")
</pallas_src>

<mosaic_0001>
module attributes {stable_mosaic.version = 11 : i64} {
  func.func @_fused_kernel(%arg0: i32, %arg1: memref<36x16xf32, #tpu.memory_space<vmem>>, %arg2: memref<92x16xf32, #tpu.memory_space<vmem>>, %arg3: memref<96x16xf32, #tpu.memory_space<vmem>>, %arg4: memref<3x16xf32, #tpu.memory_space<vmem>>, %arg5: memref<416x16xf32, #tpu.memory_space<vmem>>, %arg6: memref<4x16xf32, #tpu.memory_space<vmem>>, %arg7: memref<224x128xf32, #tpu.memory_space<vmem>>, %arg8: memref<1x128xf32, #tpu.memory_space<vmem>>, %arg9: memref<2x128xf32, #tpu.memory_space<vmem>>, %arg10: memref<36x16xf32, #tpu.memory_space<vmem>>, %arg11: memref<36x16xf32, #tpu.memory_space<vmem>>, %arg12: memref<92x16xf32, #tpu.memory_space<vmem>>, %arg13: memref<92x16xf32, #tpu.memory_space<vmem>>) attributes {dimension_semantics = [#tpu.dimension_semantics<arbitrary>], iteration_bounds = array<i64: 1>, scalar_prefetch = 0 : i64, scratch_operands = 4 : i64, tpu.core_type = #tpu.core_type<tc>, window_params = [{pipeline_mode = #tpu.pipeline_mode<synchronous>, transform_indices = @transform_0, window_bounds = array<i64: 36, 16>}, {pipeline_mode = #tpu.pipeline_mode<synchronous>, transform_indices = @transform_1, window_bounds = array<i64: 92, 16>}, {pipeline_mode = #tpu.pipeline_mode<synchronous>, transform_indices = @transform_2, window_bounds = array<i64: 96, 16>}, {pipeline_mode = #tpu.pipeline_mode<synchronous>, transform_indices = @transform_3, window_bounds = array<i64: 3, 16>}, {pipeline_mode = #tpu.pipeline_mode<synchronous>, transform_indices = @transform_4, window_bounds = array<i64: 416, 16>}, {pipeline_mode = #tpu.pipeline_mode<synchronous>, transform_indices = @transform_5, window_bounds = array<i64: 4, 16>}, {pipeline_mode = #tpu.pipeline_mode<synchronous>, transform_indices = @transform_6, window_bounds = array<i64: 224, 128>}, {pipeline_mode = #tpu.pipeline_mode<synchronous>, transform_indices = @transform_7, window_bounds = array<i64: 1, 128>}, {pipeline_mode = #tpu.pipeline_mode<synchronous>, transform_indices = @transform_8, window_bounds = array<i64: 2, 128>}]} {
    %c0 = arith.constant 0 : index
    %c0_0 = arith.constant 0 : index
    %0 = vector.load %arg1[%c0, %c0_0] : memref<36x16xf32, #tpu.memory_space<vmem>>, vector<34x16xf32>
    %c0_1 = arith.constant 0 : index
    %c0_2 = arith.constant 0 : index
    %1 = vector.load %arg3[%c0_1, %c0_2] : memref<96x16xf32, #tpu.memory_space<vmem>>, vector<16x16xf32>
    %cst = arith.constant dense<0.000000e+00> : vector<34x16xf32>
    %2 = tpu.matmul %0, %1, %cst {dimension_numbers = #tpu.dot_dimension_numbers<[1], [0], [0], [1], [0, 0, 1, 1], [], []>} : vector<34x16xf32>, vector<16x16xf32>, vector<34x16xf32> -> vector<34x16xf32>
    %c2 = arith.constant 2 : index
    %c0_3 = arith.constant 0 : index
    %3 = vector.load %arg1[%c2, %c0_3] : memref<36x16xf32, #tpu.memory_space<vmem>>, vector<34x16xf32>
    %c16 = arith.constant 16 : index
    %c0_4 = arith.constant 0 : index
    %4 = vector.load %arg3[%c16, %c0_4] : memref<96x16xf32, #tpu.memory_space<vmem>>, vector<16x16xf32>
    %cst_5 = arith.constant dense<0.000000e+00> : vector<34x16xf32>
    %5 = tpu.matmul %3, %4, %cst_5 {dimension_numbers = #tpu.dot_dimension_numbers<[1], [0], [0], [1], [0, 0, 1, 1], [], []>} : vector<34x16xf32>, vector<16x16xf32>, vector<34x16xf32> -> vector<34x16xf32>
    %6 = arith.addf %2, %5 : vector<34x16xf32>
    %c0_6 = arith.constant 0 : index
    %c0_7 = arith.constant 0 : index
    %7 = vector.load %arg4[%c0_6, %c0_7] : memref<3x16xf32, #tpu.memory_space<vmem>>, vector<1x16xf32>
    %8 = vector.broadcast %7 : vector<1x16xf32> to vector<34x16xf32>
    %9 = arith.addf %6, %8 : vector<34x16xf32>
    %cst_8 = arith.constant 0.000000e+00 : f32
    %10 = vector.broadcast %cst_8 : f32 to vector<34x16xf32>
    %11 = arith.cmpf oge, %9, %10 : vector<34x16xf32>
    %cst_9 = arith.constant 0.00999999977 : f32
    %12 = vector.broadcast %cst_9 : f32 to vector<34x16xf32>
    %13 = arith.mulf %12, %9 : vector<34x16xf32>
    %14 = arith.select %11, %9, %13 : vector<34x16xi1>, vector<34x16xf32>
    %c0_10 = arith.constant 0 : index
    %c0_11 = arith.constant 0 : index
    %15 = vector.load %arg10[%c0_10, %c0_11] : memref<36x16xf32, #tpu.memory_space<vmem>>, vector<34x16xf32>
    tpu.vector_store %arg10[%c0_10, %c0_11], %14 {strides = array<i32>} : memref<36x16xf32, #tpu.memory_space<vmem>>, vector<34x16xf32>,
    %c0_12 = arith.constant 0 : index
    %c0_13 = arith.constant 0 : index
    %16 = vector.load %arg10[%c0_12, %c0_13] : memref<36x16xf32, #tpu.memory_space<vmem>>, vector<32x16xf32>
    %c32 = arith.constant 32 : index
    %c0_14 = arith.constant 0 : index
    %17 = vector.load %arg3[%c32, %c0_14] : memref<96x16xf32, #tpu.memory_space<vmem>>, vector<16x16xf32>
    %cst_15 = arith.constant dense<0.000000e+00> : vector<32x16xf32>
    %18 = tpu.matmul %16, %17, %cst_15 {dimension_numbers = #tpu.dot_dimension_numbers<[1], [0], [0], [1], [0, 0, 1, 1], [], []>} : vector<32x16xf32>, vector<16x16xf32>, vector<32x16xf32> -> vector<32x16xf32>
    %c2_16 = arith.constant 2 : index
    %c0_17 = arith.constant 0 : index
    %19 = vector.load %arg10[%c2_16, %c0_17] : memref<36x16xf32, #tpu.memory_space<vmem>>, vector<32x16xf32>
    %c48 = arith.constant 48 : index
    %c0_18 = arith.constant 0 : index
    %20 = vector.load %arg3[%c48, %c0_18] : memref<96x16xf32, #tpu.memory_space<vmem>>, vector<16x16xf32>
    %cst_19 = arith.constant dense<0.000000e+00> : vector<32x16xf32>
    %21 = tpu.matmul %19, %20, %cst_19 {dimension_numbers = #tpu.dot_dimension_numbers<[1], [0], [0], [1], [0, 0, 1, 1], [], []>} : vector<32x16xf32>, vector<16x16xf32>, vector<32x16xf32> -> vector<32x16xf32>
    %22 = arith.addf %18, %21 : vector<32x16xf32>
    %c1 = arith.constant 1 : index
    %c0_20 = arith.constant 0 : index
    %23 = vector.load %arg4[%c1, %c0_20] : memref<3x16xf32, #tpu.memory_space<vmem>>, vector<1x16xf32>
    %24 = vector.broadcast %23 : vector<1x16xf32> to vector<32x16xf32>
    %25 = arith.addf %22, %24 : vector<32x16xf32>
    %cst_21 = arith.constant 0.000000e+00 : f32
    %26 = vector.broadcast %cst_21 : f32 to vector<32x16xf32>
    %27 = arith.cmpf oge, %25, %26 : vector<32x16xf32>
    %cst_22 = arith.constant 0.00999999977 : f32
    %28 = vector.broadcast %cst_22 : f32 to vector<32x16xf32>
    %29 = arith.mulf %28, %25 : vector<32x16xf32>
    %30 = arith.select %27, %25, %29 : vector<32x16xi1>, vector<32x16xf32>
    %c0_23 = arith.constant 0 : index
    %c0_24 = arith.constant 0 : index
    %31 = vector.load %arg11[%c0_23, %c0_24] : memref<36x16xf32, #tpu.memory_space<vmem>>, vector<32x16xf32>
    tpu.vector_store %arg11[%c0_23, %c0_24], %30 {strides = array<i32>} : memref<36x16xf32, #tpu.memory_space<vmem>>, vector<32x16xf32>,
    %c0_25 = arith.constant 0 : index
    %c0_26 = arith.constant 0 : index
    %32 = vector.load %arg11[%c0_25, %c0_26] : memref<36x16xf32, #tpu.memory_space<vmem>>, vector<30x16xf32>
    %c64 = arith.constant 64 : index
    %c0_27 = arith.constant 0 : index
    %33 = vector.load %arg3[%c64, %c0_27] : memref<96x16xf32, #tpu.memory_space<vmem>>, vector<16x16xf32>
    %cst_28 = arith.constant dense<0.000000e+00> : vector<30x16xf32>
    %34 = tpu.matmul %32, %33, %cst_28 {dimension_numbers = #tpu.dot_dimension_numbers<[1], [0], [0], [1], [0, 0, 1, 1], [], []>} : vector<30x16xf32>, vector<16x16xf32>, vector<30x16xf32> -> vector<30x16xf32>
    %c2_29 = arith.constant 2 : index
    %c0_30 = arith.constant 0 : index
    %35 = vector.load %arg11[%c2_29, %c0_30] : memref<36x16xf32, #tpu.memory_space<vmem>>, vector<30x16xf32>
    %c80 = arith.constant 80 : index
    %c0_31 = arith.constant 0 : index
    %36 = vector.load %arg3[%c80, %c0_31] : memref<96x16xf32, #tpu.memory_space<vmem>>, vector<16x16xf32>
    %cst_32 = arith.constant dense<0.000000e+00> : vector<30x16xf32>
    %37 = tpu.matmul %35, %36, %cst_32 {dimension_numbers = #tpu.dot_dimension_numbers<[1], [0], [0], [1], [0, 0, 1, 1], [], []>} : vector<30x16xf32>, vector<16x16xf32>, vector<30x16xf32> -> vector<30x16xf32>
    %38 = arith.addf %34, %37 : vector<30x16xf32>
    %c2_33 = arith.constant 2 : index
    %c0_34 = arith.constant 0 : index
    %39 = vector.load %arg4[%c2_33, %c0_34] : memref<3x16xf32, #tpu.memory_space<vmem>>, vector<1x16xf32>
    %40 = vector.broadcast %39 : vector<1x16xf32> to vector<30x16xf32>
    %41 = arith.addf %38, %40 : vector<30x16xf32>
    %cst_35 = arith.constant 0.000000e+00 : f32
    %42 = vector.broadcast %cst_35 : f32 to vector<30x16xf32>
    %43 = arith.cmpf oge, %41, %42 : vector<30x16xf32>
    %cst_36 = arith.constant 0.00999999977 : f32
    %44 = vector.broadcast %cst_36 : f32 to vector<30x16xf32>
    %45 = arith.mulf %44, %41 : vector<30x16xf32>
    %46 = arith.select %43, %41, %45 : vector<30x16xi1>, vector<30x16xf32>
    %c0_37 = arith.constant 0 : index
    %c0_38 = arith.constant 0 : index
    %47 = vector.load %arg10[%c0_37, %c0_38] : memref<36x16xf32, #tpu.memory_space<vmem>>, vector<30x16xf32>
    tpu.vector_store %arg10[%c0_37, %c0_38], %46 {strides = array<i32>} : memref<36x16xf32, #tpu.memory_space<vmem>>, vector<30x16xf32>,
    %c0_39 = arith.constant 0 : index
    %c0_40 = arith.constant 0 : index
    %48 = vector.load %arg2[%c0_39, %c0_40] : memref<92x16xf32, #tpu.memory_space<vmem>>, vector<74x16xf32>
    %c0_41 = arith.constant 0 : index
    %c0_42 = arith.constant 0 : index
    %49 = vector.load %arg5[%c0_41, %c0_42] : memref<416x16xf32, #tpu.memory_space<vmem>>, vector<16x16xf32>
    %cst_43 = arith.constant dense<0.000000e+00> : vector<74x16xf32>
    %50 = tpu.matmul %48, %49, %cst_43 {dimension_numbers = #tpu.dot_dimension_numbers<[1], [0], [0], [1], [0, 0, 1, 1], [], []>} : vector<74x16xf32>, vector<16x16xf32>, vector<74x16xf32> -> vector<74x16xf32>
    %c2_44 = arith.constant 2 : index
    %c0_45 = arith.constant 0 : index
    %51 = vector.load %arg2[%c2_44, %c0_45] : memref<92x16xf32, #tpu.memory_space<vmem>>, vector<74x16xf32>
    %c16_46 = arith.constant 16 : index
    %c0_47 = arith.constant 0 : index
    %52 = vector.load %arg5[%c16_46, %c0_47] : memref<416x16xf32, #tpu.memory_space<vmem>>, vector<16x16xf32>
    %cst_48 = arith.constant dense<0.000000e+00> : vector<74x16xf32>
    %53 = tpu.matmul %51, %52, %cst_48 {dimension_numbers = #tpu.dot_dimension_numbers<[1], [0], [0], [1], [0, 0, 1, 1], [], []>} : vector<74x16xf32>, vector<16x16xf32>, vector<74x16xf32> -> vector<74x16xf32>
    %54 = arith.addf %50, %53 : vector<74x16xf32>
    %c4 = arith.constant 4 : index
    %c0_49 = arith.constant 0 : index
    %55 = vector.load %arg2[%c4, %c0_49] : memref<92x16xf32, #tpu.memory_space<vmem>>, vector<74x16xf32>
    %c32_50 = arith.constant 32 : index
    %c0_51 = arith.constant 0 : index
    %56 = vector.load %arg5[%c32_50, %c0_51] : memref<416x16xf32, #tpu.memory_space<vmem>>, vector<16x16xf32>
    %cst_52 = arith.constant dense<0.000000e+00> : vector<74x16xf32>
    %57 = tpu.matmul %55, %56, %cst_52 {dimension_numbers = #tpu.dot_dimension_numbers<[1], [0], [0], [1], [0, 0, 1, 1], [], []>} : vector<74x16xf32>, vector<16x16xf32>, vector<74x16xf32> -> vector<74x16xf32>
    %58 = arith.addf %54, %57 : vector<74x16xf32>
    %c6 = arith.constant 6 : index
    %c0_53 = arith.constant 0 : index
    %59 = vector.load %arg2[%c6, %c0_53] : memref<92x16xf32, #tpu.memory_space<vmem>>, vector<74x16xf32>
    %c48_54 = arith.constant 48 : index
    %c0_55 = arith.constant 0 : index
    %60 = vector.load %arg5[%c48_54, %c0_55] : memref<416x16xf32, #tpu.memory_space<vmem>>, vector<16x16xf32>
    %cst_56 = arith.constant dense<0.000000e+00> : vector<74x16xf32>
    %61 = tpu.matmul %59, %60, %cst_56 {dimension_numbers = #tpu.dot_dimension_numbers<[1], [0], [0], [1], [0, 0, 1, 1], [], []>} : vector<74x16xf32>, vector<16x16xf32>, vector<74x16xf32> -> vector<74x16xf32>
    %62 = arith.addf %58, %61 : vector<74x16xf32>
    %c8 = arith.constant 8 : index
    %c0_57 = arith.constant 0 : index
    %63 = vector.load %arg2[%c8, %c0_57] : memref<92x16xf32, #tpu.memory_space<vmem>>, vector<74x16xf32>
    %c64_58 = arith.constant 64 : index
    %c0_59 = arith.constant 0 : index
    %64 = vector.load %arg5[%c64_58, %c0_59] : memref<416x16xf32, #tpu.memory_space<vmem>>, vector<16x16xf32>
    %cst_60 = arith.constant dense<0.000000e+00> : vector<74x16xf32>
    %65 = tpu.matmul %63, %64, %cst_60 {dimension_numbers = #tpu.dot_dimension_numbers<[1], [0], [0], [1], [0, 0, 1, 1], [], []>} : vector<74x16xf32>, vector<16x16xf32>, vector<74x16xf32> -> vector<74x16xf32>
    %66 = arith.addf %62, %65 : vector<74x16xf32>
    %c10 = arith.constant 10 : index
    %c0_61 = arith.constant 0 : index
    %67 = vector.load %arg2[%c10, %c0_61] : memref<92x16xf32, #tpu.memory_space<vmem>>, vector<74x16xf32>
    %c80_62 = arith.constant 80 : index
    %c0_63 = arith.constant 0 : index
    %68 = vector.load %arg5[%c80_62, %c0_63] : memref<416x16xf32, #tpu.memory_space<vmem>>, vector<16x16xf32>
    %cst_64 = arith.constant dense<0.000000e+00> : vector<74x16xf32>
    %69 = tpu.matmul %67, %68, %cst_64 {dimension_numbers = #tpu.dot_dimension_numbers<[1], [0], [0], [1], [0, 0, 1, 1], [], []>} : vector<74x16xf32>, vector<16x16xf32>, vector<74x16xf32> -> vector<74x16xf32>
    %70 = arith.addf %66, %69 : vector<74x16xf32>
    %c12 = arith.constant 12 : index
    %c0_65 = arith.constant 0 : index
    %71 = vector.load %arg2[%c12, %c0_65] : memref<92x16xf32, #tpu.memory_space<vmem>>, vector<74x16xf32>
    %c96 = arith.constant 96 : index
    %c0_66 = arith.constant 0 : index
    %72 = vector.load %arg5[%c96, %c0_66] : memref<416x16xf32, #tpu.memory_space<vmem>>, vector<16x16xf32>
    %cst_67 = arith.constant dense<0.000000e+00> : vector<74x16xf32>
    %73 = tpu.matmul %71, %72, %cst_67 {dimension_numbers = #tpu.dot_dimension_numbers<[1], [0], [0], [1], [0, 0, 1, 1], [], []>} : vector<74x16xf32>, vector<16x16xf32>, vector<74x16xf32> -> vector<74x16xf32>
    %74 = arith.addf %70, %73 : vector<74x16xf32>
    %c14 = arith.constant 14 : index
    %c0_68 = arith.constant 0 : index
    %75 = vector.load %arg2[%c14, %c0_68] : memref<92x16xf32, #tpu.memory_space<vmem>>, vector<74x16xf32>
    %c112 = arith.constant 112 : index
    %c0_69 = arith.constant 0 : index
    %76 = vector.load %arg5[%c112, %c0_69] : memref<416x16xf32, #tpu.memory_space<vmem>>, vector<16x16xf32>
    %cst_70 = arith.constant dense<0.000000e+00> : vector<74x16xf32>
    %77 = tpu.matmul %75, %76, %cst_70 {dimension_numbers = #tpu.dot_dimension_numbers<[1], [0], [0], [1], [0, 0, 1, 1], [], []>} : vector<74x16xf32>, vector<16x16xf32>, vector<74x16xf32> -> vector<74x16xf32>
    %78 = arith.addf %74, %77 : vector<74x16xf32>
    %c16_71 = arith.constant 16 : index
    %c0_72 = arith.constant 0 : index
    %79 = vector.load %arg2[%c16_71, %c0_72] : memref<92x16xf32, #tpu.memory_space<vmem>>, vector<74x16xf32>
    %c128 = arith.constant 128 : index
    %c0_73 = arith.constant 0 : index
    %80 = vector.load %arg5[%c128, %c0_73] : memref<416x16xf32, #tpu.memory_space<vmem>>, vector<16x16xf32>
    %cst_74 = arith.constant dense<0.000000e+00> : vector<74x16xf32>
    %81 = tpu.matmul %79, %80, %cst_74 {dimension_numbers = #tpu.dot_dimension_numbers<[1], [0], [0], [1], [0, 0, 1, 1], [], []>} : vector<74x16xf32>, vector<16x16xf32>, vector<74x16xf32> -> vector<74x16xf32>
    %82 = arith.addf %78, %81 : vector<74x16xf32>
    %c18 = arith.constant 18 : index
    %c0_75 = arith.constant 0 : index
    %83 = vector.load %arg2[%c18, %c0_75] : memref<92x16xf32, #tpu.memory_space<vmem>>, vector<74x16xf32>
    %c144 = arith.constant 144 : index
    %c0_76 = arith.constant 0 : index
    %84 = vector.load %arg5[%c144, %c0_76] : memref<416x16xf32, #tpu.memory_space<vmem>>, vector<16x16xf32>
    %cst_77 = arith.constant dense<0.000000e+00> : vector<74x16xf32>
    %85 = tpu.matmul %83, %84, %cst_77 {dimension_numbers = #tpu.dot_dimension_numbers<[1], [0], [0], [1], [0, 0, 1, 1], [], []>} : vector<74x16xf32>, vector<16x16xf32>, vector<74x16xf32> -> vector<74x16xf32>
    %86 = arith.addf %82, %85 : vector<74x16xf32>
    %c0_78 = arith.constant 0 : index
    %c0_79 = arith.constant 0 : index
    %87 = vector.load %arg6[%c0_78, %c0_79] : memref<4x16xf32, #tpu.memory_space<vmem>>, vector<1x16xf32>
    %88 = vector.broadcast %87 : vector<1x16xf32> to vector<74x16xf32>
    %89 = arith.addf %86, %88 : vector<74x16xf32>
    %cst_80 = arith.constant 0.000000e+00 : f32
    %90 = vector.broadcast %cst_80 : f32 to vector<74x16xf32>
    %91 = arith.cmpf oge, %89, %90 : vector<74x16xf32>
    %cst_81 = arith.constant 0.00999999977 : f32
    %92 = vector.broadcast %cst_81 : f32 to vector<74x16xf32>
    %93 = arith.mulf %92, %89 : vector<74x16xf32>
    %94 = arith.select %91, %89, %93 : vector<74x16xi1>, vector<74x16xf32>
    %c0_82 = arith.constant 0 : index
    %c0_83 = arith.constant 0 : index
    %95 = vector.load %arg12[%c0_82, %c0_83] : memref<92x16xf32, #tpu.memory_space<vmem>>, vector<74x16xf32>
    tpu.vector_store %arg12[%c0_82, %c0_83], %94 {strides = array<i32>} : memref<92x16xf32, #tpu.memory_space<vmem>>, vector<74x16xf32>,
    %c0_84 = arith.constant 0 : index
    %c0_85 = arith.constant 0 : index
    %96 = vector.load %arg12[%c0_84, %c0_85] : memref<92x16xf32, #tpu.memory_space<vmem>>, vector<56x16xf32>
    %c160 = arith.constant 160 : index
    %c0_86 = arith.constant 0 : index
    %97 = vector.load %arg5[%c160, %c0_86] : memref<416x16xf32, #tpu.memory_space<vmem>>, vector<16x16xf32>
    %cst_87 = arith.constant dense<0.000000e+00> : vector<56x16xf32>
    %98 = tpu.matmul %96, %97, %cst_87 {dimension_numbers = #tpu.dot_dimension_numbers<[1], [0], [0], [1], [0, 0, 1, 1], [], []>} : vector<56x16xf32>, vector<16x16xf32>, vector<56x16xf32> -> vector<56x16xf32>
    %c2_88 = arith.constant 2 : index
    %c0_89 = arith.constant 0 : index
    %99 = vector.load %arg12[%c2_88, %c0_89] : memref<92x16xf32, #tpu.memory_space<vmem>>, vector<56x16xf32>
    %c176 = arith.constant 176 : index
    %c0_90 = arith.constant 0 : index
    %100 = vector.load %arg5[%c176, %c0_90] : memref<416x16xf32, #tpu.memory_space<vmem>>, vector<16x16xf32>
    %cst_91 = arith.constant dense<0.000000e+00> : vector<56x16xf32>
    %101 = tpu.matmul %99, %100, %cst_91 {dimension_numbers = #tpu.dot_dimension_numbers<[1], [0], [0], [1], [0, 0, 1, 1], [], []>} : vector<56x16xf32>, vector<16x16xf32>, vector<56x16xf32> -> vector<56x16xf32>
    %102 = arith.addf %98, %101 : vector<56x16xf32>
    %c4_92 = arith.constant 4 : index
    %c0_93 = arith.constant 0 : index
    %103 = vector.load %arg12[%c4_92, %c0_93] : memref<92x16xf32, #tpu.memory_space<vmem>>, vector<56x16xf32>
    %c192 = arith.constant 192 : index
    %c0_94 = arith.constant 0 : index
    %104 = vector.load %arg5[%c192, %c0_94] : memref<416x16xf32, #tpu.memory_space<vmem>>, vector<16x16xf32>
    %cst_95 = arith.constant dense<0.000000e+00> : vector<56x16xf32>
    %105 = tpu.matmul %103, %104, %cst_95 {dimension_numbers = #tpu.dot_dimension_numbers<[1], [0], [0], [1], [0, 0, 1, 1], [], []>} : vector<56x16xf32>, vector<16x16xf32>, vector<56x16xf32> -> vector<56x16xf32>
    %106 = arith.addf %102, %105 : vector<56x16xf32>
    %c6_96 = arith.constant 6 : index
    %c0_97 = arith.constant 0 : index
    %107 = vector.load %arg12[%c6_96, %c0_97] : memref<92x16xf32, #tpu.memory_space<vmem>>, vector<56x16xf32>
    %c208 = arith.constant 208 : index
    %c0_98 = arith.constant 0 : index
    %108 = vector.load %arg5[%c208, %c0_98] : memref<416x16xf32, #tpu.memory_space<vmem>>, vector<16x16xf32>
    %cst_99 = arith.constant dense<0.000000e+00> : vector<56x16xf32>
    %109 = tpu.matmul %107, %108, %cst_99 {dimension_numbers = #tpu.dot_dimension_numbers<[1], [0], [0], [1], [0, 0, 1, 1], [], []>} : vector<56x16xf32>, vector<16x16xf32>, vector<56x16xf32> -> vector<56x16xf32>
    %110 = arith.addf %106, %109 : vector<56x16xf32>
    %c8_100 = arith.constant 8 : index
    %c0_101 = arith.constant 0 : index
    %111 = vector.load %arg12[%c8_100, %c0_101] : memref<92x16xf32, #tpu.memory_space<vmem>>, vector<56x16xf32>
    %c224 = arith.constant 224 : index
    %c0_102 = arith.constant 0 : index
    %112 = vector.load %arg5[%c224, %c0_102] : memref<416x16xf32, #tpu.memory_space<vmem>>, vector<16x16xf32>
    %cst_103 = arith.constant dense<0.000000e+00> : vector<56x16xf32>
    %113 = tpu.matmul %111, %112, %cst_103 {dimension_numbers = #tpu.dot_dimension_numbers<[1], [0], [0], [1], [0, 0, 1, 1], [], []>} : vector<56x16xf32>, vector<16x16xf32>, vector<56x16xf32> -> vector<56x16xf32>
    %114 = arith.addf %110, %113 : vector<56x16xf32>
    %c10_104 = arith.constant 10 : index
    %c0_105 = arith.constant 0 : index
    %115 = vector.load %arg12[%c10_104, %c0_105] : memref<92x16xf32, #tpu.memory_space<vmem>>, vector<56x16xf32>
    %c240 = arith.constant 240 : index
    %c0_106 = arith.constant 0 : index
    %116 = vector.load %arg5[%c240, %c0_106] : memref<416x16xf32, #tpu.memory_space<vmem>>, vector<16x16xf32>
    %cst_107 = arith.constant dense<0.000000e+00> : vector<56x16xf32>
    %117 = tpu.matmul %115, %116, %cst_107 {dimension_numbers = #tpu.dot_dimension_numbers<[1], [0], [0], [1], [0, 0, 1, 1], [], []>} : vector<56x16xf32>, vector<16x16xf32>, vector<56x16xf32> -> vector<56x16xf32>
    %118 = arith.addf %114, %117 : vector<56x16xf32>
    %c12_108 = arith.constant 12 : index
    %c0_109 = arith.constant 0 : index
    %119 = vector.load %arg12[%c12_108, %c0_109] : memref<92x16xf32, #tpu.memory_space<vmem>>, vector<56x16xf32>
    %c256 = arith.constant 256 : index
    %c0_110 = arith.constant 0 : index
    %120 = vector.load %arg5[%c256, %c0_110] : memref<416x16xf32, #tpu.memory_space<vmem>>, vector<16x16xf32>
    %cst_111 = arith.constant dense<0.000000e+00> : vector<56x16xf32>
    %121 = tpu.matmul %119, %120, %cst_111 {dimension_numbers = #tpu.dot_dimension_numbers<[1], [0], [0], [1], [0, 0, 1, 1], [], []>} : vector<56x16xf32>, vector<16x16xf32>, vector<56x16xf32> -> vector<56x16xf32>
    %122 = arith.addf %118, %121 : vector<56x16xf32>
    %c14_112 = arith.constant 14 : index
    %c0_113 = arith.constant 0 : index
    %123 = vector.load %arg12[%c14_112, %c0_113] : memref<92x16xf32, #tpu.memory_space<vmem>>, vector<56x16xf32>
    %c272 = arith.constant 272 : index
    %c0_114 = arith.constant 0 : index
    %124 = vector.load %arg5[%c272, %c0_114] : memref<416x16xf32, #tpu.memory_space<vmem>>, vector<16x16xf32>
    %cst_115 = arith.constant dense<0.000000e+00> : vector<56x16xf32>
    %125 = tpu.matmul %123, %124, %cst_115 {dimension_numbers = #tpu.dot_dimension_numbers<[1], [0], [0], [1], [0, 0, 1, 1], [], []>} : vector<56x16xf32>, vector<16x16xf32>, vector<56x16xf32> -> vector<56x16xf32>
    %126 = arith.addf %122, %125 : vector<56x16xf32>
    %c16_116 = arith.constant 16 : index
    %c0_117 = arith.constant 0 : index
    %127 = vector.load %arg12[%c16_116, %c0_117] : memref<92x16xf32, #tpu.memory_space<vmem>>, vector<56x16xf32>
    %c288 = arith.constant 288 : index
    %c0_118 = arith.constant 0 : index
    %128 = vector.load %arg5[%c288, %c0_118] : memref<416x16xf32, #tpu.memory_space<vmem>>, vector<16x16xf32>
    %cst_119 = arith.constant dense<0.000000e+00> : vector<56x16xf32>
    %129 = tpu.matmul %127, %128, %cst_119 {dimension_numbers = #tpu.dot_dimension_numbers<[1], [0], [0], [1], [0, 0, 1, 1], [], []>} : vector<56x16xf32>, vector<16x16xf32>, vector<56x16xf32> -> vector<56x16xf32>
    %130 = arith.addf %126, %129 : vector<56x16xf32>
    %c18_120 = arith.constant 18 : index
    %c0_121 = arith.constant 0 : index
    %131 = vector.load %arg12[%c18_120, %c0_121] : memref<92x16xf32, #tpu.memory_space<vmem>>, vector<56x16xf32>
    %c304 = arith.constant 304 : index
    %c0_122 = arith.constant 0 : index
    %132 = vector.load %arg5[%c304, %c0_122] : memref<416x16xf32, #tpu.memory_space<vmem>>, vector<16x16xf32>
    %cst_123 = arith.constant dense<0.000000e+00> : vector<56x16xf32>
    %133 = tpu.matmul %131, %132, %cst_123 {dimension_numbers = #tpu.dot_dimension_numbers<[1], [0], [0], [1], [0, 0, 1, 1], [], []>} : vector<56x16xf32>, vector<16x16xf32>, vector<56x16xf32> -> vector<56x16xf32>
    %134 = arith.addf %130, %133 : vector<56x16xf32>
    %c1_124 = arith.constant 1 : index
    %c0_125 = arith.constant 0 : index
    %135 = vector.load %arg6[%c1_124, %c0_125] : memref<4x16xf32, #tpu.memory_space<vmem>>, vector<1x16xf32>
    %136 = vector.broadcast %135 : vector<1x16xf32> to vector<56x16xf32>
    %137 = arith.addf %134, %136 : vector<56x16xf32>
    %cst_126 = arith.constant 0.000000e+00 : f32
    %138 = vector.broadcast %cst_126 : f32 to vector<56x16xf32>
    %139 = arith.cmpf oge, %137, %138 : vector<56x16xf32>
    %cst_127 = arith.constant 0.00999999977 : f32
    %140 = vector.broadcast %cst_127 : f32 to vector<56x16xf32>
    %141 = arith.mulf %140, %137 : vector<56x16xf32>
    %142 = arith.select %139, %137, %141 : vector<56x16xi1>, vector<56x16xf32>
    %c0_128 = arith.constant 0 : index
    %c0_129 = arith.constant 0 : index
    %143 = vector.load %arg13[%c0_128, %c0_129] : memref<92x16xf32, #tpu.memory_space<vmem>>, vector<56x16xf32>
    tpu.vector_store %arg13[%c0_128, %c0_129], %142 {strides = array<i32>} : memref<92x16xf32, #tpu.memory_space<vmem>>, vector<56x16xf32>,
    %c0_130 = arith.constant 0 : index
    %c0_131 = arith.constant 0 : index
    %144 = vector.load %arg13[%c0_130, %c0_131] : memref<92x16xf32, #tpu.memory_space<vmem>>, vector<50x16xf32>
    %c320 = arith.constant 320 : index
    %c0_132 = arith.constant 0 : index
    %145 = vector.load %arg5[%c320, %c0_132] : memref<416x16xf32, #tpu.memory_space<vmem>>, vector<16x16xf32>
    %cst_133 = arith.constant dense<0.000000e+00> : vector<50x16xf32>
    %146 = tpu.matmul %144, %145, %cst_133 {dimension_numbers = #tpu.dot_dimension_numbers<[1], [0], [0], [1], [0, 0, 1, 1], [], []>} : vector<50x16xf32>, vector<16x16xf32>, vector<50x16xf32> -> vector<50x16xf32>
    %c2_134 = arith.constant 2 : index
    %c0_135 = arith.constant 0 : index
    %147 = vector.load %arg13[%c2_134, %c0_135] : memref<92x16xf32, #tpu.memory_space<vmem>>, vector<50x16xf32>
    %c336 = arith.constant 336 : index
    %c0_136 = arith.constant 0 : index
    %148 = vector.load %arg5[%c336, %c0_136] : memref<416x16xf32, #tpu.memory_space<vmem>>, vector<16x16xf32>
    %cst_137 = arith.constant dense<0.000000e+00> : vector<50x16xf32>
    %149 = tpu.matmul %147, %148, %cst_137 {dimension_numbers = #tpu.dot_dimension_numbers<[1], [0], [0], [1], [0, 0, 1, 1], [], []>} : vector<50x16xf32>, vector<16x16xf32>, vector<50x16xf32> -> vector<50x16xf32>
    %150 = arith.addf %146, %149 : vector<50x16xf32>
    %c4_138 = arith.constant 4 : index
    %c0_139 = arith.constant 0 : index
    %151 = vector.load %arg13[%c4_138, %c0_139] : memref<92x16xf32, #tpu.memory_space<vmem>>, vector<50x16xf32>
    %c352 = arith.constant 352 : index
    %c0_140 = arith.constant 0 : index
    %152 = vector.load %arg5[%c352, %c0_140] : memref<416x16xf32, #tpu.memory_space<vmem>>, vector<16x16xf32>
    %cst_141 = arith.constant dense<0.000000e+00> : vector<50x16xf32>
    %153 = tpu.matmul %151, %152, %cst_141 {dimension_numbers = #tpu.dot_dimension_numbers<[1], [0], [0], [1], [0, 0, 1, 1], [], []>} : vector<50x16xf32>, vector<16x16xf32>, vector<50x16xf32> -> vector<50x16xf32>
    %154 = arith.addf %150, %153 : vector<50x16xf32>
    %c6_142 = arith.constant 6 : index
    %c0_143 = arith.constant 0 : index
    %155 = vector.load %arg13[%c6_142, %c0_143] : memref<92x16xf32, #tpu.memory_space<vmem>>, vector<50x16xf32>
    %c368 = arith.constant 368 : index
    %c0_144 = arith.constant 0 : index
    %156 = vector.load %arg5[%c368, %c0_144] : memref<416x16xf32, #tpu.memory_space<vmem>>, vector<16x16xf32>
    %cst_145 = arith.constant dense<0.000000e+00> : vector<50x16xf32>
    %157 = tpu.matmul %155, %156, %cst_145 {dimension_numbers = #tpu.dot_dimension_numbers<[1], [0], [0], [1], [0, 0, 1, 1], [], []>} : vector<50x16xf32>, vector<16x16xf32>, vector<50x16xf32> -> vector<50x16xf32>
    %158 = arith.addf %154, %157 : vector<50x16xf32>
    %c2_146 = arith.constant 2 : index
    %c0_147 = arith.constant 0 : index
    %159 = vector.load %arg6[%c2_146, %c0_147] : memref<4x16xf32, #tpu.memory_space<vmem>>, vector<1x16xf32>
    %160 = vector.broadcast %159 : vector<1x16xf32> to vector<50x16xf32>
    %161 = arith.addf %158, %160 : vector<50x16xf32>
    %cst_148 = arith.constant 0.000000e+00 : f32
    %162 = vector.broadcast %cst_148 : f32 to vector<50x16xf32>
    %163 = arith.cmpf oge, %161, %162 : vector<50x16xf32>
    %cst_149 = arith.constant 0.00999999977 : f32
    %164 = vector.broadcast %cst_149 : f32 to vector<50x16xf32>
    %165 = arith.mulf %164, %161 : vector<50x16xf32>
    %166 = arith.select %163, %161, %165 : vector<50x16xi1>, vector<50x16xf32>
    %c0_150 = arith.constant 0 : index
    %c0_151 = arith.constant 0 : index
    %167 = vector.load %arg12[%c0_150, %c0_151] : memref<92x16xf32, #tpu.memory_space<vmem>>, vector<50x16xf32>
    tpu.vector_store %arg12[%c0_150, %c0_151], %166 {strides = array<i32>} : memref<92x16xf32, #tpu.memory_space<vmem>>, vector<50x16xf32>,
    %c0_152 = arith.constant 0 : index
    %c0_153 = arith.constant 0 : index
    %168 = vector.load %arg12[%c0_152, %c0_153] : memref<92x16xf32, #tpu.memory_space<vmem>>, vector<48x16xf32>
    %c384 = arith.constant 384 : index
    %c0_154 = arith.constant 0 : index
    %169 = vector.load %arg5[%c384, %c0_154] : memref<416x16xf32, #tpu.memory_space<vmem>>, vector<16x16xf32>
    %cst_155 = arith.constant dense<0.000000e+00> : vector<48x16xf32>
    %170 = tpu.matmul %168, %169, %cst_155 {dimension_numbers = #tpu.dot_dimension_numbers<[1], [0], [0], [1], [0, 0, 1, 1], [], []>} : vector<48x16xf32>, vector<16x16xf32>, vector<48x16xf32> -> vector<48x16xf32>
    %c2_156 = arith.constant 2 : index
    %c0_157 = arith.constant 0 : index
    %171 = vector.load %arg12[%c2_156, %c0_157] : memref<92x16xf32, #tpu.memory_space<vmem>>, vector<48x16xf32>
    %c400 = arith.constant 400 : index
    %c0_158 = arith.constant 0 : index
    %172 = vector.load %arg5[%c400, %c0_158] : memref<416x16xf32, #tpu.memory_space<vmem>>, vector<16x16xf32>
    %cst_159 = arith.constant dense<0.000000e+00> : vector<48x16xf32>
    %173 = tpu.matmul %171, %172, %cst_159 {dimension_numbers = #tpu.dot_dimension_numbers<[1], [0], [0], [1], [0, 0, 1, 1], [], []>} : vector<48x16xf32>, vector<16x16xf32>, vector<48x16xf32> -> vector<48x16xf32>
    %174 = arith.addf %170, %173 : vector<48x16xf32>
    %c3 = arith.constant 3 : index
    %c0_160 = arith.constant 0 : index
    %175 = vector.load %arg6[%c3, %c0_160] : memref<4x16xf32, #tpu.memory_space<vmem>>, vector<1x16xf32>
    %176 = vector.broadcast %175 : vector<1x16xf32> to vector<48x16xf32>
    %177 = arith.addf %174, %176 : vector<48x16xf32>
    %cst_161 = arith.constant 0.000000e+00 : f32
    %178 = vector.broadcast %cst_161 : f32 to vector<48x16xf32>
    %179 = arith.cmpf oge, %177, %178 : vector<48x16xf32>
    %cst_162 = arith.constant 0.00999999977 : f32
    %180 = vector.broadcast %cst_162 : f32 to vector<48x16xf32>
    %181 = arith.mulf %180, %177 : vector<48x16xf32>
    %182 = arith.select %179, %177, %181 : vector<48x16xi1>, vector<48x16xf32>
    %c0_163 = arith.constant 0 : index
    %c0_164 = arith.constant 0 : index
    %183 = vector.load %arg13[%c0_163, %c0_164] : memref<92x16xf32, #tpu.memory_space<vmem>>, vector<48x16xf32>
    tpu.vector_store %arg13[%c0_163, %c0_164], %182 {strides = array<i32>} : memref<92x16xf32, #tpu.memory_space<vmem>>, vector<48x16xf32>,
    %cst_165 = arith.constant 0.000000e+00 : f32
    %184 = vector.broadcast %cst_165 : f32 to vector<2x128xf32>
    %c0_166 = arith.constant 0 : index
    %c0_167 = arith.constant 0 : index
    %185 = vector.load %arg10[%c0_166, %c0_167] : memref<36x16xf32, #tpu.memory_space<vmem>>, vector<2x16xf32>
    %c0_168 = arith.constant 0 : index
    %c0_169 = arith.constant 0 : index
    %186 = vector.load %arg7[%c0_168, %c0_169] : memref<224x128xf32, #tpu.memory_space<vmem>>, vector<16x128xf32>
    %cst_170 = arith.constant dense<0.000000e+00> : vector<2x128xf32>
    %187 = tpu.matmul %185, %186, %cst_170 {dimension_numbers = #tpu.dot_dimension_numbers<[1], [0], [0], [1], [0, 0, 1, 1], [], []>} : vector<2x16xf32>, vector<16x128xf32>, vector<2x128xf32> -> vector<2x128xf32>
    %188 = arith.addf %184, %187 : vector<2x128xf32>
    %c2_171 = arith.constant 2 : index
    %c0_172 = arith.constant 0 : index
    %189 = vector.load %arg10[%c2_171, %c0_172] : memref<36x16xf32, #tpu.memory_space<vmem>>, vector<2x16xf32>
    %c16_173 = arith.constant 16 : index
    %c0_174 = arith.constant 0 : index
    %190 = vector.load %arg7[%c16_173, %c0_174] : memref<224x128xf32, #tpu.memory_space<vmem>>, vector<16x128xf32>
    %cst_175 = arith.constant dense<0.000000e+00> : vector<2x128xf32>
    %191 = tpu.matmul %189, %190, %cst_175 {dimension_numbers = #tpu.dot_dimension_numbers<[1], [0], [0], [1], [0, 0, 1, 1], [], []>} : vector<2x16xf32>, vector<16x128xf32>, vector<2x128xf32> -> vector<2x128xf32>
    %192 = arith.addf %188, %191 : vector<2x128xf32>
    %c4_176 = arith.constant 4 : index
    %c0_177 = arith.constant 0 : index
    %193 = vector.load %arg10[%c4_176, %c0_177] : memref<36x16xf32, #tpu.memory_space<vmem>>, vector<2x16xf32>
    %c32_178 = arith.constant 32 : index
    %c0_179 = arith.constant 0 : index
    %194 = vector.load %arg7[%c32_178, %c0_179] : memref<224x128xf32, #tpu.memory_space<vmem>>, vector<16x128xf32>
    %cst_180 = arith.constant dense<0.000000e+00> : vector<2x128xf32>
    %195 = tpu.matmul %193, %194, %cst_180 {dimension_numbers = #tpu.dot_dimension_numbers<[1], [0], [0], [1], [0, 0, 1, 1], [], []>} : vector<2x16xf32>, vector<16x128xf32>, vector<2x128xf32> -> vector<2x128xf32>
    %196 = arith.addf %192, %195 : vector<2x128xf32>
    %c6_181 = arith.constant 6 : index
    %c0_182 = arith.constant 0 : index
    %197 = vector.load %arg10[%c6_181, %c0_182] : memref<36x16xf32, #tpu.memory_space<vmem>>, vector<2x16xf32>
    %c48_183 = arith.constant 48 : index
    %c0_184 = arith.constant 0 : index
    %198 = vector.load %arg7[%c48_183, %c0_184] : memref<224x128xf32, #tpu.memory_space<vmem>>, vector<16x128xf32>
    %cst_185 = arith.constant dense<0.000000e+00> : vector<2x128xf32>
    %199 = tpu.matmul %197, %198, %cst_185 {dimension_numbers = #tpu.dot_dimension_numbers<[1], [0], [0], [1], [0, 0, 1, 1], [], []>} : vector<2x16xf32>, vector<16x128xf32>, vector<2x128xf32> -> vector<2x128xf32>
    %200 = arith.addf %196, %199 : vector<2x128xf32>
    %c8_186 = arith.constant 8 : index
    %c0_187 = arith.constant 0 : index
    %201 = vector.load %arg10[%c8_186, %c0_187] : memref<36x16xf32, #tpu.memory_space<vmem>>, vector<2x16xf32>
    %c64_188 = arith.constant 64 : index
    %c0_189 = arith.constant 0 : index
    %202 = vector.load %arg7[%c64_188, %c0_189] : memref<224x128xf32, #tpu.memory_space<vmem>>, vector<16x128xf32>
    %cst_190 = arith.constant dense<0.000000e+00> : vector<2x128xf32>
    %203 = tpu.matmul %201, %202, %cst_190 {dimension_numbers = #tpu.dot_dimension_numbers<[1], [0], [0], [1], [0, 0, 1, 1], [], []>} : vector<2x16xf32>, vector<16x128xf32>, vector<2x128xf32> -> vector<2x128xf32>
    %204 = arith.addf %200, %203 : vector<2x128xf32>
    %c10_191 = arith.constant 10 : index
    %c0_192 = arith.constant 0 : index
    %205 = vector.load %arg10[%c10_191, %c0_192] : memref<36x16xf32, #tpu.memory_space<vmem>>, vector<2x16xf32>
    %c80_193 = arith.constant 80 : index
    %c0_194 = arith.constant 0 : index
    %206 = vector.load %arg7[%c80_193, %c0_194] : memref<224x128xf32, #tpu.memory_space<vmem>>, vector<16x128xf32>
    %cst_195 = arith.constant dense<0.000000e+00> : vector<2x128xf32>
    %207 = tpu.matmul %205, %206, %cst_195 {dimension_numbers = #tpu.dot_dimension_numbers<[1], [0], [0], [1], [0, 0, 1, 1], [], []>} : vector<2x16xf32>, vector<16x128xf32>, vector<2x128xf32> -> vector<2x128xf32>
    %208 = arith.addf %204, %207 : vector<2x128xf32>
    %c12_196 = arith.constant 12 : index
    %c0_197 = arith.constant 0 : index
    %209 = vector.load %arg10[%c12_196, %c0_197] : memref<36x16xf32, #tpu.memory_space<vmem>>, vector<2x16xf32>
    %c96_198 = arith.constant 96 : index
    %c0_199 = arith.constant 0 : index
    %210 = vector.load %arg7[%c96_198, %c0_199] : memref<224x128xf32, #tpu.memory_space<vmem>>, vector<16x128xf32>
    %cst_200 = arith.constant dense<0.000000e+00> : vector<2x128xf32>
    %211 = tpu.matmul %209, %210, %cst_200 {dimension_numbers = #tpu.dot_dimension_numbers<[1], [0], [0], [1], [0, 0, 1, 1], [], []>} : vector<2x16xf32>, vector<16x128xf32>, vector<2x128xf32> -> vector<2x128xf32>
    %212 = arith.addf %208, %211 : vector<2x128xf32>
    %c14_201 = arith.constant 14 : index
    %c0_202 = arith.constant 0 : index
    %213 = vector.load %arg10[%c14_201, %c0_202] : memref<36x16xf32, #tpu.memory_space<vmem>>, vector<2x16xf32>
    %c112_203 = arith.constant 112 : index
    %c0_204 = arith.constant 0 : index
    %214 = vector.load %arg7[%c112_203, %c0_204] : memref<224x128xf32, #tpu.memory_space<vmem>>, vector<16x128xf32>
    %cst_205 = arith.constant dense<0.000000e+00> : vector<2x128xf32>
    %215 = tpu.matmul %213, %214, %cst_205 {dimension_numbers = #tpu.dot_dimension_numbers<[1], [0], [0], [1], [0, 0, 1, 1], [], []>} : vector<2x16xf32>, vector<16x128xf32>, vector<2x128xf32> -> vector<2x128xf32>
    %216 = arith.addf %212, %215 : vector<2x128xf32>
    %c16_206 = arith.constant 16 : index
    %c0_207 = arith.constant 0 : index
    %217 = vector.load %arg10[%c16_206, %c0_207] : memref<36x16xf32, #tpu.memory_space<vmem>>, vector<2x16xf32>
    %c128_208 = arith.constant 128 : index
    %c0_209 = arith.constant 0 : index
    %218 = vector.load %arg7[%c128_208, %c0_209] : memref<224x128xf32, #tpu.memory_space<vmem>>, vector<16x128xf32>
    %cst_210 = arith.constant dense<0.000000e+00> : vector<2x128xf32>
    %219 = tpu.matmul %217, %218, %cst_210 {dimension_numbers = #tpu.dot_dimension_numbers<[1], [0], [0], [1], [0, 0, 1, 1], [], []>} : vector<2x16xf32>, vector<16x128xf32>, vector<2x128xf32> -> vector<2x128xf32>
    %220 = arith.addf %216, %219 : vector<2x128xf32>
    %c18_211 = arith.constant 18 : index
    %c0_212 = arith.constant 0 : index
    %221 = vector.load %arg10[%c18_211, %c0_212] : memref<36x16xf32, #tpu.memory_space<vmem>>, vector<2x16xf32>
    %c144_213 = arith.constant 144 : index
    %c0_214 = arith.constant 0 : index
    %222 = vector.load %arg7[%c144_213, %c0_214] : memref<224x128xf32, #tpu.memory_space<vmem>>, vector<16x128xf32>
    %cst_215 = arith.constant dense<0.000000e+00> : vector<2x128xf32>
    %223 = tpu.matmul %221, %222, %cst_215 {dimension_numbers = #tpu.dot_dimension_numbers<[1], [0], [0], [1], [0, 0, 1, 1], [], []>} : vector<2x16xf32>, vector<16x128xf32>, vector<2x128xf32> -> vector<2x128xf32>
    %224 = arith.addf %220, %223 : vector<2x128xf32>
    %c20 = arith.constant 20 : index
    %c0_216 = arith.constant 0 : index
    %225 = vector.load %arg10[%c20, %c0_216] : memref<36x16xf32, #tpu.memory_space<vmem>>, vector<2x16xf32>
    %c160_217 = arith.constant 160 : index
    %c0_218 = arith.constant 0 : index
    %226 = vector.load %arg7[%c160_217, %c0_218] : memref<224x128xf32, #tpu.memory_space<vmem>>, vector<16x128xf32>
    %cst_219 = arith.constant dense<0.000000e+00> : vector<2x128xf32>
    %227 = tpu.matmul %225, %226, %cst_219 {dimension_numbers = #tpu.dot_dimension_numbers<[1], [0], [0], [1], [0, 0, 1, 1], [], []>} : vector<2x16xf32>, vector<16x128xf32>, vector<2x128xf32> -> vector<2x128xf32>
    %228 = arith.addf %224, %227 : vector<2x128xf32>
    %c22 = arith.constant 22 : index
    %c0_220 = arith.constant 0 : index
    %229 = vector.load %arg10[%c22, %c0_220] : memref<36x16xf32, #tpu.memory_space<vmem>>, vector<2x16xf32>
    %c176_221 = arith.constant 176 : index
    %c0_222 = arith.constant 0 : index
    %230 = vector.load %arg7[%c176_221, %c0_222] : memref<224x128xf32, #tpu.memory_space<vmem>>, vector<16x128xf32>
    %cst_223 = arith.constant dense<0.000000e+00> : vector<2x128xf32>
    %231 = tpu.matmul %229, %230, %cst_223 {dimension_numbers = #tpu.dot_dimension_numbers<[1], [0], [0], [1], [0, 0, 1, 1], [], []>} : vector<2x16xf32>, vector<16x128xf32>, vector<2x128xf32> -> vector<2x128xf32>
    %232 = arith.addf %228, %231 : vector<2x128xf32>
    %c0_224 = arith.constant 0 : index
    %c0_225 = arith.constant 0 : index
    %233 = vector.load %arg13[%c0_224, %c0_225] : memref<92x16xf32, #tpu.memory_space<vmem>>, vector<2x16xf32>
    %c192_226 = arith.constant 192 : index
    %c0_227 = arith.constant 0 : index
    %234 = vector.load %arg7[%c192_226, %c0_227] : memref<224x128xf32, #tpu.memory_space<vmem>>, vector<16x128xf32>
    %cst_228 = arith.constant dense<0.000000e+00> : vector<2x128xf32>
    %235 = tpu.matmul %233, %234, %cst_228 {dimension_numbers = #tpu.dot_dimension_numbers<[1], [0], [0], [1], [0, 0, 1, 1], [], []>} : vector<2x16xf32>, vector<16x128xf32>, vector<2x128xf32> -> vector<2x128xf32>
    %236 = arith.addf %232, %235 : vector<2x128xf32>
    %c2_229 = arith.constant 2 : index
    %c0_230 = arith.constant 0 : index
    %237 = vector.load %arg13[%c2_229, %c0_230] : memref<92x16xf32, #tpu.memory_space<vmem>>, vector<2x16xf32>
    %c208_231 = arith.constant 208 : index
    %c0_232 = arith.constant 0 : index
    %238 = vector.load %arg7[%c208_231, %c0_232] : memref<224x128xf32, #tpu.memory_space<vmem>>, vector<16x128xf32>
    %cst_233 = arith.constant dense<0.000000e+00> : vector<2x128xf32>
    %239 = tpu.matmul %237, %238, %cst_233 {dimension_numbers = #tpu.dot_dimension_numbers<[1], [0], [0], [1], [0, 0, 1, 1], [], []>} : vector<2x16xf32>, vector<16x128xf32>, vector<2x128xf32> -> vector<2x128xf32>
    %240 = arith.addf %236, %239 : vector<2x128xf32>
    %c0_234 = arith.constant 0 : index
    %c0_235 = arith.constant 0 : index
    %241 = vector.load %arg8[%c0_234, %c0_235] : memref<1x128xf32, #tpu.memory_space<vmem>>, vector<1x128xf32>
    %242 = vector.broadcast %241 : vector<1x128xf32> to vector<2x128xf32>
    %243 = arith.addf %240, %242 : vector<2x128xf32>
    %cst_236 = arith.constant 0.000000e+00 : f32
    %244 = vector.broadcast %cst_236 : f32 to vector<2x128xf32>
    %245 = arith.cmpf oge, %243, %244 : vector<2x128xf32>
    %cst_237 = arith.constant 0.00999999977 : f32
    %246 = vector.broadcast %cst_237 : f32 to vector<2x128xf32>
    %247 = arith.mulf %246, %243 : vector<2x128xf32>
    %248 = arith.select %245, %243, %247 : vector<2x128xi1>, vector<2x128xf32>
    %cst_238 = arith.constant dense<0xFF800000> : vector<128xf32>
    %249 = vector.multi_reduction <maximumf>, %248, %cst_238 [0] : vector<2x128xf32> to vector<128xf32>
    %250 = vector.shape_cast %249 : vector<128xf32> to vector<1x128xf32>
    %251 = vector.broadcast %250 : vector<1x128xf32> to vector<2x128xf32>
    %252 = arith.subf %248, %251 : vector<2x128xf32>
    %253 = math.exp %252 : vector<2x128xf32>
    %cst_239 = arith.constant dense<0.000000e+00> : vector<128xf32>
    %254 = vector.multi_reduction <add>, %253, %cst_239 [0] : vector<2x128xf32> to vector<128xf32>
    %255 = vector.shape_cast %254 : vector<128xf32> to vector<1x128xf32>
    %256 = tpu.reciprocal %255 {approx = true} : vector<1x128xf32> -> vector<1x128xf32>
    %257 = vector.broadcast %256 : vector<1x128xf32> to vector<2x128xf32>
    %258 = arith.mulf %253, %257 : vector<2x128xf32>
    %259 = tpu.iota {dimensions = array<i32: 1>} : vector<2x128xi32>
    %c15_i32 = arith.constant 15 : i32
    %260 = vector.broadcast %c15_i32 : i32 to vector<2x128xi32>
    %261 = arith.cmpi eq, %259, %260 : vector<2x128xi32>
    %262 = arith.select %261, %248, %258 : vector<2x128xi1>, vector<2x128xf32>
    %c0_240 = arith.constant 0 : index
    %c0_241 = arith.constant 0 : index
    %263 = vector.load %arg9[%c0_240, %c0_241] : memref<2x128xf32, #tpu.memory_space<vmem>>, vector<2x128xf32>
    tpu.vector_store %arg9[%c0_240, %c0_241], %262 {strides = array<i32>} : memref<2x128xf32, #tpu.memory_space<vmem>>, vector<2x128xf32>,
    return
  }
  func.func @transform_0(%arg0: i32) -> (i32, i32) {
    %c0_i32 = arith.constant 0 : i32
    %c0_i32_0 = arith.constant 0 : i32
    %c0_i32_1 = arith.constant 0 : i32
    return %c0_i32, %c0_i32_0 : i32, i32
  }
  func.func @transform_1(%arg0: i32) -> (i32, i32) {
    %c0_i32 = arith.constant 0 : i32
    %c0_i32_0 = arith.constant 0 : i32
    %c0_i32_1 = arith.constant 0 : i32
    return %c0_i32, %c0_i32_0 : i32, i32
  }
  func.func @transform_2(%arg0: i32) -> (i32, i32) {
    %c0_i32 = arith.constant 0 : i32
    %c0_i32_0 = arith.constant 0 : i32
    %c0_i32_1 = arith.constant 0 : i32
    return %c0_i32, %c0_i32_0 : i32, i32
  }
  func.func @transform_3(%arg0: i32) -> (i32, i32) {
    %c0_i32 = arith.constant 0 : i32
    %c0_i32_0 = arith.constant 0 : i32
    %c0_i32_1 = arith.constant 0 : i32
    return %c0_i32, %c0_i32_0 : i32, i32
  }
  func.func @transform_4(%arg0: i32) -> (i32, i32) {
    %c0_i32 = arith.constant 0 : i32
    %c0_i32_0 = arith.constant 0 : i32
    %c0_i32_1 = arith.constant 0 : i32
    return %c0_i32, %c0_i32_0 : i32, i32
  }
  func.func @transform_5(%arg0: i32) -> (i32, i32) {
    %c0_i32 = arith.constant 0 : i32
    %c0_i32_0 = arith.constant 0 : i32
    %c0_i32_1 = arith.constant 0 : i32
    return %c0_i32, %c0_i32_0 : i32, i32
  }
  func.func @transform_6(%arg0: i32) -> (i32, i32) {
    %c0_i32 = arith.constant 0 : i32
    %c0_i32_0 = arith.constant 0 : i32
    %c0_i32_1 = arith.constant 0 : i32
    return %c0_i32, %c0_i32_0 : i32, i32
  }
  func.func @transform_7(%arg0: i32) -> (i32, i32) {
    %c0_i32 = arith.constant 0 : i32
    %c0_i32_0 = arith.constant 0 : i32
    %c0_i32_1 = arith.constant 0 : i32
    return %c0_i32, %c0_i32_0 : i32, i32
  }
  func.func @transform_8(%arg0: i32) -> (i32, i32) {
    %c0_i32 = arith.constant 0 : i32
    %c0_i32_0 = arith.constant 0 : i32
    %c0_i32_1 = arith.constant 0 : i32
    return %c0_i32, %c0_i32_0 : i32, i32
  }
}

</mosaic_0001>

<llo_original>
// kernel: forward.1
$region0: #{forward.1}
  #allocation0 [shape = 'u32[]', space=smem, size = 0x4, offset = 0x4, fixed_abs, tag = 'smem constant byte address 0x4 - core index']
  #allocation1 [shape = 'u32[144,128]{1,0:T(1,128)}', space=vmem, size = 0x12000, scoped, tag = 'internal scratch']
  #allocation2 [shape = 'f32[36,16]{1,0:T(8,128)}', space=vmem, size = 0x5000, scoped, tag = 'scratch operand']
  #allocation3 [shape = 'f32[36,16]{1,0:T(8,128)}', space=vmem, size = 0x5000, scoped, tag = 'scratch operand']
  #allocation4 [shape = 'f32[92,16]{1,0:T(8,128)}', space=vmem, size = 0xc000, scoped, tag = 'scratch operand']
  #allocation5 [shape = 'f32[92,16]{1,0:T(8,128)}', space=vmem, size = 0xc000, scoped, tag = 'scratch operand']
  %s0 = inlined_call_operand.vmem [shape: f32[36,16], index: 0, kind: input, shape index: {}]
  %s1 = inlined_call_operand.vmem [shape: f32[92,16], index: 1, kind: input, shape index: {}]
  %s2 = inlined_call_operand.vmem [shape: f32[96,16], index: 2, kind: input, shape index: {}]
  %s3 = inlined_call_operand.vmem [shape: f32[3,16], index: 3, kind: input, shape index: {}]
  %s4 = inlined_call_operand.vmem [shape: f32[416,16], index: 4, kind: input, shape index: {}]
  %s5 = inlined_call_operand.vmem [shape: f32[4,16], index: 5, kind: input, shape index: {}]
  %s6 = inlined_call_operand.vmem [shape: f32[224,128], index: 6, kind: input, shape index: {}]
  %s7 = inlined_call_operand.vmem [shape: f32[1,128], index: 7, kind: input, shape index: {}]
  %s8 = inlined_call_operand.hbm [shape: f32[2,128], index: 8, kind: output, shape index: {}]
  %s9 = sld [smem:[#allocation0]]
  $region42: #{forward.1} parent=0
    _
  %s11 = ssub.s32 1, %s9
  %s12 = scalar_select 0, %s11, %s9
  $region1: #{forward.1} parent=0
    #allocation6 [shape = 'u8[1024]{0}', space=vmem, size = 0x400, scoped, tag = 'output window, operand 0, single buffered']
    #allocation7 [shape = 's32[1]{0}', space=sflag, size = 0x4, scoped, tag = 'scoped memory for forward.1']
    %13 = vsyncpa [#allocation7], 0
    // Predicated region
    $region2: #{forward.1} parent=1 // pred_check
      _
    $region3: #{forward.1} parent=1 // pred_check_branch
      %15 = sbr.rel (0) target = $region5
    $region4: #{forward.1} parent=1 // pred_region
      _
    $region5: #{forward.1} parent=1 // pred_fallthru
      _
    // Predicated region
    $region6: #{forward.1} parent=1 // pred_check
      _
    $region7: #{forward.1} parent=1 // pred_check_branch
      %17 = sbr.rel (0) target = $region9
    $region8: #{forward.1} parent=1 // pred_region
      _
    $region9: #{forward.1} parent=1 // pred_fallthru
      _
    // Predicated region
    $region10: #{forward.1} parent=1 // pred_check
      _
    $region11: #{forward.1} parent=1 // pred_check_branch
      %19 = sbr.rel (0) target = $region13
    $region12: #{forward.1} parent=1 // pred_region
      _
    $region13: #{forward.1} parent=1 // pred_fallthru
      _
    // Predicated region
    $region14: #{forward.1} parent=1 // pred_check
      _
    $region15: #{forward.1} parent=1 // pred_check_branch
      %21 = sbr.rel (0) target = $region17
    $region16: #{forward.1} parent=1 // pred_region
      _
    $region17: #{forward.1} parent=1 // pred_fallthru
      _
    // Predicated region
    $region18: #{forward.1} parent=1 // pred_check
      _
    $region19: #{forward.1} parent=1 // pred_check_branch
      %23 = sbr.rel (0) target = $region21
    $region20: #{forward.1} parent=1 // pred_region
      _
    $region21: #{forward.1} parent=1 // pred_fallthru
      _
    // Predicated region
    $region22: #{forward.1} parent=1 // pred_check
      _
    $region23: #{forward.1} parent=1 // pred_check_branch
      %25 = sbr.rel (0) target = $region25
    $region24: #{forward.1} parent=1 // pred_region
      _
    $region25: #{forward.1} parent=1 // pred_fallthru
      _
    // Predicated region
    $region26: #{forward.1} parent=1 // pred_check
      _
    $region27: #{forward.1} parent=1 // pred_check_branch
      %27 = sbr.rel (0) target = $region29
    $region28: #{forward.1} parent=1 // pred_region
      _
    $region29: #{forward.1} parent=1 // pred_fallthru
      _
    // Predicated region
    $region30: #{forward.1} parent=1 // pred_check
      _
    $region31: #{forward.1} parent=1 // pred_check_branch
      %29 = sbr.rel (0) target = $region33
    $region32: #{forward.1} parent=1 // pred_region
      _
    $region33: #{forward.1} parent=1 // pred_fallthru
      _
    %v30 = vld [vmem:[%s0] sm:$0xff]
    %v31 = vld [vmem:[%s0 + $0x8] sm:$0xff]
    %v32 = vld [vmem:[%s0 + $0x10] sm:$0xff]
    %v33 = vld [vmem:[%s0 + $0x18] sm:$0xff]
    %v34 = vld [vmem:[%s0 + $0x20] sm:$0x3]
    %v35 = vld [vmem:[%s2] sm:$0xff]
    %v36 = vld [vmem:[%s2 + $0x8] sm:$0xff]
    %v37 = vld [vmem:[%s0 + $0x2] sm:$0xff]
    %v38 = vld [vmem:[%s0 + $0xa] sm:$0xff]
    %v39 = vld [vmem:[%s0 + $0x12] sm:$0xff]
    %v40 = vld [vmem:[%s0 + $0x1a] sm:$0xff]
    %v41 = vld [vmem:[%s0 + $0x22] sm:$0x3]
    %v42 = vld [vmem:[%s2 + $0x10] sm:$0xff]
    %v43 = vld [vmem:[%s2 + $0x18] sm:$0xff]
    %vm44 = vcmask 130048
    %v46 = vsel %vm44, %v37, 0
    %v49 = vsel %vm44, %v38, 0
    %v52 = vsel %vm44, %v39, 0
    %v55 = vsel %vm44, %v40, 0
    %v58 = vsel %vm44, %v41, 0
    %60 = vmatprep.subr.mxu0 0.0
    %61 = vmatpush1.msra.mxu0 %v42
    %62 = vmatprep.subr.mxu0 0.0
    %63 = vmatpush1.msra.mxu0 %v43
    %64 = vmatprep.subr.mxu0 0.0
    %65 = vmatpush1.msra.mxu0 0.0
    %66 = vmatprep.subr.mxu0 0.0
    %67 = vmatpush1.msra.mxu0 0.0
    %68 = vmatprep.subr.mxu0 0.0
    %69 = vmatpush1.msra.mxu0 0.0
    %70 = vmatprep.subr.mxu0 0.0
    %71 = vmatpush1.msra.mxu0 0.0
    %72 = vmatprep.subr.mxu0 0.0
    %73 = vmatpush1.msra.mxu0 0.0
    %74 = vmatprep.subr.mxu0 0.0
    %75 = vmatpush1.msra.mxu0 0.0
    %76 = vmatprep.subr.mxu0 0.0
    %77 = vmatpush1.msra.mxu0 0.0
    %78 = vmatprep.subr.mxu0 0.0
    %79 = vmatpush1.msra.mxu0 0.0
    %80 = vmatprep.subr.mxu0 0.0
    %81 = vmatpush1.msra.mxu0 0.0
    %82 = vmatprep.subr.mxu0 0.0
    %83 = vmatpush1.msra.mxu0 0.0
    %84 = vmatprep.subr.mxu0 0.0
    %85 = vmatpush1.msra.mxu0 0.0
    %86 = vmatprep.subr.mxu0 0.0
    %87 = vmatpush1.msra.mxu0 0.0
    %88 = vmatprep.subr.mxu0 0.0
    %89 = vmatpush1.msra.mxu0 0.0
    %90 = vmatprep.subr.mxu0 0.0
    %91 = vmatpush1.msra.mxu0 0.0
    %92 = vmatprep.subr.mxu0 0.0
    %93 = vmatpush1.msra.mxu0 0.0
    %94 = vmatprep.subr.mxu0 0.0
    %95 = vmatpush1.msra.mxu0 0.0
    %96 = vmatprep.subr.mxu0 0.0
    %97 = vmatpush1.msra.mxu0 0.0
    %98 = vmatprep.subr.mxu0 0.0
    %99 = vmatpush1.msra.mxu0 0.0
    %100 = vmatprep.subr.mxu0 0.0
    %101 = vmatpush1.msra.mxu0 0.0
    %102 = vmatprep.subr.mxu0 0.0
    %103 = vmatpush1.msra.mxu0 0.0
    %104 = vmatprep.subr.mxu0 0.0
    %105 = vmatpush1.msra.mxu0 0.0
    %106 = vmatprep.subr.mxu0 0.0
    %107 = vmatpush1.msra.mxu0 0.0
    %108 = vmatprep.subr.mxu0 0.0
    %109 = vmatpush1.msra.mxu0 0.0
    %110 = vmatprep.subr.mxu0 0.0
    %111 = vmatpush1.msra.mxu0 0.0
    %112 = vmatprep.subr.mxu0 0.0
    %113 = vmatpush1.msra.mxu0 0.0
    %114 = vmatprep.subr.mxu0 0.0
    %115 = vmatpush1.msra.mxu0 0.0
    %116 = vmatprep.subr.mxu0 0.0
    %117 = vmatpush1.msra.mxu0 0.0
    %118 = vmatprep.subr.mxu0 0.0
    %119 = vmatpush1.msra.mxu0 0.0
    %120 = vmatprep.subr.mxu0 0.0
    %121 = vmatpush1.msra.mxu0 0.0
    %122 = vmatprep.subr.mxu0 0.0
    %123 = vmatpush1.msra.mxu0 0.0
    %124 = vmatprep.mubr.f32.mxu0 0.0
    %125 = vmatmul.mubr.f32.gmra.mrb[0].mxu0 %v46
    %v126 = vpop.f32.mrb[0].mxu0
    %v127 = vadd.f32 0.0, %v126
    %v128 = vpop.f32.mrb[0].mxu0
    %129 = vmatprep.mubr.f32.mxu0 0.0
    %130 = vmatmul.mubr.f32.gmra.mrb[0].mxu0 %v49
    %v131 = vpop.f32.mrb[0].mxu0
    %v132 = vadd.f32 0.0, %v131
    %v133 = vpop.f32.mrb[0].mxu0
    %134 = vmatprep.mubr.f32.mxu0 0.0
    %135 = vmatmul.mubr.f32.gmra.mrb[0].mxu0 %v52
    %v136 = vpop.f32.mrb[0].mxu0
    %v137 = vadd.f32 0.0, %v136
    %v138 = vpop.f32.mrb[0].mxu0
    %139 = vmatprep.mubr.f32.mxu0 0.0
    %140 = vmatmul.mubr.f32.gmra.mrb[0].mxu0 %v55
    %v141 = vpop.f32.mrb[0].mxu0
    %v142 = vadd.f32 0.0, %v141
    %v143 = vpop.f32.mrb[0].mxu0
    %144 = vmatprep.mubr.f32.mxu0 0.0
    %145 = vmatmul.mubr.f32.gmra.mrb[0].mxu0 %v58
    %v146 = vpop.f32.mrb[0].mxu0
    %v147 = vadd.f32 0.0, %v146
    %v148 = vpop.f32.mrb[0].mxu0
    %149 = vdwg.mxu0
    %v151 = vsel %vm44, %v30, 0
    %v154 = vsel %vm44, %v31, 0
    %v157 = vsel %vm44, %v32, 0
    %v160 = vsel %vm44, %v33, 0
    %v163 = vsel %vm44, %v34, 0
    %165 = vmatprep.subr.mxu0 0.0
    %166 = vmatpush1.msra.mxu0 %v35
    %167 = vmatprep.subr.mxu0 0.0
    %168 = vmatpush1.msra.mxu0 %v36
    %169 = vmatprep.subr.mxu0 0.0
    %170 = vmatpush1.msra.mxu0 0.0
    %171 = vmatprep.subr.mxu0 0.0
    %172 = vmatpush1.msra.mxu0 0.0
    %173 = vmatprep.subr.mxu0 0.0
    %174 = vmatpush1.msra.mxu0 0.0
    %175 = vmatprep.subr.mxu0 0.0
    %176 = vmatpush1.msra.mxu0 0.0
    %177 = vmatprep.subr.mxu0 0.0
    %178 = vmatpush1.msra.mxu0 0.0
    %179 = vmatprep.subr.mxu0 0.0
    %180 = vmatpush1.msra.mxu0 0.0
    %181 = vmatprep.subr.mxu0 0.0
    %182 = vmatpush1.msra.mxu0 0.0
    %183 = vmatprep.subr.mxu0 0.0
    %184 = vmatpush1.msra.mxu0 0.0
    %185 = vmatprep.subr.mxu0 0.0
    %186 = vmatpush1.msra.mxu0 0.0
    %187 = vmatprep.subr.mxu0 0.0
    %188 = vmatpush1.msra.mxu0 0.0
    %189 = vmatprep.subr.mxu0 0.0
    %190 = vmatpush1.msra.mxu0 0.0
    %191 = vmatprep.subr.mxu0 0.0
    %192 = vmatpush1.msra.mxu0 0.0
    %193 = vmatprep.subr.mxu0 0.0
    %194 = vmatpush1.msra.mxu0 0.0
    %195 = vmatprep.subr.mxu0 0.0
    %196 = vmatpush1.msra.mxu0 0.0
    %197 = vmatprep.subr.mxu0 0.0
    %198 = vmatpush1.msra.mxu0 0.0
    %199 = vmatprep.subr.mxu0 0.0
    %200 = vmatpush1.msra.mxu0 0.0
    %201 = vmatprep.subr.mxu0 0.0
    %202 = vmatpush1.msra.mxu0 0.0
    %203 = vmatprep.subr.mxu0 0.0
    %204 = vmatpush1.msra.mxu0 0.0
    %205 = vmatprep.subr.mxu0 0.0
    %206 = vmatpush1.msra.mxu0 0.0
    %207 = vmatprep.subr.mxu0 0.0
    %208 = vmatpush1.msra.mxu0 0.0
    %209 = vmatprep.subr.mxu0 0.0
    %210 = vmatpush1.msra.mxu0 0.0
    %211 = vmatprep.subr.mxu0 0.0
    %212 = vmatpush1.msra.mxu0 0.0
    %213 = vmatprep.subr.mxu0 0.0
    %214 = vmatpush1.msra.mxu0 0.0
    %215 = vmatprep.subr.mxu0 0.0
    %216 = vmatpush1.msra.mxu0 0.0
    %217 = vmatprep.subr.mxu0 0.0
    %218 = vmatpush1.msra.mxu0 0.0
    %219 = vmatprep.subr.mxu0 0.0
    %220 = vmatpush1.msra.mxu0 0.0
    %221 = vmatprep.subr.mxu0 0.0
    %222 = vmatpush1.msra.mxu0 0.0
    %223 = vmatprep.subr.mxu0 0.0
    %224 = vmatpush1.msra.mxu0 0.0
    %225 = vmatprep.subr.mxu0 0.0
    %226 = vmatpush1.msra.mxu0 0.0
    %227 = vmatprep.subr.mxu0 0.0
    %228 = vmatpush1.msra.mxu0 0.0
    %229 = vmatprep.mubr.f32.mxu0 0.0
    %230 = vmatmul.mubr.f32.gmra.mrb[0].mxu0 %v151
    %v231 = vpop.f32.mrb[0].mxu0
    %v232 = vadd.f32 %v127, %v231
    %v233 = vpop.f32.mrb[0].mxu0
    %234 = vmatprep.mubr.f32.mxu0 0.0
    %235 = vmatmul.mubr.f32.gmra.mrb[0].mxu0 %v154
    %v236 = vpop.f32.mrb[0].mxu0
    %v237 = vadd.f32 %v132, %v236
    %v238 = vpop.f32.mrb[0].mxu0
    %239 = vmatprep.mubr.f32.mxu0 0.0
    %240 = vmatmul.mubr.f32.gmra.mrb[0].mxu0 %v157
    %v241 = vpop.f32.mrb[0].mxu0
    %v242 = vadd.f32 %v137, %v241
    %v243 = vpop.f32.mrb[0].mxu0
    %244 = vmatprep.mubr.f32.mxu0 0.0
    %245 = vmatmul.mubr.f32.gmra.mrb[0].mxu0 %v160
    %v246 = vpop.f32.mrb[0].mxu0
    %v247 = vadd.f32 %v142, %v246
    %v248 = vpop.f32.mrb[0].mxu0
    %249 = vmatprep.mubr.f32.mxu0 0.0
    %250 = vmatmul.mubr.f32.gmra.mrb[0].mxu0 %v163
    %v251 = vpop.f32.mrb[0].mxu0
    %v252 = vadd.f32 %v147, %v251
    %v253 = vpop.f32.mrb[0].mxu0
    %254 = vdwg.mxu0
    %v255 = vld [vmem:[%s3] sm:$0x1]
    %v256 = vlaneseq
    %v257 = vshrl.u32 %v256, 7
    %v258 = vsub.s32 0, %v257
    %v259 = vrot.slane %v255, %v258
    %v260 = vadd.f32 %v232, %v259
    %v261 = vadd.f32 %v237, %v259
    %v262 = vadd.f32 %v242, %v259
    %v263 = vadd.f32 %v247, %v259
    %v264 = vadd.f32 %v252, %v259
    %vm265 = vcmp.ge.f32.partialorder %v260, 0.0
    %vm266 = vcmp.ge.f32.partialorder %v261, 0.0
    %vm267 = vcmp.ge.f32.partialorder %v262, 0.0
    %vm268 = vcmp.ge.f32.partialorder %v263, 0.0
    %vm269 = vcmp.ge.f32.partialorder %v264, 0.0
    %v270 = vmul.f32 %v260, 0.01
    %v271 = vmul.f32 %v261, 0.01
    %v272 = vmul.f32 %v262, 0.01
    %v273 = vmul.f32 %v263, 0.01
    %v274 = vmul.f32 %v264, 0.01
    %v275 = vsel %vm265, %v260, %v270
    %v276 = vsel %vm266, %v261, %v271
    %v277 = vsel %vm267, %v262, %v272
    %v278 = vsel %vm268, %v263, %v273
    %v279 = vsel %vm269, %v264, %v274
    %280 = vst.msk [vmem:[#allocation2] sm:$0xff] %vm44, %v275
    %281 = vst.msk [vmem:[#allocation2 + $0x8] sm:$0xff] %vm44, %v276
    %282 = vst.msk [vmem:[#allocation2 + $0x10] sm:$0xff] %vm44, %v277
    %283 = vst.msk [vmem:[#allocation2 + $0x18] sm:$0xff] %vm44, %v278
    %vm284 = vcmask 123904
    %285 = vst.msk [vmem:[#allocation2 + $0x20] sm:$0x3] %vm284, %v279
    %v286 = vld [vmem:[#allocation2] sm:$0xff]
    %v287 = vld [vmem:[#allocation2 + $0x8] sm:$0xff]
    %v288 = vld [vmem:[#allocation2 + $0x10] sm:$0xff]
    %v289 = vld [vmem:[#allocation2 + $0x18] sm:$0xff]
    %v290 = vld [vmem:[%s2 + $0x20] sm:$0xff]
    %v291 = vld [vmem:[%s2 + $0x28] sm:$0xff]
    %v292 = vld [vmem:[#allocation2 + $0x2] sm:$0xff]
    %v293 = vld [vmem:[#allocation2 + $0xa] sm:$0xff]
    %v294 = vld [vmem:[#allocation2 + $0x12] sm:$0xff]
    %v295 = vld [vmem:[#allocation2 + $0x1a] sm:$0xff]
    %v296 = vld [vmem:[%s2 + $0x30] sm:$0xff]
    %v297 = vld [vmem:[%s2 + $0x38] sm:$0xff]
    %v299 = vsel %vm44, %v292, 0
    %v302 = vsel %vm44, %v293, 0
    %v305 = vsel %vm44, %v294, 0
    %v308 = vsel %vm44, %v295, 0
    %310 = vmatprep.subr.mxu0 0.0
    %311 = vmatpush1.msra.mxu0 %v296
    %312 = vmatprep.subr.mxu0 0.0
    %313 = vmatpush1.msra.mxu0 %v297
    %314 = vmatprep.subr.mxu0 0.0
    %315 = vmatpush1.msra.mxu0 0.0
    %316 = vmatprep.subr.mxu0 0.0
    %317 = vmatpush1.msra.mxu0 0.0
    %318 = vmatprep.subr.mxu0 0.0
    %319 = vmatpush1.msra.mxu0 0.0
    %320 = vmatprep.subr.mxu0 0.0
    %321 = vmatpush1.msra.mxu0 0.0
    %322 = vmatprep.subr.mxu0 0.0
    %323 = vmatpush1.msra.mxu0 0.0
    %324 = vmatprep.subr.mxu0 0.0
    %325 = vmatpush1.msra.mxu0 0.0
    %326 = vmatprep.subr.mxu0 0.0
    %327 = vmatpush1.msra.mxu0 0.0
    %328 = vmatprep.subr.mxu0 0.0
    %329 = vmatpush1.msra.mxu0 0.0
    %330 = vmatprep.subr.mxu0 0.0
    %331 = vmatpush1.msra.mxu0 0.0
    %332 = vmatprep.subr.mxu0 0.0
    %333 = vmatpush1.msra.mxu0 0.0
    %334 = vmatprep.subr.mxu0 0.0
    %335 = vmatpush1.msra.mxu0 0.0
    %336 = vmatprep.subr.mxu0 0.0
    %337 = vmatpush1.msra.mxu0 0.0
    %338 = vmatprep.subr.mxu0 0.0
    %339 = vmatpush1.msra.mxu0 0.0
    %340 = vmatprep.subr.mxu0 0.0
    %341 = vmatpush1.msra.mxu0 0.0
    %342 = vmatprep.subr.mxu0 0.0
    %343 = vmatpush1.msra.mxu0 0.0
    %344 = vmatprep.subr.mxu0 0.0
    %345 = vmatpush1.msra.mxu0 0.0
    %346 = vmatprep.subr.mxu0 0.0
    %347 = vmatpush1.msra.mxu0 0.0
    %348 = vmatprep.subr.mxu0 0.0
    %349 = vmatpush1.msra.mxu0 0.0
    %350 = vmatprep.subr.mxu0 0.0
    %351 = vmatpush1.msra.mxu0 0.0
    %352 = vmatprep.subr.mxu0 0.0
    %353 = vmatpush1.msra.mxu0 0.0
    %354 = vmatprep.subr.mxu0 0.0
    %355 = vmatpush1.msra.mxu0 0.0
    %356 = vmatprep.subr.mxu0 0.0
    %357 = vmatpush1.msra.mxu0 0.0
    %358 = vmatprep.subr.mxu0 0.0
    %359 = vmatpush1.msra.mxu0 0.0
    %360 = vmatprep.subr.mxu0 0.0
    %361 = vmatpush1.msra.mxu0 0.0
    %362 = vmatprep.subr.mxu0 0.0
    %363 = vmatpush1.msra.mxu0 0.0
    %364 = vmatprep.subr.mxu0 0.0
    %365 = vmatpush1.msra.mxu0 0.0
    %366 = vmatprep.subr.mxu0 0.0
    %367 = vmatpush1.msra.mxu0 0.0
    %368 = vmatprep.subr.mxu0 0.0
    %369 = vmatpush1.msra.mxu0 0.0
    %370 = vmatprep.subr.mxu0 0.0
    %371 = vmatpush1.msra.mxu0 0.0
    %372 = vmatprep.subr.mxu0 0.0
    %373 = vmatpush1.msra.mxu0 0.0
    %374 = vmatprep.mubr.f32.mxu0 0.0
    %375 = vmatmul.mubr.f32.gmra.mrb[0].mxu0 %v299
    %v376 = vpop.f32.mrb[0].mxu0
    %v377 = vadd.f32 0.0, %v376
    %v378 = vpop.f32.mrb[0].mxu0
    %379 = vmatprep.mubr.f32.mxu0 0.0
    %380 = vmatmul.mubr.f32.gmra.mrb[0].mxu0 %v302
    %v381 = vpop.f32.mrb[0].mxu0
    %v382 = vadd.f32 0.0, %v381
    %v383 = vpop.f32.mrb[0].mxu0
    %384 = vmatprep.mubr.f32.mxu0 0.0
    %385 = vmatmul.mubr.f32.gmra.mrb[0].mxu0 %v305
    %v386 = vpop.f32.mrb[0].mxu0
    %v387 = vadd.f32 0.0, %v386
    %v388 = vpop.f32.mrb[0].mxu0
    %389 = vmatprep.mubr.f32.mxu0 0.0
    %390 = vmatmul.mubr.f32.gmra.mrb[0].mxu0 %v308
    %v391 = vpop.f32.mrb[0].mxu0
    %v392 = vadd.f32 0.0, %v391
    %v393 = vpop.f32.mrb[0].mxu0
    %394 = vdwg.mxu0
    %v396 = vsel %vm44, %v286, 0
    %v399 = vsel %vm44, %v287, 0
    %v402 = vsel %vm44, %v288, 0
    %v405 = vsel %vm44, %v289, 0
    %407 = vmatprep.subr.mxu0 0.0
    %408 = vmatpush1.msra.mxu0 %v290
    %409 = vmatprep.subr.mxu0 0.0
    %410 = vmatpush1.msra.mxu0 %v291
    %411 = vmatprep.subr.mxu0 0.0
    %412 = vmatpush1.msra.mxu0 0.0
    %413 = vmatprep.subr.mxu0 0.0
    %414 = vmatpush1.msra.mxu0 0.0
    %415 = vmatprep.subr.mxu0 0.0
    %416 = vmatpush1.msra.mxu0 0.0
    %417 = vmatprep.subr.mxu0 0.0
    %418 = vmatpush1.msra.mxu0 0.0
    %419 = vmatprep.subr.mxu0 0.0
    %420 = vmatpush1.msra.mxu0 0.0
    %421 = vmatprep.subr.mxu0 0.0
    %422 = vmatpush1.msra.mxu0 0.0
    %423 = vmatprep.subr.mxu0 0.0
    %424 = vmatpush1.msra.mxu0 0.0
    %425 = vmatprep.subr.mxu0 0.0
    %426 = vmatpush1.msra.mxu0 0.0
    %427 = vmatprep.subr.mxu0 0.0
    %428 = vmatpush1.msra.mxu0 0.0
    %429 = vmatprep.subr.mxu0 0.0
    %430 = vmatpush1.msra.mxu0 0.0
    %431 = vmatprep.subr.mxu0 0.0
    %432 = vmatpush1.msra.mxu0 0.0
    %433 = vmatprep.subr.mxu0 0.0
    %434 = vmatpush1.msra.mxu0 0.0
    %435 = vmatprep.subr.mxu0 0.0
    %436 = vmatpush1.msra.mxu0 0.0
    %437 = vmatprep.subr.mxu0 0.0
    %438 = vmatpush1.msra.mxu0 0.0
    %439 = vmatprep.subr.mxu0 0.0
    %440 = vmatpush1.msra.mxu0 0.0
    %441 = vmatprep.subr.mxu0 0.0
    %442 = vmatpush1.msra.mxu0 0.0
    %443 = vmatprep.subr.mxu0 0.0
    %444 = vmatpush1.msra.mxu0 0.0
    %445 = vmatprep.subr.mxu0 0.0
    %446 = vmatpush1.msra.mxu0 0.0
    %447 = vmatprep.subr.mxu0 0.0
    %448 = vmatpush1.msra.mxu0 0.0
    %449 = vmatprep.subr.mxu0 0.0
    %450 = vmatpush1.msra.mxu0 0.0
    %451 = vmatprep.subr.mxu0 0.0
    %452 = vmatpush1.msra.mxu0 0.0
    %453 = vmatprep.subr.mxu0 0.0
    %454 = vmatpush1.msra.mxu0 0.0
    %455 = vmatprep.subr.mxu0 0.0
    %456 = vmatpush1.msra.mxu0 0.0
    %457 = vmatprep.subr.mxu0 0.0
    %458 = vmatpush1.msra.mxu0 0.0
    %459 = vmatprep.subr.mxu0 0.0
    %460 = vmatpush1.msra.mxu0 0.0
    %461 = vmatprep.subr.mxu0 0.0
    %462 = vmatpush1.msra.mxu0 0.0
    %463 = vmatprep.subr.mxu0 0.0
    %464 = vmatpush1.msra.mxu0 0.0
    %465 = vmatprep.subr.mxu0 0.0
    %466 = vmatpush1.msra.mxu0 0.0
    %467 = vmatprep.subr.mxu0 0.0
    %468 = vmatpush1.msra.mxu0 0.0
    %469 = vmatprep.subr.mxu0 0.0
    %470 = vmatpush1.msra.mxu0 0.0
    %471 = vmatprep.mubr.f32.mxu0 0.0
    %472 = vmatmul.mubr.f32.gmra.mrb[0].mxu0 %v396
    %v473 = vpop.f32.mrb[0].mxu0
    %v474 = vadd.f32 %v377, %v473
    %v475 = vpop.f32.mrb[0].mxu0
    %476 = vmatprep.mubr.f32.mxu0 0.0
    %477 = vmatmul.mubr.f32.gmra.mrb[0].mxu0 %v399
    %v478 = vpop.f32.mrb[0].mxu0
    %v479 = vadd.f32 %v382, %v478
    %v480 = vpop.f32.mrb[0].mxu0
    %481 = vmatprep.mubr.f32.mxu0 0.0
    %482 = vmatmul.mubr.f32.gmra.mrb[0].mxu0 %v402
    %v483 = vpop.f32.mrb[0].mxu0
    %v484 = vadd.f32 %v387, %v483
    %v485 = vpop.f32.mrb[0].mxu0
    %486 = vmatprep.mubr.f32.mxu0 0.0
    %487 = vmatmul.mubr.f32.gmra.mrb[0].mxu0 %v405
    %v488 = vpop.f32.mrb[0].mxu0
    %v489 = vadd.f32 %v392, %v488
    %v490 = vpop.f32.mrb[0].mxu0
    %491 = vdwg.mxu0
    %v492 = vld [vmem:[%s3 + $0x1] sm:$0x1]
    %v493 = vlaneseq
    %v494 = vshrl.u32 %v493, 7
    %v495 = vsub.s32 0, %v494
    %v496 = vrot.slane %v492, %v495
    %v497 = vadd.f32 %v474, %v496
    %v498 = vadd.f32 %v479, %v496
    %v499 = vadd.f32 %v484, %v496
    %v500 = vadd.f32 %v489, %v496
    %vm501 = vcmp.ge.f32.partialorder %v497, 0.0
    %vm502 = vcmp.ge.f32.partialorder %v498, 0.0
    %vm503 = vcmp.ge.f32.partialorder %v499, 0.0
    %vm504 = vcmp.ge.f32.partialorder %v500, 0.0
    %v505 = vmul.f32 %v497, 0.01
    %v506 = vmul.f32 %v498, 0.01
    %v507 = vmul.f32 %v499, 0.01
    %v508 = vmul.f32 %v500, 0.01
    %v509 = vsel %vm501, %v497, %v505
    %v510 = vsel %vm502, %v498, %v506
    %v511 = vsel %vm503, %v499, %v507
    %v512 = vsel %vm504, %v500, %v508
    %513 = vst.msk [vmem:[#allocation3] sm:$0xff] %vm44, %v509
    %514 = vst.msk [vmem:[#allocation3 + $0x8] sm:$0xff] %vm44, %v510
    %515 = vst.msk [vmem:[#allocation3 + $0x10] sm:$0xff] %vm44, %v511
    %516 = vst.msk [vmem:[#allocation3 + $0x18] sm:$0xff] %vm44, %v512
    %v517 = vld [vmem:[#allocation3] sm:$0xff]
    %v518 = vld [vmem:[#allocation3 + $0x8] sm:$0xff]
    %v519 = vld [vmem:[#allocation3 + $0x10] sm:$0xff]
    %v520 = vld [vmem:[#allocation3 + $0x18] sm:$0x3f]
    %v521 = vld [vmem:[%s2 + $0x40] sm:$0xff]
    %v522 = vld [vmem:[%s2 + $0x48] sm:$0xff]
    %v523 = vld [vmem:[#allocation3 + $0x2] sm:$0xff]
    %v524 = vld [vmem:[#allocation3 + $0xa] sm:$0xff]
    %v525 = vld [vmem:[#allocation3 + $0x12] sm:$0xff]
    %v526 = vld [vmem:[#allocation3 + $0x1a] sm:$0x3f]
    %v527 = vld [vmem:[%s2 + $0x50] sm:$0xff]
    %v528 = vld [vmem:[%s2 + $0x58] sm:$0xff]
    %v530 = vsel %vm44, %v523, 0
    %v533 = vsel %vm44, %v524, 0
    %v536 = vsel %vm44, %v525, 0
    %v539 = vsel %vm44, %v526, 0
    %541 = vmatprep.subr.mxu0 0.0
    %542 = vmatpush1.msra.mxu0 %v527
    %543 = vmatprep.subr.mxu0 0.0
    %544 = vmatpush1.msra.mxu0 %v528
    %545 = vmatprep.subr.mxu0 0.0
    %546 = vmatpush1.msra.mxu0 0.0
    %547 = vmatprep.subr.mxu0 0.0
    %548 = vmatpush1.msra.mxu0 0.0
    %549 = vmatprep.subr.mxu0 0.0
    %550 = vmatpush1.msra.mxu0 0.0
    %551 = vmatprep.subr.mxu0 0.0
    %552 = vmatpush1.msra.mxu0 0.0
    %553 = vmatprep.subr.mxu0 0.0
    %554 = vmatpush1.msra.mxu0 0.0
    %555 = vmatprep.subr.mxu0 0.0
    %556 = vmatpush1.msra.mxu0 0.0
    %557 = vmatprep.subr.mxu0 0.0
    %558 = vmatpush1.msra.mxu0 0.0
    %559 = vmatprep.subr.mxu0 0.0
    %560 = vmatpush1.msra.mxu0 0.0
    %561 = vmatprep.subr.mxu0 0.0
    %562 = vmatpush1.msra.mxu0 0.0
    %563 = vmatprep.subr.mxu0 0.0
    %564 = vmatpush1.msra.mxu0 0.0
    %565 = vmatprep.subr.mxu0 0.0
    %566 = vmatpush1.msra.mxu0 0.0
    %567 = vmatprep.subr.mxu0 0.0
    %568 = vmatpush1.msra.mxu0 0.0
    %569 = vmatprep.subr.mxu0 0.0
    %570 = vmatpush1.msra.mxu0 0.0
    %571 = vmatprep.subr.mxu0 0.0
    %572 = vmatpush1.msra.mxu0 0.0
    %573 = vmatprep.subr.mxu0 0.0
    %574 = vmatpush1.msra.mxu0 0.0
    %575 = vmatprep.subr.mxu0 0.0
    %576 = vmatpush1.msra.mxu0 0.0
    %577 = vmatprep.subr.mxu0 0.0
    %578 = vmatpush1.msra.mxu0 0.0
    %579 = vmatprep.subr.mxu0 0.0
    %580 = vmatpush1.msra.mxu0 0.0
    %581 = vmatprep.subr.mxu0 0.0
    %582 = vmatpush1.msra.mxu0 0.0
    %583 = vmatprep.subr.mxu0 0.0
    %584 = vmatpush1.msra.mxu0 0.0
    %585 = vmatprep.subr.mxu0 0.0
    %586 = vmatpush1.msra.mxu0 0.0
    %587 = vmatprep.subr.mxu0 0.0
    %588 = vmatpush1.msra.mxu0 0.0
    %589 = vmatprep.subr.mxu0 0.0
    %590 = vmatpush1.msra.mxu0 0.0
    %591 = vmatprep.subr.mxu0 0.0
    %592 = vmatpush1.msra.mxu0 0.0
    %593 = vmatprep.subr.mxu0 0.0
    %594 = vmatpush1.msra.mxu0 0.0
    %595 = vmatprep.subr.mxu0 0.0
    %596 = vmatpush1.msra.mxu0 0.0
    %597 = vmatprep.subr.mxu0 0.0
    %598 = vmatpush1.msra.mxu0 0.0
    %599 = vmatprep.subr.mxu0 0.0
    %600 = vmatpush1.msra.mxu0 0.0
    %601 = vmatprep.subr.mxu0 0.0
    %602 = vmatpush1.msra.mxu0 0.0
    %603 = vmatprep.subr.mxu0 0.0
    %604 = vmatpush1.msra.mxu0 0.0
    %605 = vmatprep.mubr.f32.mxu0 0.0
    %606 = vmatmul.mubr.f32.gmra.mrb[0].mxu0 %v530
    %v607 = vpop.f32.mrb[0].mxu0
    %v608 = vadd.f32 0.0, %v607
    %v609 = vpop.f32.mrb[0].mxu0
    %610 = vmatprep.mubr.f32.mxu0 0.0
    %611 = vmatmul.mubr.f32.gmra.mrb[0].mxu0 %v533
    %v612 = vpop.f32.mrb[0].mxu0
    %v613 = vadd.f32 0.0, %v612
    %v614 = vpop.f32.mrb[0].mxu0
    %615 = vmatprep.mubr.f32.mxu0 0.0
    %616 = vmatmul.mubr.f32.gmra.mrb[0].mxu0 %v536
    %v617 = vpop.f32.mrb[0].mxu0
    %v618 = vadd.f32 0.0, %v617
    %v619 = vpop.f32.mrb[0].mxu0
    %620 = vmatprep.mubr.f32.mxu0 0.0
    %621 = vmatmul.mubr.f32.gmra.mrb[0].mxu0 %v539
    %v622 = vpop.f32.mrb[0].mxu0
    %v623 = vadd.f32 0.0, %v622
    %v624 = vpop.f32.mrb[0].mxu0
    %625 = vdwg.mxu0
    %v627 = vsel %vm44, %v517, 0
    %v630 = vsel %vm44, %v518, 0
    %v633 = vsel %vm44, %v519, 0
    %v636 = vsel %vm44, %v520, 0
    %638 = vmatprep.subr.mxu0 0.0
    %639 = vmatpush1.msra.mxu0 %v521
    %640 = vmatprep.subr.mxu0 0.0
    %641 = vmatpush1.msra.mxu0 %v522
    %642 = vmatprep.subr.mxu0 0.0
    %643 = vmatpush1.msra.mxu0 0.0
    %644 = vmatprep.subr.mxu0 0.0
    %645 = vmatpush1.msra.mxu0 0.0
    %646 = vmatprep.subr.mxu0 0.0
    %647 = vmatpush1.msra.mxu0 0.0
    %648 = vmatprep.subr.mxu0 0.0
    %649 = vmatpush1.msra.mxu0 0.0
    %650 = vmatprep.subr.mxu0 0.0
    %651 = vmatpush1.msra.mxu0 0.0
    %652 = vmatprep.subr.mxu0 0.0
    %653 = vmatpush1.msra.mxu0 0.0
    %654 = vmatprep.subr.mxu0 0.0
    %655 = vmatpush1.msra.mxu0 0.0
    %656 = vmatprep.subr.mxu0 0.0
    %657 = vmatpush1.msra.mxu0 0.0
    %658 = vmatprep.subr.mxu0 0.0
    %659 = vmatpush1.msra.mxu0 0.0
    %660 = vmatprep.subr.mxu0 0.0
    %661 = vmatpush1.msra.mxu0 0.0
    %662 = vmatprep.subr.mxu0 0.0
    %663 = vmatpush1.msra.mxu0 0.0
    %664 = vmatprep.subr.mxu0 0.0
    %665 = vmatpush1.msra.mxu0 0.0
    %666 = vmatprep.subr.mxu0 0.0
    %667 = vmatpush1.msra.mxu0 0.0
    %668 = vmatprep.subr.mxu0 0.0
    %669 = vmatpush1.msra.mxu0 0.0
    %670 = vmatprep.subr.mxu0 0.0
    %671 = vmatpush1.msra.mxu0 0.0
    %672 = vmatprep.subr.mxu0 0.0
    %673 = vmatpush1.msra.mxu0 0.0
    %674 = vmatprep.subr.mxu0 0.0
    %675 = vmatpush1.msra.mxu0 0.0
    %676 = vmatprep.subr.mxu0 0.0
    %677 = vmatpush1.msra.mxu0 0.0
    %678 = vmatprep.subr.mxu0 0.0
    %679 = vmatpush1.msra.mxu0 0.0
    %680 = vmatprep.subr.mxu0 0.0
    %681 = vmatpush1.msra.mxu0 0.0
    %682 = vmatprep.subr.mxu0 0.0
    %683 = vmatpush1.msra.mxu0 0.0
    %684 = vmatprep.subr.mxu0 0.0
    %685 = vmatpush1.msra.mxu0 0.0
    %686 = vmatprep.subr.mxu0 0.0
    %687 = vmatpush1.msra.mxu0 0.0
    %688 = vmatprep.subr.mxu0 0.0
    %689 = vmatpush1.msra.mxu0 0.0
    %690 = vmatprep.subr.mxu0 0.0
    %691 = vmatpush1.msra.mxu0 0.0
    %692 = vmatprep.subr.mxu0 0.0
    %693 = vmatpush1.msra.mxu0 0.0
    %694 = vmatprep.subr.mxu0 0.0
    %695 = vmatpush1.msra.mxu0 0.0
    %696 = vmatprep.subr.mxu0 0.0
    %697 = vmatpush1.msra.mxu0 0.0
    %698 = vmatprep.subr.mxu0 0.0
    %699 = vmatpush1.msra.mxu0 0.0
    %700 = vmatprep.subr.mxu0 0.0
    %701 = vmatpush1.msra.mxu0 0.0
    %702 = vmatprep.mubr.f32.mxu0 0.0
    %703 = vmatmul.mubr.f32.gmra.mrb[0].mxu0 %v627
    %v704 = vpop.f32.mrb[0].mxu0
    %v705 = vadd.f32 %v608, %v704
    %v706 = vpop.f32.mrb[0].mxu0
    %707 = vmatprep.mubr.f32.mxu0 0.0
    %708 = vmatmul.mubr.f32.gmra.mrb[0].mxu0 %v630
    %v709 = vpop.f32.mrb[0].mxu0
    %v710 = vadd.f32 %v613, %v709
    %v711 = vpop.f32.mrb[0].mxu0
    %712 = vmatprep.mubr.f32.mxu0 0.0
    %713 = vmatmul.mubr.f32.gmra.mrb[0].mxu0 %v633
    %v714 = vpop.f32.mrb[0].mxu0
    %v715 = vadd.f32 %v618, %v714
    %v716 = vpop.f32.mrb[0].mxu0
    %717 = vmatprep.mubr.f32.mxu0 0.0
    %718 = vmatmul.mubr.f32.gmra.mrb[0].mxu0 %v636
    %v719 = vpop.f32.mrb[0].mxu0
    %v720 = vadd.f32 %v623, %v719
    %v721 = vpop.f32.mrb[0].mxu0
    %722 = vdwg.mxu0
    %v723 = vld [vmem:[%s3 + $0x2] sm:$0x1]
    %v724 = vlaneseq
    %v725 = vshrl.u32 %v724, 7
    %v726 = vsub.s32 0, %v725
    %v727 = vrot.slane %v723, %v726
    %v728 = vadd.f32 %v705, %v727
    %v729 = vadd.f32 %v710, %v727
    %v730 = vadd.f32 %v715, %v727
    %v731 = vadd.f32 %v720, %v727
    %vm732 = vcmp.ge.f32.partialorder %v728, 0.0
    %vm733 = vcmp.ge.f32.partialorder %v729, 0.0
    %vm734 = vcmp.ge.f32.partialorder %v730, 0.0
    %vm735 = vcmp.ge.f32.partialorder %v731, 0.0
    %v736 = vmul.f32 %v728, 0.01
    %v737 = vmul.f32 %v729, 0.01
    %v738 = vmul.f32 %v730, 0.01
    %v739 = vmul.f32 %v731, 0.01
    %v740 = vsel %vm732, %v728, %v736
    %v741 = vsel %vm733, %v729, %v737
    %v742 = vsel %vm734, %v730, %v738
    %v743 = vsel %vm735, %v731, %v739
    %744 = vst.msk [vmem:[#allocation2] sm:$0xff] %vm44, %v740
    %745 = vst.msk [vmem:[#allocation2 + $0x8] sm:$0xff] %vm44, %v741
    %746 = vst.msk [vmem:[#allocation2 + $0x10] sm:$0xff] %vm44, %v742
    %vm747 = vcmask 128000
    %748 = vst.msk [vmem:[#allocation2 + $0x18] sm:$0x3f] %vm747, %v743
    %v749 = vld [vmem:[%s1] sm:$0xff]
    %v750 = vld [vmem:[%s1 + $0x8] sm:$0xff]
    %v751 = vld [vmem:[%s1 + $0x10] sm:$0xff]
    %v752 = vld [vmem:[%s1 + $0x18] sm:$0xff]
    %v753 = vld [vmem:[%s1 + $0x20] sm:$0xff]
    %v754 = vld [vmem:[%s1 + $0x28] sm:$0xff]
    %v755 = vld [vmem:[%s1 + $0x30] sm:$0xff]
    %v756 = vld [vmem:[%s1 + $0x38] sm:$0xff]
    %v757 = vld [vmem:[%s1 + $0x40] sm:$0xff]
    %v758 = vld [vmem:[%s1 + $0x48] sm:$0x3]
    %v759 = vld [vmem:[%s4] sm:$0xff]
    %v760 = vld [vmem:[%s4 + $0x8] sm:$0xff]
    %v761 = vld [vmem:[%s1 + $0x2] sm:$0xff]
    %v762 = vld [vmem:[%s1 + $0xa] sm:$0xff]
    %v763 = vld [vmem:[%s1 + $0x12] sm:$0xff]
    %v764 = vld [vmem:[%s1 + $0x1a] sm:$0xff]
    %v765 = vld [vmem:[%s1 + $0x22] sm:$0xff]
    %v766 = vld [vmem:[%s1 + $0x2a] sm:$0xff]
    %v767 = vld [vmem:[%s1 + $0x32] sm:$0xff]
    %v768 = vld [vmem:[%s1 + $0x3a] sm:$0xff]
    %v769 = vld [vmem:[%s1 + $0x42] sm:$0xff]
    %v770 = vld [vmem:[%s1 + $0x4a] sm:$0x3]
    %v771 = vld [vmem:[%s4 + $0x10] sm:$0xff]
    %v772 = vld [vmem:[%s4 + $0x18] sm:$0xff]
    %v774 = vsel %vm44, %v761, 0
    %v777 = vsel %vm44, %v762, 0
    %v780 = vsel %vm44, %v763, 0
    %v783 = vsel %vm44, %v764, 0
    %v786 = vsel %vm44, %v765, 0
    %v789 = vsel %vm44, %v766, 0
    %v792 = vsel %vm44, %v767, 0
    %v795 = vsel %vm44, %v768, 0
    %v798 = vsel %vm44, %v769, 0
    %v801 = vsel %vm44, %v770, 0
    %803 = vmatprep.subr.mxu0 0.0
    %804 = vmatpush1.msra.mxu0 %v771
    %805 = vmatprep.subr.mxu0 0.0
    %806 = vmatpush1.msra.mxu0 %v772
    %807 = vmatprep.subr.mxu0 0.0
    %808 = vmatpush1.msra.mxu0 0.0
    %809 = vmatprep.subr.mxu0 0.0
    %810 = vmatpush1.msra.mxu0 0.0
    %811 = vmatprep.subr.mxu0 0.0
    %812 = vmatpush1.msra.mxu0 0.0
    %813 = vmatprep.subr.mxu0 0.0
    %814 = vmatpush1.msra.mxu0 0.0
    %815 = vmatprep.subr.mxu0 0.0
    %816 = vmatpush1.msra.mxu0 0.0
    %817 = vmatprep.subr.mxu0 0.0
    %818 = vmatpush1.msra.mxu0 0.0
    %819 = vmatprep.subr.mxu0 0.0
    %820 = vmatpush1.msra.mxu0 0.0
    %821 = vmatprep.subr.mxu0 0.0
    %822 = vmatpush1.msra.mxu0 0.0
    %823 = vmatprep.subr.mxu0 0.0
    %824 = vmatpush1.msra.mxu0 0.0
    %825 = vmatprep.subr.mxu0 0.0
    %826 = vmatpush1.msra.mxu0 0.0
    %827 = vmatprep.subr.mxu0 0.0
    %828 = vmatpush1.msra.mxu0 0.0
    %829 = vmatprep.subr.mxu0 0.0
    %830 = vmatpush1.msra.mxu0 0.0
    %831 = vmatprep.subr.mxu0 0.0
    %832 = vmatpush1.msra.mxu0 0.0
    %833 = vmatprep.subr.mxu0 0.0
    %834 = vmatpush1.msra.mxu0 0.0
    %835 = vmatprep.subr.mxu0 0.0
    %836 = vmatpush1.msra.mxu0 0.0
    %837 = vmatprep.subr.mxu0 0.0
    %838 = vmatpush1.msra.mxu0 0.0
    %839 = vmatprep.subr.mxu0 0.0
    %840 = vmatpush1.msra.mxu0 0.0
    %841 = vmatprep.subr.mxu0 0.0
    %842 = vmatpush1.msra.mxu0 0.0
    %843 = vmatprep.subr.mxu0 0.0
    %844 = vmatpush1.msra.mxu0 0.0
    %845 = vmatprep.subr.mxu0 0.0
    %846 = vmatpush1.msra.mxu0 0.0
    %847 = vmatprep.subr.mxu0 0.0
    %848 = vmatpush1.msra.mxu0 0.0
    %849 = vmatprep.subr.mxu0 0.0
    %850 = vmatpush1.msra.mxu0 0.0
    %851 = vmatprep.subr.mxu0 0.0
    %852 = vmatpush1.msra.mxu0 0.0
    %853 = vmatprep.subr.mxu0 0.0
    %854 = vmatpush1.msra.mxu0 0.0
    %855 = vmatprep.subr.mxu0 0.0
    %856 = vmatpush1.msra.mxu0 0.0
    %857 = vmatprep.subr.mxu0 0.0
    %858 = vmatpush1.msra.mxu0 0.0
    %859 = vmatprep.subr.mxu0 0.0
    %860 = vmatpush1.msra.mxu0 0.0
    %861 = vmatprep.subr.mxu0 0.0
    %862 = vmatpush1.msra.mxu0 0.0
    %863 = vmatprep.subr.mxu0 0.0
    %864 = vmatpush1.msra.mxu0 0.0
    %865 = vmatprep.subr.mxu0 0.0
    %866 = vmatpush1.msra.mxu0 0.0
    %867 = vmatprep.mubr.f32.mxu0 0.0
    %868 = vmatmul.mubr.f32.gmra.mrb[0].mxu0 %v774
    %v869 = vpop.f32.mrb[0].mxu0
    %v870 = vadd.f32 0.0, %v869
    %v871 = vpop.f32.mrb[0].mxu0
    %872 = vmatprep.mubr.f32.mxu0 0.0
    %873 = vmatmul.mubr.f32.gmra.mrb[0].mxu0 %v777
    %v874 = vpop.f32.mrb[0].mxu0
    %v875 = vadd.f32 0.0, %v874
    %v876 = vpop.f32.mrb[0].mxu0
    %877 = vmatprep.mubr.f32.mxu0 0.0
    %878 = vmatmul.mubr.f32.gmra.mrb[0].mxu0 %v780
    %v879 = vpop.f32.mrb[0].mxu0
    %v880 = vadd.f32 0.0, %v879
    %v881 = vpop.f32.mrb[0].mxu0
    %882 = vmatprep.mubr.f32.mxu0 0.0
    %883 = vmatmul.mubr.f32.gmra.mrb[0].mxu0 %v783
    %v884 = vpop.f32.mrb[0].mxu0
    %v885 = vadd.f32 0.0, %v884
    %v886 = vpop.f32.mrb[0].mxu0
    %887 = vmatprep.mubr.f32.mxu0 0.0
    %888 = vmatmul.mubr.f32.gmra.mrb[0].mxu0 %v786
    %v889 = vpop.f32.mrb[0].mxu0
    %v890 = vadd.f32 0.0, %v889
    %v891 = vpop.f32.mrb[0].mxu0
    %892 = vmatprep.mubr.f32.mxu0 0.0
    %893 = vmatmul.mubr.f32.gmra.mrb[0].mxu0 %v789
    %v894 = vpop.f32.mrb[0].mxu0
    %v895 = vadd.f32 0.0, %v894
    %v896 = vpop.f32.mrb[0].mxu0
    %897 = vmatprep.mubr.f32.mxu0 0.0
    %898 = vmatmul.mubr.f32.gmra.mrb[0].mxu0 %v792
    %v899 = vpop.f32.mrb[0].mxu0
    %v900 = vadd.f32 0.0, %v899
    %v901 = vpop.f32.mrb[0].mxu0
    %902 = vmatprep.mubr.f32.mxu0 0.0
    %903 = vmatmul.mubr.f32.gmra.mrb[0].mxu0 %v795
    %v904 = vpop.f32.mrb[0].mxu0
    %v905 = vadd.f32 0.0, %v904
    %v906 = vpop.f32.mrb[0].mxu0
    %907 = vmatprep.mubr.f32.mxu0 0.0
    %908 = vmatmul.mubr.f32.gmra.mrb[0].mxu0 %v798
    %v909 = vpop.f32.mrb[0].mxu0
    %v910 = vadd.f32 0.0, %v909
    %v911 = vpop.f32.mrb[0].mxu0
    %912 = vmatprep.mubr.f32.mxu0 0.0
    %913 = vmatmul.mubr.f32.gmra.mrb[0].mxu0 %v801
    %v914 = vpop.f32.mrb[0].mxu0
    %v915 = vadd.f32 0.0, %v914
    %v916 = vpop.f32.mrb[0].mxu0
    %917 = vdwg.mxu0
    %v919 = vsel %vm44, %v749, 0
    %v922 = vsel %vm44, %v750, 0
    %v925 = vsel %vm44, %v751, 0
    %v928 = vsel %vm44, %v752, 0
    %v931 = vsel %vm44, %v753, 0
    %v934 = vsel %vm44, %v754, 0
    %v937 = vsel %vm44, %v755, 0
    %v940 = vsel %vm44, %v756, 0
    %v943 = vsel %vm44, %v757, 0
    %v946 = vsel %vm44, %v758, 0
    %948 = vmatprep.subr.mxu0 0.0
    %949 = vmatpush1.msra.mxu0 %v759
    %950 = vmatprep.subr.mxu0 0.0
    %951 = vmatpush1.msra.mxu0 %v760
    %952 = vmatprep.subr.mxu0 0.0
    %953 = vmatpush1.msra.mxu0 0.0
    %954 = vmatprep.subr.mxu0 0.0
    %955 = vmatpush1.msra.mxu0 0.0
    %956 = vmatprep.subr.mxu0 0.0
    %957 = vmatpush1.msra.mxu0 0.0
    %958 = vmatprep.subr.mxu0 0.0
    %959 = vmatpush1.msra.mxu0 0.0
    %960 = vmatprep.subr.mxu0 0.0
    %961 = vmatpush1.msra.mxu0 0.0
    %962 = vmatprep.subr.mxu0 0.0
    %963 = vmatpush1.msra.mxu0 0.0
    %964 = vmatprep.subr.mxu0 0.0
    %965 = vmatpush1.msra.mxu0 0.0
    %966 = vmatprep.subr.mxu0 0.0
    %967 = vmatpush1.msra.mxu0 0.0
    %968 = vmatprep.subr.mxu0 0.0
    %969 = vmatpush1.msra.mxu0 0.0
    %970 = vmatprep.subr.mxu0 0.0
    %971 = vmatpush1.msra.mxu0 0.0
    %972 = vmatprep.subr.mxu0 0.0
    %973 = vmatpush1.msra.mxu0 0.0
    %974 = vmatprep.subr.mxu0 0.0
    %975 = vmatpush1.msra.mxu0 0.0
    %976 = vmatprep.subr.mxu0 0.0
    %977 = vmatpush1.msra.mxu0 0.0
    %978 = vmatprep.subr.mxu0 0.0
    %979 = vmatpush1.msra.mxu0 0.0
    %980 = vmatprep.subr.mxu0 0.0
    %981 = vmatpush1.msra.mxu0 0.0
    %982 = vmatprep.subr.mxu0 0.0
    %983 = vmatpush1.msra.mxu0 0.0
    %984 = vmatprep.subr.mxu0 0.0
    %985 = vmatpush1.msra.mxu0 0.0
    %986 = vmatprep.subr.mxu0 0.0
    %987 = vmatpush1.msra.mxu0 0.0
    %988 = vmatprep.subr.mxu0 0.0
    %989 = vmatpush1.msra.mxu0 0.0
    %990 = vmatprep.subr.mxu0 0.0
    %991 = vmatpush1.msra.mxu0 0.0
    %992 = vmatprep.subr.mxu0 0.0
    %993 = vmatpush1.msra.mxu0 0.0
    %994 = vmatprep.subr.mxu0 0.0
    %995 = vmatpush1.msra.mxu0 0.0
    %996 = vmatprep.subr.mxu0 0.0
    %997 = vmatpush1.msra.mxu0 0.0
    %998 = vmatprep.subr.mxu0 0.0
    %999 = vmatpush1.msra.mxu0 0.0
    %1000 = vmatprep.subr.mxu0 0.0
    %1001 = vmatpush1.msra.mxu0 0.0
    %1002 = vmatprep.subr.mxu0 0.0
    %1003 = vmatpush1.msra.mxu0 0.0
    %1004 = vmatprep.subr.mxu0 0.0
    %1005 = vmatpush1.msra.mxu0 0.0
    %1006 = vmatprep.subr.mxu0 0.0
    %1007 = vmatpush1.msra.mxu0 0.0
    %1008 = vmatprep.subr.mxu0 0.0
    %1009 = vmatpush1.msra.mxu0 0.0
    %1010 = vmatprep.subr.mxu0 0.0
    %1011 = vmatpush1.msra.mxu0 0.0
    %1012 = vmatprep.mubr.f32.mxu0 0.0
    %1013 = vmatmul.mubr.f32.gmra.mrb[0].mxu0 %v919
    %v1014 = vpop.f32.mrb[0].mxu0
    %v1015 = vadd.f32 %v870, %v1014
    %v1016 = vpop.f32.mrb[0].mxu0
    %1017 = vmatprep.mubr.f32.mxu0 0.0
    %1018 = vmatmul.mubr.f32.gmra.mrb[0].mxu0 %v922
    %v1019 = vpop.f32.mrb[0].mxu0
    %v1020 = vadd.f32 %v875, %v1019
    %v1021 = vpop.f32.mrb[0].mxu0
    %1022 = vmatprep.mubr.f32.mxu0 0.0
    %1023 = vmatmul.mubr.f32.gmra.mrb[0].mxu0 %v925
    %v1024 = vpop.f32.mrb[0].mxu0
    %v1025 = vadd.f32 %v880, %v1024
    %v1026 = vpop.f32.mrb[0].mxu0
    %1027 = vmatprep.mubr.f32.mxu0 0.0
    %1028 = vmatmul.mubr.f32.gmra.mrb[0].mxu0 %v928
    %v1029 = vpop.f32.mrb[0].mxu0
    %v1030 = vadd.f32 %v885, %v1029
    %v1031 = vpop.f32.mrb[0].mxu0
    %1032 = vmatprep.mubr.f32.mxu0 0.0
    %1033 = vmatmul.mubr.f32.gmra.mrb[0].mxu0 %v931
    %v1034 = vpop.f32.mrb[0].mxu0
    %v1035 = vadd.f32 %v890, %v1034
    %v1036 = vpop.f32.mrb[0].mxu0
    %1037 = vmatprep.mubr.f32.mxu0 0.0
    %1038 = vmatmul.mubr.f32.gmra.mrb[0].mxu0 %v934
    %v1039 = vpop.f32.mrb[0].mxu0
    %v1040 = vadd.f32 %v895, %v1039
    %v1041 = vpop.f32.mrb[0].mxu0
    %1042 = vmatprep.mubr.f32.mxu0 0.0
    %1043 = vmatmul.mubr.f32.gmra.mrb[0].mxu0 %v937
    %v1044 = vpop.f32.mrb[0].mxu0
    %v1045 = vadd.f32 %v900, %v1044
    %v1046 = vpop.f32.mrb[0].mxu0
    %1047 = vmatprep.mubr.f32.mxu0 0.0
    %1048 = vmatmul.mubr.f32.gmra.mrb[0].mxu0 %v940
    %v1049 = vpop.f32.mrb[0].mxu0
    %v1050 = vadd.f32 %v905, %v1049
    %v1051 = vpop.f32.mrb[0].mxu0
    %1052 = vmatprep.mubr.f32.mxu0 0.0
    %1053 = vmatmul.mubr.f32.gmra.mrb[0].mxu0 %v943
    %v1054 = vpop.f32.mrb[0].mxu0
    %v1055 = vadd.f32 %v910, %v1054
    %v1056 = vpop.f32.mrb[0].mxu0
    %1057 = vmatprep.mubr.f32.mxu0 0.0
    %1058 = vmatmul.mubr.f32.gmra.mrb[0].mxu0 %v946
    %v1059 = vpop.f32.mrb[0].mxu0
    %v1060 = vadd.f32 %v915, %v1059
    %v1061 = vpop.f32.mrb[0].mxu0
    %1062 = vdwg.mxu0
    %v1063 = vld [vmem:[%s1 + $0x4] sm:$0xff]
    %v1064 = vld [vmem:[%s1 + $0xc] sm:$0xff]
    %v1065 = vld [vmem:[%s1 + $0x14] sm:$0xff]
    %v1066 = vld [vmem:[%s1 + $0x1c] sm:$0xff]
    %v1067 = vld [vmem:[%s1 + $0x24] sm:$0xff]
    %v1068 = vld [vmem:[%s1 + $0x2c] sm:$0xff]
    %v1069 = vld [vmem:[%s1 + $0x34] sm:$0xff]
    %v1070 = vld [vmem:[%s1 + $0x3c] sm:$0xff]
    %v1071 = vld [vmem:[%s1 + $0x44] sm:$0xff]
    %v1072 = vld [vmem:[%s1 + $0x4c] sm:$0x3]
    %v1073 = vld [vmem:[%s4 + $0x20] sm:$0xff]
    %v1074 = vld [vmem:[%s4 + $0x28] sm:$0xff]
    %v1076 = vsel %vm44, %v1063, 0
    %v1079 = vsel %vm44, %v1064, 0
    %v1082 = vsel %vm44, %v1065, 0
    %v1085 = vsel %vm44, %v1066, 0
    %v1088 = vsel %vm44, %v1067, 0
    %v1091 = vsel %vm44, %v1068, 0
    %v1094 = vsel %vm44, %v1069, 0
    %v1097 = vsel %vm44, %v1070, 0
    %v1100 = vsel %vm44, %v1071, 0
    %v1103 = vsel %vm44, %v1072, 0
    %1105 = vmatprep.subr.mxu0 0.0
    %1106 = vmatpush1.msra.mxu0 %v1073
    %1107 = vmatprep.subr.mxu0 0.0
    %1108 = vmatpush1.msra.mxu0 %v1074
    %1109 = vmatprep.subr.mxu0 0.0
    %1110 = vmatpush1.msra.mxu0 0.0
    %1111 = vmatprep.subr.mxu0 0.0
    %1112 = vmatpush1.msra.mxu0 0.0
    %1113 = vmatprep.subr.mxu0 0.0
    %1114 = vmatpush1.msra.mxu0 0.0
    %1115 = vmatprep.subr.mxu0 0.0
    %1116 = vmatpush1.msra.mxu0 0.0
    %1117 = vmatprep.subr.mxu0 0.0
    %1118 = vmatpush1.msra.mxu0 0.0
    %1119 = vmatprep.subr.mxu0 0.0
    %1120 = vmatpush1.msra.mxu0 0.0
    %1121 = vmatprep.subr.mxu0 0.0
    %1122 = vmatpush1.msra.mxu0 0.0
    %1123 = vmatprep.subr.mxu0 0.0
    %1124 = vmatpush1.msra.mxu0 0.0
    %1125 = vmatprep.subr.mxu0 0.0
    %1126 = vmatpush1.msra.mxu0 0.0
    %1127 = vmatprep.subr.mxu0 0.0
    %1128 = vmatpush1.msra.mxu0 0.0
    %1129 = vmatprep.subr.mxu0 0.0
    %1130 = vmatpush1.msra.mxu0 0.0
    %1131 = vmatprep.subr.mxu0 0.0
    %1132 = vmatpush1.msra.mxu0 0.0
    %1133 = vmatprep.subr.mxu0 0.0
    %1134 = vmatpush1.msra.mxu0 0.0
    %1135 = vmatprep.subr.mxu0 0.0
    %1136 = vmatpush1.msra.mxu0 0.0
    %1137 = vmatprep.subr.mxu0 0.0
    %1138 = vmatpush1.msra.mxu0 0.0
    %1139 = vmatprep.subr.mxu0 0.0
    %1140 = vmatpush1.msra.mxu0 0.0
    %1141 = vmatprep.subr.mxu0 0.0
    %1142 = vmatpush1.msra.mxu0 0.0
    %1143 = vmatprep.subr.mxu0 0.0
    %1144 = vmatpush1.msra.mxu0 0.0
    %1145 = vmatprep.subr.mxu0 0.0
    %1146 = vmatpush1.msra.mxu0 0.0
    %1147 = vmatprep.subr.mxu0 0.0
    %1148 = vmatpush1.msra.mxu0 0.0
    %1149 = vmatprep.subr.mxu0 0.0
    %1150 = vmatpush1.msra.mxu0 0.0
    %1151 = vmatprep.subr.mxu0 0.0
    %1152 = vmatpush1.msra.mxu0 0.0
    %1153 = vmatprep.subr.mxu0 0.0
    %1154 = vmatpush1.msra.mxu0 0.0
    %1155 = vmatprep.subr.mxu0 0.0
    %1156 = vmatpush1.msra.mxu0 0.0
    %1157 = vmatprep.subr.mxu0 0.0
    %1158 = vmatpush1.msra.mxu0 0.0
    %1159 = vmatprep.subr.mxu0 0.0
    %1160 = vmatpush1.msra.mxu0 0.0
    %1161 = vmatprep.subr.mxu0 0.0
    %1162 = vmatpush1.msra.mxu0 0.0
    %1163 = vmatprep.subr.mxu0 0.0
    %1164 = vmatpush1.msra.mxu0 0.0
    %1165 = vmatprep.subr.mxu0 0.0
    %1166 = vmatpush1.msra.mxu0 0.0
    %1167 = vmatprep.subr.mxu0 0.0
    %1168 = vmatpush1.msra.mxu0 0.0
    %1169 = vmatprep.mubr.f32.mxu0 0.0
    %1170 = vmatmul.mubr.f32.gmra.mrb[0].mxu0 %v1076
    %v1171 = vpop.f32.mrb[0].mxu0
    %v1172 = vadd.f32 0.0, %v1171
    %v1173 = vpop.f32.mrb[0].mxu0
    %1174 = vmatprep.mubr.f32.mxu0 0.0
    %1175 = vmatmul.mubr.f32.gmra.mrb[0].mxu0 %v1079
    %v1176 = vpop.f32.mrb[0].mxu0
    %v1177 = vadd.f32 0.0, %v1176
    %v1178 = vpop.f32.mrb[0].mxu0
    %1179 = vmatprep.mubr.f32.mxu0 0.0
    %1180 = vmatmul.mubr.f32.gmra.mrb[0].mxu0 %v1082
    %v1181 = vpop.f32.mrb[0].mxu0
    %v1182 = vadd.f32 0.0, %v1181
    %v1183 = vpop.f32.mrb[0].mxu0
    %1184 = vmatprep.mubr.f32.mxu0 0.0
    %1185 = vmatmul.mubr.f32.gmra.mrb[0].mxu0 %v1085
    %v1186 = vpop.f32.mrb[0].mxu0
    %v1187 = vadd.f32 0.0, %v1186
    %v1188 = vpop.f32.mrb[0].mxu0
    %1189 = vmatprep.mubr.f32.mxu0 0.0
    %1190 = vmatmul.mubr.f32.gmra.mrb[0].mxu0 %v1088
    %v1191 = vpop.f32.mrb[0].mxu0
    %v1192 = vadd.f32 0.0, %v1191
    %v1193 = vpop.f32.mrb[0].mxu0
    %1194 = vmatprep.mubr.f32.mxu0 0.0
    %1195 = vmatmul.mubr.f32.gmra.mrb[0].mxu0 %v1091
    %v1196 = vpop.f32.mrb[0].mxu0
    %v1197 = vadd.f32 0.0, %v1196
    %v1198 = vpop.f32.mrb[0].mxu0
    %1199 = vmatprep.mubr.f32.mxu0 0.0
    %1200 = vmatmul.mubr.f32.gmra.mrb[0].mxu0 %v1094
    %v1201 = vpop.f32.mrb[0].mxu0
    %v1202 = vadd.f32 0.0, %v1201
    %v1203 = vpop.f32.mrb[0].mxu0
    %1204 = vmatprep.mubr.f32.mxu0 0.0
    %1205 = vmatmul.mubr.f32.gmra.mrb[0].mxu0 %v1097
    %v1206 = vpop.f32.mrb[0].mxu0
    %v1207 = vadd.f32 0.0, %v1206
    %v1208 = vpop.f32.mrb[0].mxu0
    %1209 = vmatprep.mubr.f32.mxu0 0.0
    %1210 = vmatmul.mubr.f32.gmra.mrb[0].mxu0 %v1100
    %v1211 = vpop.f32.mrb[0].mxu0
    %v1212 = vadd.f32 0.0, %v1211
    %v1213 = vpop.f32.mrb[0].mxu0
    %1214 = vmatprep.mubr.f32.mxu0 0.0
    %1215 = vmatmul.mubr.f32.gmra.mrb[0].mxu0 %v1103
    %v1216 = vpop.f32.mrb[0].mxu0
    %v1217 = vadd.f32 0.0, %v1216
    %v1218 = vpop.f32.mrb[0].mxu0
    %1219 = vdwg.mxu0
    %v1220 = vadd.f32 %v1015, %v1172
    %v1221 = vadd.f32 %v1020, %v1177
    %v1222 = vadd.f32 %v1025, %v1182
    %v1223 = vadd.f32 %v1030, %v1187
    %v1224 = vadd.f32 %v1035, %v1192
    %v1225 = vadd.f32 %v1040, %v1197
    %v1226 = vadd.f32 %v1045, %v1202
    %v1227 = vadd.f32 %v1050, %v1207
    %v1228 = vadd.f32 %v1055, %v1212
    %v1229 = vadd.f32 %v1060, %v1217
    %v1230 = vld [vmem:[%s1 + $0x6] sm:$0xff]
    %v1231 = vld [vmem:[%s1 + $0xe] sm:$0xff]
    %v1232 = vld [vmem:[%s1 + $0x16] sm:$0xff]
    %v1233 = vld [vmem:[%s1 + $0x1e] sm:$0xff]
    %v1234 = vld [vmem:[%s1 + $0x26] sm:$0xff]
    %v1235 = vld [vmem:[%s1 + $0x2e] sm:$0xff]
    %v1236 = vld [vmem:[%s1 + $0x36] sm:$0xff]
    %v1237 = vld [vmem:[%s1 + $0x3e] sm:$0xff]
    %v1238 = vld [vmem:[%s1 + $0x46] sm:$0xff]
    %v1239 = vld [vmem:[%s1 + $0x4e] sm:$0x3]
    %v1240 = vld [vmem:[%s4 + $0x30] sm:$0xff]
    %v1241 = vld [vmem:[%s4 + $0x38] sm:$0xff]
    %v1243 = vsel %vm44, %v1230, 0
    %v1246 = vsel %vm44, %v1231, 0
    %v1249 = vsel %vm44, %v1232, 0
    %v1252 = vsel %vm44, %v1233, 0
    %v1255 = vsel %vm44, %v1234, 0
    %v1258 = vsel %vm44, %v1235, 0
    %v1261 = vsel %vm44, %v1236, 0
    %v1264 = vsel %vm44, %v1237, 0
    %v1267 = vsel %vm44, %v1238, 0
    %v1270 = vsel %vm44, %v1239, 0
    %1272 = vmatprep.subr.mxu0 0.0
    %1273 = vmatpush1.msra.mxu0 %v1240
    %1274 = vmatprep.subr.mxu0 0.0
    %1275 = vmatpush1.msra.mxu0 %v1241
    %1276 = vmatprep.subr.mxu0 0.0
    %1277 = vmatpush1.msra.mxu0 0.0
    %1278 = vmatprep.subr.mxu0 0.0
    %1279 = vmatpush1.msra.mxu0 0.0
    %1280 = vmatprep.subr.mxu0 0.0
    %1281 = vmatpush1.msra.mxu0 0.0
    %1282 = vmatprep.subr.mxu0 0.0
    %1283 = vmatpush1.msra.mxu0 0.0
    %1284 = vmatprep.subr.mxu0 0.0
    %1285 = vmatpush1.msra.mxu0 0.0
    %1286 = vmatprep.subr.mxu0 0.0
    %1287 = vmatpush1.msra.mxu0 0.0
    %1288 = vmatprep.subr.mxu0 0.0
    %1289 = vmatpush1.msra.mxu0 0.0
    %1290 = vmatprep.subr.mxu0 0.0
    %1291 = vmatpush1.msra.mxu0 0.0
    %1292 = vmatprep.subr.mxu0 0.0
    %1293 = vmatpush1.msra.mxu0 0.0
    %1294 = vmatprep.subr.mxu0 0.0
    %1295 = vmatpush1.msra.mxu0 0.0
    %1296 = vmatprep.subr.mxu0 0.0
    %1297 = vmatpush1.msra.mxu0 0.0
    %1298 = vmatprep.subr.mxu0 0.0
    %1299 = vmatpush1.msra.mxu0 0.0
    %1300 = vmatprep.subr.mxu0 0.0
    %1301 = vmatpush1.msra.mxu0 0.0
    %1302 = vmatprep.subr.mxu0 0.0
    %1303 = vmatpush1.msra.mxu0 0.0
    %1304 = vmatprep.subr.mxu0 0.0
    %1305 = vmatpush1.msra.mxu0 0.0
    %1306 = vmatprep.subr.mxu0 0.0
    %1307 = vmatpush1.msra.mxu0 0.0
    %1308 = vmatprep.subr.mxu0 0.0
    %1309 = vmatpush1.msra.mxu0 0.0
    %1310 = vmatprep.subr.mxu0 0.0
    %1311 = vmatpush1.msra.mxu0 0.0
    %1312 = vmatprep.subr.mxu0 0.0
    %1313 = vmatpush1.msra.mxu0 0.0
    %1314 = vmatprep.subr.mxu0 0.0
    %1315 = vmatpush1.msra.mxu0 0.0
    %1316 = vmatprep.subr.mxu0 0.0
    %1317 = vmatpush1.msra.mxu0 0.0
    %1318 = vmatprep.subr.mxu0 0.0
    %1319 = vmatpush1.msra.mxu0 0.0
    %1320 = vmatprep.subr.mxu0 0.0
    %1321 = vmatpush1.msra.mxu0 0.0
    %1322 = vmatprep.subr.mxu0 0.0
    %1323 = vmatpush1.msra.mxu0 0.0
    %1324 = vmatprep.subr.mxu0 0.0
    %1325 = vmatpush1.msra.mxu0 0.0
    %1326 = vmatprep.subr.mxu0 0.0
    %1327 = vmatpush1.msra.mxu0 0.0
    %1328 = vmatprep.subr.mxu0 0.0
    %1329 = vmatpush1.msra.mxu0 0.0
    %1330 = vmatprep.subr.mxu0 0.0
    %1331 = vmatpush1.msra.mxu0 0.0
    %1332 = vmatprep.subr.mxu0 0.0
    %1333 = vmatpush1.msra.mxu0 0.0
    %1334 = vmatprep.subr.mxu0 0.0
    %1335 = vmatpush1.msra.mxu0 0.0
    %1336 = vmatprep.mubr.f32.mxu0 0.0
    %1337 = vmatmul.mubr.f32.gmra.mrb[0].mxu0 %v1243
    %v1338 = vpop.f32.mrb[0].mxu0
    %v1339 = vadd.f32 0.0, %v1338
    %v1340 = vpop.f32.mrb[0].mxu0
    %1341 = vmatprep.mubr.f32.mxu0 0.0
    %1342 = vmatmul.mubr.f32.gmra.mrb[0].mxu0 %v1246
    %v1343 = vpop.f32.mrb[0].mxu0
    %v1344 = vadd.f32 0.0, %v1343
    %v1345 = vpop.f32.mrb[0].mxu0
    %1346 = vmatprep.mubr.f32.mxu0 0.0
    %1347 = vmatmul.mubr.f32.gmra.mrb[0].mxu0 %v1249
    %v1348 = vpop.f32.mrb[0].mxu0
    %v1349 = vadd.f32 0.0, %v1348
    %v1350 = vpop.f32.mrb[0].mxu0
    %1351 = vmatprep.mubr.f32.mxu0 0.0
    %1352 = vmatmul.mubr.f32.gmra.mrb[0].mxu0 %v1252
    %v1353 = vpop.f32.mrb[0].mxu0
    %v1354 = vadd.f32 0.0, %v1353
    %v1355 = vpop.f32.mrb[0].mxu0
    %1356 = vmatprep.mubr.f32.mxu0 0.0
    %1357 = vmatmul.mubr.f32.gmra.mrb[0].mxu0 %v1255
    %v1358 = vpop.f32.mrb[0].mxu0
    %v1359 = vadd.f32 0.0, %v1358
    %v1360 = vpop.f32.mrb[0].mxu0
    %1361 = vmatprep.mubr.f32.mxu0 0.0
    %1362 = vmatmul.mubr.f32.gmra.mrb[0].mxu0 %v1258
    %v1363 = vpop.f32.mrb[0].mxu0
    %v1364 = vadd.f32 0.0, %v1363
    %v1365 = vpop.f32.mrb[0].mxu0
    %1366 = vmatprep.mubr.f32.mxu0 0.0
    %1367 = vmatmul.mubr.f32.gmra.mrb[0].mxu0 %v1261
    %v1368 = vpop.f32.mrb[0].mxu0
    %v1369 = vadd.f32 0.0, %v1368
    %v1370 = vpop.f32.mrb[0].mxu0
    %1371 = vmatprep.mubr.f32.mxu0 0.0
    %1372 = vmatmul.mubr.f32.gmra.mrb[0].mxu0 %v1264
    %v1373 = vpop.f32.mrb[0].mxu0
    %v1374 = vadd.f32 0.0, %v1373
    %v1375 = vpop.f32.mrb[0].mxu0
    %1376 = vmatprep.mubr.f32.mxu0 0.0
    %1377 = vmatmul.mubr.f32.gmra.mrb[0].mxu0 %v1267
    %v1378 = vpop.f32.mrb[0].mxu0
    %v1379 = vadd.f32 0.0, %v1378
    %v1380 = vpop.f32.mrb[0].mxu0
    %1381 = vmatprep.mubr.f32.mxu0 0.0
    %1382 = vmatmul.mubr.f32.gmra.mrb[0].mxu0 %v1270
    %v1383 = vpop.f32.mrb[0].mxu0
    %v1384 = vadd.f32 0.0, %v1383
    %v1385 = vpop.f32.mrb[0].mxu0
    %1386 = vdwg.mxu0
    %v1387 = vadd.f32 %v1220, %v1339
    %v1388 = vadd.f32 %v1221, %v1344
    %v1389 = vadd.f32 %v1222, %v1349
    %v1390 = vadd.f32 %v1223, %v1354
    %v1391 = vadd.f32 %v1224, %v1359
    %v1392 = vadd.f32 %v1225, %v1364
    %v1393 = vadd.f32 %v1226, %v1369
    %v1394 = vadd.f32 %v1227, %v1374
    %v1395 = vadd.f32 %v1228, %v1379
    %v1396 = vadd.f32 %v1229, %v1384
    %v1397 = vld [vmem:[%s1 + $0x8] sm:$0xff]
    %v1398 = vld [vmem:[%s1 + $0x10] sm:$0xff]
    %v1399 = vld [vmem:[%s1 + $0x18] sm:$0xff]
    %v1400 = vld [vmem:[%s1 + $0x20] sm:$0xff]
    %v1401 = vld [vmem:[%s1 + $0x28] sm:$0xff]
    %v1402 = vld [vmem:[%s1 + $0x30] sm:$0xff]
    %v1403 = vld [vmem:[%s1 + $0x38] sm:$0xff]
    %v1404 = vld [vmem:[%s1 + $0x40] sm:$0xff]
    %v1405 = vld [vmem:[%s1 + $0x48] sm:$0xff]
    %v1406 = vld [vmem:[%s1 + $0x50] sm:$0x3]
    %v1407 = vld [vmem:[%s4 + $0x40] sm:$0xff]
    %v1408 = vld [vmem:[%s4 + $0x48] sm:$0xff]
    %v1410 = vsel %vm44, %v1397, 0
    %v1413 = vsel %vm44, %v1398, 0
    %v1416 = vsel %vm44, %v1399, 0
    %v1419 = vsel %vm44, %v1400, 0
    %v1422 = vsel %vm44, %v1401, 0
    %v1425 = vsel %vm44, %v1402, 0
    %v1428 = vsel %vm44, %v1403, 0
    %v1431 = vsel %vm44, %v1404, 0
    %v1434 = vsel %vm44, %v1405, 0
    %v1437 = vsel %vm44, %v1406, 0
    %1439 = vmatprep.subr.mxu0 0.0
    %1440 = vmatpush1.msra.mxu0 %v1407
    %1441 = vmatprep.subr.mxu0 0.0
    %1442 = vmatpush1.msra.mxu0 %v1408
    %1443 = vmatprep.subr.mxu0 0.0
    %1444 = vmatpush1.msra.mxu0 0.0
    %1445 = vmatprep.subr.mxu0 0.0
    %1446 = vmatpush1.msra.mxu0 0.0
    %1447 = vmatprep.subr.mxu0 0.0
    %1448 = vmatpush1.msra.mxu0 0.0
    %1449 = vmatprep.subr.mxu0 0.0
    %1450 = vmatpush1.msra.mxu0 0.0
    %1451 = vmatprep.subr.mxu0 0.0
    %1452 = vmatpush1.msra.mxu0 0.0
    %1453 = vmatprep.subr.mxu0 0.0
    %1454 = vmatpush1.msra.mxu0 0.0
    %1455 = vmatprep.subr.mxu0 0.0
    %1456 = vmatpush1.msra.mxu0 0.0
    %1457 = vmatprep.subr.mxu0 0.0
    %1458 = vmatpush1.msra.mxu0 0.0
    %1459 = vmatprep.subr.mxu0 0.0
    %1460 = vmatpush1.msra.mxu0 0.0
    %1461 = vmatprep.subr.mxu0 0.0
    %1462 = vmatpush1.msra.mxu0 0.0
    %1463 = vmatprep.subr.mxu0 0.0
    %1464 = vmatpush1.msra.mxu0 0.0
    %1465 = vmatprep.subr.mxu0 0.0
    %1466 = vmatpush1.msra.mxu0 0.0
    %1467 = vmatprep.subr.mxu0 0.0
    %1468 = vmatpush1.msra.mxu0 0.0
    %1469 = vmatprep.subr.mxu0 0.0
    %1470 = vmatpush1.msra.mxu0 0.0
    %1471 = vmatprep.subr.mxu0 0.0
    %1472 = vmatpush1.msra.mxu0 0.0
    %1473 = vmatprep.subr.mxu0 0.0
    %1474 = vmatpush1.msra.mxu0 0.0
    %1475 = vmatprep.subr.mxu0 0.0
    %1476 = vmatpush1.msra.mxu0 0.0
    %1477 = vmatprep.subr.mxu0 0.0
    %1478 = vmatpush1.msra.mxu0 0.0
    %1479 = vmatprep.subr.mxu0 0.0
    %1480 = vmatpush1.msra.mxu0 0.0
    %1481 = vmatprep.subr.mxu0 0.0
    %1482 = vmatpush1.msra.mxu0 0.0
    %1483 = vmatprep.subr.mxu0 0.0
    %1484 = vmatpush1.msra.mxu0 0.0
    %1485 = vmatprep.subr.mxu0 0.0
    %1486 = vmatpush1.msra.mxu0 0.0
    %1487 = vmatprep.subr.mxu0 0.0
    %1488 = vmatpush1.msra.mxu0 0.0
    %1489 = vmatprep.subr.mxu0 0.0
    %1490 = vmatpush1.msra.mxu0 0.0
    %1491 = vmatprep.subr.mxu0 0.0
    %1492 = vmatpush1.msra.mxu0 0.0
    %1493 = vmatprep.subr.mxu0 0.0
    %1494 = vmatpush1.msra.mxu0 0.0
    %1495 = vmatprep.subr.mxu0 0.0
    %1496 = vmatpush1.msra.mxu0 0.0
    %1497 = vmatprep.subr.mxu0 0.0
    %1498 = vmatpush1.msra.mxu0 0.0
    %1499 = vmatprep.subr.mxu0 0.0
    %1500 = vmatpush1.msra.mxu0 0.0
    %1501 = vmatprep.subr.mxu0 0.0
    %1502 = vmatpush1.msra.mxu0 0.0
    %1503 = vmatprep.mubr.f32.mxu0 0.0
    %1504 = vmatmul.mubr.f32.gmra.mrb[0].mxu0 %v1410
    %v1505 = vpop.f32.mrb[0].mxu0
    %v1506 = vadd.f32 0.0, %v1505
    %v1507 = vpop.f32.mrb[0].mxu0
    %1508 = vmatprep.mubr.f32.mxu0 0.0
    %1509 = vmatmul.mubr.f32.gmra.mrb[0].mxu0 %v1413
    %v1510 = vpop.f32.mrb[0].mxu0
    %v1511 = vadd.f32 0.0, %v1510
    %v1512 = vpop.f32.mrb[0].mxu0
    %1513 = vmatprep.mubr.f32.mxu0 0.0
    %1514 = vmatmul.mubr.f32.gmra.mrb[0].mxu0 %v1416
    %v1515 = vpop.f32.mrb[0].mxu0
    %v1516 = vadd.f32 0.0, %v1515
    %v1517 = vpop.f32.mrb[0].mxu0
    %1518 = vmatprep.mubr.f32.mxu0 0.0
    %1519 = vmatmul.mubr.f32.gmra.mrb[0].mxu0 %v1419
    %v1520 = vpop.f32.mrb[0].mxu0
    %v1521 = vadd.f32 0.0, %v1520
    %v1522 = vpop.f32.mrb[0].mxu0
    %1523 = vmatprep.mubr.f32.mxu0 0.0
    %1524 = vmatmul.mubr.f32.gmra.mrb[0].mxu0 %v1422
    %v1525 = vpop.f32.mrb[0].mxu0
    %v1526 = vadd.f32 0.0, %v1525
    %v1527 = vpop.f32.mrb[0].mxu0
    %1528 = vmatprep.mubr.f32.mxu0 0.0
    %1529 = vmatmul.mubr.f32.gmra.mrb[0].mxu0 %v1425
    %v1530 = vpop.f32.mrb[0].mxu0
    %v1531 = vadd.f32 0.0, %v1530
    %v1532 = vpop.f32.mrb[0].mxu0
    %1533 = vmatprep.mubr.f32.mxu0 0.0
    %1534 = vmatmul.mubr.f32.gmra.mrb[0].mxu0 %v1428
    %v1535 = vpop.f32.mrb[0].mxu0
    %v1536 = vadd.f32 0.0, %v1535
    %v1537 = vpop.f32.mrb[0].mxu0
    %1538 = vmatprep.mubr.f32.mxu0 0.0
    %1539 = vmatmul.mubr.f32.gmra.mrb[0].mxu0 %v1431
    %v1540 = vpop.f32.mrb[0].mxu0
    %v1541 = vadd.f32 0.0, %v1540
    %v1542 = vpop.f32.mrb[0].mxu0
    %1543 = vmatprep.mubr.f32.mxu0 0.0
    %1544 = vmatmul.mubr.f32.gmra.mrb[0].mxu0 %v1434
    %v1545 = vpop.f32.mrb[0].mxu0
    %v1546 = vadd.f32 0.0, %v1545
    %v1547 = vpop.f32.mrb[0].mxu0
    %1548 = vmatprep.mubr.f32.mxu0 0.0
    %1549 = vmatmul.mubr.f32.gmra.mrb[0].mxu0 %v1437
    %v1550 = vpop.f32.mrb[0].mxu0
    %v1551 = vadd.f32 0.0, %v1550
    %v1552 = vpop.f32.mrb[0].mxu0
    %1553 = vdwg.mxu0
    %v1554 = vadd.f32 %v1387, %v1506
    %v1555 = vadd.f32 %v1388, %v1511
    %v1556 = vadd.f32 %v1389, %v1516
    %v1557 = vadd.f32 %v1390, %v1521
    %v1558 = vadd.f32 %v1391, %v1526
    %v1559 = vadd.f32 %v1392, %v1531
    %v1560 = vadd.f32 %v1393, %v1536
    %v1561 = vadd.f32 %v1394, %v1541
    %v1562 = vadd.f32 %v1395, %v1546
    %v1563 = vadd.f32 %v1396, %v1551
    %v1564 = vld [vmem:[%s1 + $0xa] sm:$0xff]
    %v1565 = vld [vmem:[%s1 + $0x12] sm:$0xff]
    %v1566 = vld [vmem:[%s1 + $0x1a] sm:$0xff]
    %v1567 = vld [vmem:[%s1 + $0x22] sm:$0xff]
    %v1568 = vld [vmem:[%s1 + $0x2a] sm:$0xff]
    %v1569 = vld [vmem:[%s1 + $0x32] sm:$0xff]
    %v1570 = vld [vmem:[%s1 + $0x3a] sm:$0xff]
    %v1571 = vld [vmem:[%s1 + $0x42] sm:$0xff]
    %v1572 = vld [vmem:[%s1 + $0x4a] sm:$0xff]
    %v1573 = vld [vmem:[%s1 + $0x52] sm:$0x3]
    %v1574 = vld [vmem:[%s4 + $0x50] sm:$0xff]
    %v1575 = vld [vmem:[%s4 + $0x58] sm:$0xff]
    %v1577 = vsel %vm44, %v1564, 0
    %v1580 = vsel %vm44, %v1565, 0
    %v1583 = vsel %vm44, %v1566, 0
    %v1586 = vsel %vm44, %v1567, 0
    %v1589 = vsel %vm44, %v1568, 0
    %v1592 = vsel %vm44, %v1569, 0
    %v1595 = vsel %vm44, %v1570, 0
    %v1598 = vsel %vm44, %v1571, 0
    %v1601 = vsel %vm44, %v1572, 0
    %v1604 = vsel %vm44, %v1573, 0
    %1606 = vmatprep.subr.mxu0 0.0
    %1607 = vmatpush1.msra.mxu0 %v1574
    %1608 = vmatprep.subr.mxu0 0.0
    %1609 = vmatpush1.msra.mxu0 %v1575
    %1610 = vmatprep.subr.mxu0 0.0
    %1611 = vmatpush1.msra.mxu0 0.0
    %1612 = vmatprep.subr.mxu0 0.0
    %1613 = vmatpush1.msra.mxu0 0.0
    %1614 = vmatprep.subr.mxu0 0.0
    %1615 = vmatpush1.msra.mxu0 0.0
    %1616 = vmatprep.subr.mxu0 0.0
    %1617 = vmatpush1.msra.mxu0 0.0
    %1618 = vmatprep.subr.mxu0 0.0
    %1619 = vmatpush1.msra.mxu0 0.0
    %1620 = vmatprep.subr.mxu0 0.0
    %1621 = vmatpush1.msra.mxu0 0.0
    %1622 = vmatprep.subr.mxu0 0.0
    %1623 = vmatpush1.msra.mxu0 0.0
    %1624 = vmatprep.subr.mxu0 0.0
    %1625 = vmatpush1.msra.mxu0 0.0
    %1626 = vmatprep.subr.mxu0 0.0
    %1627 = vmatpush1.msra.mxu0 0.0
    %1628 = vmatprep.subr.mxu0 0.0
    %1629 = vmatpush1.msra.mxu0 0.0
    %1630 = vmatprep.subr.mxu0 0.0
    %1631 = vmatpush1.msra.mxu0 0.0
    %1632 = vmatprep.subr.mxu0 0.0
    %1633 = vmatpush1.msra.mxu0 0.0
    %1634 = vmatprep.subr.mxu0 0.0
    %1635 = vmatpush1.msra.mxu0 0.0
    %1636 = vmatprep.subr.mxu0 0.0
    %1637 = vmatpush1.msra.mxu0 0.0
    %1638 = vmatprep.subr.mxu0 0.0
    %1639 = vmatpush1.msra.mxu0 0.0
    %1640 = vmatprep.subr.mxu0 0.0
    %1641 = vmatpush1.msra.mxu0 0.0
    %1642 = vmatprep.subr.mxu0 0.0
    %1643 = vmatpush1.msra.mxu0 0.0
    %1644 = vmatprep.subr.mxu0 0.0
    %1645 = vmatpush1.msra.mxu0 0.0
    %1646 = vmatprep.subr.mxu0 0.0
    %1647 = vmatpush1.msra.mxu0 0.0
    %1648 = vmatprep.subr.mxu0 0.0
    %1649 = vmatpush1.msra.mxu0 0.0
    %1650 = vmatprep.subr.mxu0 0.0
    %1651 = vmatpush1.msra.mxu0 0.0
    %1652 = vmatprep.subr.mxu0 0.0
    %1653 = vmatpush1.msra.mxu0 0.0
    %1654 = vmatprep.subr.mxu0 0.0
    %1655 = vmatpush1.msra.mxu0 0.0
    %1656 = vmatprep.subr.mxu0 0.0
    %1657 = vmatpush1.msra.mxu0 0.0
    %1658 = vmatprep.subr.mxu0 0.0
    %1659 = vmatpush1.msra.mxu0 0.0
    %1660 = vmatprep.subr.mxu0 0.0
    %1661 = vmatpush1.msra.mxu0 0.0
    %1662 = vmatprep.subr.mxu0 0.0
    %1663 = vmatpush1.msra.mxu0 0.0
    %1664 = vmatprep.subr.mxu0 0.0
    %1665 = vmatpush1.msra.mxu0 0.0
    %1666 = vmatprep.subr.mxu0 0.0
    %1667 = vmatpush1.msra.mxu0 0.0
    %1668 = vmatprep.subr.mxu0 0.0
    %1669 = vmatpush1.msra.mxu0 0.0
    %1670 = vmatprep.mubr.f32.mxu0 0.0
    %1671 = vmatmul.mubr.f32.gmra.mrb[0].mxu0 %v1577
    %v1672 = vpop.f32.mrb[0].mxu0
    %v1673 = vadd.f32 0.0, %v1672
    %v1674 = vpop.f32.mrb[0].mxu0
    %1675 = vmatprep.mubr.f32.mxu0 0.0
    %1676 = vmatmul.mubr.f32.gmra.mrb[0].mxu0 %v1580
    %v1677 = vpop.f32.mrb[0].mxu0
    %v1678 = vadd.f32 0.0, %v1677
    %v1679 = vpop.f32.mrb[0].mxu0
    %1680 = vmatprep.mubr.f32.mxu0 0.0
    %1681 = vmatmul.mubr.f32.gmra.mrb[0].mxu0 %v1583
    %v1682 = vpop.f32.mrb[0].mxu0
    %v1683 = vadd.f32 0.0, %v1682
    %v1684 = vpop.f32.mrb[0].mxu0
    %1685 = vmatprep.mubr.f32.mxu0 0.0
    %1686 = vmatmul.mubr.f32.gmra.mrb[0].mxu0 %v1586
    %v1687 = vpop.f32.mrb[0].mxu0
    %v1688 = vadd.f32 0.0, %v1687
    %v1689 = vpop.f32.mrb[0].mxu0
    %1690 = vmatprep.mubr.f32.mxu0 0.0
    %1691 = vmatmul.mubr.f32.gmra.mrb[0].mxu0 %v1589
    %v1692 = vpop.f32.mrb[0].mxu0
    %v1693 = vadd.f32 0.0, %v1692
    %v1694 = vpop.f32.mrb[0].mxu0
    %1695 = vmatprep.mubr.f32.mxu0 0.0
    %1696 = vmatmul.mubr.f32.gmra.mrb[0].mxu0 %v1592
    %v1697 = vpop.f32.mrb[0].mxu0
    %v1698 = vadd.f32 0.0, %v1697
    %v1699 = vpop.f32.mrb[0].mxu0
    %1700 = vmatprep.mubr.f32.mxu0 0.0
    %1701 = vmatmul.mubr.f32.gmra.mrb[0].mxu0 %v1595
    %v1702 = vpop.f32.mrb[0].mxu0
    %v1703 = vadd.f32 0.0, %v1702
    %v1704 = vpop.f32.mrb[0].mxu0
    %1705 = vmatprep.mubr.f32.mxu0 0.0
    %1706 = vmatmul.mubr.f32.gmra.mrb[0].mxu0 %v1598
    %v1707 = vpop.f32.mrb[0].mxu0
    %v1708 = vadd.f32 0.0, %v1707
    %v1709 = vpop.f32.mrb[0].mxu0
    %1710 = vmatprep.mubr.f32.mxu0 0.0
    %1711 = vmatmul.mubr.f32.gmra.mrb[0].mxu0 %v1601
    %v1712 = vpop.f32.mrb[0].mxu0
    %v1713 = vadd.f32 0.0, %v1712
    %v1714 = vpop.f32.mrb[0].mxu0
    %1715 = vmatprep.mubr.f32.mxu0 0.0
    %1716 = vmatmul.mubr.f32.gmra.mrb[0].mxu0 %v1604
    %v1717 = vpop.f32.mrb[0].mxu0
    %v1718 = vadd.f32 0.0, %v1717
    %v1719 = vpop.f32.mrb[0].mxu0
    %1720 = vdwg.mxu0
    %v1721 = vadd.f32 %v1554, %v1673
    %v1722 = vadd.f32 %v1555, %v1678
    %v1723 = vadd.f32 %v1556, %v1683
    %v1724 = vadd.f32 %v1557, %v1688
    %v1725 = vadd.f32 %v1558, %v1693
    %v1726 = vadd.f32 %v1559, %v1698
    %v1727 = vadd.f32 %v1560, %v1703
    %v1728 = vadd.f32 %v1561, %v1708
    %v1729 = vadd.f32 %v1562, %v1713
    %v1730 = vadd.f32 %v1563, %v1718
    %v1731 = vld [vmem:[%s1 + $0xc] sm:$0xff]
    %v1732 = vld [vmem:[%s1 + $0x14] sm:$0xff]
    %v1733 = vld [vmem:[%s1 + $0x1c] sm:$0xff]
    %v1734 = vld [vmem:[%s1 + $0x24] sm:$0xff]
    %v1735 = vld [vmem:[%s1 + $0x2c] sm:$0xff]
    %v1736 = vld [vmem:[%s1 + $0x34] sm:$0xff]
    %v1737 = vld [vmem:[%s1 + $0x3c] sm:$0xff]
    %v1738 = vld [vmem:[%s1 + $0x44] sm:$0xff]
    %v1739 = vld [vmem:[%s1 + $0x4c] sm:$0xff]
    %v1740 = vld [vmem:[%s1 + $0x54] sm:$0x3]
    %v1741 = vld [vmem:[%s4 + $0x60] sm:$0xff]
    %v1742 = vld [vmem:[%s4 + $0x68] sm:$0xff]
    %v1744 = vsel %vm44, %v1731, 0
    %v1747 = vsel %vm44, %v1732, 0
    %v1750 = vsel %vm44, %v1733, 0
    %v1753 = vsel %vm44, %v1734, 0
    %v1756 = vsel %vm44, %v1735, 0
    %v1759 = vsel %vm44, %v1736, 0
    %v1762 = vsel %vm44, %v1737, 0
    %v1765 = vsel %vm44, %v1738, 0
    %v1768 = vsel %vm44, %v1739, 0
    %v1771 = vsel %vm44, %v1740, 0
    %1773 = vmatprep.subr.mxu0 0.0
    %1774 = vmatpush1.msra.mxu0 %v1741
    %1775 = vmatprep.subr.mxu0 0.0
    %1776 = vmatpush1.msra.mxu0 %v1742
    %1777 = vmatprep.subr.mxu0 0.0
    %1778 = vmatpush1.msra.mxu0 0.0
    %1779 = vmatprep.subr.mxu0 0.0
    %1780 = vmatpush1.msra.mxu0 0.0
    %1781 = vmatprep.subr.mxu0 0.0
    %1782 = vmatpush1.msra.mxu0 0.0
    %1783 = vmatprep.subr.mxu0 0.0
    %1784 = vmatpush1.msra.mxu0 0.0
    %1785 = vmatprep.subr.mxu0 0.0
    %1786 = vmatpush1.msra.mxu0 0.0
    %1787 = vmatprep.subr.mxu0 0.0
    %1788 = vmatpush1.msra.mxu0 0.0
    %1789 = vmatprep.subr.mxu0 0.0
    %1790 = vmatpush1.msra.mxu0 0.0
    %1791 = vmatprep.subr.mxu0 0.0
    %1792 = vmatpush1.msra.mxu0 0.0
    %1793 = vmatprep.subr.mxu0 0.0
    %1794 = vmatpush1.msra.mxu0 0.0
    %1795 = vmatprep.subr.mxu0 0.0
    %1796 = vmatpush1.msra.mxu0 0.0
    %1797 = vmatprep.subr.mxu0 0.0
    %1798 = vmatpush1.msra.mxu0 0.0
    %1799 = vmatprep.subr.mxu0 0.0
    %1800 = vmatpush1.msra.mxu0 0.0
    %1801 = vmatprep.subr.mxu0 0.0
    %1802 = vmatpush1.msra.mxu0 0.0
    %1803 = vmatprep.subr.mxu0 0.0
    %1804 = vmatpush1.msra.mxu0 0.0
    %1805 = vmatprep.subr.mxu0 0.0
    %1806 = vmatpush1.msra.mxu0 0.0
    %1807 = vmatprep.subr.mxu0 0.0
    %1808 = vmatpush1.msra.mxu0 0.0
    %1809 = vmatprep.subr.mxu0 0.0
    %1810 = vmatpush1.msra.mxu0 0.0
    %1811 = vmatprep.subr.mxu0 0.0
    %1812 = vmatpush1.msra.mxu0 0.0
    %1813 = vmatprep.subr.mxu0 0.0
    %1814 = vmatpush1.msra.mxu0 0.0
    %1815 = vmatprep.subr.mxu0 0.0
    %1816 = vmatpush1.msra.mxu0 0.0
    %1817 = vmatprep.subr.mxu0 0.0
    %1818 = vmatpush1.msra.mxu0 0.0
    %1819 = vmatprep.subr.mxu0 0.0
    %1820 = vmatpush1.msra.mxu0 0.0
    %1821 = vmatprep.subr.mxu0 0.0
    %1822 = vmatpush1.msra.mxu0 0.0
    %1823 = vmatprep.subr.mxu0 0.0
    %1824 = vmatpush1.msra.mxu0 0.0
    %1825 = vmatprep.subr.mxu0 0.0
    %1826 = vmatpush1.msra.mxu0 0.0
    %1827 = vmatprep.subr.mxu0 0.0
    %1828 = vmatpush1.msra.mxu0 0.0
    %1829 = vmatprep.subr.mxu0 0.0
    %1830 = vmatpush1.msra.mxu0 0.0
    %1831 = vmatprep.subr.mxu0 0.0
    %1832 = vmatpush1.msra.mxu0 0.0
    %1833 = vmatprep.subr.mxu0 0.0
    %1834 = vmatpush1.msra.mxu0 0.0
    %1835 = vmatprep.subr.mxu0 0.0
    %1836 = vmatpush1.msra.mxu0 0.0
    %1837 = vmatprep.mubr.f32.mxu0 0.0
    %1838 = vmatmul.mubr.f32.gmra.mrb[0].mxu0 %v1744
    %v1839 = vpop.f32.mrb[0].mxu0
    %v1840 = vadd.f32 0.0, %v1839
    %v1841 = vpop.f32.mrb[0].mxu0
    %1842 = vmatprep.mubr.f32.mxu0 0.0
    %1843 = vmatmul.mubr.f32.gmra.mrb[0].mxu0 %v1747
    %v1844 = vpop.f32.mrb[0].mxu0
    %v1845 = vadd.f32 0.0, %v1844
    %v1846 = vpop.f32.mrb[0].mxu0
    %1847 = vmatprep.mubr.f32.mxu0 0.0
    %1848 = vmatmul.mubr.f32.gmra.mrb[0].mxu0 %v1750
    %v1849 = vpop.f32.mrb[0].mxu0
    %v1850 = vadd.f32 0.0, %v1849
    %v1851 = vpop.f32.mrb[0].mxu0
    %1852 = vmatprep.mubr.f32.mxu0 0.0
    %1853 = vmatmul.mubr.f32.gmra.mrb[0].mxu0 %v1753
    %v1854 = vpop.f32.mrb[0].mxu0
    %v1855 = vadd.f32 0.0, %v1854
    %v1856 = vpop.f32.mrb[0].mxu0
    %1857 = vmatprep.mubr.f32.mxu0 0.0
    %1858 = vmatmul.mubr.f32.gmra.mrb[0].mxu0 %v1756
    %v1859 = vpop.f32.mrb[0].mxu0
    %v1860 = vadd.f32 0.0, %v1859
    %v1861 = vpop.f32.mrb[0].mxu0
    %1862 = vmatprep.mubr.f32.mxu0 0.0
    %1863 = vmatmul.mubr.f32.gmra.mrb[0].mxu0 %v1759
    %v1864 = vpop.f32.mrb[0].mxu0
    %v1865 = vadd.f32 0.0, %v1864
    %v1866 = vpop.f32.mrb[0].mxu0
    %1867 = vmatprep.mubr.f32.mxu0 0.0
    %1868 = vmatmul.mubr.f32.gmra.mrb[0].mxu0 %v1762
    %v1869 = vpop.f32.mrb[0].mxu0
    %v1870 = vadd.f32 0.0, %v1869
    %v1871 = vpop.f32.mrb[0].mxu0
    %1872 = vmatprep.mubr.f32.mxu0 0.0
    %1873 = vmatmul.mubr.f32.gmra.mrb[0].mxu0 %v1765
    %v1874 = vpop.f32.mrb[0].mxu0
    %v1875 = vadd.f32 0.0, %v1874
    %v1876 = vpop.f32.mrb[0].mxu0
    %1877 = vmatprep.mubr.f32.mxu0 0.0
    %1878 = vmatmul.mubr.f32.gmra.mrb[0].mxu0 %v1768
    %v1879 = vpop.f32.mrb[0].mxu0
    %v1880 = vadd.f32 0.0, %v1879
    %v1881 = vpop.f32.mrb[0].mxu0
    %1882 = vmatprep.mubr.f32.mxu0 0.0
    %1883 = vmatmul.mubr.f32.gmra.mrb[0].mxu0 %v1771
    %v1884 = vpop.f32.mrb[0].mxu0
    %v1885 = vadd.f32 0.0, %v1884
    %v1886 = vpop.f32.mrb[0].mxu0
    %1887 = vdwg.mxu0
    %v1888 = vadd.f32 %v1721, %v1840
    %v1889 = vadd.f32 %v1722, %v1845
    %v1890 = vadd.f32 %v1723, %v1850
    %v1891 = vadd.f32 %v1724, %v1855
    %v1892 = vadd.f32 %v1725, %v1860
    %v1893 = vadd.f32 %v1726, %v1865
    %v1894 = vadd.f32 %v1727, %v1870
    %v1895 = vadd.f32 %v1728, %v1875
    %v1896 = vadd.f32 %v1729, %v1880
    %v1897 = vadd.f32 %v1730, %v1885
    %v1898 = vld [vmem:[%s1 + $0xe] sm:$0xff]
    %v1899 = vld [vmem:[%s1 + $0x16] sm:$0xff]
    %v1900 = vld [vmem:[%s1 + $0x1e] sm:$0xff]
    %v1901 = vld [vmem:[%s1 + $0x26] sm:$0xff]
    %v1902 = vld [vmem:[%s1 + $0x2e] sm:$0xff]
    %v1903 = vld [vmem:[%s1 + $0x36] sm:$0xff]
    %v1904 = vld [vmem:[%s1 + $0x3e] sm:$0xff]
    %v1905 = vld [vmem:[%s1 + $0x46] sm:$0xff]
    %v1906 = vld [vmem:[%s1 + $0x4e] sm:$0xff]
    %v1907 = vld [vmem:[%s1 + $0x56] sm:$0x3]
    %v1908 = vld [vmem:[%s4 + $0x70] sm:$0xff]
    %v1909 = vld [vmem:[%s4 + $0x78] sm:$0xff]
    %v1911 = vsel %vm44, %v1898, 0
    %v1914 = vsel %vm44, %v1899, 0
    %v1917 = vsel %vm44, %v1900, 0
    %v1920 = vsel %vm44, %v1901, 0
    %v1923 = vsel %vm44, %v1902, 0
    %v1926 = vsel %vm44, %v1903, 0
    %v1929 = vsel %vm44, %v1904, 0
    %v1932 = vsel %vm44, %v1905, 0
    %v1935 = vsel %vm44, %v1906, 0
    %v1938 = vsel %vm44, %v1907, 0
    %1940 = vmatprep.subr.mxu0 0.0
    %1941 = vmatpush1.msra.mxu0 %v1908
    %1942 = vmatprep.subr.mxu0 0.0
    %1943 = vmatpush1.msra.mxu0 %v1909
    %1944 = vmatprep.subr.mxu0 0.0
    %1945 = vmatpush1.msra.mxu0 0.0
    %1946 = vmatprep.subr.mxu0 0.0
    %1947 = vmatpush1.msra.mxu0 0.0
    %1948 = vmatprep.subr.mxu0 0.0
    %1949 = vmatpush1.msra.mxu0 0.0
    %1950 = vmatprep.subr.mxu0 0.0
    %1951 = vmatpush1.msra.mxu0 0.0
    %1952 = vmatprep.subr.mxu0 0.0
    %1953 = vmatpush1.msra.mxu0 0.0
    %1954 = vmatprep.subr.mxu0 0.0
    %1955 = vmatpush1.msra.mxu0 0.0
    %1956 = vmatprep.subr.mxu0 0.0
    %1957 = vmatpush1.msra.mxu0 0.0
    %1958 = vmatprep.subr.mxu0 0.0
    %1959 = vmatpush1.msra.mxu0 0.0
    %1960 = vmatprep.subr.mxu0 0.0
    %1961 = vmatpush1.msra.mxu0 0.0
    %1962 = vmatprep.subr.mxu0 0.0
    %1963 = vmatpush1.msra.mxu0 0.0
    %1964 = vmatprep.subr.mxu0 0.0
    %1965 = vmatpush1.msra.mxu0 0.0
    %1966 = vmatprep.subr.mxu0 0.0
    %1967 = vmatpush1.msra.mxu0 0.0
    %1968 = vmatprep.subr.mxu0 0.0
    %1969 = vmatpush1.msra.mxu0 0.0
    %1970 = vmatprep.subr.mxu0 0.0
    %1971 = vmatpush1.msra.mxu0 0.0
    %1972 = vmatprep.subr.mxu0 0.0
    %1973 = vmatpush1.msra.mxu0 0.0
    %1974 = vmatprep.subr.mxu0 0.0
    %1975 = vmatpush1.msra.mxu0 0.0
    %1976 = vmatprep.subr.mxu0 0.0
    %1977 = vmatpush1.msra.mxu0 0.0
    %1978 = vmatprep.subr.mxu0 0.0
    %1979 = vmatpush1.msra.mxu0 0.0
    %1980 = vmatprep.subr.mxu0 0.0
    %1981 = vmatpush1.msra.mxu0 0.0
    %1982 = vmatprep.subr.mxu0 0.0
    %1983 = vmatpush1.msra.mxu0 0.0
    %1984 = vmatprep.subr.mxu0 0.0
    %1985 = vmatpush1.msra.mxu0 0.0
    %1986 = vmatprep.subr.mxu0 0.0
    %1987 = vmatpush1.msra.mxu0 0.0
    %1988 = vmatprep.subr.mxu0 0.0
    %1989 = vmatpush1.msra.mxu0 0.0
    %1990 = vmatprep.subr.mxu0 0.0
    %1991 = vmatpush1.msra.mxu0 0.0
    %1992 = vmatprep.subr.mxu0 0.0
    %1993 = vmatpush1.msra.mxu0 0.0
    %1994 = vmatprep.subr.mxu0 0.0
    %1995 = vmatpush1.msra.mxu0 0.0
    %1996 = vmatprep.subr.mxu0 0.0
    %1997 = vmatpush1.msra.mxu0 0.0
    %1998 = vmatprep.subr.mxu0 0.0
    %1999 = vmatpush1.msra.mxu0 0.0
    %2000 = vmatprep.subr.mxu0 0.0
    %2001 = vmatpush1.msra.mxu0 0.0
    %2002 = vmatprep.subr.mxu0 0.0
    %2003 = vmatpush1.msra.mxu0 0.0
    %2004 = vmatprep.mubr.f32.mxu0 0.0
    %2005 = vmatmul.mubr.f32.gmra.mrb[0].mxu0 %v1911
    %v2006 = vpop.f32.mrb[0].mxu0
    %v2007 = vadd.f32 0.0, %v2006
    %v2008 = vpop.f32.mrb[0].mxu0
    %2009 = vmatprep.mubr.f32.mxu0 0.0
    %2010 = vmatmul.mubr.f32.gmra.mrb[0].mxu0 %v1914
    %v2011 = vpop.f32.mrb[0].mxu0
    %v2012 = vadd.f32 0.0, %v2011
    %v2013 = vpop.f32.mrb[0].mxu0
    %2014 = vmatprep.mubr.f32.mxu0 0.0
    %2015 = vmatmul.mubr.f32.gmra.mrb[0].mxu0 %v1917
    %v2016 = vpop.f32.mrb[0].mxu0
    %v2017 = vadd.f32 0.0, %v2016
    %v2018 = vpop.f32.mrb[0].mxu0
    %2019 = vmatprep.mubr.f32.mxu0 0.0
    %2020 = vmatmul.mubr.f32.gmra.mrb[0].mxu0 %v1920
    %v2021 = vpop.f32.mrb[0].mxu0
    %v2022 = vadd.f32 0.0, %v2021
    %v2023 = vpop.f32.mrb[0].mxu0
    %2024 = vmatprep.mubr.f32.mxu0 0.0
    %2025 = vmatmul.mubr.f32.gmra.mrb[0].mxu0 %v1923
    %v2026 = vpop.f32.mrb[0].mxu0
    %v2027 = vadd.f32 0.0, %v2026
    %v2028 = vpop.f32.mrb[0].mxu0
    %2029 = vmatprep.mubr.f32.mxu0 0.0
    %2030 = vmatmul.mubr.f32.gmra.mrb[0].mxu0 %v1926
    %v2031 = vpop.f32.mrb[0].mxu0
    %v2032 = vadd.f32 0.0, %v2031
    %v2033 = vpop.f32.mrb[0].mxu0
    %2034 = vmatprep.mubr.f32.mxu0 0.0
    %2035 = vmatmul.mubr.f32.gmra.mrb[0].mxu0 %v1929
    %v2036 = vpop.f32.mrb[0].mxu0
    %v2037 = vadd.f32 0.0, %v2036
    %v2038 = vpop.f32.mrb[0].mxu0
    %2039 = vmatprep.mubr.f32.mxu0 0.0
    %2040 = vmatmul.mubr.f32.gmra.mrb[0].mxu0 %v1932
    %v2041 = vpop.f32.mrb[0].mxu0
    %v2042 = vadd.f32 0.0, %v2041
    %v2043 = vpop.f32.mrb[0].mxu0
    %2044 = vmatprep.mubr.f32.mxu0 0.0
    %2045 = vmatmul.mubr.f32.gmra.mrb[0].mxu0 %v1935
    %v2046 = vpop.f32.mrb[0].mxu0
    %v2047 = vadd.f32 0.0, %v2046
    %v2048 = vpop.f32.mrb[0].mxu0
    %2049 = vmatprep.mubr.f32.mxu0 0.0
    %2050 = vmatmul.mubr.f32.gmra.mrb[0].mxu0 %v1938
    %v2051 = vpop.f32.mrb[0].mxu0
    %v2052 = vadd.f32 0.0, %v2051
    %v2053 = vpop.f32.mrb[0].mxu0
    %2054 = vdwg.mxu0
    %v2055 = vadd.f32 %v1888, %v2007
    %v2056 = vadd.f32 %v1889, %v2012
    %v2057 = vadd.f32 %v1890, %v2017
    %v2058 = vadd.f32 %v1891, %v2022
    %v2059 = vadd.f32 %v1892, %v2027
    %v2060 = vadd.f32 %v1893, %v2032
    %v2061 = vadd.f32 %v1894, %v2037
    %v2062 = vadd.f32 %v1895, %v2042
    %v2063 = vadd.f32 %v1896, %v2047
    %v2064 = vadd.f32 %v1897, %v2052
    %v2065 = vld [vmem:[%s1 + $0x10] sm:$0xff]
    %v2066 = vld [vmem:[%s1 + $0x18] sm:$0xff]
    %v2067 = vld [vmem:[%s1 + $0x20] sm:$0xff]
    %v2068 = vld [vmem:[%s1 + $0x28] sm:$0xff]
    %v2069 = vld [vmem:[%s1 + $0x30] sm:$0xff]
    %v2070 = vld [vmem:[%s1 + $0x38] sm:$0xff]
    %v2071 = vld [vmem:[%s1 + $0x40] sm:$0xff]
    %v2072 = vld [vmem:[%s1 + $0x48] sm:$0xff]
    %v2073 = vld [vmem:[%s1 + $0x50] sm:$0xff]
    %v2074 = vld [vmem:[%s1 + $0x58] sm:$0x3]
    %v2075 = vld [vmem:[%s4 + $0x80] sm:$0xff]
    %v2076 = vld [vmem:[%s4 + $0x88] sm:$0xff]
    %v2078 = vsel %vm44, %v2065, 0
    %v2081 = vsel %vm44, %v2066, 0
    %v2084 = vsel %vm44, %v2067, 0
    %v2087 = vsel %vm44, %v2068, 0
    %v2090 = vsel %vm44, %v2069, 0
    %v2093 = vsel %vm44, %v2070, 0
    %v2096 = vsel %vm44, %v2071, 0
    %v2099 = vsel %vm44, %v2072, 0
    %v2102 = vsel %vm44, %v2073, 0
    %v2105 = vsel %vm44, %v2074, 0
    %2107 = vmatprep.subr.mxu0 0.0
    %2108 = vmatpush1.msra.mxu0 %v2075
    %2109 = vmatprep.subr.mxu0 0.0
    %2110 = vmatpush1.msra.mxu0 %v2076
    %2111 = vmatprep.subr.mxu0 0.0
    %2112 = vmatpush1.msra.mxu0 0.0
    %2113 = vmatprep.subr.mxu0 0.0
    %2114 = vmatpush1.msra.mxu0 0.0
    %2115 = vmatprep.subr.mxu0 0.0
    %2116 = vmatpush1.msra.mxu0 0.0
    %2117 = vmatprep.subr.mxu0 0.0
    %2118 = vmatpush1.msra.mxu0 0.0
    %2119 = vmatprep.subr.mxu0 0.0
    %2120 = vmatpush1.msra.mxu0 0.0
    %2121 = vmatprep.subr.mxu0 0.0
    %2122 = vmatpush1.msra.mxu0 0.0
    %2123 = vmatprep.subr.mxu0 0.0
    %2124 = vmatpush1.msra.mxu0 0.0
    %2125 = vmatprep.subr.mxu0 0.0
    %2126 = vmatpush1.msra.mxu0 0.0
    %2127 = vmatprep.subr.mxu0 0.0
    %2128 = vmatpush1.msra.mxu0 0.0
    %2129 = vmatprep.subr.mxu0 0.0
    %2130 = vmatpush1.msra.mxu0 0.0
    %2131 = vmatprep.subr.mxu0 0.0
    %2132 = vmatpush1.msra.mxu0 0.0
    %2133 = vmatprep.subr.mxu0 0.0
    %2134 = vmatpush1.msra.mxu0 0.0
    %2135 = vmatprep.subr.mxu0 0.0
    %2136 = vmatpush1.msra.mxu0 0.0
    %2137 = vmatprep.subr.mxu0 0.0
    %2138 = vmatpush1.msra.mxu0 0.0
    %2139 = vmatprep.subr.mxu0 0.0
    %2140 = vmatpush1.msra.mxu0 0.0
    %2141 = vmatprep.subr.mxu0 0.0
    %2142 = vmatpush1.msra.mxu0 0.0
    %2143 = vmatprep.subr.mxu0 0.0
    %2144 = vmatpush1.msra.mxu0 0.0
    %2145 = vmatprep.subr.mxu0 0.0
    %2146 = vmatpush1.msra.mxu0 0.0
    %2147 = vmatprep.subr.mxu0 0.0
    %2148 = vmatpush1.msra.mxu0 0.0
    %2149 = vmatprep.subr.mxu0 0.0
    %2150 = vmatpush1.msra.mxu0 0.0
    %2151 = vmatprep.subr.mxu0 0.0
    %2152 = vmatpush1.msra.mxu0 0.0
    %2153 = vmatprep.subr.mxu0 0.0
    %2154 = vmatpush1.msra.mxu0 0.0
    %2155 = vmatprep.subr.mxu0 0.0
    %2156 = vmatpush1.msra.mxu0 0.0
    %2157 = vmatprep.subr.mxu0 0.0
    %2158 = vmatpush1.msra.mxu0 0.0
    %2159 = vmatprep.subr.mxu0 0.0
    %2160 = vmatpush1.msra.mxu0 0.0
    %2161 = vmatprep.subr.mxu0 0.0
    %2162 = vmatpush1.msra.mxu0 0.0
    %2163 = vmatprep.subr.mxu0 0.0
    %2164 = vmatpush1.msra.mxu0 0.0
    %2165 = vmatprep.subr.mxu0 0.0
    %2166 = vmatpush1.msra.mxu0 0.0
    %2167 = vmatprep.subr.mxu0 0.0
    %2168 = vmatpush1.msra.mxu0 0.0
    %2169 = vmatprep.subr.mxu0 0.0
    %2170 = vmatpush1.msra.mxu0 0.0
    %2171 = vmatprep.mubr.f32.mxu0 0.0
    %2172 = vmatmul.mubr.f32.gmra.mrb[0].mxu0 %v2078
    %v2173 = vpop.f32.mrb[0].mxu0
    %v2174 = vadd.f32 0.0, %v2173
    %v2175 = vpop.f32.mrb[0].mxu0
    %2176 = vmatprep.mubr.f32.mxu0 0.0
    %2177 = vmatmul.mubr.f32.gmra.mrb[0].mxu0 %v2081
    %v2178 = vpop.f32.mrb[0].mxu0
    %v2179 = vadd.f32 0.0, %v2178
    %v2180 = vpop.f32.mrb[0].mxu0
    %2181 = vmatprep.mubr.f32.mxu0 0.0
    %2182 = vmatmul.mubr.f32.gmra.mrb[0].mxu0 %v2084
    %v2183 = vpop.f32.mrb[0].mxu0
    %v2184 = vadd.f32 0.0, %v2183
    %v2185 = vpop.f32.mrb[0].mxu0
    %2186 = vmatprep.mubr.f32.mxu0 0.0
    %2187 = vmatmul.mubr.f32.gmra.mrb[0].mxu0 %v2087
    %v2188 = vpop.f32.mrb[0].mxu0
    %v2189 = vadd.f32 0.0, %v2188
    %v2190 = vpop.f32.mrb[0].mxu0
    %2191 = vmatprep.mubr.f32.mxu0 0.0
    %2192 = vmatmul.mubr.f32.gmra.mrb[0].mxu0 %v2090
    %v2193 = vpop.f32.mrb[0].mxu0
    %v2194 = vadd.f32 0.0, %v2193
    %v2195 = vpop.f32.mrb[0].mxu0
    %2196 = vmatprep.mubr.f32.mxu0 0.0
    %2197 = vmatmul.mubr.f32.gmra.mrb[0].mxu0 %v2093
    %v2198 = vpop.f32.mrb[0].mxu0
    %v2199 = vadd.f32 0.0, %v2198
    %v2200 = vpop.f32.mrb[0].mxu0
    %2201 = vmatprep.mubr.f32.mxu0 0.0
    %2202 = vmatmul.mubr.f32.gmra.mrb[0].mxu0 %v2096
    %v2203 = vpop.f32.mrb[0].mxu0
    %v2204 = vadd.f32 0.0, %v2203
    %v2205 = vpop.f32.mrb[0].mxu0
    %2206 = vmatprep.mubr.f32.mxu0 0.0
    %2207 = vmatmul.mubr.f32.gmra.mrb[0].mxu0 %v2099
    %v2208 = vpop.f32.mrb[0].mxu0
    %v2209 = vadd.f32 0.0, %v2208
    %v2210 = vpop.f32.mrb[0].mxu0
    %2211 = vmatprep.mubr.f32.mxu0 0.0
    %2212 = vmatmul.mubr.f32.gmra.mrb[0].mxu0 %v2102
    %v2213 = vpop.f32.mrb[0].mxu0
    %v2214 = vadd.f32 0.0, %v2213
    %v2215 = vpop.f32.mrb[0].mxu0
    %2216 = vmatprep.mubr.f32.mxu0 0.0
    %2217 = vmatmul.mubr.f32.gmra.mrb[0].mxu0 %v2105
    %v2218 = vpop.f32.mrb[0].mxu0
    %v2219 = vadd.f32 0.0, %v2218
    %v2220 = vpop.f32.mrb[0].mxu0
    %2221 = vdwg.mxu0
    %v2222 = vadd.f32 %v2055, %v2174
    %v2223 = vadd.f32 %v2056, %v2179
    %v2224 = vadd.f32 %v2057, %v2184
    %v2225 = vadd.f32 %v2058, %v2189
    %v2226 = vadd.f32 %v2059, %v2194
    %v2227 = vadd.f32 %v2060, %v2199
    %v2228 = vadd.f32 %v2061, %v2204
    %v2229 = vadd.f32 %v2062, %v2209
    %v2230 = vadd.f32 %v2063, %v2214
    %v2231 = vadd.f32 %v2064, %v2219
    %v2232 = vld [vmem:[%s1 + $0x12] sm:$0xff]
    %v2233 = vld [vmem:[%s1 + $0x1a] sm:$0xff]
    %v2234 = vld [vmem:[%s1 + $0x22] sm:$0xff]
    %v2235 = vld [vmem:[%s1 + $0x2a] sm:$0xff]
    %v2236 = vld [vmem:[%s1 + $0x32] sm:$0xff]
    %v2237 = vld [vmem:[%s1 + $0x3a] sm:$0xff]
    %v2238 = vld [vmem:[%s1 + $0x42] sm:$0xff]
    %v2239 = vld [vmem:[%s1 + $0x4a] sm:$0xff]
    %v2240 = vld [vmem:[%s1 + $0x52] sm:$0xff]
    %v2241 = vld [vmem:[%s1 + $0x5a] sm:$0x3]
    %v2242 = vld [vmem:[%s4 + $0x90] sm:$0xff]
    %v2243 = vld [vmem:[%s4 + $0x98] sm:$0xff]
    %v2245 = vsel %vm44, %v2232, 0
    %v2248 = vsel %vm44, %v2233, 0
    %v2251 = vsel %vm44, %v2234, 0
    %v2254 = vsel %vm44, %v2235, 0
    %v2257 = vsel %vm44, %v2236, 0
    %v2260 = vsel %vm44, %v2237, 0
    %v2263 = vsel %vm44, %v2238, 0
    %v2266 = vsel %vm44, %v2239, 0
    %v2269 = vsel %vm44, %v2240, 0
    %v2272 = vsel %vm44, %v2241, 0
    %2274 = vmatprep.subr.mxu0 0.0
    %2275 = vmatpush1.msra.mxu0 %v2242
    %2276 = vmatprep.subr.mxu0 0.0
    %2277 = vmatpush1.msra.mxu0 %v2243
    %2278 = vmatprep.subr.mxu0 0.0
    %2279 = vmatpush1.msra.mxu0 0.0
    %2280 = vmatprep.subr.mxu0 0.0
    %2281 = vmatpush1.msra.mxu0 0.0
    %2282 = vmatprep.subr.mxu0 0.0
    %2283 = vmatpush1.msra.mxu0 0.0
    %2284 = vmatprep.subr.mxu0 0.0
    %2285 = vmatpush1.msra.mxu0 0.0
    %2286 = vmatprep.subr.mxu0 0.0
    %2287 = vmatpush1.msra.mxu0 0.0
    %2288 = vmatprep.subr.mxu0 0.0
    %2289 = vmatpush1.msra.mxu0 0.0
    %2290 = vmatprep.subr.mxu0 0.0
    %2291 = vmatpush1.msra.mxu0 0.0
    %2292 = vmatprep.subr.mxu0 0.0
    %2293 = vmatpush1.msra.mxu0 0.0
    %2294 = vmatprep.subr.mxu0 0.0
    %2295 = vmatpush1.msra.mxu0 0.0
    %2296 = vmatprep.subr.mxu0 0.0
    %2297 = vmatpush1.msra.mxu0 0.0
    %2298 = vmatprep.subr.mxu0 0.0
    %2299 = vmatpush1.msra.mxu0 0.0
    %2300 = vmatprep.subr.mxu0 0.0
    %2301 = vmatpush1.msra.mxu0 0.0
    %2302 = vmatprep.subr.mxu0 0.0
    %2303 = vmatpush1.msra.mxu0 0.0
    %2304 = vmatprep.subr.mxu0 0.0
    %2305 = vmatpush1.msra.mxu0 0.0
    %2306 = vmatprep.subr.mxu0 0.0
    %2307 = vmatpush1.msra.mxu0 0.0
    %2308 = vmatprep.subr.mxu0 0.0
    %2309 = vmatpush1.msra.mxu0 0.0
    %2310 = vmatprep.subr.mxu0 0.0
    %2311 = vmatpush1.msra.mxu0 0.0
    %2312 = vmatprep.subr.mxu0 0.0
    %2313 = vmatpush1.msra.mxu0 0.0
    %2314 = vmatprep.subr.mxu0 0.0
    %2315 = vmatpush1.msra.mxu0 0.0
    %2316 = vmatprep.subr.mxu0 0.0
    %2317 = vmatpush1.msra.mxu0 0.0
    %2318 = vmatprep.subr.mxu0 0.0
    %2319 = vmatpush1.msra.mxu0 0.0
    %2320 = vmatprep.subr.mxu0 0.0
    %2321 = vmatpush1.msra.mxu0 0.0
    %2322 = vmatprep.subr.mxu0 0.0
    %2323 = vmatpush1.msra.mxu0 0.0
    %2324 = vmatprep.subr.mxu0 0.0
    %2325 = vmatpush1.msra.mxu0 0.0
    %2326 = vmatprep.subr.mxu0 0.0
    %2327 = vmatpush1.msra.mxu0 0.0
    %2328 = vmatprep.subr.mxu0 0.0
    %2329 = vmatpush1.msra.mxu0 0.0
    %2330 = vmatprep.subr.mxu0 0.0
    %2331 = vmatpush1.msra.mxu0 0.0
    %2332 = vmatprep.subr.mxu0 0.0
    %2333 = vmatpush1.msra.mxu0 0.0
    %2334 = vmatprep.subr.mxu0 0.0
    %2335 = vmatpush1.msra.mxu0 0.0
    %2336 = vmatprep.subr.mxu0 0.0
    %2337 = vmatpush1.msra.mxu0 0.0
    %2338 = vmatprep.mubr.f32.mxu0 0.0
    %2339 = vmatmul.mubr.f32.gmra.mrb[0].mxu0 %v2245
    %v2340 = vpop.f32.mrb[0].mxu0
    %v2341 = vadd.f32 0.0, %v2340
    %v2342 = vpop.f32.mrb[0].mxu0
    %2343 = vmatprep.mubr.f32.mxu0 0.0
    %2344 = vmatmul.mubr.f32.gmra.mrb[0].mxu0 %v2248
    %v2345 = vpop.f32.mrb[0].mxu0
    %v2346 = vadd.f32 0.0, %v2345
    %v2347 = vpop.f32.mrb[0].mxu0
    %2348 = vmatprep.mubr.f32.mxu0 0.0
    %2349 = vmatmul.mubr.f32.gmra.mrb[0].mxu0 %v2251
    %v2350 = vpop.f32.mrb[0].mxu0
    %v2351 = vadd.f32 0.0, %v2350
    %v2352 = vpop.f32.mrb[0].mxu0
    %2353 = vmatprep.mubr.f32.mxu0 0.0
    %2354 = vmatmul.mubr.f32.gmra.mrb[0].mxu0 %v2254
    %v2355 = vpop.f32.mrb[0].mxu0
    %v2356 = vadd.f32 0.0, %v2355
    %v2357 = vpop.f32.mrb[0].mxu0
    %2358 = vmatprep.mubr.f32.mxu0 0.0
    %2359 = vmatmul.mubr.f32.gmra.mrb[0].mxu0 %v2257
    %v2360 = vpop.f32.mrb[0].mxu0
    %v2361 = vadd.f32 0.0, %v2360
    %v2362 = vpop.f32.mrb[0].mxu0
    %2363 = vmatprep.mubr.f32.mxu0 0.0
    %2364 = vmatmul.mubr.f32.gmra.mrb[0].mxu0 %v2260
    %v2365 = vpop.f32.mrb[0].mxu0
    %v2366 = vadd.f32 0.0, %v2365
    %v2367 = vpop.f32.mrb[0].mxu0
    %2368 = vmatprep.mubr.f32.mxu0 0.0
    %2369 = vmatmul.mubr.f32.gmra.mrb[0].mxu0 %v2263
    %v2370 = vpop.f32.mrb[0].mxu0
    %v2371 = vadd.f32 0.0, %v2370
    %v2372 = vpop.f32.mrb[0].mxu0
    %2373 = vmatprep.mubr.f32.mxu0 0.0
    %2374 = vmatmul.mubr.f32.gmra.mrb[0].mxu0 %v2266
    %v2375 = vpop.f32.mrb[0].mxu0
    %v2376 = vadd.f32 0.0, %v2375
    %v2377 = vpop.f32.mrb[0].mxu0
    %2378 = vmatprep.mubr.f32.mxu0 0.0
    %2379 = vmatmul.mubr.f32.gmra.mrb[0].mxu0 %v2269
    %v2380 = vpop.f32.mrb[0].mxu0
    %v2381 = vadd.f32 0.0, %v2380
    %v2382 = vpop.f32.mrb[0].mxu0
    %2383 = vmatprep.mubr.f32.mxu0 0.0
    %2384 = vmatmul.mubr.f32.gmra.mrb[0].mxu0 %v2272
    %v2385 = vpop.f32.mrb[0].mxu0
    %v2386 = vadd.f32 0.0, %v2385
    %v2387 = vpop.f32.mrb[0].mxu0
    %2388 = vdwg.mxu0
    %v2389 = vadd.f32 %v2222, %v2341
    %v2390 = vadd.f32 %v2223, %v2346
    %v2391 = vadd.f32 %v2224, %v2351
    %v2392 = vadd.f32 %v2225, %v2356
    %v2393 = vadd.f32 %v2226, %v2361
    %v2394 = vadd.f32 %v2227, %v2366
    %v2395 = vadd.f32 %v2228, %v2371
    %v2396 = vadd.f32 %v2229, %v2376
    %v2397 = vadd.f32 %v2230, %v2381
    %v2398 = vadd.f32 %v2231, %v2386
    %v2399 = vld [vmem:[%s5] sm:$0x1]
    %v2400 = vlaneseq
    %v2401 = vshrl.u32 %v2400, 7
    %v2402 = vsub.s32 0, %v2401
    %v2403 = vrot.slane %v2399, %v2402
    %v2404 = vadd.f32 %v2389, %v2403
    %v2405 = vadd.f32 %v2390, %v2403
    %v2406 = vadd.f32 %v2391, %v2403
    %v2407 = vadd.f32 %v2392, %v2403
    %v2408 = vadd.f32 %v2393, %v2403
    %v2409 = vadd.f32 %v2394, %v2403
    %v2410 = vadd.f32 %v2395, %v2403
    %v2411 = vadd.f32 %v2396, %v2403
    %v2412 = vadd.f32 %v2397, %v2403
    %v2413 = vadd.f32 %v2398, %v2403
    %vm2414 = vcmp.ge.f32.partialorder %v2404, 0.0
    %vm2415 = vcmp.ge.f32.partialorder %v2405, 0.0
    %vm2416 = vcmp.ge.f32.partialorder %v2406, 0.0
    %vm2417 = vcmp.ge.f32.partialorder %v2407, 0.0
    %vm2418 = vcmp.ge.f32.partialorder %v2408, 0.0
    %vm2419 = vcmp.ge.f32.partialorder %v2409, 0.0
    %vm2420 = vcmp.ge.f32.partialorder %v2410, 0.0
    %vm2421 = vcmp.ge.f32.partialorder %v2411, 0.0
    %vm2422 = vcmp.ge.f32.partialorder %v2412, 0.0
    %vm2423 = vcmp.ge.f32.partialorder %v2413, 0.0
    %v2424 = vmul.f32 %v2404, 0.01
    %v2425 = vmul.f32 %v2405, 0.01
    %v2426 = vmul.f32 %v2406, 0.01
    %v2427 = vmul.f32 %v2407, 0.01
    %v2428 = vmul.f32 %v2408, 0.01
    %v2429 = vmul.f32 %v2409, 0.01
    %v2430 = vmul.f32 %v2410, 0.01
    %v2431 = vmul.f32 %v2411, 0.01
    %v2432 = vmul.f32 %v2412, 0.01
    %v2433 = vmul.f32 %v2413, 0.01
    %v2434 = vsel %vm2414, %v2404, %v2424
    %v2435 = vsel %vm2415, %v2405, %v2425
    %v2436 = vsel %vm2416, %v2406, %v2426
    %v2437 = vsel %vm2417, %v2407, %v2427
    %v2438 = vsel %vm2418, %v2408, %v2428
    %v2439 = vsel %vm2419, %v2409, %v2429
    %v2440 = vsel %vm2420, %v2410, %v2430
    %v2441 = vsel %vm2421, %v2411, %v2431
    %v2442 = vsel %vm2422, %v2412, %v2432
    %v2443 = vsel %vm2423, %v2413, %v2433
    %2444 = vst.msk [vmem:[#allocation4] sm:$0xff] %vm44, %v2434
    %2445 = vst.msk [vmem:[#allocation4 + $0x8] sm:$0xff] %vm44, %v2435
    %2446 = vst.msk [vmem:[#allocation4 + $0x10] sm:$0xff] %vm44, %v2436
    %2447 = vst.msk [vmem:[#allocation4 + $0x18] sm:$0xff] %vm44, %v2437
    %2448 = vst.msk [vmem:[#allocation4 + $0x20] sm:$0xff] %vm44, %v2438
    %2449 = vst.msk [vmem:[#allocation4 + $0x28] sm:$0xff] %vm44, %v2439
    %2450 = vst.msk [vmem:[#allocation4 + $0x30] sm:$0xff] %vm44, %v2440
    %2451 = vst.msk [vmem:[#allocation4 + $0x38] sm:$0xff] %vm44, %v2441
    %2452 = vst.msk [vmem:[#allocation4 + $0x40] sm:$0xff] %vm44, %v2442
    %2453 = vst.msk [vmem:[#allocation4 + $0x48] sm:$0x3] %vm284, %v2443
    %v2454 = vld [vmem:[#allocation4] sm:$0xff]
    %v2455 = vld [vmem:[#allocation4 + $0x8] sm:$0xff]
    %v2456 = vld [vmem:[#allocation4 + $0x10] sm:$0xff]
    %v2457 = vld [vmem:[#allocation4 + $0x18] sm:$0xff]
    %v2458 = vld [vmem:[#allocation4 + $0x20] sm:$0xff]
    %v2459 = vld [vmem:[#allocation4 + $0x28] sm:$0xff]
    %v2460 = vld [vmem:[#allocation4 + $0x30] sm:$0xff]
    %v2461 = vld [vmem:[%s4 + $0xa0] sm:$0xff]
    %v2462 = vld [vmem:[%s4 + $0xa8] sm:$0xff]
    %v2463 = vld [vmem:[#allocation4 + $0x2] sm:$0xff]
    %v2464 = vld [vmem:[#allocation4 + $0xa] sm:$0xff]
    %v2465 = vld [vmem:[#allocation4 + $0x12] sm:$0xff]
    %v2466 = vld [vmem:[#allocation4 + $0x1a] sm:$0xff]
    %v2467 = vld [vmem:[#allocation4 + $0x22] sm:$0xff]
    %v2468 = vld [vmem:[#allocation4 + $0x2a] sm:$0xff]
    %v2469 = vld [vmem:[#allocation4 + $0x32] sm:$0xff]
    %v2470 = vld [vmem:[%s4 + $0xb0] sm:$0xff]
    %v2471 = vld [vmem:[%s4 + $0xb8] sm:$0xff]
    %v2473 = vsel %vm44, %v2463, 0
    %v2476 = vsel %vm44, %v2464, 0
    %v2479 = vsel %vm44, %v2465, 0
    %v2482 = vsel %vm44, %v2466, 0
    %v2485 = vsel %vm44, %v2467, 0
    %v2488 = vsel %vm44, %v2468, 0
    %v2491 = vsel %vm44, %v2469, 0
    %2493 = vmatprep.subr.mxu0 0.0
    %2494 = vmatpush1.msra.mxu0 %v2470
    %2495 = vmatprep.subr.mxu0 0.0
    %2496 = vmatpush1.msra.mxu0 %v2471
    %2497 = vmatprep.subr.mxu0 0.0
    %2498 = vmatpush1.msra.mxu0 0.0
    %2499 = vmatprep.subr.mxu0 0.0
    %2500 = vmatpush1.msra.mxu0 0.0
    %2501 = vmatprep.subr.mxu0 0.0
    %2502 = vmatpush1.msra.mxu0 0.0
    %2503 = vmatprep.subr.mxu0 0.0
    %2504 = vmatpush1.msra.mxu0 0.0
    %2505 = vmatprep.subr.mxu0 0.0
    %2506 = vmatpush1.msra.mxu0 0.0
    %2507 = vmatprep.subr.mxu0 0.0
    %2508 = vmatpush1.msra.mxu0 0.0
    %2509 = vmatprep.subr.mxu0 0.0
    %2510 = vmatpush1.msra.mxu0 0.0
    %2511 = vmatprep.subr.mxu0 0.0
    %2512 = vmatpush1.msra.mxu0 0.0
    %2513 = vmatprep.subr.mxu0 0.0
    %2514 = vmatpush1.msra.mxu0 0.0
    %2515 = vmatprep.subr.mxu0 0.0
    %2516 = vmatpush1.msra.mxu0 0.0
    %2517 = vmatprep.subr.mxu0 0.0
    %2518 = vmatpush1.msra.mxu0 0.0
    %2519 = vmatprep.subr.mxu0 0.0
    %2520 = vmatpush1.msra.mxu0 0.0
    %2521 = vmatprep.subr.mxu0 0.0
    %2522 = vmatpush1.msra.mxu0 0.0
    %2523 = vmatprep.subr.mxu0 0.0
    %2524 = vmatpush1.msra.mxu0 0.0
    %2525 = vmatprep.subr.mxu0 0.0
    %2526 = vmatpush1.msra.mxu0 0.0
    %2527 = vmatprep.subr.mxu0 0.0
    %2528 = vmatpush1.msra.mxu0 0.0
    %2529 = vmatprep.subr.mxu0 0.0
    %2530 = vmatpush1.msra.mxu0 0.0
    %2531 = vmatprep.subr.mxu0 0.0
    %2532 = vmatpush1.msra.mxu0 0.0
    %2533 = vmatprep.subr.mxu0 0.0
    %2534 = vmatpush1.msra.mxu0 0.0
    %2535 = vmatprep.subr.mxu0 0.0
    %2536 = vmatpush1.msra.mxu0 0.0
    %2537 = vmatprep.subr.mxu0 0.0
    %2538 = vmatpush1.msra.mxu0 0.0
    %2539 = vmatprep.subr.mxu0 0.0
    %2540 = vmatpush1.msra.mxu0 0.0
    %2541 = vmatprep.subr.mxu0 0.0
    %2542 = vmatpush1.msra.mxu0 0.0
    %2543 = vmatprep.subr.mxu0 0.0
    %2544 = vmatpush1.msra.mxu0 0.0
    %2545 = vmatprep.subr.mxu0 0.0
    %2546 = vmatpush1.msra.mxu0 0.0
    %2547 = vmatprep.subr.mxu0 0.0
    %2548 = vmatpush1.msra.mxu0 0.0
    %2549 = vmatprep.subr.mxu0 0.0
    %2550 = vmatpush1.msra.mxu0 0.0
    %2551 = vmatprep.subr.mxu0 0.0
    %2552 = vmatpush1.msra.mxu0 0.0
    %2553 = vmatprep.subr.mxu0 0.0
    %2554 = vmatpush1.msra.mxu0 0.0
    %2555 = vmatprep.subr.mxu0 0.0
    %2556 = vmatpush1.msra.mxu0 0.0
    %2557 = vmatprep.mubr.f32.mxu0 0.0
    %2558 = vmatmul.mubr.f32.gmra.mrb[0].mxu0 %v2473
    %v2559 = vpop.f32.mrb[0].mxu0
    %v2560 = vadd.f32 0.0, %v2559
    %v2561 = vpop.f32.mrb[0].mxu0
    %2562 = vmatprep.mubr.f32.mxu0 0.0
    %2563 = vmatmul.mubr.f32.gmra.mrb[0].mxu0 %v2476
    %v2564 = vpop.f32.mrb[0].mxu0
    %v2565 = vadd.f32 0.0, %v2564
    %v2566 = vpop.f32.mrb[0].mxu0
    %2567 = vmatprep.mubr.f32.mxu0 0.0
    %2568 = vmatmul.mubr.f32.gmra.mrb[0].mxu0 %v2479
    %v2569 = vpop.f32.mrb[0].mxu0
    %v2570 = vadd.f32 0.0, %v2569
    %v2571 = vpop.f32.mrb[0].mxu0
    %2572 = vmatprep.mubr.f32.mxu0 0.0
    %2573 = vmatmul.mubr.f32.gmra.mrb[0].mxu0 %v2482
    %v2574 = vpop.f32.mrb[0].mxu0
    %v2575 = vadd.f32 0.0, %v2574
    %v2576 = vpop.f32.mrb[0].mxu0
    %2577 = vmatprep.mubr.f32.mxu0 0.0
    %2578 = vmatmul.mubr.f32.gmra.mrb[0].mxu0 %v2485
    %v2579 = vpop.f32.mrb[0].mxu0
    %v2580 = vadd.f32 0.0, %v2579
    %v2581 = vpop.f32.mrb[0].mxu0
    %2582 = vmatprep.mubr.f32.mxu0 0.0
    %2583 = vmatmul.mubr.f32.gmra.mrb[0].mxu0 %v2488
    %v2584 = vpop.f32.mrb[0].mxu0
    %v2585 = vadd.f32 0.0, %v2584
    %v2586 = vpop.f32.mrb[0].mxu0
    %2587 = vmatprep.mubr.f32.mxu0 0.0
    %2588 = vmatmul.mubr.f32.gmra.mrb[0].mxu0 %v2491
    %v2589 = vpop.f32.mrb[0].mxu0
    %v2590 = vadd.f32 0.0, %v2589
    %v2591 = vpop.f32.mrb[0].mxu0
    %2592 = vdwg.mxu0
    %v2594 = vsel %vm44, %v2454, 0
    %v2597 = vsel %vm44, %v2455, 0
    %v2600 = vsel %vm44, %v2456, 0
    %v2603 = vsel %vm44, %v2457, 0
    %v2606 = vsel %vm44, %v2458, 0
    %v2609 = vsel %vm44, %v2459, 0
    %v2612 = vsel %vm44, %v2460, 0
    %2614 = vmatprep.subr.mxu0 0.0
    %2615 = vmatpush1.msra.mxu0 %v2461
    %2616 = vmatprep.subr.mxu0 0.0
    %2617 = vmatpush1.msra.mxu0 %v2462
    %2618 = vmatprep.subr.mxu0 0.0
    %2619 = vmatpush1.msra.mxu0 0.0
    %2620 = vmatprep.subr.mxu0 0.0
    %2621 = vmatpush1.msra.mxu0 0.0
    %2622 = vmatprep.subr.mxu0 0.0
    %2623 = vmatpush1.msra.mxu0 0.0
    %2624 = vmatprep.subr.mxu0 0.0
    %2625 = vmatpush1.msra.mxu0 0.0
    %2626 = vmatprep.subr.mxu0 0.0
    %2627 = vmatpush1.msra.mxu0 0.0
    %2628 = vmatprep.subr.mxu0 0.0
    %2629 = vmatpush1.msra.mxu0 0.0
    %2630 = vmatprep.subr.mxu0 0.0
    %2631 = vmatpush1.msra.mxu0 0.0
    %2632 = vmatprep.subr.mxu0 0.0
    %2633 = vmatpush1.msra.mxu0 0.0
    %2634 = vmatprep.subr.mxu0 0.0
    %2635 = vmatpush1.msra.mxu0 0.0
    %2636 = vmatprep.subr.mxu0 0.0
    %2637 = vmatpush1.msra.mxu0 0.0
    %2638 = vmatprep.subr.mxu0 0.0
    %2639 = vmatpush1.msra.mxu0 0.0
    %2640 = vmatprep.subr.mxu0 0.0
    %2641 = vmatpush1.msra.mxu0 0.0
    %2642 = vmatprep.subr.mxu0 0.0
    %2643 = vmatpush1.msra.mxu0 0.0
    %2644 = vmatprep.subr.mxu0 0.0
    %2645 = vmatpush1.msra.mxu0 0.0
    %2646 = vmatprep.subr.mxu0 0.0
    %2647 = vmatpush1.msra.mxu0 0.0
    %2648 = vmatprep.subr.mxu0 0.0
    %2649 = vmatpush1.msra.mxu0 0.0
    %2650 = vmatprep.subr.mxu0 0.0
    %2651 = vmatpush1.msra.mxu0 0.0
    %2652 = vmatprep.subr.mxu0 0.0
    %2653 = vmatpush1.msra.mxu0 0.0
    %2654 = vmatprep.subr.mxu0 0.0
    %2655 = vmatpush1.msra.mxu0 0.0
    %2656 = vmatprep.subr.mxu0 0.0
    %2657 = vmatpush1.msra.mxu0 0.0
    %2658 = vmatprep.subr.mxu0 0.0
    %2659 = vmatpush1.msra.mxu0 0.0
    %2660 = vmatprep.subr.mxu0 0.0
    %2661 = vmatpush1.msra.mxu0 0.0
    %2662 = vmatprep.subr.mxu0 0.0
    %2663 = vmatpush1.msra.mxu0 0.0
    %2664 = vmatprep.subr.mxu0 0.0
    %2665 = vmatpush1.msra.mxu0 0.0
    %2666 = vmatprep.subr.mxu0 0.0
    %2667 = vmatpush1.msra.mxu0 0.0
    %2668 = vmatprep.subr.mxu0 0.0
    %2669 = vmatpush1.msra.mxu0 0.0
    %2670 = vmatprep.subr.mxu0 0.0
    %2671 = vmatpush1.msra.mxu0 0.0
    %2672 = vmatprep.subr.mxu0 0.0
    %2673 = vmatpush1.msra.mxu0 0.0
    %2674 = vmatprep.subr.mxu0 0.0
    %2675 = vmatpush1.msra.mxu0 0.0
    %2676 = vmatprep.subr.mxu0 0.0
    %2677 = vmatpush1.msra.mxu0 0.0
    %2678 = vmatprep.mubr.f32.mxu0 0.0
    %2679 = vmatmul.mubr.f32.gmra.mrb[0].mxu0 %v2594
    %v2680 = vpop.f32.mrb[0].mxu0
    %v2681 = vadd.f32 %v2560, %v2680
    %v2682 = vpop.f32.mrb[0].mxu0
    %2683 = vmatprep.mubr.f32.mxu0 0.0
    %2684 = vmatmul.mubr.f32.gmra.mrb[0].mxu0 %v2597
    %v2685 = vpop.f32.mrb[0].mxu0
    %v2686 = vadd.f32 %v2565, %v2685
    %v2687 = vpop.f32.mrb[0].mxu0
    %2688 = vmatprep.mubr.f32.mxu0 0.0
    %2689 = vmatmul.mubr.f32.gmra.mrb[0].mxu0 %v2600
    %v2690 = vpop.f32.mrb[0].mxu0
    %v2691 = vadd.f32 %v2570, %v2690
    %v2692 = vpop.f32.mrb[0].mxu0
    %2693 = vmatprep.mubr.f32.mxu0 0.0
    %2694 = vmatmul.mubr.f32.gmra.mrb[0].mxu0 %v2603
    %v2695 = vpop.f32.mrb[0].mxu0
    %v2696 = vadd.f32 %v2575, %v2695
    %v2697 = vpop.f32.mrb[0].mxu0
    %2698 = vmatprep.mubr.f32.mxu0 0.0
    %2699 = vmatmul.mubr.f32.gmra.mrb[0].mxu0 %v2606
    %v2700 = vpop.f32.mrb[0].mxu0
    %v2701 = vadd.f32 %v2580, %v2700
    %v2702 = vpop.f32.mrb[0].mxu0
    %2703 = vmatprep.mubr.f32.mxu0 0.0
    %2704 = vmatmul.mubr.f32.gmra.mrb[0].mxu0 %v2609
    %v2705 = vpop.f32.mrb[0].mxu0
    %v2706 = vadd.f32 %v2585, %v2705
    %v2707 = vpop.f32.mrb[0].mxu0
    %2708 = vmatprep.mubr.f32.mxu0 0.0
    %2709 = vmatmul.mubr.f32.gmra.mrb[0].mxu0 %v2612
    %v2710 = vpop.f32.mrb[0].mxu0
    %v2711 = vadd.f32 %v2590, %v2710
    %v2712 = vpop.f32.mrb[0].mxu0
    %2713 = vdwg.mxu0
    %v2714 = vld [vmem:[#allocation4 + $0x4] sm:$0xff]
    %v2715 = vld [vmem:[#allocation4 + $0xc] sm:$0xff]
    %v2716 = vld [vmem:[#allocation4 + $0x14] sm:$0xff]
    %v2717 = vld [vmem:[#allocation4 + $0x1c] sm:$0xff]
    %v2718 = vld [vmem:[#allocation4 + $0x24] sm:$0xff]
    %v2719 = vld [vmem:[#allocation4 + $0x2c] sm:$0xff]
    %v2720 = vld [vmem:[#allocation4 + $0x34] sm:$0xff]
    %v2721 = vld [vmem:[%s4 + $0xc0] sm:$0xff]
    %v2722 = vld [vmem:[%s4 + $0xc8] sm:$0xff]
    %v2724 = vsel %vm44, %v2714, 0
    %v2727 = vsel %vm44, %v2715, 0
    %v2730 = vsel %vm44, %v2716, 0
    %v2733 = vsel %vm44, %v2717, 0
    %v2736 = vsel %vm44, %v2718, 0
    %v2739 = vsel %vm44, %v2719, 0
    %v2742 = vsel %vm44, %v2720, 0
    %2744 = vmatprep.subr.mxu0 0.0
    %2745 = vmatpush1.msra.mxu0 %v2721
    %2746 = vmatprep.subr.mxu0 0.0
    %2747 = vmatpush1.msra.mxu0 %v2722
    %2748 = vmatprep.subr.mxu0 0.0
    %2749 = vmatpush1.msra.mxu0 0.0
    %2750 = vmatprep.subr.mxu0 0.0
    %2751 = vmatpush1.msra.mxu0 0.0
    %2752 = vmatprep.subr.mxu0 0.0
    %2753 = vmatpush1.msra.mxu0 0.0
    %2754 = vmatprep.subr.mxu0 0.0
    %2755 = vmatpush1.msra.mxu0 0.0
    %2756 = vmatprep.subr.mxu0 0.0
    %2757 = vmatpush1.msra.mxu0 0.0
    %2758 = vmatprep.subr.mxu0 0.0
    %2759 = vmatpush1.msra.mxu0 0.0
    %2760 = vmatprep.subr.mxu0 0.0
    %2761 = vmatpush1.msra.mxu0 0.0
    %2762 = vmatprep.subr.mxu0 0.0
    %2763 = vmatpush1.msra.mxu0 0.0
    %2764 = vmatprep.subr.mxu0 0.0
    %2765 = vmatpush1.msra.mxu0 0.0
    %2766 = vmatprep.subr.mxu0 0.0
    %2767 = vmatpush1.msra.mxu0 0.0
    %2768 = vmatprep.subr.mxu0 0.0
    %2769 = vmatpush1.msra.mxu0 0.0
    %2770 = vmatprep.subr.mxu0 0.0
    %2771 = vmatpush1.msra.mxu0 0.0
    %2772 = vmatprep.subr.mxu0 0.0
    %2773 = vmatpush1.msra.mxu0 0.0
    %2774 = vmatprep.subr.mxu0 0.0
    %2775 = vmatpush1.msra.mxu0 0.0
    %2776 = vmatprep.subr.mxu0 0.0
    %2777 = vmatpush1.msra.mxu0 0.0
    %2778 = vmatprep.subr.mxu0 0.0
    %2779 = vmatpush1.msra.mxu0 0.0
    %2780 = vmatprep.subr.mxu0 0.0
    %2781 = vmatpush1.msra.mxu0 0.0
    %2782 = vmatprep.subr.mxu0 0.0
    %2783 = vmatpush1.msra.mxu0 0.0
    %2784 = vmatprep.subr.mxu0 0.0
    %2785 = vmatpush1.msra.mxu0 0.0
    %2786 = vmatprep.subr.mxu0 0.0
    %2787 = vmatpush1.msra.mxu0 0.0
    %2788 = vmatprep.subr.mxu0 0.0
    %2789 = vmatpush1.msra.mxu0 0.0
    %2790 = vmatprep.subr.mxu0 0.0
    %2791 = vmatpush1.msra.mxu0 0.0
    %2792 = vmatprep.subr.mxu0 0.0
    %2793 = vmatpush1.msra.mxu0 0.0
    %2794 = vmatprep.subr.mxu0 0.0
    %2795 = vmatpush1.msra.mxu0 0.0
    %2796 = vmatprep.subr.mxu0 0.0
    %2797 = vmatpush1.msra.mxu0 0.0
    %2798 = vmatprep.subr.mxu0 0.0
    %2799 = vmatpush1.msra.mxu0 0.0
    %2800 = vmatprep.subr.mxu0 0.0
    %2801 = vmatpush1.msra.mxu0 0.0
    %2802 = vmatprep.subr.mxu0 0.0
    %2803 = vmatpush1.msra.mxu0 0.0
    %2804 = vmatprep.subr.mxu0 0.0
    %2805 = vmatpush1.msra.mxu0 0.0
    %2806 = vmatprep.subr.mxu0 0.0
    %2807 = vmatpush1.msra.mxu0 0.0
    %2808 = vmatprep.mubr.f32.mxu0 0.0
    %2809 = vmatmul.mubr.f32.gmra.mrb[0].mxu0 %v2724
    %v2810 = vpop.f32.mrb[0].mxu0
    %v2811 = vadd.f32 0.0, %v2810
    %v2812 = vpop.f32.mrb[0].mxu0
    %2813 = vmatprep.mubr.f32.mxu0 0.0
    %2814 = vmatmul.mubr.f32.gmra.mrb[0].mxu0 %v2727
    %v2815 = vpop.f32.mrb[0].mxu0
    %v2816 = vadd.f32 0.0, %v2815
    %v2817 = vpop.f32.mrb[0].mxu0
    %2818 = vmatprep.mubr.f32.mxu0 0.0
    %2819 = vmatmul.mubr.f32.gmra.mrb[0].mxu0 %v2730
    %v2820 = vpop.f32.mrb[0].mxu0
    %v2821 = vadd.f32 0.0, %v2820
    %v2822 = vpop.f32.mrb[0].mxu0
    %2823 = vmatprep.mubr.f32.mxu0 0.0
    %2824 = vmatmul.mubr.f32.gmra.mrb[0].mxu0 %v2733
    %v2825 = vpop.f32.mrb[0].mxu0
    %v2826 = vadd.f32 0.0, %v2825
    %v2827 = vpop.f32.mrb[0].mxu0
    %2828 = vmatprep.mubr.f32.mxu0 0.0
    %2829 = vmatmul.mubr.f32.gmra.mrb[0].mxu0 %v2736
    %v2830 = vpop.f32.mrb[0].mxu0
    %v2831 = vadd.f32 0.0, %v2830
    %v2832 = vpop.f32.mrb[0].mxu0
    %2833 = vmatprep.mubr.f32.mxu0 0.0
    %2834 = vmatmul.mubr.f32.gmra.mrb[0].mxu0 %v2739
    %v2835 = vpop.f32.mrb[0].mxu0
    %v2836 = vadd.f32 0.0, %v2835
    %v2837 = vpop.f32.mrb[0].mxu0
    %2838 = vmatprep.mubr.f32.mxu0 0.0
    %2839 = vmatmul.mubr.f32.gmra.mrb[0].mxu0 %v2742
    %v2840 = vpop.f32.mrb[0].mxu0
    %v2841 = vadd.f32 0.0, %v2840
    %v2842 = vpop.f32.mrb[0].mxu0
    %2843 = vdwg.mxu0
    %v2844 = vadd.f32 %v2681, %v2811
    %v2845 = vadd.f32 %v2686, %v2816
    %v2846 = vadd.f32 %v2691, %v2821
    %v2847 = vadd.f32 %v2696, %v2826
    %v2848 = vadd.f32 %v2701, %v2831
    %v2849 = vadd.f32 %v2706, %v2836
    %v2850 = vadd.f32 %v2711, %v2841
    %v2851 = vld [vmem:[#allocation4 + $0x6] sm:$0xff]
    %v2852 = vld [vmem:[#allocation4 + $0xe] sm:$0xff]
    %v2853 = vld [vmem:[#allocation4 + $0x16] sm:$0xff]
    %v2854 = vld [vmem:[#allocation4 + $0x1e] sm:$0xff]
    %v2855 = vld [vmem:[#allocation4 + $0x26] sm:$0xff]
    %v2856 = vld [vmem:[#allocation4 + $0x2e] sm:$0xff]
    %v2857 = vld [vmem:[#allocation4 + $0x36] sm:$0xff]
    %v2858 = vld [vmem:[%s4 + $0xd0] sm:$0xff]
    %v2859 = vld [vmem:[%s4 + $0xd8] sm:$0xff]
    %v2861 = vsel %vm44, %v2851, 0
    %v2864 = vsel %vm44, %v2852, 0
    %v2867 = vsel %vm44, %v2853, 0
    %v2870 = vsel %vm44, %v2854, 0
    %v2873 = vsel %vm44, %v2855, 0
    %v2876 = vsel %vm44, %v2856, 0
    %v2879 = vsel %vm44, %v2857, 0
    %2881 = vmatprep.subr.mxu0 0.0
    %2882 = vmatpush1.msra.mxu0 %v2858
    %2883 = vmatprep.subr.mxu0 0.0
    %2884 = vmatpush1.msra.mxu0 %v2859
    %2885 = vmatprep.subr.mxu0 0.0
    %2886 = vmatpush1.msra.mxu0 0.0
    %2887 = vmatprep.subr.mxu0 0.0
    %2888 = vmatpush1.msra.mxu0 0.0
    %2889 = vmatprep.subr.mxu0 0.0
    %2890 = vmatpush1.msra.mxu0 0.0
    %2891 = vmatprep.subr.mxu0 0.0
    %2892 = vmatpush1.msra.mxu0 0.0
    %2893 = vmatprep.subr.mxu0 0.0
    %2894 = vmatpush1.msra.mxu0 0.0
    %2895 = vmatprep.subr.mxu0 0.0
    %2896 = vmatpush1.msra.mxu0 0.0
    %2897 = vmatprep.subr.mxu0 0.0
    %2898 = vmatpush1.msra.mxu0 0.0
    %2899 = vmatprep.subr.mxu0 0.0
    %2900 = vmatpush1.msra.mxu0 0.0
    %2901 = vmatprep.subr.mxu0 0.0
    %2902 = vmatpush1.msra.mxu0 0.0
    %2903 = vmatprep.subr.mxu0 0.0
    %2904 = vmatpush1.msra.mxu0 0.0
    %2905 = vmatprep.subr.mxu0 0.0
    %2906 = vmatpush1.msra.mxu0 0.0
    %2907 = vmatprep.subr.mxu0 0.0
    %2908 = vmatpush1.msra.mxu0 0.0
    %2909 = vmatprep.subr.mxu0 0.0
    %2910 = vmatpush1.msra.mxu0 0.0
    %2911 = vmatprep.subr.mxu0 0.0
    %2912 = vmatpush1.msra.mxu0 0.0
    %2913 = vmatprep.subr.mxu0 0.0
    %2914 = vmatpush1.msra.mxu0 0.0
    %2915 = vmatprep.subr.mxu0 0.0
    %2916 = vmatpush1.msra.mxu0 0.0
    %2917 = vmatprep.subr.mxu0 0.0
    %2918 = vmatpush1.msra.mxu0 0.0
    %2919 = vmatprep.subr.mxu0 0.0
    %2920 = vmatpush1.msra.mxu0 0.0
    %2921 = vmatprep.subr.mxu0 0.0
    %2922 = vmatpush1.msra.mxu0 0.0
    %2923 = vmatprep.subr.mxu0 0.0
    %2924 = vmatpush1.msra.mxu0 0.0
    %2925 = vmatprep.subr.mxu0 0.0
    %2926 = vmatpush1.msra.mxu0 0.0
    %2927 = vmatprep.subr.mxu0 0.0
    %2928 = vmatpush1.msra.mxu0 0.0
    %2929 = vmatprep.subr.mxu0 0.0
    %2930 = vmatpush1.msra.mxu0 0.0
    %2931 = vmatprep.subr.mxu0 0.0
    %2932 = vmatpush1.msra.mxu0 0.0
    %2933 = vmatprep.subr.mxu0 0.0
    %2934 = vmatpush1.msra.mxu0 0.0
    %2935 = vmatprep.subr.mxu0 0.0
    %2936 = vmatpush1.msra.mxu0 0.0
    %2937 = vmatprep.subr.mxu0 0.0
    %2938 = vmatpush1.msra.mxu0 0.0
    %2939 = vmatprep.subr.mxu0 0.0
    %2940 = vmatpush1.msra.mxu0 0.0
    %2941 = vmatprep.subr.mxu0 0.0
    %2942 = vmatpush1.msra.mxu0 0.0
    %2943 = vmatprep.subr.mxu0 0.0
    %2944 = vmatpush1.msra.mxu0 0.0
    %2945 = vmatprep.mubr.f32.mxu0 0.0
    %2946 = vmatmul.mubr.f32.gmra.mrb[0].mxu0 %v2861
    %v2947 = vpop.f32.mrb[0].mxu0
    %v2948 = vadd.f32 0.0, %v2947
    %v2949 = vpop.f32.mrb[0].mxu0
    %2950 = vmatprep.mubr.f32.mxu0 0.0
    %2951 = vmatmul.mubr.f32.gmra.mrb[0].mxu0 %v2864
    %v2952 = vpop.f32.mrb[0].mxu0
    %v2953 = vadd.f32 0.0, %v2952
    %v2954 = vpop.f32.mrb[0].mxu0
    %2955 = vmatprep.mubr.f32.mxu0 0.0
    %2956 = vmatmul.mubr.f32.gmra.mrb[0].mxu0 %v2867
    %v2957 = vpop.f32.mrb[0].mxu0
    %v2958 = vadd.f32 0.0, %v2957
    %v2959 = vpop.f32.mrb[0].mxu0
    %2960 = vmatprep.mubr.f32.mxu0 0.0
    %2961 = vmatmul.mubr.f32.gmra.mrb[0].mxu0 %v2870
    %v2962 = vpop.f32.mrb[0].mxu0
    %v2963 = vadd.f32 0.0, %v2962
    %v2964 = vpop.f32.mrb[0].mxu0
    %2965 = vmatprep.mubr.f32.mxu0 0.0
    %2966 = vmatmul.mubr.f32.gmra.mrb[0].mxu0 %v2873
    %v2967 = vpop.f32.mrb[0].mxu0
    %v2968 = vadd.f32 0.0, %v2967
    %v2969 = vpop.f32.mrb[0].mxu0
    %2970 = vmatprep.mubr.f32.mxu0 0.0
    %2971 = vmatmul.mubr.f32.gmra.mrb[0].mxu0 %v2876
    %v2972 = vpop.f32.mrb[0].mxu0
    %v2973 = vadd.f32 0.0, %v2972
    %v2974 = vpop.f32.mrb[0].mxu0
    %2975 = vmatprep.mubr.f32.mxu0 0.0
    %2976 = vmatmul.mubr.f32.gmra.mrb[0].mxu0 %v2879
    %v2977 = vpop.f32.mrb[0].mxu0
    %v2978 = vadd.f32 0.0, %v2977
    %v2979 = vpop.f32.mrb[0].mxu0
    %2980 = vdwg.mxu0
    %v2981 = vadd.f32 %v2844, %v2948
    %v2982 = vadd.f32 %v2845, %v2953
    %v2983 = vadd.f32 %v2846, %v2958
    %v2984 = vadd.f32 %v2847, %v2963
    %v2985 = vadd.f32 %v2848, %v2968
    %v2986 = vadd.f32 %v2849, %v2973
    %v2987 = vadd.f32 %v2850, %v2978
    %v2988 = vld [vmem:[#allocation4 + $0x8] sm:$0xff]
    %v2989 = vld [vmem:[#allocation4 + $0x10] sm:$0xff]
    %v2990 = vld [vmem:[#allocation4 + $0x18] sm:$0xff]
    %v2991 = vld [vmem:[#allocation4 + $0x20] sm:$0xff]
    %v2992 = vld [vmem:[#allocation4 + $0x28] sm:$0xff]
    %v2993 = vld [vmem:[#allocation4 + $0x30] sm:$0xff]
    %v2994 = vld [vmem:[#allocation4 + $0x38] sm:$0xff]
    %v2995 = vld [vmem:[%s4 + $0xe0] sm:$0xff]
    %v2996 = vld [vmem:[%s4 + $0xe8] sm:$0xff]
    %v2998 = vsel %vm44, %v2988, 0
    %v3001 = vsel %vm44, %v2989, 0
    %v3004 = vsel %vm44, %v2990, 0
    %v3007 = vsel %vm44, %v2991, 0
    %v3010 = vsel %vm44, %v2992, 0
    %v3013 = vsel %vm44, %v2993, 0
    %v3016 = vsel %vm44, %v2994, 0
    %3018 = vmatprep.subr.mxu0 0.0
    %3019 = vmatpush1.msra.mxu0 %v2995
    %3020 = vmatprep.subr.mxu0 0.0
    %3021 = vmatpush1.msra.mxu0 %v2996
    %3022 = vmatprep.subr.mxu0 0.0
    %3023 = vmatpush1.msra.mxu0 0.0
    %3024 = vmatprep.subr.mxu0 0.0
    %3025 = vmatpush1.msra.mxu0 0.0
    %3026 = vmatprep.subr.mxu0 0.0
    %3027 = vmatpush1.msra.mxu0 0.0
    %3028 = vmatprep.subr.mxu0 0.0
    %3029 = vmatpush1.msra.mxu0 0.0
    %3030 = vmatprep.subr.mxu0 0.0
    %3031 = vmatpush1.msra.mxu0 0.0
    %3032 = vmatprep.subr.mxu0 0.0
    %3033 = vmatpush1.msra.mxu0 0.0
    %3034 = vmatprep.subr.mxu0 0.0
    %3035 = vmatpush1.msra.mxu0 0.0
    %3036 = vmatprep.subr.mxu0 0.0
    %3037 = vmatpush1.msra.mxu0 0.0
    %3038 = vmatprep.subr.mxu0 0.0
    %3039 = vmatpush1.msra.mxu0 0.0
    %3040 = vmatprep.subr.mxu0 0.0
    %3041 = vmatpush1.msra.mxu0 0.0
    %3042 = vmatprep.subr.mxu0 0.0
    %3043 = vmatpush1.msra.mxu0 0.0
    %3044 = vmatprep.subr.mxu0 0.0
    %3045 = vmatpush1.msra.mxu0 0.0
    %3046 = vmatprep.subr.mxu0 0.0
    %3047 = vmatpush1.msra.mxu0 0.0
    %3048 = vmatprep.subr.mxu0 0.0
    %3049 = vmatpush1.msra.mxu0 0.0
    %3050 = vmatprep.subr.mxu0 0.0
    %3051 = vmatpush1.msra.mxu0 0.0
    %3052 = vmatprep.subr.mxu0 0.0
    %3053 = vmatpush1.msra.mxu0 0.0
    %3054 = vmatprep.subr.mxu0 0.0
    %3055 = vmatpush1.msra.mxu0 0.0
    %3056 = vmatprep.subr.mxu0 0.0
    %3057 = vmatpush1.msra.mxu0 0.0
    %3058 = vmatprep.subr.mxu0 0.0
    %3059 = vmatpush1.msra.mxu0 0.0
    %3060 = vmatprep.subr.mxu0 0.0
    %3061 = vmatpush1.msra.mxu0 0.0
    %3062 = vmatprep.subr.mxu0 0.0
    %3063 = vmatpush1.msra.mxu0 0.0
    %3064 = vmatprep.subr.mxu0 0.0
    %3065 = vmatpush1.msra.mxu0 0.0
    %3066 = vmatprep.subr.mxu0 0.0
    %3067 = vmatpush1.msra.mxu0 0.0
    %3068 = vmatprep.subr.mxu0 0.0
    %3069 = vmatpush1.msra.mxu0 0.0
    %3070 = vmatprep.subr.mxu0 0.0
    %3071 = vmatpush1.msra.mxu0 0.0
    %3072 = vmatprep.subr.mxu0 0.0
    %3073 = vmatpush1.msra.mxu0 0.0
    %3074 = vmatprep.subr.mxu0 0.0
    %3075 = vmatpush1.msra.mxu0 0.0
    %3076 = vmatprep.subr.mxu0 0.0
    %3077 = vmatpush1.msra.mxu0 0.0
    %3078 = vmatprep.subr.mxu0 0.0
    %3079 = vmatpush1.msra.mxu0 0.0
    %3080 = vmatprep.subr.mxu0 0.0
    %3081 = vmatpush1.msra.mxu0 0.0
    %3082 = vmatprep.mubr.f32.mxu0 0.0
    %3083 = vmatmul.mubr.f32.gmra.mrb[0].mxu0 %v2998
    %v3084 = vpop.f32.mrb[0].mxu0
    %v3085 = vadd.f32 0.0, %v3084
    %v3086 = vpop.f32.mrb[0].mxu0
    %3087 = vmatprep.mubr.f32.mxu0 0.0
    %3088 = vmatmul.mubr.f32.gmra.mrb[0].mxu0 %v3001
    %v3089 = vpop.f32.mrb[0].mxu0
    %v3090 = vadd.f32 0.0, %v3089
    %v3091 = vpop.f32.mrb[0].mxu0
    %3092 = vmatprep.mubr.f32.mxu0 0.0
    %3093 = vmatmul.mubr.f32.gmra.mrb[0].mxu0 %v3004
    %v3094 = vpop.f32.mrb[0].mxu0
    %v3095 = vadd.f32 0.0, %v3094
    %v3096 = vpop.f32.mrb[0].mxu0
    %3097 = vmatprep.mubr.f32.mxu0 0.0
    %3098 = vmatmul.mubr.f32.gmra.mrb[0].mxu0 %v3007
    %v3099 = vpop.f32.mrb[0].mxu0
    %v3100 = vadd.f32 0.0, %v3099
    %v3101 = vpop.f32.mrb[0].mxu0
    %3102 = vmatprep.mubr.f32.mxu0 0.0
    %3103 = vmatmul.mubr.f32.gmra.mrb[0].mxu0 %v3010
    %v3104 = vpop.f32.mrb[0].mxu0
    %v3105 = vadd.f32 0.0, %v3104
    %v3106 = vpop.f32.mrb[0].mxu0
    %3107 = vmatprep.mubr.f32.mxu0 0.0
    %3108 = vmatmul.mubr.f32.gmra.mrb[0].mxu0 %v3013
    %v3109 = vpop.f32.mrb[0].mxu0
    %v3110 = vadd.f32 0.0, %v3109
    %v3111 = vpop.f32.mrb[0].mxu0
    %3112 = vmatprep.mubr.f32.mxu0 0.0
    %3113 = vmatmul.mubr.f32.gmra.mrb[0].mxu0 %v3016
    %v3114 = vpop.f32.mrb[0].mxu0
    %v3115 = vadd.f32 0.0, %v3114
    %v3116 = vpop.f32.mrb[0].mxu0
    %3117 = vdwg.mxu0
    %v3118 = vadd.f32 %v2981, %v3085
    %v3119 = vadd.f32 %v2982, %v3090
    %v3120 = vadd.f32 %v2983, %v3095
    %v3121 = vadd.f32 %v2984, %v3100
    %v3122 = vadd.f32 %v2985, %v3105
    %v3123 = vadd.f32 %v2986, %v3110
    %v3124 = vadd.f32 %v2987, %v3115
    %v3125 = vld [vmem:[#allocation4 + $0xa] sm:$0xff]
    %v3126 = vld [vmem:[#allocation4 + $0x12] sm:$0xff]
    %v3127 = vld [vmem:[#allocation4 + $0x1a] sm:$0xff]
    %v3128 = vld [vmem:[#allocation4 + $0x22] sm:$0xff]
    %v3129 = vld [vmem:[#allocation4 + $0x2a] sm:$0xff]
    %v3130 = vld [vmem:[#allocation4 + $0x32] sm:$0xff]
    %v3131 = vld [vmem:[#allocation4 + $0x3a] sm:$0xff]
    %v3132 = vld [vmem:[%s4 + $0xf0] sm:$0xff]
    %v3133 = vld [vmem:[%s4 + $0xf8] sm:$0xff]
    %v3135 = vsel %vm44, %v3125, 0
    %v3138 = vsel %vm44, %v3126, 0
    %v3141 = vsel %vm44, %v3127, 0
    %v3144 = vsel %vm44, %v3128, 0
    %v3147 = vsel %vm44, %v3129, 0
    %v3150 = vsel %vm44, %v3130, 0
    %v3153 = vsel %vm44, %v3131, 0
    %3155 = vmatprep.subr.mxu0 0.0
    %3156 = vmatpush1.msra.mxu0 %v3132
    %3157 = vmatprep.subr.mxu0 0.0
    %3158 = vmatpush1.msra.mxu0 %v3133
    %3159 = vmatprep.subr.mxu0 0.0
    %3160 = vmatpush1.msra.mxu0 0.0
    %3161 = vmatprep.subr.mxu0 0.0
    %3162 = vmatpush1.msra.mxu0 0.0
    %3163 = vmatprep.subr.mxu0 0.0
    %3164 = vmatpush1.msra.mxu0 0.0
    %3165 = vmatprep.subr.mxu0 0.0
    %3166 = vmatpush1.msra.mxu0 0.0
    %3167 = vmatprep.subr.mxu0 0.0
    %3168 = vmatpush1.msra.mxu0 0.0
    %3169 = vmatprep.subr.mxu0 0.0
    %3170 = vmatpush1.msra.mxu0 0.0
    %3171 = vmatprep.subr.mxu0 0.0
    %3172 = vmatpush1.msra.mxu0 0.0
    %3173 = vmatprep.subr.mxu0 0.0
    %3174 = vmatpush1.msra.mxu0 0.0
    %3175 = vmatprep.subr.mxu0 0.0
    %3176 = vmatpush1.msra.mxu0 0.0
    %3177 = vmatprep.subr.mxu0 0.0
    %3178 = vmatpush1.msra.mxu0 0.0
    %3179 = vmatprep.subr.mxu0 0.0
    %3180 = vmatpush1.msra.mxu0 0.0
    %3181 = vmatprep.subr.mxu0 0.0
    %3182 = vmatpush1.msra.mxu0 0.0
    %3183 = vmatprep.subr.mxu0 0.0
    %3184 = vmatpush1.msra.mxu0 0.0
    %3185 = vmatprep.subr.mxu0 0.0
    %3186 = vmatpush1.msra.mxu0 0.0
    %3187 = vmatprep.subr.mxu0 0.0
    %3188 = vmatpush1.msra.mxu0 0.0
    %3189 = vmatprep.subr.mxu0 0.0
    %3190 = vmatpush1.msra.mxu0 0.0
    %3191 = vmatprep.subr.mxu0 0.0
    %3192 = vmatpush1.msra.mxu0 0.0
    %3193 = vmatprep.subr.mxu0 0.0
    %3194 = vmatpush1.msra.mxu0 0.0
    %3195 = vmatprep.subr.mxu0 0.0
    %3196 = vmatpush1.msra.mxu0 0.0
    %3197 = vmatprep.subr.mxu0 0.0
    %3198 = vmatpush1.msra.mxu0 0.0
    %3199 = vmatprep.subr.mxu0 0.0
    %3200 = vmatpush1.msra.mxu0 0.0
    %3201 = vmatprep.subr.mxu0 0.0
    %3202 = vmatpush1.msra.mxu0 0.0
    %3203 = vmatprep.subr.mxu0 0.0
    %3204 = vmatpush1.msra.mxu0 0.0
    %3205 = vmatprep.subr.mxu0 0.0
    %3206 = vmatpush1.msra.mxu0 0.0
    %3207 = vmatprep.subr.mxu0 0.0
    %3208 = vmatpush1.msra.mxu0 0.0
    %3209 = vmatprep.subr.mxu0 0.0
    %3210 = vmatpush1.msra.mxu0 0.0
    %3211 = vmatprep.subr.mxu0 0.0
    %3212 = vmatpush1.msra.mxu0 0.0
    %3213 = vmatprep.subr.mxu0 0.0
    %3214 = vmatpush1.msra.mxu0 0.0
    %3215 = vmatprep.subr.mxu0 0.0
    %3216 = vmatpush1.msra.mxu0 0.0
    %3217 = vmatprep.subr.mxu0 0.0
    %3218 = vmatpush1.msra.mxu0 0.0
    %3219 = vmatprep.mubr.f32.mxu0 0.0
    %3220 = vmatmul.mubr.f32.gmra.mrb[0].mxu0 %v3135
    %v3221 = vpop.f32.mrb[0].mxu0
    %v3222 = vadd.f32 0.0, %v3221
    %v3223 = vpop.f32.mrb[0].mxu0
    %3224 = vmatprep.mubr.f32.mxu0 0.0
    %3225 = vmatmul.mubr.f32.gmra.mrb[0].mxu0 %v3138
    %v3226 = vpop.f32.mrb[0].mxu0
    %v3227 = vadd.f32 0.0, %v3226
    %v3228 = vpop.f32.mrb[0].mxu0
    %3229 = vmatprep.mubr.f32.mxu0 0.0
    %3230 = vmatmul.mubr.f32.gmra.mrb[0].mxu0 %v3141
    %v3231 = vpop.f32.mrb[0].mxu0
    %v3232 = vadd.f32 0.0, %v3231
    %v3233 = vpop.f32.mrb[0].mxu0
    %3234 = vmatprep.mubr.f32.mxu0 0.0
    %3235 = vmatmul.mubr.f32.gmra.mrb[0].mxu0 %v3144
    %v3236 = vpop.f32.mrb[0].mxu0
    %v3237 = vadd.f32 0.0, %v3236
    %v3238 = vpop.f32.mrb[0].mxu0
    %3239 = vmatprep.mubr.f32.mxu0 0.0
    %3240 = vmatmul.mubr.f32.gmra.mrb[0].mxu0 %v3147
    %v3241 = vpop.f32.mrb[0].mxu0
    %v3242 = vadd.f32 0.0, %v3241
    %v3243 = vpop.f32.mrb[0].mxu0
    %3244 = vmatprep.mubr.f32.mxu0 0.0
    %3245 = vmatmul.mubr.f32.gmra.mrb[0].mxu0 %v3150
    %v3246 = vpop.f32.mrb[0].mxu0
    %v3247 = vadd.f32 0.0, %v3246
    %v3248 = vpop.f32.mrb[0].mxu0
    %3249 = vmatprep.mubr.f32.mxu0 0.0
    %3250 = vmatmul.mubr.f32.gmra.mrb[0].mxu0 %v3153
    %v3251 = vpop.f32.mrb[0].mxu0
    %v3252 = vadd.f32 0.0, %v3251
    %v3253 = vpop.f32.mrb[0].mxu0
    %3254 = vdwg.mxu0
    %v3255 = vadd.f32 %v3118, %v3222
    %v3256 = vadd.f32 %v3119, %v3227
    %v3257 = vadd.f32 %v3120, %v3232
    %v3258 = vadd.f32 %v3121, %v3237
    %v3259 = vadd.f32 %v3122, %v3242
    %v3260 = vadd.f32 %v3123, %v3247
    %v3261 = vadd.f32 %v3124, %v3252
    %v3262 = vld [vmem:[#allocation4 + $0xc] sm:$0xff]
    %v3263 = vld [vmem:[#allocation4 + $0x14] sm:$0xff]
    %v3264 = vld [vmem:[#allocation4 + $0x1c] sm:$0xff]
    %v3265 = vld [vmem:[#allocation4 + $0x24] sm:$0xff]
    %v3266 = vld [vmem:[#allocation4 + $0x2c] sm:$0xff]
    %v3267 = vld [vmem:[#allocation4 + $0x34] sm:$0xff]
    %v3268 = vld [vmem:[#allocation4 + $0x3c] sm:$0xff]
    %v3269 = vld [vmem:[%s4 + $0x100] sm:$0xff]
    %v3270 = vld [vmem:[%s4 + $0x108] sm:$0xff]
    %v3272 = vsel %vm44, %v3262, 0
    %v3275 = vsel %vm44, %v3263, 0
    %v3278 = vsel %vm44, %v3264, 0
    %v3281 = vsel %vm44, %v3265, 0
    %v3284 = vsel %vm44, %v3266, 0
    %v3287 = vsel %vm44, %v3267, 0
    %v3290 = vsel %vm44, %v3268, 0
    %3292 = vmatprep.subr.mxu0 0.0
    %3293 = vmatpush1.msra.mxu0 %v3269
    %3294 = vmatprep.subr.mxu0 0.0
    %3295 = vmatpush1.msra.mxu0 %v3270
    %3296 = vmatprep.subr.mxu0 0.0
    %3297 = vmatpush1.msra.mxu0 0.0
    %3298 = vmatprep.subr.mxu0 0.0
    %3299 = vmatpush1.msra.mxu0 0.0
    %3300 = vmatprep.subr.mxu0 0.0
    %3301 = vmatpush1.msra.mxu0 0.0
    %3302 = vmatprep.subr.mxu0 0.0
    %3303 = vmatpush1.msra.mxu0 0.0
    %3304 = vmatprep.subr.mxu0 0.0
    %3305 = vmatpush1.msra.mxu0 0.0
    %3306 = vmatprep.subr.mxu0 0.0
    %3307 = vmatpush1.msra.mxu0 0.0
    %3308 = vmatprep.subr.mxu0 0.0
    %3309 = vmatpush1.msra.mxu0 0.0
    %3310 = vmatprep.subr.mxu0 0.0
    %3311 = vmatpush1.msra.mxu0 0.0
    %3312 = vmatprep.subr.mxu0 0.0
    %3313 = vmatpush1.msra.mxu0 0.0
    %3314 = vmatprep.subr.mxu0 0.0
    %3315 = vmatpush1.msra.mxu0 0.0
    %3316 = vmatprep.subr.mxu0 0.0
    %3317 = vmatpush1.msra.mxu0 0.0
    %3318 = vmatprep.subr.mxu0 0.0
    %3319 = vmatpush1.msra.mxu0 0.0
    %3320 = vmatprep.subr.mxu0 0.0
    %3321 = vmatpush1.msra.mxu0 0.0
    %3322 = vmatprep.subr.mxu0 0.0
    %3323 = vmatpush1.msra.mxu0 0.0
    %3324 = vmatprep.subr.mxu0 0.0
    %3325 = vmatpush1.msra.mxu0 0.0
    %3326 = vmatprep.subr.mxu0 0.0
    %3327 = vmatpush1.msra.mxu0 0.0
    %3328 = vmatprep.subr.mxu0 0.0
    %3329 = vmatpush1.msra.mxu0 0.0
    %3330 = vmatprep.subr.mxu0 0.0
    %3331 = vmatpush1.msra.mxu0 0.0
    %3332 = vmatprep.subr.mxu0 0.0
    %3333 = vmatpush1.msra.mxu0 0.0
    %3334 = vmatprep.subr.mxu0 0.0
    %3335 = vmatpush1.msra.mxu0 0.0
    %3336 = vmatprep.subr.mxu0 0.0
    %3337 = vmatpush1.msra.mxu0 0.0
    %3338 = vmatprep.subr.mxu0 0.0
    %3339 = vmatpush1.msra.mxu0 0.0
    %3340 = vmatprep.subr.mxu0 0.0
    %3341 = vmatpush1.msra.mxu0 0.0
    %3342 = vmatprep.subr.mxu0 0.0
    %3343 = vmatpush1.msra.mxu0 0.0
    %3344 = vmatprep.subr.mxu0 0.0
    %3345 = vmatpush1.msra.mxu0 0.0
    %3346 = vmatprep.subr.mxu0 0.0
    %3347 = vmatpush1.msra.mxu0 0.0
    %3348 = vmatprep.subr.mxu0 0.0
    %3349 = vmatpush1.msra.mxu0 0.0
    %3350 = vmatprep.subr.mxu0 0.0
    %3351 = vmatpush1.msra.mxu0 0.0
    %3352 = vmatprep.subr.mxu0 0.0
    %3353 = vmatpush1.msra.mxu0 0.0
    %3354 = vmatprep.subr.mxu0 0.0
    %3355 = vmatpush1.msra.mxu0 0.0
    %3356 = vmatprep.mubr.f32.mxu0 0.0
    %3357 = vmatmul.mubr.f32.gmra.mrb[0].mxu0 %v3272
    %v3358 = vpop.f32.mrb[0].mxu0
    %v3359 = vadd.f32 0.0, %v3358
    %v3360 = vpop.f32.mrb[0].mxu0
    %3361 = vmatprep.mubr.f32.mxu0 0.0
    %3362 = vmatmul.mubr.f32.gmra.mrb[0].mxu0 %v3275
    %v3363 = vpop.f32.mrb[0].mxu0
    %v3364 = vadd.f32 0.0, %v3363
    %v3365 = vpop.f32.mrb[0].mxu0
    %3366 = vmatprep.mubr.f32.mxu0 0.0
    %3367 = vmatmul.mubr.f32.gmra.mrb[0].mxu0 %v3278
    %v3368 = vpop.f32.mrb[0].mxu0
    %v3369 = vadd.f32 0.0, %v3368
    %v3370 = vpop.f32.mrb[0].mxu0
    %3371 = vmatprep.mubr.f32.mxu0 0.0
    %3372 = vmatmul.mubr.f32.gmra.mrb[0].mxu0 %v3281
    %v3373 = vpop.f32.mrb[0].mxu0
    %v3374 = vadd.f32 0.0, %v3373
    %v3375 = vpop.f32.mrb[0].mxu0
    %3376 = vmatprep.mubr.f32.mxu0 0.0
    %3377 = vmatmul.mubr.f32.gmra.mrb[0].mxu0 %v3284
    %v3378 = vpop.f32.mrb[0].mxu0
    %v3379 = vadd.f32 0.0, %v3378
    %v3380 = vpop.f32.mrb[0].mxu0
    %3381 = vmatprep.mubr.f32.mxu0 0.0
    %3382 = vmatmul.mubr.f32.gmra.mrb[0].mxu0 %v3287
    %v3383 = vpop.f32.mrb[0].mxu0
    %v3384 = vadd.f32 0.0, %v3383
    %v3385 = vpop.f32.mrb[0].mxu0
    %3386 = vmatprep.mubr.f32.mxu0 0.0
    %3387 = vmatmul.mubr.f32.gmra.mrb[0].mxu0 %v3290
    %v3388 = vpop.f32.mrb[0].mxu0
    %v3389 = vadd.f32 0.0, %v3388
    %v3390 = vpop.f32.mrb[0].mxu0
    %3391 = vdwg.mxu0
    %v3392 = vadd.f32 %v3255, %v3359
    %v3393 = vadd.f32 %v3256, %v3364
    %v3394 = vadd.f32 %v3257, %v3369
    %v3395 = vadd.f32 %v3258, %v3374
    %v3396 = vadd.f32 %v3259, %v3379
    %v3397 = vadd.f32 %v3260, %v3384
    %v3398 = vadd.f32 %v3261, %v3389
    %v3399 = vld [vmem:[#allocation4 + $0xe] sm:$0xff]
    %v3400 = vld [vmem:[#allocation4 + $0x16] sm:$0xff]
    %v3401 = vld [vmem:[#allocation4 + $0x1e] sm:$0xff]
    %v3402 = vld [vmem:[#allocation4 + $0x26] sm:$0xff]
    %v3403 = vld [vmem:[#allocation4 + $0x2e] sm:$0xff]
    %v3404 = vld [vmem:[#allocation4 + $0x36] sm:$0xff]
    %v3405 = vld [vmem:[#allocation4 + $0x3e] sm:$0xff]
    %v3406 = vld [vmem:[%s4 + $0x110] sm:$0xff]
    %v3407 = vld [vmem:[%s4 + $0x118] sm:$0xff]
    %v3409 = vsel %vm44, %v3399, 0
    %v3412 = vsel %vm44, %v3400, 0
    %v3415 = vsel %vm44, %v3401, 0
    %v3418 = vsel %vm44, %v3402, 0
    %v3421 = vsel %vm44, %v3403, 0
    %v3424 = vsel %vm44, %v3404, 0
    %v3427 = vsel %vm44, %v3405, 0
    %3429 = vmatprep.subr.mxu0 0.0
    %3430 = vmatpush1.msra.mxu0 %v3406
    %3431 = vmatprep.subr.mxu0 0.0
    %3432 = vmatpush1.msra.mxu0 %v3407
    %3433 = vmatprep.subr.mxu0 0.0
    %3434 = vmatpush1.msra.mxu0 0.0
    %3435 = vmatprep.subr.mxu0 0.0
    %3436 = vmatpush1.msra.mxu0 0.0
    %3437 = vmatprep.subr.mxu0 0.0
    %3438 = vmatpush1.msra.mxu0 0.0
    %3439 = vmatprep.subr.mxu0 0.0
    %3440 = vmatpush1.msra.mxu0 0.0
    %3441 = vmatprep.subr.mxu0 0.0
    %3442 = vmatpush1.msra.mxu0 0.0
    %3443 = vmatprep.subr.mxu0 0.0
    %3444 = vmatpush1.msra.mxu0 0.0
    %3445 = vmatprep.subr.mxu0 0.0
    %3446 = vmatpush1.msra.mxu0 0.0
    %3447 = vmatprep.subr.mxu0 0.0
    %3448 = vmatpush1.msra.mxu0 0.0
    %3449 = vmatprep.subr.mxu0 0.0
    %3450 = vmatpush1.msra.mxu0 0.0
    %3451 = vmatprep.subr.mxu0 0.0
    %3452 = vmatpush1.msra.mxu0 0.0
    %3453 = vmatprep.subr.mxu0 0.0
    %3454 = vmatpush1.msra.mxu0 0.0
    %3455 = vmatprep.subr.mxu0 0.0
    %3456 = vmatpush1.msra.mxu0 0.0
    %3457 = vmatprep.subr.mxu0 0.0
    %3458 = vmatpush1.msra.mxu0 0.0
    %3459 = vmatprep.subr.mxu0 0.0
    %3460 = vmatpush1.msra.mxu0 0.0
    %3461 = vmatprep.subr.mxu0 0.0
    %3462 = vmatpush1.msra.mxu0 0.0
    %3463 = vmatprep.subr.mxu0 0.0
    %3464 = vmatpush1.msra.mxu0 0.0
    %3465 = vmatprep.subr.mxu0 0.0
    %3466 = vmatpush1.msra.mxu0 0.0
    %3467 = vmatprep.subr.mxu0 0.0
    %3468 = vmatpush1.msra.mxu0 0.0
    %3469 = vmatprep.subr.mxu0 0.0
    %3470 = vmatpush1.msra.mxu0 0.0
    %3471 = vmatprep.subr.mxu0 0.0
    %3472 = vmatpush1.msra.mxu0 0.0
    %3473 = vmatprep.subr.mxu0 0.0
    %3474 = vmatpush1.msra.mxu0 0.0
    %3475 = vmatprep.subr.mxu0 0.0
    %3476 = vmatpush1.msra.mxu0 0.0
    %3477 = vmatprep.subr.mxu0 0.0
    %3478 = vmatpush1.msra.mxu0 0.0
    %3479 = vmatprep.subr.mxu0 0.0
    %3480 = vmatpush1.msra.mxu0 0.0
    %3481 = vmatprep.subr.mxu0 0.0
    %3482 = vmatpush1.msra.mxu0 0.0
    %3483 = vmatprep.subr.mxu0 0.0
    %3484 = vmatpush1.msra.mxu0 0.0
    %3485 = vmatprep.subr.mxu0 0.0
    %3486 = vmatpush1.msra.mxu0 0.0
    %3487 = vmatprep.subr.mxu0 0.0
    %3488 = vmatpush1.msra.mxu0 0.0
    %3489 = vmatprep.subr.mxu0 0.0
    %3490 = vmatpush1.msra.mxu0 0.0
    %3491 = vmatprep.subr.mxu0 0.0
    %3492 = vmatpush1.msra.mxu0 0.0
    %3493 = vmatprep.mubr.f32.mxu0 0.0
    %3494 = vmatmul.mubr.f32.gmra.mrb[0].mxu0 %v3409
    %v3495 = vpop.f32.mrb[0].mxu0
    %v3496 = vadd.f32 0.0, %v3495
    %v3497 = vpop.f32.mrb[0].mxu0
    %3498 = vmatprep.mubr.f32.mxu0 0.0
    %3499 = vmatmul.mubr.f32.gmra.mrb[0].mxu0 %v3412
    %v3500 = vpop.f32.mrb[0].mxu0
    %v3501 = vadd.f32 0.0, %v3500
    %v3502 = vpop.f32.mrb[0].mxu0
    %3503 = vmatprep.mubr.f32.mxu0 0.0
    %3504 = vmatmul.mubr.f32.gmra.mrb[0].mxu0 %v3415
    %v3505 = vpop.f32.mrb[0].mxu0
    %v3506 = vadd.f32 0.0, %v3505
    %v3507 = vpop.f32.mrb[0].mxu0
    %3508 = vmatprep.mubr.f32.mxu0 0.0
    %3509 = vmatmul.mubr.f32.gmra.mrb[0].mxu0 %v3418
    %v3510 = vpop.f32.mrb[0].mxu0
    %v3511 = vadd.f32 0.0, %v3510
    %v3512 = vpop.f32.mrb[0].mxu0
    %3513 = vmatprep.mubr.f32.mxu0 0.0
    %3514 = vmatmul.mubr.f32.gmra.mrb[0].mxu0 %v3421
    %v3515 = vpop.f32.mrb[0].mxu0
    %v3516 = vadd.f32 0.0, %v3515
    %v3517 = vpop.f32.mrb[0].mxu0
    %3518 = vmatprep.mubr.f32.mxu0 0.0
    %3519 = vmatmul.mubr.f32.gmra.mrb[0].mxu0 %v3424
    %v3520 = vpop.f32.mrb[0].mxu0
    %v3521 = vadd.f32 0.0, %v3520
    %v3522 = vpop.f32.mrb[0].mxu0
    %3523 = vmatprep.mubr.f32.mxu0 0.0
    %3524 = vmatmul.mubr.f32.gmra.mrb[0].mxu0 %v3427
    %v3525 = vpop.f32.mrb[0].mxu0
    %v3526 = vadd.f32 0.0, %v3525
    %v3527 = vpop.f32.mrb[0].mxu0
    %3528 = vdwg.mxu0
    %v3529 = vadd.f32 %v3392, %v3496
    %v3530 = vadd.f32 %v3393, %v3501
    %v3531 = vadd.f32 %v3394, %v3506
    %v3532 = vadd.f32 %v3395, %v3511
    %v3533 = vadd.f32 %v3396, %v3516
    %v3534 = vadd.f32 %v3397, %v3521
    %v3535 = vadd.f32 %v3398, %v3526
    %v3536 = vld [vmem:[#allocation4 + $0x10] sm:$0xff]
    %v3537 = vld [vmem:[#allocation4 + $0x18] sm:$0xff]
    %v3538 = vld [vmem:[#allocation4 + $0x20] sm:$0xff]
    %v3539 = vld [vmem:[#allocation4 + $0x28] sm:$0xff]
    %v3540 = vld [vmem:[#allocation4 + $0x30] sm:$0xff]
    %v3541 = vld [vmem:[#allocation4 + $0x38] sm:$0xff]
    %v3542 = vld [vmem:[#allocation4 + $0x40] sm:$0xff]
    %v3543 = vld [vmem:[%s4 + $0x120] sm:$0xff]
    %v3544 = vld [vmem:[%s4 + $0x128] sm:$0xff]
    %v3546 = vsel %vm44, %v3536, 0
    %v3549 = vsel %vm44, %v3537, 0
    %v3552 = vsel %vm44, %v3538, 0
    %v3555 = vsel %vm44, %v3539, 0
    %v3558 = vsel %vm44, %v3540, 0
    %v3561 = vsel %vm44, %v3541, 0
    %v3564 = vsel %vm44, %v3542, 0
    %3566 = vmatprep.subr.mxu0 0.0
    %3567 = vmatpush1.msra.mxu0 %v3543
    %3568 = vmatprep.subr.mxu0 0.0
    %3569 = vmatpush1.msra.mxu0 %v3544
    %3570 = vmatprep.subr.mxu0 0.0
    %3571 = vmatpush1.msra.mxu0 0.0
    %3572 = vmatprep.subr.mxu0 0.0
    %3573 = vmatpush1.msra.mxu0 0.0
    %3574 = vmatprep.subr.mxu0 0.0
    %3575 = vmatpush1.msra.mxu0 0.0
    %3576 = vmatprep.subr.mxu0 0.0
    %3577 = vmatpush1.msra.mxu0 0.0
    %3578 = vmatprep.subr.mxu0 0.0
    %3579 = vmatpush1.msra.mxu0 0.0
    %3580 = vmatprep.subr.mxu0 0.0
    %3581 = vmatpush1.msra.mxu0 0.0
    %3582 = vmatprep.subr.mxu0 0.0
    %3583 = vmatpush1.msra.mxu0 0.0
    %3584 = vmatprep.subr.mxu0 0.0
    %3585 = vmatpush1.msra.mxu0 0.0
    %3586 = vmatprep.subr.mxu0 0.0
    %3587 = vmatpush1.msra.mxu0 0.0
    %3588 = vmatprep.subr.mxu0 0.0
    %3589 = vmatpush1.msra.mxu0 0.0
    %3590 = vmatprep.subr.mxu0 0.0
    %3591 = vmatpush1.msra.mxu0 0.0
    %3592 = vmatprep.subr.mxu0 0.0
    %3593 = vmatpush1.msra.mxu0 0.0
    %3594 = vmatprep.subr.mxu0 0.0
    %3595 = vmatpush1.msra.mxu0 0.0
    %3596 = vmatprep.subr.mxu0 0.0
    %3597 = vmatpush1.msra.mxu0 0.0
    %3598 = vmatprep.subr.mxu0 0.0
    %3599 = vmatpush1.msra.mxu0 0.0
    %3600 = vmatprep.subr.mxu0 0.0
    %3601 = vmatpush1.msra.mxu0 0.0
    %3602 = vmatprep.subr.mxu0 0.0
    %3603 = vmatpush1.msra.mxu0 0.0
    %3604 = vmatprep.subr.mxu0 0.0
    %3605 = vmatpush1.msra.mxu0 0.0
    %3606 = vmatprep.subr.mxu0 0.0
    %3607 = vmatpush1.msra.mxu0 0.0
    %3608 = vmatprep.subr.mxu0 0.0
    %3609 = vmatpush1.msra.mxu0 0.0
    %3610 = vmatprep.subr.mxu0 0.0
    %3611 = vmatpush1.msra.mxu0 0.0
    %3612 = vmatprep.subr.mxu0 0.0
    %3613 = vmatpush1.msra.mxu0 0.0
    %3614 = vmatprep.subr.mxu0 0.0
    %3615 = vmatpush1.msra.mxu0 0.0
    %3616 = vmatprep.subr.mxu0 0.0
    %3617 = vmatpush1.msra.mxu0 0.0
    %3618 = vmatprep.subr.mxu0 0.0
    %3619 = vmatpush1.msra.mxu0 0.0
    %3620 = vmatprep.subr.mxu0 0.0
    %3621 = vmatpush1.msra.mxu0 0.0
    %3622 = vmatprep.subr.mxu0 0.0
    %3623 = vmatpush1.msra.mxu0 0.0
    %3624 = vmatprep.subr.mxu0 0.0
    %3625 = vmatpush1.msra.mxu0 0.0
    %3626 = vmatprep.subr.mxu0 0.0
    %3627 = vmatpush1.msra.mxu0 0.0
    %3628 = vmatprep.subr.mxu0 0.0
    %3629 = vmatpush1.msra.mxu0 0.0
    %3630 = vmatprep.mubr.f32.mxu0 0.0
    %3631 = vmatmul.mubr.f32.gmra.mrb[0].mxu0 %v3546
    %v3632 = vpop.f32.mrb[0].mxu0
    %v3633 = vadd.f32 0.0, %v3632
    %v3634 = vpop.f32.mrb[0].mxu0
    %3635 = vmatprep.mubr.f32.mxu0 0.0
    %3636 = vmatmul.mubr.f32.gmra.mrb[0].mxu0 %v3549
    %v3637 = vpop.f32.mrb[0].mxu0
    %v3638 = vadd.f32 0.0, %v3637
    %v3639 = vpop.f32.mrb[0].mxu0
    %3640 = vmatprep.mubr.f32.mxu0 0.0
    %3641 = vmatmul.mubr.f32.gmra.mrb[0].mxu0 %v3552
    %v3642 = vpop.f32.mrb[0].mxu0
    %v3643 = vadd.f32 0.0, %v3642
    %v3644 = vpop.f32.mrb[0].mxu0
    %3645 = vmatprep.mubr.f32.mxu0 0.0
    %3646 = vmatmul.mubr.f32.gmra.mrb[0].mxu0 %v3555
    %v3647 = vpop.f32.mrb[0].mxu0
    %v3648 = vadd.f32 0.0, %v3647
    %v3649 = vpop.f32.mrb[0].mxu0
    %3650 = vmatprep.mubr.f32.mxu0 0.0
    %3651 = vmatmul.mubr.f32.gmra.mrb[0].mxu0 %v3558
    %v3652 = vpop.f32.mrb[0].mxu0
    %v3653 = vadd.f32 0.0, %v3652
    %v3654 = vpop.f32.mrb[0].mxu0
    %3655 = vmatprep.mubr.f32.mxu0 0.0
    %3656 = vmatmul.mubr.f32.gmra.mrb[0].mxu0 %v3561
    %v3657 = vpop.f32.mrb[0].mxu0
    %v3658 = vadd.f32 0.0, %v3657
    %v3659 = vpop.f32.mrb[0].mxu0
    %3660 = vmatprep.mubr.f32.mxu0 0.0
    %3661 = vmatmul.mubr.f32.gmra.mrb[0].mxu0 %v3564
    %v3662 = vpop.f32.mrb[0].mxu0
    %v3663 = vadd.f32 0.0, %v3662
    %v3664 = vpop.f32.mrb[0].mxu0
    %3665 = vdwg.mxu0
    %v3666 = vadd.f32 %v3529, %v3633
    %v3667 = vadd.f32 %v3530, %v3638
    %v3668 = vadd.f32 %v3531, %v3643
    %v3669 = vadd.f32 %v3532, %v3648
    %v3670 = vadd.f32 %v3533, %v3653
    %v3671 = vadd.f32 %v3534, %v3658
    %v3672 = vadd.f32 %v3535, %v3663
    %v3673 = vld [vmem:[#allocation4 + $0x12] sm:$0xff]
    %v3674 = vld [vmem:[#allocation4 + $0x1a] sm:$0xff]
    %v3675 = vld [vmem:[#allocation4 + $0x22] sm:$0xff]
    %v3676 = vld [vmem:[#allocation4 + $0x2a] sm:$0xff]
    %v3677 = vld [vmem:[#allocation4 + $0x32] sm:$0xff]
    %v3678 = vld [vmem:[#allocation4 + $0x3a] sm:$0xff]
    %v3679 = vld [vmem:[#allocation4 + $0x42] sm:$0xff]
    %v3680 = vld [vmem:[%s4 + $0x130] sm:$0xff]
    %v3681 = vld [vmem:[%s4 + $0x138] sm:$0xff]
    %v3683 = vsel %vm44, %v3673, 0
    %v3686 = vsel %vm44, %v3674, 0
    %v3689 = vsel %vm44, %v3675, 0
    %v3692 = vsel %vm44, %v3676, 0
    %v3695 = vsel %vm44, %v3677, 0
    %v3698 = vsel %vm44, %v3678, 0
    %v3701 = vsel %vm44, %v3679, 0
    %3703 = vmatprep.subr.mxu0 0.0
    %3704 = vmatpush1.msra.mxu0 %v3680
    %3705 = vmatprep.subr.mxu0 0.0
    %3706 = vmatpush1.msra.mxu0 %v3681
    %3707 = vmatprep.subr.mxu0 0.0
    %3708 = vmatpush1.msra.mxu0 0.0
    %3709 = vmatprep.subr.mxu0 0.0
    %3710 = vmatpush1.msra.mxu0 0.0
    %3711 = vmatprep.subr.mxu0 0.0
    %3712 = vmatpush1.msra.mxu0 0.0
    %3713 = vmatprep.subr.mxu0 0.0
    %3714 = vmatpush1.msra.mxu0 0.0
    %3715 = vmatprep.subr.mxu0 0.0
    %3716 = vmatpush1.msra.mxu0 0.0
    %3717 = vmatprep.subr.mxu0 0.0
    %3718 = vmatpush1.msra.mxu0 0.0
    %3719 = vmatprep.subr.mxu0 0.0
    %3720 = vmatpush1.msra.mxu0 0.0
    %3721 = vmatprep.subr.mxu0 0.0
    %3722 = vmatpush1.msra.mxu0 0.0
    %3723 = vmatprep.subr.mxu0 0.0
    %3724 = vmatpush1.msra.mxu0 0.0
    %3725 = vmatprep.subr.mxu0 0.0
    %3726 = vmatpush1.msra.mxu0 0.0
    %3727 = vmatprep.subr.mxu0 0.0
    %3728 = vmatpush1.msra.mxu0 0.0
    %3729 = vmatprep.subr.mxu0 0.0
    %3730 = vmatpush1.msra.mxu0 0.0
    %3731 = vmatprep.subr.mxu0 0.0
    %3732 = vmatpush1.msra.mxu0 0.0
    %3733 = vmatprep.subr.mxu0 0.0
    %3734 = vmatpush1.msra.mxu0 0.0
    %3735 = vmatprep.subr.mxu0 0.0
    %3736 = vmatpush1.msra.mxu0 0.0
    %3737 = vmatprep.subr.mxu0 0.0
    %3738 = vmatpush1.msra.mxu0 0.0
    %3739 = vmatprep.subr.mxu0 0.0
    %3740 = vmatpush1.msra.mxu0 0.0
    %3741 = vmatprep.subr.mxu0 0.0
    %3742 = vmatpush1.msra.mxu0 0.0
    %3743 = vmatprep.subr.mxu0 0.0
    %3744 = vmatpush1.msra.mxu0 0.0
    %3745 = vmatprep.subr.mxu0 0.0
    %3746 = vmatpush1.msra.mxu0 0.0
    %3747 = vmatprep.subr.mxu0 0.0
    %3748 = vmatpush1.msra.mxu0 0.0
    %3749 = vmatprep.subr.mxu0 0.0
    %3750 = vmatpush1.msra.mxu0 0.0
    %3751 = vmatprep.subr.mxu0 0.0
    %3752 = vmatpush1.msra.mxu0 0.0
    %3753 = vmatprep.subr.mxu0 0.0
    %3754 = vmatpush1.msra.mxu0 0.0
    %3755 = vmatprep.subr.mxu0 0.0
    %3756 = vmatpush1.msra.mxu0 0.0
    %3757 = vmatprep.subr.mxu0 0.0
    %3758 = vmatpush1.msra.mxu0 0.0
    %3759 = vmatprep.subr.mxu0 0.0
    %3760 = vmatpush1.msra.mxu0 0.0
    %3761 = vmatprep.subr.mxu0 0.0
    %3762 = vmatpush1.msra.mxu0 0.0
    %3763 = vmatprep.subr.mxu0 0.0
    %3764 = vmatpush1.msra.mxu0 0.0
    %3765 = vmatprep.subr.mxu0 0.0
    %3766 = vmatpush1.msra.mxu0 0.0
    %3767 = vmatprep.mubr.f32.mxu0 0.0
    %3768 = vmatmul.mubr.f32.gmra.mrb[0].mxu0 %v3683
    %v3769 = vpop.f32.mrb[0].mxu0
    %v3770 = vadd.f32 0.0, %v3769
    %v3771 = vpop.f32.mrb[0].mxu0
    %3772 = vmatprep.mubr.f32.mxu0 0.0
    %3773 = vmatmul.mubr.f32.gmra.mrb[0].mxu0 %v3686
    %v3774 = vpop.f32.mrb[0].mxu0
    %v3775 = vadd.f32 0.0, %v3774
    %v3776 = vpop.f32.mrb[0].mxu0
    %3777 = vmatprep.mubr.f32.mxu0 0.0
    %3778 = vmatmul.mubr.f32.gmra.mrb[0].mxu0 %v3689
    %v3779 = vpop.f32.mrb[0].mxu0
    %v3780 = vadd.f32 0.0, %v3779
    %v3781 = vpop.f32.mrb[0].mxu0
    %3782 = vmatprep.mubr.f32.mxu0 0.0
    %3783 = vmatmul.mubr.f32.gmra.mrb[0].mxu0 %v3692
    %v3784 = vpop.f32.mrb[0].mxu0
    %v3785 = vadd.f32 0.0, %v3784
    %v3786 = vpop.f32.mrb[0].mxu0
    %3787 = vmatprep.mubr.f32.mxu0 0.0
    %3788 = vmatmul.mubr.f32.gmra.mrb[0].mxu0 %v3695
    %v3789 = vpop.f32.mrb[0].mxu0
    %v3790 = vadd.f32 0.0, %v3789
    %v3791 = vpop.f32.mrb[0].mxu0
    %3792 = vmatprep.mubr.f32.mxu0 0.0
    %3793 = vmatmul.mubr.f32.gmra.mrb[0].mxu0 %v3698
    %v3794 = vpop.f32.mrb[0].mxu0
    %v3795 = vadd.f32 0.0, %v3794
    %v3796 = vpop.f32.mrb[0].mxu0
    %3797 = vmatprep.mubr.f32.mxu0 0.0
    %3798 = vmatmul.mubr.f32.gmra.mrb[0].mxu0 %v3701
    %v3799 = vpop.f32.mrb[0].mxu0
    %v3800 = vadd.f32 0.0, %v3799
    %v3801 = vpop.f32.mrb[0].mxu0
    %3802 = vdwg.mxu0
    %v3803 = vadd.f32 %v3666, %v3770
    %v3804 = vadd.f32 %v3667, %v3775
    %v3805 = vadd.f32 %v3668, %v3780
    %v3806 = vadd.f32 %v3669, %v3785
    %v3807 = vadd.f32 %v3670, %v3790
    %v3808 = vadd.f32 %v3671, %v3795
    %v3809 = vadd.f32 %v3672, %v3800
    %v3810 = vld [vmem:[%s5 + $0x1] sm:$0x1]
    %v3811 = vlaneseq
    %v3812 = vshrl.u32 %v3811, 7
    %v3813 = vsub.s32 0, %v3812
    %v3814 = vrot.slane %v3810, %v3813
    %v3815 = vadd.f32 %v3803, %v3814
    %v3816 = vadd.f32 %v3804, %v3814
    %v3817 = vadd.f32 %v3805, %v3814
    %v3818 = vadd.f32 %v3806, %v3814
    %v3819 = vadd.f32 %v3807, %v3814
    %v3820 = vadd.f32 %v3808, %v3814
    %v3821 = vadd.f32 %v3809, %v3814
    %vm3822 = vcmp.ge.f32.partialorder %v3815, 0.0
    %vm3823 = vcmp.ge.f32.partialorder %v3816, 0.0
    %vm3824 = vcmp.ge.f32.partialorder %v3817, 0.0
    %vm3825 = vcmp.ge.f32.partialorder %v3818, 0.0
    %vm3826 = vcmp.ge.f32.partialorder %v3819, 0.0
    %vm3827 = vcmp.ge.f32.partialorder %v3820, 0.0
    %vm3828 = vcmp.ge.f32.partialorder %v3821, 0.0
    %v3829 = vmul.f32 %v3815, 0.01
    %v3830 = vmul.f32 %v3816, 0.01
    %v3831 = vmul.f32 %v3817, 0.01
    %v3832 = vmul.f32 %v3818, 0.01
    %v3833 = vmul.f32 %v3819, 0.01
    %v3834 = vmul.f32 %v3820, 0.01
    %v3835 = vmul.f32 %v3821, 0.01
    %v3836 = vsel %vm3822, %v3815, %v3829
    %v3837 = vsel %vm3823, %v3816, %v3830
    %v3838 = vsel %vm3824, %v3817, %v3831
    %v3839 = vsel %vm3825, %v3818, %v3832
    %v3840 = vsel %vm3826, %v3819, %v3833
    %v3841 = vsel %vm3827, %v3820, %v3834
    %v3842 = vsel %vm3828, %v3821, %v3835
    %3843 = vst.msk [vmem:[#allocation5] sm:$0xff] %vm44, %v3836
    %3844 = vst.msk [vmem:[#allocation5 + $0x8] sm:$0xff] %vm44, %v3837
    %3845 = vst.msk [vmem:[#allocation5 + $0x10] sm:$0xff] %vm44, %v3838
    %3846 = vst.msk [vmem:[#allocation5 + $0x18] sm:$0xff] %vm44, %v3839
    %3847 = vst.msk [vmem:[#allocation5 + $0x20] sm:$0xff] %vm44, %v3840
    %3848 = vst.msk [vmem:[#allocation5 + $0x28] sm:$0xff] %vm44, %v3841
    %3849 = vst.msk [vmem:[#allocation5 + $0x30] sm:$0xff] %vm44, %v3842
    %v3850 = vld [vmem:[#allocation5] sm:$0xff]
    %v3851 = vld [vmem:[#allocation5 + $0x8] sm:$0xff]
    %v3852 = vld [vmem:[#allocation5 + $0x10] sm:$0xff]
    %v3853 = vld [vmem:[#allocation5 + $0x18] sm:$0xff]
    %v3854 = vld [vmem:[#allocation5 + $0x20] sm:$0xff]
    %v3855 = vld [vmem:[#allocation5 + $0x28] sm:$0xff]
    %v3856 = vld [vmem:[#allocation5 + $0x30] sm:$0x3]
    %v3857 = vld [vmem:[%s4 + $0x140] sm:$0xff]
    %v3858 = vld [vmem:[%s4 + $0x148] sm:$0xff]
    %v3859 = vld [vmem:[#allocation5 + $0x2] sm:$0xff]
    %v3860 = vld [vmem:[#allocation5 + $0xa] sm:$0xff]
    %v3861 = vld [vmem:[#allocation5 + $0x12] sm:$0xff]
    %v3862 = vld [vmem:[#allocation5 + $0x1a] sm:$0xff]
    %v3863 = vld [vmem:[#allocation5 + $0x22] sm:$0xff]
    %v3864 = vld [vmem:[#allocation5 + $0x2a] sm:$0xff]
    %v3865 = vld [vmem:[#allocation5 + $0x32] sm:$0x3]
    %v3866 = vld [vmem:[%s4 + $0x150] sm:$0xff]
    %v3867 = vld [vmem:[%s4 + $0x158] sm:$0xff]
    %v3869 = vsel %vm44, %v3859, 0
    %v3872 = vsel %vm44, %v3860, 0
    %v3875 = vsel %vm44, %v3861, 0
    %v3878 = vsel %vm44, %v3862, 0
    %v3881 = vsel %vm44, %v3863, 0
    %v3884 = vsel %vm44, %v3864, 0
    %v3887 = vsel %vm44, %v3865, 0
    %3889 = vmatprep.subr.mxu0 0.0
    %3890 = vmatpush1.msra.mxu0 %v3866
    %3891 = vmatprep.subr.mxu0 0.0
    %3892 = vmatpush1.msra.mxu0 %v3867
    %3893 = vmatprep.subr.mxu0 0.0
    %3894 = vmatpush1.msra.mxu0 0.0
    %3895 = vmatprep.subr.mxu0 0.0
    %3896 = vmatpush1.msra.mxu0 0.0
    %3897 = vmatprep.subr.mxu0 0.0
    %3898 = vmatpush1.msra.mxu0 0.0
    %3899 = vmatprep.subr.mxu0 0.0
    %3900 = vmatpush1.msra.mxu0 0.0
    %3901 = vmatprep.subr.mxu0 0.0
    %3902 = vmatpush1.msra.mxu0 0.0
    %3903 = vmatprep.subr.mxu0 0.0
    %3904 = vmatpush1.msra.mxu0 0.0
    %3905 = vmatprep.subr.mxu0 0.0
    %3906 = vmatpush1.msra.mxu0 0.0
    %3907 = vmatprep.subr.mxu0 0.0
    %3908 = vmatpush1.msra.mxu0 0.0
    %3909 = vmatprep.subr.mxu0 0.0
    %3910 = vmatpush1.msra.mxu0 0.0
    %3911 = vmatprep.subr.mxu0 0.0
    %3912 = vmatpush1.msra.mxu0 0.0
    %3913 = vmatprep.subr.mxu0 0.0
    %3914 = vmatpush1.msra.mxu0 0.0
    %3915 = vmatprep.subr.mxu0 0.0
    %3916 = vmatpush1.msra.mxu0 0.0
    %3917 = vmatprep.subr.mxu0 0.0
    %3918 = vmatpush1.msra.mxu0 0.0
    %3919 = vmatprep.subr.mxu0 0.0
    %3920 = vmatpush1.msra.mxu0 0.0
    %3921 = vmatprep.subr.mxu0 0.0
    %3922 = vmatpush1.msra.mxu0 0.0
    %3923 = vmatprep.subr.mxu0 0.0
    %3924 = vmatpush1.msra.mxu0 0.0
    %3925 = vmatprep.subr.mxu0 0.0
    %3926 = vmatpush1.msra.mxu0 0.0
    %3927 = vmatprep.subr.mxu0 0.0
    %3928 = vmatpush1.msra.mxu0 0.0
    %3929 = vmatprep.subr.mxu0 0.0
    %3930 = vmatpush1.msra.mxu0 0.0
    %3931 = vmatprep.subr.mxu0 0.0
    %3932 = vmatpush1.msra.mxu0 0.0
    %3933 = vmatprep.subr.mxu0 0.0
    %3934 = vmatpush1.msra.mxu0 0.0
    %3935 = vmatprep.subr.mxu0 0.0
    %3936 = vmatpush1.msra.mxu0 0.0
    %3937 = vmatprep.subr.mxu0 0.0
    %3938 = vmatpush1.msra.mxu0 0.0
    %3939 = vmatprep.subr.mxu0 0.0
    %3940 = vmatpush1.msra.mxu0 0.0
    %3941 = vmatprep.subr.mxu0 0.0
    %3942 = vmatpush1.msra.mxu0 0.0
    %3943 = vmatprep.subr.mxu0 0.0
    %3944 = vmatpush1.msra.mxu0 0.0
    %3945 = vmatprep.subr.mxu0 0.0
    %3946 = vmatpush1.msra.mxu0 0.0
    %3947 = vmatprep.subr.mxu0 0.0
    %3948 = vmatpush1.msra.mxu0 0.0
    %3949 = vmatprep.subr.mxu0 0.0
    %3950 = vmatpush1.msra.mxu0 0.0
    %3951 = vmatprep.subr.mxu0 0.0
    %3952 = vmatpush1.msra.mxu0 0.0
    %3953 = vmatprep.mubr.f32.mxu0 0.0
    %3954 = vmatmul.mubr.f32.gmra.mrb[0].mxu0 %v3869
    %v3955 = vpop.f32.mrb[0].mxu0
    %v3956 = vadd.f32 0.0, %v3955
    %v3957 = vpop.f32.mrb[0].mxu0
    %3958 = vmatprep.mubr.f32.mxu0 0.0
    %3959 = vmatmul.mubr.f32.gmra.mrb[0].mxu0 %v3872
    %v3960 = vpop.f32.mrb[0].mxu0
    %v3961 = vadd.f32 0.0, %v3960
    %v3962 = vpop.f32.mrb[0].mxu0
    %3963 = vmatprep.mubr.f32.mxu0 0.0
    %3964 = vmatmul.mubr.f32.gmra.mrb[0].mxu0 %v3875
    %v3965 = vpop.f32.mrb[0].mxu0
    %v3966 = vadd.f32 0.0, %v3965
    %v3967 = vpop.f32.mrb[0].mxu0
    %3968 = vmatprep.mubr.f32.mxu0 0.0
    %3969 = vmatmul.mubr.f32.gmra.mrb[0].mxu0 %v3878
    %v3970 = vpop.f32.mrb[0].mxu0
    %v3971 = vadd.f32 0.0, %v3970
    %v3972 = vpop.f32.mrb[0].mxu0
    %3973 = vmatprep.mubr.f32.mxu0 0.0
    %3974 = vmatmul.mubr.f32.gmra.mrb[0].mxu0 %v3881
    %v3975 = vpop.f32.mrb[0].mxu0
    %v3976 = vadd.f32 0.0, %v3975
    %v3977 = vpop.f32.mrb[0].mxu0
    %3978 = vmatprep.mubr.f32.mxu0 0.0
    %3979 = vmatmul.mubr.f32.gmra.mrb[0].mxu0 %v3884
    %v3980 = vpop.f32.mrb[0].mxu0
    %v3981 = vadd.f32 0.0, %v3980
    %v3982 = vpop.f32.mrb[0].mxu0
    %3983 = vmatprep.mubr.f32.mxu0 0.0
    %3984 = vmatmul.mubr.f32.gmra.mrb[0].mxu0 %v3887
    %v3985 = vpop.f32.mrb[0].mxu0
    %v3986 = vadd.f32 0.0, %v3985
    %v3987 = vpop.f32.mrb[0].mxu0
    %3988 = vdwg.mxu0
    %v3990 = vsel %vm44, %v3850, 0
    %v3993 = vsel %vm44, %v3851, 0
    %v3996 = vsel %vm44, %v3852, 0
    %v3999 = vsel %vm44, %v3853, 0
    %v4002 = vsel %vm44, %v3854, 0
    %v4005 = vsel %vm44, %v3855, 0
    %v4008 = vsel %vm44, %v3856, 0
    %4010 = vmatprep.subr.mxu0 0.0
    %4011 = vmatpush1.msra.mxu0 %v3857
    %4012 = vmatprep.subr.mxu0 0.0
    %4013 = vmatpush1.msra.mxu0 %v3858
    %4014 = vmatprep.subr.mxu0 0.0
    %4015 = vmatpush1.msra.mxu0 0.0
    %4016 = vmatprep.subr.mxu0 0.0
    %4017 = vmatpush1.msra.mxu0 0.0
    %4018 = vmatprep.subr.mxu0 0.0
    %4019 = vmatpush1.msra.mxu0 0.0
    %4020 = vmatprep.subr.mxu0 0.0
    %4021 = vmatpush1.msra.mxu0 0.0
    %4022 = vmatprep.subr.mxu0 0.0
    %4023 = vmatpush1.msra.mxu0 0.0
    %4024 = vmatprep.subr.mxu0 0.0
    %4025 = vmatpush1.msra.mxu0 0.0
    %4026 = vmatprep.subr.mxu0 0.0
    %4027 = vmatpush1.msra.mxu0 0.0
    %4028 = vmatprep.subr.mxu0 0.0
    %4029 = vmatpush1.msra.mxu0 0.0
    %4030 = vmatprep.subr.mxu0 0.0
    %4031 = vmatpush1.msra.mxu0 0.0
    %4032 = vmatprep.subr.mxu0 0.0
    %4033 = vmatpush1.msra.mxu0 0.0
    %4034 = vmatprep.subr.mxu0 0.0
    %4035 = vmatpush1.msra.mxu0 0.0
    %4036 = vmatprep.subr.mxu0 0.0
    %4037 = vmatpush1.msra.mxu0 0.0
    %4038 = vmatprep.subr.mxu0 0.0
    %4039 = vmatpush1.msra.mxu0 0.0
    %4040 = vmatprep.subr.mxu0 0.0
    %4041 = vmatpush1.msra.mxu0 0.0
    %4042 = vmatprep.subr.mxu0 0.0
    %4043 = vmatpush1.msra.mxu0 0.0
    %4044 = vmatprep.subr.mxu0 0.0
    %4045 = vmatpush1.msra.mxu0 0.0
    %4046 = vmatprep.subr.mxu0 0.0
    %4047 = vmatpush1.msra.mxu0 0.0
    %4048 = vmatprep.subr.mxu0 0.0
    %4049 = vmatpush1.msra.mxu0 0.0
    %4050 = vmatprep.subr.mxu0 0.0
    %4051 = vmatpush1.msra.mxu0 0.0
    %4052 = vmatprep.subr.mxu0 0.0
    %4053 = vmatpush1.msra.mxu0 0.0
    %4054 = vmatprep.subr.mxu0 0.0
    %4055 = vmatpush1.msra.mxu0 0.0
    %4056 = vmatprep.subr.mxu0 0.0
    %4057 = vmatpush1.msra.mxu0 0.0
    %4058 = vmatprep.subr.mxu0 0.0
    %4059 = vmatpush1.msra.mxu0 0.0
    %4060 = vmatprep.subr.mxu0 0.0
    %4061 = vmatpush1.msra.mxu0 0.0
    %4062 = vmatprep.subr.mxu0 0.0
    %4063 = vmatpush1.msra.mxu0 0.0
    %4064 = vmatprep.subr.mxu0 0.0
    %4065 = vmatpush1.msra.mxu0 0.0
    %4066 = vmatprep.subr.mxu0 0.0
    %4067 = vmatpush1.msra.mxu0 0.0
    %4068 = vmatprep.subr.mxu0 0.0
    %4069 = vmatpush1.msra.mxu0 0.0
    %4070 = vmatprep.subr.mxu0 0.0
    %4071 = vmatpush1.msra.mxu0 0.0
    %4072 = vmatprep.subr.mxu0 0.0
    %4073 = vmatpush1.msra.mxu0 0.0
    %4074 = vmatprep.mubr.f32.mxu0 0.0
    %4075 = vmatmul.mubr.f32.gmra.mrb[0].mxu0 %v3990
    %v4076 = vpop.f32.mrb[0].mxu0
    %v4077 = vadd.f32 %v3956, %v4076
    %v4078 = vpop.f32.mrb[0].mxu0
    %4079 = vmatprep.mubr.f32.mxu0 0.0
    %4080 = vmatmul.mubr.f32.gmra.mrb[0].mxu0 %v3993
    %v4081 = vpop.f32.mrb[0].mxu0
    %v4082 = vadd.f32 %v3961, %v4081
    %v4083 = vpop.f32.mrb[0].mxu0
    %4084 = vmatprep.mubr.f32.mxu0 0.0
    %4085 = vmatmul.mubr.f32.gmra.mrb[0].mxu0 %v3996
    %v4086 = vpop.f32.mrb[0].mxu0
    %v4087 = vadd.f32 %v3966, %v4086
    %v4088 = vpop.f32.mrb[0].mxu0
    %4089 = vmatprep.mubr.f32.mxu0 0.0
    %4090 = vmatmul.mubr.f32.gmra.mrb[0].mxu0 %v3999
    %v4091 = vpop.f32.mrb[0].mxu0
    %v4092 = vadd.f32 %v3971, %v4091
    %v4093 = vpop.f32.mrb[0].mxu0
    %4094 = vmatprep.mubr.f32.mxu0 0.0
    %4095 = vmatmul.mubr.f32.gmra.mrb[0].mxu0 %v4002
    %v4096 = vpop.f32.mrb[0].mxu0
    %v4097 = vadd.f32 %v3976, %v4096
    %v4098 = vpop.f32.mrb[0].mxu0
    %4099 = vmatprep.mubr.f32.mxu0 0.0
    %4100 = vmatmul.mubr.f32.gmra.mrb[0].mxu0 %v4005
    %v4101 = vpop.f32.mrb[0].mxu0
    %v4102 = vadd.f32 %v3981, %v4101
    %v4103 = vpop.f32.mrb[0].mxu0
    %4104 = vmatprep.mubr.f32.mxu0 0.0
    %4105 = vmatmul.mubr.f32.gmra.mrb[0].mxu0 %v4008
    %v4106 = vpop.f32.mrb[0].mxu0
    %v4107 = vadd.f32 %v3986, %v4106
    %v4108 = vpop.f32.mrb[0].mxu0
    %4109 = vdwg.mxu0
    %v4110 = vld [vmem:[#allocation5 + $0x4] sm:$0xff]
    %v4111 = vld [vmem:[#allocation5 + $0xc] sm:$0xff]
    %v4112 = vld [vmem:[#allocation5 + $0x14] sm:$0xff]
    %v4113 = vld [vmem:[#allocation5 + $0x1c] sm:$0xff]
    %v4114 = vld [vmem:[#allocation5 + $0x24] sm:$0xff]
    %v4115 = vld [vmem:[#allocation5 + $0x2c] sm:$0xff]
    %v4116 = vld [vmem:[#allocation5 + $0x34] sm:$0x3]
    %v4117 = vld [vmem:[%s4 + $0x160] sm:$0xff]
    %v4118 = vld [vmem:[%s4 + $0x168] sm:$0xff]
    %v4120 = vsel %vm44, %v4110, 0
    %v4123 = vsel %vm44, %v4111, 0
    %v4126 = vsel %vm44, %v4112, 0
    %v4129 = vsel %vm44, %v4113, 0
    %v4132 = vsel %vm44, %v4114, 0
    %v4135 = vsel %vm44, %v4115, 0
    %v4138 = vsel %vm44, %v4116, 0
    %4140 = vmatprep.subr.mxu0 0.0
    %4141 = vmatpush1.msra.mxu0 %v4117
    %4142 = vmatprep.subr.mxu0 0.0
    %4143 = vmatpush1.msra.mxu0 %v4118
    %4144 = vmatprep.subr.mxu0 0.0
    %4145 = vmatpush1.msra.mxu0 0.0
    %4146 = vmatprep.subr.mxu0 0.0
    %4147 = vmatpush1.msra.mxu0 0.0
    %4148 = vmatprep.subr.mxu0 0.0
    %4149 = vmatpush1.msra.mxu0 0.0
    %4150 = vmatprep.subr.mxu0 0.0
    %4151 = vmatpush1.msra.mxu0 0.0
    %4152 = vmatprep.subr.mxu0 0.0
    %4153 = vmatpush1.msra.mxu0 0.0
    %4154 = vmatprep.subr.mxu0 0.0
    %4155 = vmatpush1.msra.mxu0 0.0
    %4156 = vmatprep.subr.mxu0 0.0
    %4157 = vmatpush1.msra.mxu0 0.0
    %4158 = vmatprep.subr.mxu0 0.0
    %4159 = vmatpush1.msra.mxu0 0.0
    %4160 = vmatprep.subr.mxu0 0.0
    %4161 = vmatpush1.msra.mxu0 0.0
    %4162 = vmatprep.subr.mxu0 0.0
    %4163 = vmatpush1.msra.mxu0 0.0
    %4164 = vmatprep.subr.mxu0 0.0
    %4165 = vmatpush1.msra.mxu0 0.0
    %4166 = vmatprep.subr.mxu0 0.0
    %4167 = vmatpush1.msra.mxu0 0.0
    %4168 = vmatprep.subr.mxu0 0.0
    %4169 = vmatpush1.msra.mxu0 0.0
    %4170 = vmatprep.subr.mxu0 0.0
    %4171 = vmatpush1.msra.mxu0 0.0
    %4172 = vmatprep.subr.mxu0 0.0
    %4173 = vmatpush1.msra.mxu0 0.0
    %4174 = vmatprep.subr.mxu0 0.0
    %4175 = vmatpush1.msra.mxu0 0.0
    %4176 = vmatprep.subr.mxu0 0.0
    %4177 = vmatpush1.msra.mxu0 0.0
    %4178 = vmatprep.subr.mxu0 0.0
    %4179 = vmatpush1.msra.mxu0 0.0
    %4180 = vmatprep.subr.mxu0 0.0
    %4181 = vmatpush1.msra.mxu0 0.0
    %4182 = vmatprep.subr.mxu0 0.0
    %4183 = vmatpush1.msra.mxu0 0.0
    %4184 = vmatprep.subr.mxu0 0.0
    %4185 = vmatpush1.msra.mxu0 0.0
    %4186 = vmatprep.subr.mxu0 0.0
    %4187 = vmatpush1.msra.mxu0 0.0
    %4188 = vmatprep.subr.mxu0 0.0
    %4189 = vmatpush1.msra.mxu0 0.0
    %4190 = vmatprep.subr.mxu0 0.0
    %4191 = vmatpush1.msra.mxu0 0.0
    %4192 = vmatprep.subr.mxu0 0.0
    %4193 = vmatpush1.msra.mxu0 0.0
    %4194 = vmatprep.subr.mxu0 0.0
    %4195 = vmatpush1.msra.mxu0 0.0
    %4196 = vmatprep.subr.mxu0 0.0
    %4197 = vmatpush1.msra.mxu0 0.0
    %4198 = vmatprep.subr.mxu0 0.0
    %4199 = vmatpush1.msra.mxu0 0.0
    %4200 = vmatprep.subr.mxu0 0.0
    %4201 = vmatpush1.msra.mxu0 0.0
    %4202 = vmatprep.subr.mxu0 0.0
    %4203 = vmatpush1.msra.mxu0 0.0
    %4204 = vmatprep.mubr.f32.mxu0 0.0
    %4205 = vmatmul.mubr.f32.gmra.mrb[0].mxu0 %v4120
    %v4206 = vpop.f32.mrb[0].mxu0
    %v4207 = vadd.f32 0.0, %v4206
    %v4208 = vpop.f32.mrb[0].mxu0
    %4209 = vmatprep.mubr.f32.mxu0 0.0
    %4210 = vmatmul.mubr.f32.gmra.mrb[0].mxu0 %v4123
    %v4211 = vpop.f32.mrb[0].mxu0
    %v4212 = vadd.f32 0.0, %v4211
    %v4213 = vpop.f32.mrb[0].mxu0
    %4214 = vmatprep.mubr.f32.mxu0 0.0
    %4215 = vmatmul.mubr.f32.gmra.mrb[0].mxu0 %v4126
    %v4216 = vpop.f32.mrb[0].mxu0
    %v4217 = vadd.f32 0.0, %v4216
    %v4218 = vpop.f32.mrb[0].mxu0
    %4219 = vmatprep.mubr.f32.mxu0 0.0
    %4220 = vmatmul.mubr.f32.gmra.mrb[0].mxu0 %v4129
    %v4221 = vpop.f32.mrb[0].mxu0
    %v4222 = vadd.f32 0.0, %v4221
    %v4223 = vpop.f32.mrb[0].mxu0
    %4224 = vmatprep.mubr.f32.mxu0 0.0
    %4225 = vmatmul.mubr.f32.gmra.mrb[0].mxu0 %v4132
    %v4226 = vpop.f32.mrb[0].mxu0
    %v4227 = vadd.f32 0.0, %v4226
    %v4228 = vpop.f32.mrb[0].mxu0
    %4229 = vmatprep.mubr.f32.mxu0 0.0
    %4230 = vmatmul.mubr.f32.gmra.mrb[0].mxu0 %v4135
    %v4231 = vpop.f32.mrb[0].mxu0
    %v4232 = vadd.f32 0.0, %v4231
    %v4233 = vpop.f32.mrb[0].mxu0
    %4234 = vmatprep.mubr.f32.mxu0 0.0
    %4235 = vmatmul.mubr.f32.gmra.mrb[0].mxu0 %v4138
    %v4236 = vpop.f32.mrb[0].mxu0
    %v4237 = vadd.f32 0.0, %v4236
    %v4238 = vpop.f32.mrb[0].mxu0
    %4239 = vdwg.mxu0
    %v4240 = vadd.f32 %v4077, %v4207
    %v4241 = vadd.f32 %v4082, %v4212
    %v4242 = vadd.f32 %v4087, %v4217
    %v4243 = vadd.f32 %v4092, %v4222
    %v4244 = vadd.f32 %v4097, %v4227
    %v4245 = vadd.f32 %v4102, %v4232
    %v4246 = vadd.f32 %v4107, %v4237
    %v4247 = vld [vmem:[#allocation5 + $0x6] sm:$0xff]
    %v4248 = vld [vmem:[#allocation5 + $0xe] sm:$0xff]
    %v4249 = vld [vmem:[#allocation5 + $0x16] sm:$0xff]
    %v4250 = vld [vmem:[#allocation5 + $0x1e] sm:$0xff]
    %v4251 = vld [vmem:[#allocation5 + $0x26] sm:$0xff]
    %v4252 = vld [vmem:[#allocation5 + $0x2e] sm:$0xff]
    %v4253 = vld [vmem:[#allocation5 + $0x36] sm:$0x3]
    %v4254 = vld [vmem:[%s4 + $0x170] sm:$0xff]
    %v4255 = vld [vmem:[%s4 + $0x178] sm:$0xff]
    %v4257 = vsel %vm44, %v4247, 0
    %v4260 = vsel %vm44, %v4248, 0
    %v4263 = vsel %vm44, %v4249, 0
    %v4266 = vsel %vm44, %v4250, 0
    %v4269 = vsel %vm44, %v4251, 0
    %v4272 = vsel %vm44, %v4252, 0
    %v4275 = vsel %vm44, %v4253, 0
    %4277 = vmatprep.subr.mxu0 0.0
    %4278 = vmatpush1.msra.mxu0 %v4254
    %4279 = vmatprep.subr.mxu0 0.0
    %4280 = vmatpush1.msra.mxu0 %v4255
    %4281 = vmatprep.subr.mxu0 0.0
    %4282 = vmatpush1.msra.mxu0 0.0
    %4283 = vmatprep.subr.mxu0 0.0
    %4284 = vmatpush1.msra.mxu0 0.0
    %4285 = vmatprep.subr.mxu0 0.0
    %4286 = vmatpush1.msra.mxu0 0.0
    %4287 = vmatprep.subr.mxu0 0.0
    %4288 = vmatpush1.msra.mxu0 0.0
    %4289 = vmatprep.subr.mxu0 0.0
    %4290 = vmatpush1.msra.mxu0 0.0
    %4291 = vmatprep.subr.mxu0 0.0
    %4292 = vmatpush1.msra.mxu0 0.0
    %4293 = vmatprep.subr.mxu0 0.0
    %4294 = vmatpush1.msra.mxu0 0.0
    %4295 = vmatprep.subr.mxu0 0.0
    %4296 = vmatpush1.msra.mxu0 0.0
    %4297 = vmatprep.subr.mxu0 0.0
    %4298 = vmatpush1.msra.mxu0 0.0
    %4299 = vmatprep.subr.mxu0 0.0
    %4300 = vmatpush1.msra.mxu0 0.0
    %4301 = vmatprep.subr.mxu0 0.0
    %4302 = vmatpush1.msra.mxu0 0.0
    %4303 = vmatprep.subr.mxu0 0.0
    %4304 = vmatpush1.msra.mxu0 0.0
    %4305 = vmatprep.subr.mxu0 0.0
    %4306 = vmatpush1.msra.mxu0 0.0
    %4307 = vmatprep.subr.mxu0 0.0
    %4308 = vmatpush1.msra.mxu0 0.0
    %4309 = vmatprep.subr.mxu0 0.0
    %4310 = vmatpush1.msra.mxu0 0.0
    %4311 = vmatprep.subr.mxu0 0.0
    %4312 = vmatpush1.msra.mxu0 0.0
    %4313 = vmatprep.subr.mxu0 0.0
    %4314 = vmatpush1.msra.mxu0 0.0
    %4315 = vmatprep.subr.mxu0 0.0
    %4316 = vmatpush1.msra.mxu0 0.0
    %4317 = vmatprep.subr.mxu0 0.0
    %4318 = vmatpush1.msra.mxu0 0.0
    %4319 = vmatprep.subr.mxu0 0.0
    %4320 = vmatpush1.msra.mxu0 0.0
    %4321 = vmatprep.subr.mxu0 0.0
    %4322 = vmatpush1.msra.mxu0 0.0
    %4323 = vmatprep.subr.mxu0 0.0
    %4324 = vmatpush1.msra.mxu0 0.0
    %4325 = vmatprep.subr.mxu0 0.0
    %4326 = vmatpush1.msra.mxu0 0.0
    %4327 = vmatprep.subr.mxu0 0.0
    %4328 = vmatpush1.msra.mxu0 0.0
    %4329 = vmatprep.subr.mxu0 0.0
    %4330 = vmatpush1.msra.mxu0 0.0
    %4331 = vmatprep.subr.mxu0 0.0
    %4332 = vmatpush1.msra.mxu0 0.0
    %4333 = vmatprep.subr.mxu0 0.0
    %4334 = vmatpush1.msra.mxu0 0.0
    %4335 = vmatprep.subr.mxu0 0.0
    %4336 = vmatpush1.msra.mxu0 0.0
    %4337 = vmatprep.subr.mxu0 0.0
    %4338 = vmatpush1.msra.mxu0 0.0
    %4339 = vmatprep.subr.mxu0 0.0
    %4340 = vmatpush1.msra.mxu0 0.0
    %4341 = vmatprep.mubr.f32.mxu0 0.0
    %4342 = vmatmul.mubr.f32.gmra.mrb[0].mxu0 %v4257
    %v4343 = vpop.f32.mrb[0].mxu0
    %v4344 = vadd.f32 0.0, %v4343
    %v4345 = vpop.f32.mrb[0].mxu0
    %4346 = vmatprep.mubr.f32.mxu0 0.0
    %4347 = vmatmul.mubr.f32.gmra.mrb[0].mxu0 %v4260
    %v4348 = vpop.f32.mrb[0].mxu0
    %v4349 = vadd.f32 0.0, %v4348
    %v4350 = vpop.f32.mrb[0].mxu0
    %4351 = vmatprep.mubr.f32.mxu0 0.0
    %4352 = vmatmul.mubr.f32.gmra.mrb[0].mxu0 %v4263
    %v4353 = vpop.f32.mrb[0].mxu0
    %v4354 = vadd.f32 0.0, %v4353
    %v4355 = vpop.f32.mrb[0].mxu0
    %4356 = vmatprep.mubr.f32.mxu0 0.0
    %4357 = vmatmul.mubr.f32.gmra.mrb[0].mxu0 %v4266
    %v4358 = vpop.f32.mrb[0].mxu0
    %v4359 = vadd.f32 0.0, %v4358
    %v4360 = vpop.f32.mrb[0].mxu0
    %4361 = vmatprep.mubr.f32.mxu0 0.0
    %4362 = vmatmul.mubr.f32.gmra.mrb[0].mxu0 %v4269
    %v4363 = vpop.f32.mrb[0].mxu0
    %v4364 = vadd.f32 0.0, %v4363
    %v4365 = vpop.f32.mrb[0].mxu0
    %4366 = vmatprep.mubr.f32.mxu0 0.0
    %4367 = vmatmul.mubr.f32.gmra.mrb[0].mxu0 %v4272
    %v4368 = vpop.f32.mrb[0].mxu0
    %v4369 = vadd.f32 0.0, %v4368
    %v4370 = vpop.f32.mrb[0].mxu0
    %4371 = vmatprep.mubr.f32.mxu0 0.0
    %4372 = vmatmul.mubr.f32.gmra.mrb[0].mxu0 %v4275
    %v4373 = vpop.f32.mrb[0].mxu0
    %v4374 = vadd.f32 0.0, %v4373
    %v4375 = vpop.f32.mrb[0].mxu0
    %4376 = vdwg.mxu0
    %v4377 = vadd.f32 %v4240, %v4344
    %v4378 = vadd.f32 %v4241, %v4349
    %v4379 = vadd.f32 %v4242, %v4354
    %v4380 = vadd.f32 %v4243, %v4359
    %v4381 = vadd.f32 %v4244, %v4364
    %v4382 = vadd.f32 %v4245, %v4369
    %v4383 = vadd.f32 %v4246, %v4374
    %v4384 = vld [vmem:[%s5 + $0x2] sm:$0x1]
    %v4385 = vlaneseq
    %v4386 = vshrl.u32 %v4385, 7
    %v4387 = vsub.s32 0, %v4386
    %v4388 = vrot.slane %v4384, %v4387
    %v4389 = vadd.f32 %v4377, %v4388
    %v4390 = vadd.f32 %v4378, %v4388
    %v4391 = vadd.f32 %v4379, %v4388
    %v4392 = vadd.f32 %v4380, %v4388
    %v4393 = vadd.f32 %v4381, %v4388
    %v4394 = vadd.f32 %v4382, %v4388
    %v4395 = vadd.f32 %v4383, %v4388
    %vm4396 = vcmp.ge.f32.partialorder %v4389, 0.0
    %vm4397 = vcmp.ge.f32.partialorder %v4390, 0.0
    %vm4398 = vcmp.ge.f32.partialorder %v4391, 0.0
    %vm4399 = vcmp.ge.f32.partialorder %v4392, 0.0
    %vm4400 = vcmp.ge.f32.partialorder %v4393, 0.0
    %vm4401 = vcmp.ge.f32.partialorder %v4394, 0.0
    %vm4402 = vcmp.ge.f32.partialorder %v4395, 0.0
    %v4403 = vmul.f32 %v4389, 0.01
    %v4404 = vmul.f32 %v4390, 0.01
    %v4405 = vmul.f32 %v4391, 0.01
    %v4406 = vmul.f32 %v4392, 0.01
    %v4407 = vmul.f32 %v4393, 0.01
    %v4408 = vmul.f32 %v4394, 0.01
    %v4409 = vmul.f32 %v4395, 0.01
    %v4410 = vsel %vm4396, %v4389, %v4403
    %v4411 = vsel %vm4397, %v4390, %v4404
    %v4412 = vsel %vm4398, %v4391, %v4405
    %v4413 = vsel %vm4399, %v4392, %v4406
    %v4414 = vsel %vm4400, %v4393, %v4407
    %v4415 = vsel %vm4401, %v4394, %v4408
    %v4416 = vsel %vm4402, %v4395, %v4409
    %4417 = vst.msk [vmem:[#allocation4] sm:$0xff] %vm44, %v4410
    %4418 = vst.msk [vmem:[#allocation4 + $0x8] sm:$0xff] %vm44, %v4411
    %4419 = vst.msk [vmem:[#allocation4 + $0x10] sm:$0xff] %vm44, %v4412
    %4420 = vst.msk [vmem:[#allocation4 + $0x18] sm:$0xff] %vm44, %v4413
    %4421 = vst.msk [vmem:[#allocation4 + $0x20] sm:$0xff] %vm44, %v4414
    %4422 = vst.msk [vmem:[#allocation4 + $0x28] sm:$0xff] %vm44, %v4415
    %4423 = vst.msk [vmem:[#allocation4 + $0x30] sm:$0x3] %vm284, %v4416
    %v4424 = vld [vmem:[#allocation4] sm:$0xff]
    %v4425 = vld [vmem:[#allocation4 + $0x8] sm:$0xff]
    %v4426 = vld [vmem:[#allocation4 + $0x10] sm:$0xff]
    %v4427 = vld [vmem:[#allocation4 + $0x18] sm:$0xff]
    %v4428 = vld [vmem:[#allocation4 + $0x20] sm:$0xff]
    %v4429 = vld [vmem:[#allocation4 + $0x28] sm:$0xff]
    %v4430 = vld [vmem:[%s4 + $0x180] sm:$0xff]
    %v4431 = vld [vmem:[%s4 + $0x188] sm:$0xff]
    %v4432 = vld [vmem:[#allocation4 + $0x2] sm:$0xff]
    %v4433 = vld [vmem:[#allocation4 + $0xa] sm:$0xff]
    %v4434 = vld [vmem:[#allocation4 + $0x12] sm:$0xff]
    %v4435 = vld [vmem:[#allocation4 + $0x1a] sm:$0xff]
    %v4436 = vld [vmem:[#allocation4 + $0x22] sm:$0xff]
    %v4437 = vld [vmem:[#allocation4 + $0x2a] sm:$0xff]
    %v4438 = vld [vmem:[%s4 + $0x190] sm:$0xff]
    %v4439 = vld [vmem:[%s4 + $0x198] sm:$0xff]
    %v4441 = vsel %vm44, %v4432, 0
    %v4444 = vsel %vm44, %v4433, 0
    %v4447 = vsel %vm44, %v4434, 0
    %v4450 = vsel %vm44, %v4435, 0
    %v4453 = vsel %vm44, %v4436, 0
    %v4456 = vsel %vm44, %v4437, 0
    %4458 = vmatprep.subr.mxu0 0.0
    %4459 = vmatpush1.msra.mxu0 %v4438
    %4460 = vmatprep.subr.mxu0 0.0
    %4461 = vmatpush1.msra.mxu0 %v4439
    %4462 = vmatprep.subr.mxu0 0.0
    %4463 = vmatpush1.msra.mxu0 0.0
    %4464 = vmatprep.subr.mxu0 0.0
    %4465 = vmatpush1.msra.mxu0 0.0
    %4466 = vmatprep.subr.mxu0 0.0
    %4467 = vmatpush1.msra.mxu0 0.0
    %4468 = vmatprep.subr.mxu0 0.0
    %4469 = vmatpush1.msra.mxu0 0.0
    %4470 = vmatprep.subr.mxu0 0.0
    %4471 = vmatpush1.msra.mxu0 0.0
    %4472 = vmatprep.subr.mxu0 0.0
    %4473 = vmatpush1.msra.mxu0 0.0
    %4474 = vmatprep.subr.mxu0 0.0
    %4475 = vmatpush1.msra.mxu0 0.0
    %4476 = vmatprep.subr.mxu0 0.0
    %4477 = vmatpush1.msra.mxu0 0.0
    %4478 = vmatprep.subr.mxu0 0.0
    %4479 = vmatpush1.msra.mxu0 0.0
    %4480 = vmatprep.subr.mxu0 0.0
    %4481 = vmatpush1.msra.mxu0 0.0
    %4482 = vmatprep.subr.mxu0 0.0
    %4483 = vmatpush1.msra.mxu0 0.0
    %4484 = vmatprep.subr.mxu0 0.0
    %4485 = vmatpush1.msra.mxu0 0.0
    %4486 = vmatprep.subr.mxu0 0.0
    %4487 = vmatpush1.msra.mxu0 0.0
    %4488 = vmatprep.subr.mxu0 0.0
    %4489 = vmatpush1.msra.mxu0 0.0
    %4490 = vmatprep.subr.mxu0 0.0
    %4491 = vmatpush1.msra.mxu0 0.0
    %4492 = vmatprep.subr.mxu0 0.0
    %4493 = vmatpush1.msra.mxu0 0.0
    %4494 = vmatprep.subr.mxu0 0.0
    %4495 = vmatpush1.msra.mxu0 0.0
    %4496 = vmatprep.subr.mxu0 0.0
    %4497 = vmatpush1.msra.mxu0 0.0
    %4498 = vmatprep.subr.mxu0 0.0
    %4499 = vmatpush1.msra.mxu0 0.0
    %4500 = vmatprep.subr.mxu0 0.0
    %4501 = vmatpush1.msra.mxu0 0.0
    %4502 = vmatprep.subr.mxu0 0.0
    %4503 = vmatpush1.msra.mxu0 0.0
    %4504 = vmatprep.subr.mxu0 0.0
    %4505 = vmatpush1.msra.mxu0 0.0
    %4506 = vmatprep.subr.mxu0 0.0
    %4507 = vmatpush1.msra.mxu0 0.0
    %4508 = vmatprep.subr.mxu0 0.0
    %4509 = vmatpush1.msra.mxu0 0.0
    %4510 = vmatprep.subr.mxu0 0.0
    %4511 = vmatpush1.msra.mxu0 0.0
    %4512 = vmatprep.subr.mxu0 0.0
    %4513 = vmatpush1.msra.mxu0 0.0
    %4514 = vmatprep.subr.mxu0 0.0
    %4515 = vmatpush1.msra.mxu0 0.0
    %4516 = vmatprep.subr.mxu0 0.0
    %4517 = vmatpush1.msra.mxu0 0.0
    %4518 = vmatprep.subr.mxu0 0.0
    %4519 = vmatpush1.msra.mxu0 0.0
    %4520 = vmatprep.subr.mxu0 0.0
    %4521 = vmatpush1.msra.mxu0 0.0
    %4522 = vmatprep.mubr.f32.mxu0 0.0
    %4523 = vmatmul.mubr.f32.gmra.mrb[0].mxu0 %v4441
    %v4524 = vpop.f32.mrb[0].mxu0
    %v4525 = vadd.f32 0.0, %v4524
    %v4526 = vpop.f32.mrb[0].mxu0
    %4527 = vmatprep.mubr.f32.mxu0 0.0
    %4528 = vmatmul.mubr.f32.gmra.mrb[0].mxu0 %v4444
    %v4529 = vpop.f32.mrb[0].mxu0
    %v4530 = vadd.f32 0.0, %v4529
    %v4531 = vpop.f32.mrb[0].mxu0
    %4532 = vmatprep.mubr.f32.mxu0 0.0
    %4533 = vmatmul.mubr.f32.gmra.mrb[0].mxu0 %v4447
    %v4534 = vpop.f32.mrb[0].mxu0
    %v4535 = vadd.f32 0.0, %v4534
    %v4536 = vpop.f32.mrb[0].mxu0
    %4537 = vmatprep.mubr.f32.mxu0 0.0
    %4538 = vmatmul.mubr.f32.gmra.mrb[0].mxu0 %v4450
    %v4539 = vpop.f32.mrb[0].mxu0
    %v4540 = vadd.f32 0.0, %v4539
    %v4541 = vpop.f32.mrb[0].mxu0
    %4542 = vmatprep.mubr.f32.mxu0 0.0
    %4543 = vmatmul.mubr.f32.gmra.mrb[0].mxu0 %v4453
    %v4544 = vpop.f32.mrb[0].mxu0
    %v4545 = vadd.f32 0.0, %v4544
    %v4546 = vpop.f32.mrb[0].mxu0
    %4547 = vmatprep.mubr.f32.mxu0 0.0
    %4548 = vmatmul.mubr.f32.gmra.mrb[0].mxu0 %v4456
    %v4549 = vpop.f32.mrb[0].mxu0
    %v4550 = vadd.f32 0.0, %v4549
    %v4551 = vpop.f32.mrb[0].mxu0
    %4552 = vdwg.mxu0
    %v4554 = vsel %vm44, %v4424, 0
    %v4557 = vsel %vm44, %v4425, 0
    %v4560 = vsel %vm44, %v4426, 0
    %v4563 = vsel %vm44, %v4427, 0
    %v4566 = vsel %vm44, %v4428, 0
    %v4569 = vsel %vm44, %v4429, 0
    %4571 = vmatprep.subr.mxu0 0.0
    %4572 = vmatpush1.msra.mxu0 %v4430
    %4573 = vmatprep.subr.mxu0 0.0
    %4574 = vmatpush1.msra.mxu0 %v4431
    %4575 = vmatprep.subr.mxu0 0.0
    %4576 = vmatpush1.msra.mxu0 0.0
    %4577 = vmatprep.subr.mxu0 0.0
    %4578 = vmatpush1.msra.mxu0 0.0
    %4579 = vmatprep.subr.mxu0 0.0
    %4580 = vmatpush1.msra.mxu0 0.0
    %4581 = vmatprep.subr.mxu0 0.0
    %4582 = vmatpush1.msra.mxu0 0.0
    %4583 = vmatprep.subr.mxu0 0.0
    %4584 = vmatpush1.msra.mxu0 0.0
    %4585 = vmatprep.subr.mxu0 0.0
    %4586 = vmatpush1.msra.mxu0 0.0
    %4587 = vmatprep.subr.mxu0 0.0
    %4588 = vmatpush1.msra.mxu0 0.0
    %4589 = vmatprep.subr.mxu0 0.0
    %4590 = vmatpush1.msra.mxu0 0.0
    %4591 = vmatprep.subr.mxu0 0.0
    %4592 = vmatpush1.msra.mxu0 0.0
    %4593 = vmatprep.subr.mxu0 0.0
    %4594 = vmatpush1.msra.mxu0 0.0
    %4595 = vmatprep.subr.mxu0 0.0
    %4596 = vmatpush1.msra.mxu0 0.0
    %4597 = vmatprep.subr.mxu0 0.0
    %4598 = vmatpush1.msra.mxu0 0.0
    %4599 = vmatprep.subr.mxu0 0.0
    %4600 = vmatpush1.msra.mxu0 0.0
    %4601 = vmatprep.subr.mxu0 0.0
    %4602 = vmatpush1.msra.mxu0 0.0
    %4603 = vmatprep.subr.mxu0 0.0
    %4604 = vmatpush1.msra.mxu0 0.0
    %4605 = vmatprep.subr.mxu0 0.0
    %4606 = vmatpush1.msra.mxu0 0.0
    %4607 = vmatprep.subr.mxu0 0.0
    %4608 = vmatpush1.msra.mxu0 0.0
    %4609 = vmatprep.subr.mxu0 0.0
    %4610 = vmatpush1.msra.mxu0 0.0
    %4611 = vmatprep.subr.mxu0 0.0
    %4612 = vmatpush1.msra.mxu0 0.0
    %4613 = vmatprep.subr.mxu0 0.0
    %4614 = vmatpush1.msra.mxu0 0.0
    %4615 = vmatprep.subr.mxu0 0.0
    %4616 = vmatpush1.msra.mxu0 0.0
    %4617 = vmatprep.subr.mxu0 0.0
    %4618 = vmatpush1.msra.mxu0 0.0
    %4619 = vmatprep.subr.mxu0 0.0
    %4620 = vmatpush1.msra.mxu0 0.0
    %4621 = vmatprep.subr.mxu0 0.0
    %4622 = vmatpush1.msra.mxu0 0.0
    %4623 = vmatprep.subr.mxu0 0.0
    %4624 = vmatpush1.msra.mxu0 0.0
    %4625 = vmatprep.subr.mxu0 0.0
    %4626 = vmatpush1.msra.mxu0 0.0
    %4627 = vmatprep.subr.mxu0 0.0
    %4628 = vmatpush1.msra.mxu0 0.0
    %4629 = vmatprep.subr.mxu0 0.0
    %4630 = vmatpush1.msra.mxu0 0.0
    %4631 = vmatprep.subr.mxu0 0.0
    %4632 = vmatpush1.msra.mxu0 0.0
    %4633 = vmatprep.subr.mxu0 0.0
    %4634 = vmatpush1.msra.mxu0 0.0
    %4635 = vmatprep.mubr.f32.mxu0 0.0
    %4636 = vmatmul.mubr.f32.gmra.mrb[0].mxu0 %v4554
    %v4637 = vpop.f32.mrb[0].mxu0
    %v4638 = vadd.f32 %v4525, %v4637
    %v4639 = vpop.f32.mrb[0].mxu0
    %4640 = vmatprep.mubr.f32.mxu0 0.0
    %4641 = vmatmul.mubr.f32.gmra.mrb[0].mxu0 %v4557
    %v4642 = vpop.f32.mrb[0].mxu0
    %v4643 = vadd.f32 %v4530, %v4642
    %v4644 = vpop.f32.mrb[0].mxu0
    %4645 = vmatprep.mubr.f32.mxu0 0.0
    %4646 = vmatmul.mubr.f32.gmra.mrb[0].mxu0 %v4560
    %v4647 = vpop.f32.mrb[0].mxu0
    %v4648 = vadd.f32 %v4535, %v4647
    %v4649 = vpop.f32.mrb[0].mxu0
    %4650 = vmatprep.mubr.f32.mxu0 0.0
    %4651 = vmatmul.mubr.f32.gmra.mrb[0].mxu0 %v4563
    %v4652 = vpop.f32.mrb[0].mxu0
    %v4653 = vadd.f32 %v4540, %v4652
    %v4654 = vpop.f32.mrb[0].mxu0
    %4655 = vmatprep.mubr.f32.mxu0 0.0
    %4656 = vmatmul.mubr.f32.gmra.mrb[0].mxu0 %v4566
    %v4657 = vpop.f32.mrb[0].mxu0
    %v4658 = vadd.f32 %v4545, %v4657
    %v4659 = vpop.f32.mrb[0].mxu0
    %4660 = vmatprep.mubr.f32.mxu0 0.0
    %4661 = vmatmul.mubr.f32.gmra.mrb[0].mxu0 %v4569
    %v4662 = vpop.f32.mrb[0].mxu0
    %v4663 = vadd.f32 %v4550, %v4662
    %v4664 = vpop.f32.mrb[0].mxu0
    %4665 = vdwg.mxu0
    %v4666 = vld [vmem:[%s5 + $0x3] sm:$0x1]
    %v4667 = vlaneseq
    %v4668 = vshrl.u32 %v4667, 7
    %v4669 = vsub.s32 0, %v4668
    %v4670 = vrot.slane %v4666, %v4669
    %v4671 = vadd.f32 %v4638, %v4670
    %v4672 = vadd.f32 %v4643, %v4670
    %v4673 = vadd.f32 %v4648, %v4670
    %v4674 = vadd.f32 %v4653, %v4670
    %v4675 = vadd.f32 %v4658, %v4670
    %v4676 = vadd.f32 %v4663, %v4670
    %vm4677 = vcmp.ge.f32.partialorder %v4671, 0.0
    %vm4678 = vcmp.ge.f32.partialorder %v4672, 0.0
    %vm4679 = vcmp.ge.f32.partialorder %v4673, 0.0
    %vm4680 = vcmp.ge.f32.partialorder %v4674, 0.0
    %vm4681 = vcmp.ge.f32.partialorder %v4675, 0.0
    %vm4682 = vcmp.ge.f32.partialorder %v4676, 0.0
    %v4683 = vmul.f32 %v4671, 0.01
    %v4684 = vmul.f32 %v4672, 0.01
    %v4685 = vmul.f32 %v4673, 0.01
    %v4686 = vmul.f32 %v4674, 0.01
    %v4687 = vmul.f32 %v4675, 0.01
    %v4688 = vmul.f32 %v4676, 0.01
    %v4689 = vsel %vm4677, %v4671, %v4683
    %v4690 = vsel %vm4678, %v4672, %v4684
    %v4691 = vsel %vm4679, %v4673, %v4685
    %v4692 = vsel %vm4680, %v4674, %v4686
    %v4693 = vsel %vm4681, %v4675, %v4687
    %v4694 = vsel %vm4682, %v4676, %v4688
    %4695 = vst.msk [vmem:[#allocation5] sm:$0xff] %vm44, %v4689
    %4696 = vst.msk [vmem:[#allocation5 + $0x8] sm:$0xff] %vm44, %v4690
    %4697 = vst.msk [vmem:[#allocation5 + $0x10] sm:$0xff] %vm44, %v4691
    %4698 = vst.msk [vmem:[#allocation5 + $0x18] sm:$0xff] %vm44, %v4692
    %4699 = vst.msk [vmem:[#allocation5 + $0x20] sm:$0xff] %vm44, %v4693
    %4700 = vst.msk [vmem:[#allocation5 + $0x28] sm:$0xff] %vm44, %v4694
    %v4701 = vld [vmem:[#allocation2] sm:$0x3]
    %v4702 = vld [vmem:[%s6] sm:$0xff]
    %v4703 = vld [vmem:[%s6 + $0x8] sm:$0xff]
    %v4704 = vld [vmem:[#allocation2 + $0x2] sm:$0x3]
    %v4705 = vld [vmem:[%s6 + $0x10] sm:$0xff]
    %v4706 = vld [vmem:[%s6 + $0x18] sm:$0xff]
    %v4708 = vsel %vm44, %v4704, 0
    %4710 = vmatprep.subr.mxu0 0.0
    %4711 = vmatpush1.msra.mxu0 %v4705
    %4712 = vmatprep.subr.mxu0 0.0
    %4713 = vmatpush1.msra.mxu0 %v4706
    %4714 = vmatprep.subr.mxu0 0.0
    %4715 = vmatpush1.msra.mxu0 0.0
    %4716 = vmatprep.subr.mxu0 0.0
    %4717 = vmatpush1.msra.mxu0 0.0
    %4718 = vmatprep.subr.mxu0 0.0
    %4719 = vmatpush1.msra.mxu0 0.0
    %4720 = vmatprep.subr.mxu0 0.0
    %4721 = vmatpush1.msra.mxu0 0.0
    %4722 = vmatprep.subr.mxu0 0.0
    %4723 = vmatpush1.msra.mxu0 0.0
    %4724 = vmatprep.subr.mxu0 0.0
    %4725 = vmatpush1.msra.mxu0 0.0
    %4726 = vmatprep.subr.mxu0 0.0
    %4727 = vmatpush1.msra.mxu0 0.0
    %4728 = vmatprep.subr.mxu0 0.0
    %4729 = vmatpush1.msra.mxu0 0.0
    %4730 = vmatprep.subr.mxu0 0.0
    %4731 = vmatpush1.msra.mxu0 0.0
    %4732 = vmatprep.subr.mxu0 0.0
    %4733 = vmatpush1.msra.mxu0 0.0
    %4734 = vmatprep.subr.mxu0 0.0
    %4735 = vmatpush1.msra.mxu0 0.0
    %4736 = vmatprep.subr.mxu0 0.0
    %4737 = vmatpush1.msra.mxu0 0.0
    %4738 = vmatprep.subr.mxu0 0.0
    %4739 = vmatpush1.msra.mxu0 0.0
    %4740 = vmatprep.subr.mxu0 0.0
    %4741 = vmatpush1.msra.mxu0 0.0
    %4742 = vmatprep.subr.mxu0 0.0
    %4743 = vmatpush1.msra.mxu0 0.0
    %4744 = vmatprep.subr.mxu0 0.0
    %4745 = vmatpush1.msra.mxu0 0.0
    %4746 = vmatprep.subr.mxu0 0.0
    %4747 = vmatpush1.msra.mxu0 0.0
    %4748 = vmatprep.subr.mxu0 0.0
    %4749 = vmatpush1.msra.mxu0 0.0
    %4750 = vmatprep.subr.mxu0 0.0
    %4751 = vmatpush1.msra.mxu0 0.0
    %4752 = vmatprep.subr.mxu0 0.0
    %4753 = vmatpush1.msra.mxu0 0.0
    %4754 = vmatprep.subr.mxu0 0.0
    %4755 = vmatpush1.msra.mxu0 0.0
    %4756 = vmatprep.subr.mxu0 0.0
    %4757 = vmatpush1.msra.mxu0 0.0
    %4758 = vmatprep.subr.mxu0 0.0
    %4759 = vmatpush1.msra.mxu0 0.0
    %4760 = vmatprep.subr.mxu0 0.0
    %4761 = vmatpush1.msra.mxu0 0.0
    %4762 = vmatprep.subr.mxu0 0.0
    %4763 = vmatpush1.msra.mxu0 0.0
    %4764 = vmatprep.subr.mxu0 0.0
    %4765 = vmatpush1.msra.mxu0 0.0
    %4766 = vmatprep.subr.mxu0 0.0
    %4767 = vmatpush1.msra.mxu0 0.0
    %4768 = vmatprep.subr.mxu0 0.0
    %4769 = vmatpush1.msra.mxu0 0.0
    %4770 = vmatprep.subr.mxu0 0.0
    %4771 = vmatpush1.msra.mxu0 0.0
    %4772 = vmatprep.subr.mxu0 0.0
    %4773 = vmatpush1.msra.mxu0 0.0
    %4774 = vmatprep.mubr.f32.mxu0 0.0
    %4775 = vmatmul.mubr.f32.gmra.mrb[0].mxu0 %v4708
    %v4776 = vpop.f32.mrb[0].mxu0
    %v4777 = vadd.f32 0.0, %v4776
    %v4778 = vpop.f32.mrb[0].mxu0
    %4779 = vdwg.mxu0
    %v4781 = vsel %vm44, %v4701, 0
    %4783 = vmatprep.subr.mxu0 0.0
    %4784 = vmatpush1.msra.mxu0 %v4702
    %4785 = vmatprep.subr.mxu0 0.0
    %4786 = vmatpush1.msra.mxu0 %v4703
    %4787 = vmatprep.subr.mxu0 0.0
    %4788 = vmatpush1.msra.mxu0 0.0
    %4789 = vmatprep.subr.mxu0 0.0
    %4790 = vmatpush1.msra.mxu0 0.0
    %4791 = vmatprep.subr.mxu0 0.0
    %4792 = vmatpush1.msra.mxu0 0.0
    %4793 = vmatprep.subr.mxu0 0.0
    %4794 = vmatpush1.msra.mxu0 0.0
    %4795 = vmatprep.subr.mxu0 0.0
    %4796 = vmatpush1.msra.mxu0 0.0
    %4797 = vmatprep.subr.mxu0 0.0
    %4798 = vmatpush1.msra.mxu0 0.0
    %4799 = vmatprep.subr.mxu0 0.0
    %4800 = vmatpush1.msra.mxu0 0.0
    %4801 = vmatprep.subr.mxu0 0.0
    %4802 = vmatpush1.msra.mxu0 0.0
    %4803 = vmatprep.subr.mxu0 0.0
    %4804 = vmatpush1.msra.mxu0 0.0
    %4805 = vmatprep.subr.mxu0 0.0
    %4806 = vmatpush1.msra.mxu0 0.0
    %4807 = vmatprep.subr.mxu0 0.0
    %4808 = vmatpush1.msra.mxu0 0.0
    %4809 = vmatprep.subr.mxu0 0.0
    %4810 = vmatpush1.msra.mxu0 0.0
    %4811 = vmatprep.subr.mxu0 0.0
    %4812 = vmatpush1.msra.mxu0 0.0
    %4813 = vmatprep.subr.mxu0 0.0
    %4814 = vmatpush1.msra.mxu0 0.0
    %4815 = vmatprep.subr.mxu0 0.0
    %4816 = vmatpush1.msra.mxu0 0.0
    %4817 = vmatprep.subr.mxu0 0.0
    %4818 = vmatpush1.msra.mxu0 0.0
    %4819 = vmatprep.subr.mxu0 0.0
    %4820 = vmatpush1.msra.mxu0 0.0
    %4821 = vmatprep.subr.mxu0 0.0
    %4822 = vmatpush1.msra.mxu0 0.0
    %4823 = vmatprep.subr.mxu0 0.0
    %4824 = vmatpush1.msra.mxu0 0.0
    %4825 = vmatprep.subr.mxu0 0.0
    %4826 = vmatpush1.msra.mxu0 0.0
    %4827 = vmatprep.subr.mxu0 0.0
    %4828 = vmatpush1.msra.mxu0 0.0
    %4829 = vmatprep.subr.mxu0 0.0
    %4830 = vmatpush1.msra.mxu0 0.0
    %4831 = vmatprep.subr.mxu0 0.0
    %4832 = vmatpush1.msra.mxu0 0.0
    %4833 = vmatprep.subr.mxu0 0.0
    %4834 = vmatpush1.msra.mxu0 0.0
    %4835 = vmatprep.subr.mxu0 0.0
    %4836 = vmatpush1.msra.mxu0 0.0
    %4837 = vmatprep.subr.mxu0 0.0
    %4838 = vmatpush1.msra.mxu0 0.0
    %4839 = vmatprep.subr.mxu0 0.0
    %4840 = vmatpush1.msra.mxu0 0.0
    %4841 = vmatprep.subr.mxu0 0.0
    %4842 = vmatpush1.msra.mxu0 0.0
    %4843 = vmatprep.subr.mxu0 0.0
    %4844 = vmatpush1.msra.mxu0 0.0
    %4845 = vmatprep.subr.mxu0 0.0
    %4846 = vmatpush1.msra.mxu0 0.0
    %4847 = vmatprep.mubr.f32.mxu0 0.0
    %4848 = vmatmul.mubr.f32.gmra.mrb[0].mxu0 %v4781
    %v4849 = vpop.f32.mrb[0].mxu0
    %v4850 = vadd.f32 %v4777, %v4849
    %v4851 = vpop.f32.mrb[0].mxu0
    %4852 = vdwg.mxu0
    %v4853 = vld [vmem:[#allocation2 + $0x4] sm:$0x3]
    %v4854 = vld [vmem:[%s6 + $0x20] sm:$0xff]
    %v4855 = vld [vmem:[%s6 + $0x28] sm:$0xff]
    %v4857 = vsel %vm44, %v4853, 0
    %4859 = vmatprep.subr.mxu0 0.0
    %4860 = vmatpush1.msra.mxu0 %v4854
    %4861 = vmatprep.subr.mxu0 0.0
    %4862 = vmatpush1.msra.mxu0 %v4855
    %4863 = vmatprep.subr.mxu0 0.0
    %4864 = vmatpush1.msra.mxu0 0.0
    %4865 = vmatprep.subr.mxu0 0.0
    %4866 = vmatpush1.msra.mxu0 0.0
    %4867 = vmatprep.subr.mxu0 0.0
    %4868 = vmatpush1.msra.mxu0 0.0
    %4869 = vmatprep.subr.mxu0 0.0
    %4870 = vmatpush1.msra.mxu0 0.0
    %4871 = vmatprep.subr.mxu0 0.0
    %4872 = vmatpush1.msra.mxu0 0.0
    %4873 = vmatprep.subr.mxu0 0.0
    %4874 = vmatpush1.msra.mxu0 0.0
    %4875 = vmatprep.subr.mxu0 0.0
    %4876 = vmatpush1.msra.mxu0 0.0
    %4877 = vmatprep.subr.mxu0 0.0
    %4878 = vmatpush1.msra.mxu0 0.0
    %4879 = vmatprep.subr.mxu0 0.0
    %4880 = vmatpush1.msra.mxu0 0.0
    %4881 = vmatprep.subr.mxu0 0.0
    %4882 = vmatpush1.msra.mxu0 0.0
    %4883 = vmatprep.subr.mxu0 0.0
    %4884 = vmatpush1.msra.mxu0 0.0
    %4885 = vmatprep.subr.mxu0 0.0
    %4886 = vmatpush1.msra.mxu0 0.0
    %4887 = vmatprep.subr.mxu0 0.0
    %4888 = vmatpush1.msra.mxu0 0.0
    %4889 = vmatprep.subr.mxu0 0.0
    %4890 = vmatpush1.msra.mxu0 0.0
    %4891 = vmatprep.subr.mxu0 0.0
    %4892 = vmatpush1.msra.mxu0 0.0
    %4893 = vmatprep.subr.mxu0 0.0
    %4894 = vmatpush1.msra.mxu0 0.0
    %4895 = vmatprep.subr.mxu0 0.0
    %4896 = vmatpush1.msra.mxu0 0.0
    %4897 = vmatprep.subr.mxu0 0.0
    %4898 = vmatpush1.msra.mxu0 0.0
    %4899 = vmatprep.subr.mxu0 0.0
    %4900 = vmatpush1.msra.mxu0 0.0
    %4901 = vmatprep.subr.mxu0 0.0
    %4902 = vmatpush1.msra.mxu0 0.0
    %4903 = vmatprep.subr.mxu0 0.0
    %4904 = vmatpush1.msra.mxu0 0.0
    %4905 = vmatprep.subr.mxu0 0.0
    %4906 = vmatpush1.msra.mxu0 0.0
    %4907 = vmatprep.subr.mxu0 0.0
    %4908 = vmatpush1.msra.mxu0 0.0
    %4909 = vmatprep.subr.mxu0 0.0
    %4910 = vmatpush1.msra.mxu0 0.0
    %4911 = vmatprep.subr.mxu0 0.0
    %4912 = vmatpush1.msra.mxu0 0.0
    %4913 = vmatprep.subr.mxu0 0.0
    %4914 = vmatpush1.msra.mxu0 0.0
    %4915 = vmatprep.subr.mxu0 0.0
    %4916 = vmatpush1.msra.mxu0 0.0
    %4917 = vmatprep.subr.mxu0 0.0
    %4918 = vmatpush1.msra.mxu0 0.0
    %4919 = vmatprep.subr.mxu0 0.0
    %4920 = vmatpush1.msra.mxu0 0.0
    %4921 = vmatprep.subr.mxu0 0.0
    %4922 = vmatpush1.msra.mxu0 0.0
    %4923 = vmatprep.mubr.f32.mxu0 0.0
    %4924 = vmatmul.mubr.f32.gmra.mrb[0].mxu0 %v4857
    %v4925 = vpop.f32.mrb[0].mxu0
    %v4926 = vadd.f32 0.0, %v4925
    %v4927 = vpop.f32.mrb[0].mxu0
    %4928 = vdwg.mxu0
    %v4929 = vadd.f32 %v4850, %v4926
    %v4930 = vld [vmem:[#allocation2 + $0x6] sm:$0x3]
    %v4931 = vld [vmem:[%s6 + $0x30] sm:$0xff]
    %v4932 = vld [vmem:[%s6 + $0x38] sm:$0xff]
    %v4934 = vsel %vm44, %v4930, 0
    %4936 = vmatprep.subr.mxu0 0.0
    %4937 = vmatpush1.msra.mxu0 %v4931
    %4938 = vmatprep.subr.mxu0 0.0
    %4939 = vmatpush1.msra.mxu0 %v4932
    %4940 = vmatprep.subr.mxu0 0.0
    %4941 = vmatpush1.msra.mxu0 0.0
    %4942 = vmatprep.subr.mxu0 0.0
    %4943 = vmatpush1.msra.mxu0 0.0
    %4944 = vmatprep.subr.mxu0 0.0
    %4945 = vmatpush1.msra.mxu0 0.0
    %4946 = vmatprep.subr.mxu0 0.0
    %4947 = vmatpush1.msra.mxu0 0.0
    %4948 = vmatprep.subr.mxu0 0.0
    %4949 = vmatpush1.msra.mxu0 0.0
    %4950 = vmatprep.subr.mxu0 0.0
    %4951 = vmatpush1.msra.mxu0 0.0
    %4952 = vmatprep.subr.mxu0 0.0
    %4953 = vmatpush1.msra.mxu0 0.0
    %4954 = vmatprep.subr.mxu0 0.0
    %4955 = vmatpush1.msra.mxu0 0.0
    %4956 = vmatprep.subr.mxu0 0.0
    %4957 = vmatpush1.msra.mxu0 0.0
    %4958 = vmatprep.subr.mxu0 0.0
    %4959 = vmatpush1.msra.mxu0 0.0
    %4960 = vmatprep.subr.mxu0 0.0
    %4961 = vmatpush1.msra.mxu0 0.0
    %4962 = vmatprep.subr.mxu0 0.0
    %4963 = vmatpush1.msra.mxu0 0.0
    %4964 = vmatprep.subr.mxu0 0.0
    %4965 = vmatpush1.msra.mxu0 0.0
    %4966 = vmatprep.subr.mxu0 0.0
    %4967 = vmatpush1.msra.mxu0 0.0
    %4968 = vmatprep.subr.mxu0 0.0
    %4969 = vmatpush1.msra.mxu0 0.0
    %4970 = vmatprep.subr.mxu0 0.0
    %4971 = vmatpush1.msra.mxu0 0.0
    %4972 = vmatprep.subr.mxu0 0.0
    %4973 = vmatpush1.msra.mxu0 0.0
    %4974 = vmatprep.subr.mxu0 0.0
    %4975 = vmatpush1.msra.mxu0 0.0
    %4976 = vmatprep.subr.mxu0 0.0
    %4977 = vmatpush1.msra.mxu0 0.0
    %4978 = vmatprep.subr.mxu0 0.0
    %4979 = vmatpush1.msra.mxu0 0.0
    %4980 = vmatprep.subr.mxu0 0.0
    %4981 = vmatpush1.msra.mxu0 0.0
    %4982 = vmatprep.subr.mxu0 0.0
    %4983 = vmatpush1.msra.mxu0 0.0
    %4984 = vmatprep.subr.mxu0 0.0
    %4985 = vmatpush1.msra.mxu0 0.0
    %4986 = vmatprep.subr.mxu0 0.0
    %4987 = vmatpush1.msra.mxu0 0.0
    %4988 = vmatprep.subr.mxu0 0.0
    %4989 = vmatpush1.msra.mxu0 0.0
    %4990 = vmatprep.subr.mxu0 0.0
    %4991 = vmatpush1.msra.mxu0 0.0
    %4992 = vmatprep.subr.mxu0 0.0
    %4993 = vmatpush1.msra.mxu0 0.0
    %4994 = vmatprep.subr.mxu0 0.0
    %4995 = vmatpush1.msra.mxu0 0.0
    %4996 = vmatprep.subr.mxu0 0.0
    %4997 = vmatpush1.msra.mxu0 0.0
    %4998 = vmatprep.subr.mxu0 0.0
    %4999 = vmatpush1.msra.mxu0 0.0
    %5000 = vmatprep.mubr.f32.mxu0 0.0
    %5001 = vmatmul.mubr.f32.gmra.mrb[0].mxu0 %v4934
    %v5002 = vpop.f32.mrb[0].mxu0
    %v5003 = vadd.f32 0.0, %v5002
    %v5004 = vpop.f32.mrb[0].mxu0
    %5005 = vdwg.mxu0
    %v5006 = vadd.f32 %v4929, %v5003
    %v5007 = vld [vmem:[#allocation2 + $0x8] sm:$0x3]
    %v5008 = vld [vmem:[%s6 + $0x40] sm:$0xff]
    %v5009 = vld [vmem:[%s6 + $0x48] sm:$0xff]
    %v5011 = vsel %vm44, %v5007, 0
    %5013 = vmatprep.subr.mxu0 0.0
    %5014 = vmatpush1.msra.mxu0 %v5008
    %5015 = vmatprep.subr.mxu0 0.0
    %5016 = vmatpush1.msra.mxu0 %v5009
    %5017 = vmatprep.subr.mxu0 0.0
    %5018 = vmatpush1.msra.mxu0 0.0
    %5019 = vmatprep.subr.mxu0 0.0
    %5020 = vmatpush1.msra.mxu0 0.0
    %5021 = vmatprep.subr.mxu0 0.0
    %5022 = vmatpush1.msra.mxu0 0.0
    %5023 = vmatprep.subr.mxu0 0.0
    %5024 = vmatpush1.msra.mxu0 0.0
    %5025 = vmatprep.subr.mxu0 0.0
    %5026 = vmatpush1.msra.mxu0 0.0
    %5027 = vmatprep.subr.mxu0 0.0
    %5028 = vmatpush1.msra.mxu0 0.0
    %5029 = vmatprep.subr.mxu0 0.0
    %5030 = vmatpush1.msra.mxu0 0.0
    %5031 = vmatprep.subr.mxu0 0.0
    %5032 = vmatpush1.msra.mxu0 0.0
    %5033 = vmatprep.subr.mxu0 0.0
    %5034 = vmatpush1.msra.mxu0 0.0
    %5035 = vmatprep.subr.mxu0 0.0
    %5036 = vmatpush1.msra.mxu0 0.0
    %5037 = vmatprep.subr.mxu0 0.0
    %5038 = vmatpush1.msra.mxu0 0.0
    %5039 = vmatprep.subr.mxu0 0.0
    %5040 = vmatpush1.msra.mxu0 0.0
    %5041 = vmatprep.subr.mxu0 0.0
    %5042 = vmatpush1.msra.mxu0 0.0
    %5043 = vmatprep.subr.mxu0 0.0
    %5044 = vmatpush1.msra.mxu0 0.0
    %5045 = vmatprep.subr.mxu0 0.0
    %5046 = vmatpush1.msra.mxu0 0.0
    %5047 = vmatprep.subr.mxu0 0.0
    %5048 = vmatpush1.msra.mxu0 0.0
    %5049 = vmatprep.subr.mxu0 0.0
    %5050 = vmatpush1.msra.mxu0 0.0
    %5051 = vmatprep.subr.mxu0 0.0
    %5052 = vmatpush1.msra.mxu0 0.0
    %5053 = vmatprep.subr.mxu0 0.0
    %5054 = vmatpush1.msra.mxu0 0.0
    %5055 = vmatprep.subr.mxu0 0.0
    %5056 = vmatpush1.msra.mxu0 0.0
    %5057 = vmatprep.subr.mxu0 0.0
    %5058 = vmatpush1.msra.mxu0 0.0
    %5059 = vmatprep.subr.mxu0 0.0
    %5060 = vmatpush1.msra.mxu0 0.0
    %5061 = vmatprep.subr.mxu0 0.0
    %5062 = vmatpush1.msra.mxu0 0.0
    %5063 = vmatprep.subr.mxu0 0.0
    %5064 = vmatpush1.msra.mxu0 0.0
    %5065 = vmatprep.subr.mxu0 0.0
    %5066 = vmatpush1.msra.mxu0 0.0
    %5067 = vmatprep.subr.mxu0 0.0
    %5068 = vmatpush1.msra.mxu0 0.0
    %5069 = vmatprep.subr.mxu0 0.0
    %5070 = vmatpush1.msra.mxu0 0.0
    %5071 = vmatprep.subr.mxu0 0.0
    %5072 = vmatpush1.msra.mxu0 0.0
    %5073 = vmatprep.subr.mxu0 0.0
    %5074 = vmatpush1.msra.mxu0 0.0
    %5075 = vmatprep.subr.mxu0 0.0
    %5076 = vmatpush1.msra.mxu0 0.0
    %5077 = vmatprep.mubr.f32.mxu0 0.0
    %5078 = vmatmul.mubr.f32.gmra.mrb[0].mxu0 %v5011
    %v5079 = vpop.f32.mrb[0].mxu0
    %v5080 = vadd.f32 0.0, %v5079
    %v5081 = vpop.f32.mrb[0].mxu0
    %5082 = vdwg.mxu0
    %v5083 = vadd.f32 %v5006, %v5080
    %v5084 = vld [vmem:[#allocation2 + $0xa] sm:$0x3]
    %v5085 = vld [vmem:[%s6 + $0x50] sm:$0xff]
    %v5086 = vld [vmem:[%s6 + $0x58] sm:$0xff]
    %v5088 = vsel %vm44, %v5084, 0
    %5090 = vmatprep.subr.mxu0 0.0
    %5091 = vmatpush1.msra.mxu0 %v5085
    %5092 = vmatprep.subr.mxu0 0.0
    %5093 = vmatpush1.msra.mxu0 %v5086
    %5094 = vmatprep.subr.mxu0 0.0
    %5095 = vmatpush1.msra.mxu0 0.0
    %5096 = vmatprep.subr.mxu0 0.0
    %5097 = vmatpush1.msra.mxu0 0.0
    %5098 = vmatprep.subr.mxu0 0.0
    %5099 = vmatpush1.msra.mxu0 0.0
    %5100 = vmatprep.subr.mxu0 0.0
    %5101 = vmatpush1.msra.mxu0 0.0
    %5102 = vmatprep.subr.mxu0 0.0
    %5103 = vmatpush1.msra.mxu0 0.0
    %5104 = vmatprep.subr.mxu0 0.0
    %5105 = vmatpush1.msra.mxu0 0.0
    %5106 = vmatprep.subr.mxu0 0.0
    %5107 = vmatpush1.msra.mxu0 0.0
    %5108 = vmatprep.subr.mxu0 0.0
    %5109 = vmatpush1.msra.mxu0 0.0
    %5110 = vmatprep.subr.mxu0 0.0
    %5111 = vmatpush1.msra.mxu0 0.0
    %5112 = vmatprep.subr.mxu0 0.0
    %5113 = vmatpush1.msra.mxu0 0.0
    %5114 = vmatprep.subr.mxu0 0.0
    %5115 = vmatpush1.msra.mxu0 0.0
    %5116 = vmatprep.subr.mxu0 0.0
    %5117 = vmatpush1.msra.mxu0 0.0
    %5118 = vmatprep.subr.mxu0 0.0
    %5119 = vmatpush1.msra.mxu0 0.0
    %5120 = vmatprep.subr.mxu0 0.0
    %5121 = vmatpush1.msra.mxu0 0.0
    %5122 = vmatprep.subr.mxu0 0.0
    %5123 = vmatpush1.msra.mxu0 0.0
    %5124 = vmatprep.subr.mxu0 0.0
    %5125 = vmatpush1.msra.mxu0 0.0
    %5126 = vmatprep.subr.mxu0 0.0
    %5127 = vmatpush1.msra.mxu0 0.0
    %5128 = vmatprep.subr.mxu0 0.0
    %5129 = vmatpush1.msra.mxu0 0.0
    %5130 = vmatprep.subr.mxu0 0.0
    %5131 = vmatpush1.msra.mxu0 0.0
    %5132 = vmatprep.subr.mxu0 0.0
    %5133 = vmatpush1.msra.mxu0 0.0
    %5134 = vmatprep.subr.mxu0 0.0
    %5135 = vmatpush1.msra.mxu0 0.0
    %5136 = vmatprep.subr.mxu0 0.0
    %5137 = vmatpush1.msra.mxu0 0.0
    %5138 = vmatprep.subr.mxu0 0.0
    %5139 = vmatpush1.msra.mxu0 0.0
    %5140 = vmatprep.subr.mxu0 0.0
    %5141 = vmatpush1.msra.mxu0 0.0
    %5142 = vmatprep.subr.mxu0 0.0
    %5143 = vmatpush1.msra.mxu0 0.0
    %5144 = vmatprep.subr.mxu0 0.0
    %5145 = vmatpush1.msra.mxu0 0.0
    %5146 = vmatprep.subr.mxu0 0.0
    %5147 = vmatpush1.msra.mxu0 0.0
    %5148 = vmatprep.subr.mxu0 0.0
    %5149 = vmatpush1.msra.mxu0 0.0
    %5150 = vmatprep.subr.mxu0 0.0
    %5151 = vmatpush1.msra.mxu0 0.0
    %5152 = vmatprep.subr.mxu0 0.0
    %5153 = vmatpush1.msra.mxu0 0.0
    %5154 = vmatprep.mubr.f32.mxu0 0.0
    %5155 = vmatmul.mubr.f32.gmra.mrb[0].mxu0 %v5088
    %v5156 = vpop.f32.mrb[0].mxu0
    %v5157 = vadd.f32 0.0, %v5156
    %v5158 = vpop.f32.mrb[0].mxu0
    %5159 = vdwg.mxu0
    %v5160 = vadd.f32 %v5083, %v5157
    %v5161 = vld [vmem:[#allocation2 + $0xc] sm:$0x3]
    %v5162 = vld [vmem:[%s6 + $0x60] sm:$0xff]
    %v5163 = vld [vmem:[%s6 + $0x68] sm:$0xff]
    %v5165 = vsel %vm44, %v5161, 0
    %5167 = vmatprep.subr.mxu0 0.0
    %5168 = vmatpush1.msra.mxu0 %v5162
    %5169 = vmatprep.subr.mxu0 0.0
    %5170 = vmatpush1.msra.mxu0 %v5163
    %5171 = vmatprep.subr.mxu0 0.0
    %5172 = vmatpush1.msra.mxu0 0.0
    %5173 = vmatprep.subr.mxu0 0.0
    %5174 = vmatpush1.msra.mxu0 0.0
    %5175 = vmatprep.subr.mxu0 0.0
    %5176 = vmatpush1.msra.mxu0 0.0
    %5177 = vmatprep.subr.mxu0 0.0
    %5178 = vmatpush1.msra.mxu0 0.0
    %5179 = vmatprep.subr.mxu0 0.0
    %5180 = vmatpush1.msra.mxu0 0.0
    %5181 = vmatprep.subr.mxu0 0.0
    %5182 = vmatpush1.msra.mxu0 0.0
    %5183 = vmatprep.subr.mxu0 0.0
    %5184 = vmatpush1.msra.mxu0 0.0
    %5185 = vmatprep.subr.mxu0 0.0
    %5186 = vmatpush1.msra.mxu0 0.0
    %5187 = vmatprep.subr.mxu0 0.0
    %5188 = vmatpush1.msra.mxu0 0.0
    %5189 = vmatprep.subr.mxu0 0.0
    %5190 = vmatpush1.msra.mxu0 0.0
    %5191 = vmatprep.subr.mxu0 0.0
    %5192 = vmatpush1.msra.mxu0 0.0
    %5193 = vmatprep.subr.mxu0 0.0
    %5194 = vmatpush1.msra.mxu0 0.0
    %5195 = vmatprep.subr.mxu0 0.0
    %5196 = vmatpush1.msra.mxu0 0.0
    %5197 = vmatprep.subr.mxu0 0.0
    %5198 = vmatpush1.msra.mxu0 0.0
    %5199 = vmatprep.subr.mxu0 0.0
    %5200 = vmatpush1.msra.mxu0 0.0
    %5201 = vmatprep.subr.mxu0 0.0
    %5202 = vmatpush1.msra.mxu0 0.0
    %5203 = vmatprep.subr.mxu0 0.0
    %5204 = vmatpush1.msra.mxu0 0.0
    %5205 = vmatprep.subr.mxu0 0.0
    %5206 = vmatpush1.msra.mxu0 0.0
    %5207 = vmatprep.subr.mxu0 0.0
    %5208 = vmatpush1.msra.mxu0 0.0
    %5209 = vmatprep.subr.mxu0 0.0
    %5210 = vmatpush1.msra.mxu0 0.0
    %5211 = vmatprep.subr.mxu0 0.0
    %5212 = vmatpush1.msra.mxu0 0.0
    %5213 = vmatprep.subr.mxu0 0.0
    %5214 = vmatpush1.msra.mxu0 0.0
    %5215 = vmatprep.subr.mxu0 0.0
    %5216 = vmatpush1.msra.mxu0 0.0
    %5217 = vmatprep.subr.mxu0 0.0
    %5218 = vmatpush1.msra.mxu0 0.0
    %5219 = vmatprep.subr.mxu0 0.0
    %5220 = vmatpush1.msra.mxu0 0.0
    %5221 = vmatprep.subr.mxu0 0.0
    %5222 = vmatpush1.msra.mxu0 0.0
    %5223 = vmatprep.subr.mxu0 0.0
    %5224 = vmatpush1.msra.mxu0 0.0
    %5225 = vmatprep.subr.mxu0 0.0
    %5226 = vmatpush1.msra.mxu0 0.0
    %5227 = vmatprep.subr.mxu0 0.0
    %5228 = vmatpush1.msra.mxu0 0.0
    %5229 = vmatprep.subr.mxu0 0.0
    %5230 = vmatpush1.msra.mxu0 0.0
    %5231 = vmatprep.mubr.f32.mxu0 0.0
    %5232 = vmatmul.mubr.f32.gmra.mrb[0].mxu0 %v5165
    %v5233 = vpop.f32.mrb[0].mxu0
    %v5234 = vadd.f32 0.0, %v5233
    %v5235 = vpop.f32.mrb[0].mxu0
    %5236 = vdwg.mxu0
    %v5237 = vadd.f32 %v5160, %v5234
    %v5238 = vld [vmem:[#allocation2 + $0xe] sm:$0x3]
    %v5239 = vld [vmem:[%s6 + $0x70] sm:$0xff]
    %v5240 = vld [vmem:[%s6 + $0x78] sm:$0xff]
    %v5242 = vsel %vm44, %v5238, 0
    %5244 = vmatprep.subr.mxu0 0.0
    %5245 = vmatpush1.msra.mxu0 %v5239
    %5246 = vmatprep.subr.mxu0 0.0
    %5247 = vmatpush1.msra.mxu0 %v5240
    %5248 = vmatprep.subr.mxu0 0.0
    %5249 = vmatpush1.msra.mxu0 0.0
    %5250 = vmatprep.subr.mxu0 0.0
    %5251 = vmatpush1.msra.mxu0 0.0
    %5252 = vmatprep.subr.mxu0 0.0
    %5253 = vmatpush1.msra.mxu0 0.0
    %5254 = vmatprep.subr.mxu0 0.0
    %5255 = vmatpush1.msra.mxu0 0.0
    %5256 = vmatprep.subr.mxu0 0.0
    %5257 = vmatpush1.msra.mxu0 0.0
    %5258 = vmatprep.subr.mxu0 0.0
    %5259 = vmatpush1.msra.mxu0 0.0
    %5260 = vmatprep.subr.mxu0 0.0
    %5261 = vmatpush1.msra.mxu0 0.0
    %5262 = vmatprep.subr.mxu0 0.0
    %5263 = vmatpush1.msra.mxu0 0.0
    %5264 = vmatprep.subr.mxu0 0.0
    %5265 = vmatpush1.msra.mxu0 0.0
    %5266 = vmatprep.subr.mxu0 0.0
    %5267 = vmatpush1.msra.mxu0 0.0
    %5268 = vmatprep.subr.mxu0 0.0
    %5269 = vmatpush1.msra.mxu0 0.0
    %5270 = vmatprep.subr.mxu0 0.0
    %5271 = vmatpush1.msra.mxu0 0.0
    %5272 = vmatprep.subr.mxu0 0.0
    %5273 = vmatpush1.msra.mxu0 0.0
    %5274 = vmatprep.subr.mxu0 0.0
    %5275 = vmatpush1.msra.mxu0 0.0
    %5276 = vmatprep.subr.mxu0 0.0
    %5277 = vmatpush1.msra.mxu0 0.0
    %5278 = vmatprep.subr.mxu0 0.0
    %5279 = vmatpush1.msra.mxu0 0.0
    %5280 = vmatprep.subr.mxu0 0.0
    %5281 = vmatpush1.msra.mxu0 0.0
    %5282 = vmatprep.subr.mxu0 0.0
    %5283 = vmatpush1.msra.mxu0 0.0
    %5284 = vmatprep.subr.mxu0 0.0
    %5285 = vmatpush1.msra.mxu0 0.0
    %5286 = vmatprep.subr.mxu0 0.0
    %5287 = vmatpush1.msra.mxu0 0.0
    %5288 = vmatprep.subr.mxu0 0.0
    %5289 = vmatpush1.msra.mxu0 0.0
    %5290 = vmatprep.subr.mxu0 0.0
    %5291 = vmatpush1.msra.mxu0 0.0
    %5292 = vmatprep.subr.mxu0 0.0
    %5293 = vmatpush1.msra.mxu0 0.0
    %5294 = vmatprep.subr.mxu0 0.0
    %5295 = vmatpush1.msra.mxu0 0.0
    %5296 = vmatprep.subr.mxu0 0.0
    %5297 = vmatpush1.msra.mxu0 0.0
    %5298 = vmatprep.subr.mxu0 0.0
    %5299 = vmatpush1.msra.mxu0 0.0
    %5300 = vmatprep.subr.mxu0 0.0
    %5301 = vmatpush1.msra.mxu0 0.0
    %5302 = vmatprep.subr.mxu0 0.0
    %5303 = vmatpush1.msra.mxu0 0.0
    %5304 = vmatprep.subr.mxu0 0.0
    %5305 = vmatpush1.msra.mxu0 0.0
    %5306 = vmatprep.subr.mxu0 0.0
    %5307 = vmatpush1.msra.mxu0 0.0
    %5308 = vmatprep.mubr.f32.mxu0 0.0
    %5309 = vmatmul.mubr.f32.gmra.mrb[0].mxu0 %v5242
    %v5310 = vpop.f32.mrb[0].mxu0
    %v5311 = vadd.f32 0.0, %v5310
    %v5312 = vpop.f32.mrb[0].mxu0
    %5313 = vdwg.mxu0
    %v5314 = vadd.f32 %v5237, %v5311
    %v5315 = vld [vmem:[#allocation2 + $0x10] sm:$0x3]
    %v5316 = vld [vmem:[%s6 + $0x80] sm:$0xff]
    %v5317 = vld [vmem:[%s6 + $0x88] sm:$0xff]
    %v5319 = vsel %vm44, %v5315, 0
    %5321 = vmatprep.subr.mxu0 0.0
    %5322 = vmatpush1.msra.mxu0 %v5316
    %5323 = vmatprep.subr.mxu0 0.0
    %5324 = vmatpush1.msra.mxu0 %v5317
    %5325 = vmatprep.subr.mxu0 0.0
    %5326 = vmatpush1.msra.mxu0 0.0
    %5327 = vmatprep.subr.mxu0 0.0
    %5328 = vmatpush1.msra.mxu0 0.0
    %5329 = vmatprep.subr.mxu0 0.0
    %5330 = vmatpush1.msra.mxu0 0.0
    %5331 = vmatprep.subr.mxu0 0.0
    %5332 = vmatpush1.msra.mxu0 0.0
    %5333 = vmatprep.subr.mxu0 0.0
    %5334 = vmatpush1.msra.mxu0 0.0
    %5335 = vmatprep.subr.mxu0 0.0
    %5336 = vmatpush1.msra.mxu0 0.0
    %5337 = vmatprep.subr.mxu0 0.0
    %5338 = vmatpush1.msra.mxu0 0.0
    %5339 = vmatprep.subr.mxu0 0.0
    %5340 = vmatpush1.msra.mxu0 0.0
    %5341 = vmatprep.subr.mxu0 0.0
    %5342 = vmatpush1.msra.mxu0 0.0
    %5343 = vmatprep.subr.mxu0 0.0
    %5344 = vmatpush1.msra.mxu0 0.0
    %5345 = vmatprep.subr.mxu0 0.0
    %5346 = vmatpush1.msra.mxu0 0.0
    %5347 = vmatprep.subr.mxu0 0.0
    %5348 = vmatpush1.msra.mxu0 0.0
    %5349 = vmatprep.subr.mxu0 0.0
    %5350 = vmatpush1.msra.mxu0 0.0
    %5351 = vmatprep.subr.mxu0 0.0
    %5352 = vmatpush1.msra.mxu0 0.0
    %5353 = vmatprep.subr.mxu0 0.0
    %5354 = vmatpush1.msra.mxu0 0.0
    %5355 = vmatprep.subr.mxu0 0.0
    %5356 = vmatpush1.msra.mxu0 0.0
    %5357 = vmatprep.subr.mxu0 0.0
    %5358 = vmatpush1.msra.mxu0 0.0
    %5359 = vmatprep.subr.mxu0 0.0
    %5360 = vmatpush1.msra.mxu0 0.0
    %5361 = vmatprep.subr.mxu0 0.0
    %5362 = vmatpush1.msra.mxu0 0.0
    %5363 = vmatprep.subr.mxu0 0.0
    %5364 = vmatpush1.msra.mxu0 0.0
    %5365 = vmatprep.subr.mxu0 0.0
    %5366 = vmatpush1.msra.mxu0 0.0
    %5367 = vmatprep.subr.mxu0 0.0
    %5368 = vmatpush1.msra.mxu0 0.0
    %5369 = vmatprep.subr.mxu0 0.0
    %5370 = vmatpush1.msra.mxu0 0.0
    %5371 = vmatprep.subr.mxu0 0.0
    %5372 = vmatpush1.msra.mxu0 0.0
    %5373 = vmatprep.subr.mxu0 0.0
    %5374 = vmatpush1.msra.mxu0 0.0
    %5375 = vmatprep.subr.mxu0 0.0
    %5376 = vmatpush1.msra.mxu0 0.0
    %5377 = vmatprep.subr.mxu0 0.0
    %5378 = vmatpush1.msra.mxu0 0.0
    %5379 = vmatprep.subr.mxu0 0.0
    %5380 = vmatpush1.msra.mxu0 0.0
    %5381 = vmatprep.subr.mxu0 0.0
    %5382 = vmatpush1.msra.mxu0 0.0
    %5383 = vmatprep.subr.mxu0 0.0
    %5384 = vmatpush1.msra.mxu0 0.0
    %5385 = vmatprep.mubr.f32.mxu0 0.0
    %5386 = vmatmul.mubr.f32.gmra.mrb[0].mxu0 %v5319
    %v5387 = vpop.f32.mrb[0].mxu0
    %v5388 = vadd.f32 0.0, %v5387
    %v5389 = vpop.f32.mrb[0].mxu0
    %5390 = vdwg.mxu0
    %v5391 = vadd.f32 %v5314, %v5388
    %v5392 = vld [vmem:[#allocation2 + $0x12] sm:$0x3]
    %v5393 = vld [vmem:[%s6 + $0x90] sm:$0xff]
    %v5394 = vld [vmem:[%s6 + $0x98] sm:$0xff]
    %v5396 = vsel %vm44, %v5392, 0
    %5398 = vmatprep.subr.mxu0 0.0
    %5399 = vmatpush1.msra.mxu0 %v5393
    %5400 = vmatprep.subr.mxu0 0.0
    %5401 = vmatpush1.msra.mxu0 %v5394
    %5402 = vmatprep.subr.mxu0 0.0
    %5403 = vmatpush1.msra.mxu0 0.0
    %5404 = vmatprep.subr.mxu0 0.0
    %5405 = vmatpush1.msra.mxu0 0.0
    %5406 = vmatprep.subr.mxu0 0.0
    %5407 = vmatpush1.msra.mxu0 0.0
    %5408 = vmatprep.subr.mxu0 0.0
    %5409 = vmatpush1.msra.mxu0 0.0
    %5410 = vmatprep.subr.mxu0 0.0
    %5411 = vmatpush1.msra.mxu0 0.0
    %5412 = vmatprep.subr.mxu0 0.0
    %5413 = vmatpush1.msra.mxu0 0.0
    %5414 = vmatprep.subr.mxu0 0.0
    %5415 = vmatpush1.msra.mxu0 0.0
    %5416 = vmatprep.subr.mxu0 0.0
    %5417 = vmatpush1.msra.mxu0 0.0
    %5418 = vmatprep.subr.mxu0 0.0
    %5419 = vmatpush1.msra.mxu0 0.0
    %5420 = vmatprep.subr.mxu0 0.0
    %5421 = vmatpush1.msra.mxu0 0.0
    %5422 = vmatprep.subr.mxu0 0.0
    %5423 = vmatpush1.msra.mxu0 0.0
    %5424 = vmatprep.subr.mxu0 0.0
    %5425 = vmatpush1.msra.mxu0 0.0
    %5426 = vmatprep.subr.mxu0 0.0
    %5427 = vmatpush1.msra.mxu0 0.0
    %5428 = vmatprep.subr.mxu0 0.0
    %5429 = vmatpush1.msra.mxu0 0.0
    %5430 = vmatprep.subr.mxu0 0.0
    %5431 = vmatpush1.msra.mxu0 0.0
    %5432 = vmatprep.subr.mxu0 0.0
    %5433 = vmatpush1.msra.mxu0 0.0
    %5434 = vmatprep.subr.mxu0 0.0
    %5435 = vmatpush1.msra.mxu0 0.0
    %5436 = vmatprep.subr.mxu0 0.0
    %5437 = vmatpush1.msra.mxu0 0.0
    %5438 = vmatprep.subr.mxu0 0.0
    %5439 = vmatpush1.msra.mxu0 0.0
    %5440 = vmatprep.subr.mxu0 0.0
    %5441 = vmatpush1.msra.mxu0 0.0
    %5442 = vmatprep.subr.mxu0 0.0
    %5443 = vmatpush1.msra.mxu0 0.0
    %5444 = vmatprep.subr.mxu0 0.0
    %5445 = vmatpush1.msra.mxu0 0.0
    %5446 = vmatprep.subr.mxu0 0.0
    %5447 = vmatpush1.msra.mxu0 0.0
    %5448 = vmatprep.subr.mxu0 0.0
    %5449 = vmatpush1.msra.mxu0 0.0
    %5450 = vmatprep.subr.mxu0 0.0
    %5451 = vmatpush1.msra.mxu0 0.0
    %5452 = vmatprep.subr.mxu0 0.0
    %5453 = vmatpush1.msra.mxu0 0.0
    %5454 = vmatprep.subr.mxu0 0.0
    %5455 = vmatpush1.msra.mxu0 0.0
    %5456 = vmatprep.subr.mxu0 0.0
    %5457 = vmatpush1.msra.mxu0 0.0
    %5458 = vmatprep.subr.mxu0 0.0
    %5459 = vmatpush1.msra.mxu0 0.0
    %5460 = vmatprep.subr.mxu0 0.0
    %5461 = vmatpush1.msra.mxu0 0.0
    %5462 = vmatprep.mubr.f32.mxu0 0.0
    %5463 = vmatmul.mubr.f32.gmra.mrb[0].mxu0 %v5396
    %v5464 = vpop.f32.mrb[0].mxu0
    %v5465 = vadd.f32 0.0, %v5464
    %v5466 = vpop.f32.mrb[0].mxu0
    %5467 = vdwg.mxu0
    %v5468 = vadd.f32 %v5391, %v5465
    %v5469 = vld [vmem:[#allocation2 + $0x14] sm:$0x3]
    %v5470 = vld [vmem:[%s6 + $0xa0] sm:$0xff]
    %v5471 = vld [vmem:[%s6 + $0xa8] sm:$0xff]
    %v5473 = vsel %vm44, %v5469, 0
    %5475 = vmatprep.subr.mxu0 0.0
    %5476 = vmatpush1.msra.mxu0 %v5470
    %5477 = vmatprep.subr.mxu0 0.0
    %5478 = vmatpush1.msra.mxu0 %v5471
    %5479 = vmatprep.subr.mxu0 0.0
    %5480 = vmatpush1.msra.mxu0 0.0
    %5481 = vmatprep.subr.mxu0 0.0
    %5482 = vmatpush1.msra.mxu0 0.0
    %5483 = vmatprep.subr.mxu0 0.0
    %5484 = vmatpush1.msra.mxu0 0.0
    %5485 = vmatprep.subr.mxu0 0.0
    %5486 = vmatpush1.msra.mxu0 0.0
    %5487 = vmatprep.subr.mxu0 0.0
    %5488 = vmatpush1.msra.mxu0 0.0
    %5489 = vmatprep.subr.mxu0 0.0
    %5490 = vmatpush1.msra.mxu0 0.0
    %5491 = vmatprep.subr.mxu0 0.0
    %5492 = vmatpush1.msra.mxu0 0.0
    %5493 = vmatprep.subr.mxu0 0.0
    %5494 = vmatpush1.msra.mxu0 0.0
    %5495 = vmatprep.subr.mxu0 0.0
    %5496 = vmatpush1.msra.mxu0 0.0
    %5497 = vmatprep.subr.mxu0 0.0
    %5498 = vmatpush1.msra.mxu0 0.0
    %5499 = vmatprep.subr.mxu0 0.0
    %5500 = vmatpush1.msra.mxu0 0.0
    %5501 = vmatprep.subr.mxu0 0.0
    %5502 = vmatpush1.msra.mxu0 0.0
    %5503 = vmatprep.subr.mxu0 0.0
    %5504 = vmatpush1.msra.mxu0 0.0
    %5505 = vmatprep.subr.mxu0 0.0
    %5506 = vmatpush1.msra.mxu0 0.0
    %5507 = vmatprep.subr.mxu0 0.0
    %5508 = vmatpush1.msra.mxu0 0.0
    %5509 = vmatprep.subr.mxu0 0.0
    %5510 = vmatpush1.msra.mxu0 0.0
    %5511 = vmatprep.subr.mxu0 0.0
    %5512 = vmatpush1.msra.mxu0 0.0
    %5513 = vmatprep.subr.mxu0 0.0
    %5514 = vmatpush1.msra.mxu0 0.0
    %5515 = vmatprep.subr.mxu0 0.0
    %5516 = vmatpush1.msra.mxu0 0.0
    %5517 = vmatprep.subr.mxu0 0.0
    %5518 = vmatpush1.msra.mxu0 0.0
    %5519 = vmatprep.subr.mxu0 0.0
    %5520 = vmatpush1.msra.mxu0 0.0
    %5521 = vmatprep.subr.mxu0 0.0
    %5522 = vmatpush1.msra.mxu0 0.0
    %5523 = vmatprep.subr.mxu0 0.0
    %5524 = vmatpush1.msra.mxu0 0.0
    %5525 = vmatprep.subr.mxu0 0.0
    %5526 = vmatpush1.msra.mxu0 0.0
    %5527 = vmatprep.subr.mxu0 0.0
    %5528 = vmatpush1.msra.mxu0 0.0
    %5529 = vmatprep.subr.mxu0 0.0
    %5530 = vmatpush1.msra.mxu0 0.0
    %5531 = vmatprep.subr.mxu0 0.0
    %5532 = vmatpush1.msra.mxu0 0.0
    %5533 = vmatprep.subr.mxu0 0.0
    %5534 = vmatpush1.msra.mxu0 0.0
    %5535 = vmatprep.subr.mxu0 0.0
    %5536 = vmatpush1.msra.mxu0 0.0
    %5537 = vmatprep.subr.mxu0 0.0
    %5538 = vmatpush1.msra.mxu0 0.0
    %5539 = vmatprep.mubr.f32.mxu0 0.0
    %5540 = vmatmul.mubr.f32.gmra.mrb[0].mxu0 %v5473
    %v5541 = vpop.f32.mrb[0].mxu0
    %v5542 = vadd.f32 0.0, %v5541
    %v5543 = vpop.f32.mrb[0].mxu0
    %5544 = vdwg.mxu0
    %v5545 = vadd.f32 %v5468, %v5542
    %v5546 = vld [vmem:[#allocation2 + $0x16] sm:$0x3]
    %v5547 = vld [vmem:[%s6 + $0xb0] sm:$0xff]
    %v5548 = vld [vmem:[%s6 + $0xb8] sm:$0xff]
    %v5550 = vsel %vm44, %v5546, 0
    %5552 = vmatprep.subr.mxu0 0.0
    %5553 = vmatpush1.msra.mxu0 %v5547
    %5554 = vmatprep.subr.mxu0 0.0
    %5555 = vmatpush1.msra.mxu0 %v5548
    %5556 = vmatprep.subr.mxu0 0.0
    %5557 = vmatpush1.msra.mxu0 0.0
    %5558 = vmatprep.subr.mxu0 0.0
    %5559 = vmatpush1.msra.mxu0 0.0
    %5560 = vmatprep.subr.mxu0 0.0
    %5561 = vmatpush1.msra.mxu0 0.0
    %5562 = vmatprep.subr.mxu0 0.0
    %5563 = vmatpush1.msra.mxu0 0.0
    %5564 = vmatprep.subr.mxu0 0.0
    %5565 = vmatpush1.msra.mxu0 0.0
    %5566 = vmatprep.subr.mxu0 0.0
    %5567 = vmatpush1.msra.mxu0 0.0
    %5568 = vmatprep.subr.mxu0 0.0
    %5569 = vmatpush1.msra.mxu0 0.0
    %5570 = vmatprep.subr.mxu0 0.0
    %5571 = vmatpush1.msra.mxu0 0.0
    %5572 = vmatprep.subr.mxu0 0.0
    %5573 = vmatpush1.msra.mxu0 0.0
    %5574 = vmatprep.subr.mxu0 0.0
    %5575 = vmatpush1.msra.mxu0 0.0
    %5576 = vmatprep.subr.mxu0 0.0
    %5577 = vmatpush1.msra.mxu0 0.0
    %5578 = vmatprep.subr.mxu0 0.0
    %5579 = vmatpush1.msra.mxu0 0.0
    %5580 = vmatprep.subr.mxu0 0.0
    %5581 = vmatpush1.msra.mxu0 0.0
    %5582 = vmatprep.subr.mxu0 0.0
    %5583 = vmatpush1.msra.mxu0 0.0
    %5584 = vmatprep.subr.mxu0 0.0
    %5585 = vmatpush1.msra.mxu0 0.0
    %5586 = vmatprep.subr.mxu0 0.0
    %5587 = vmatpush1.msra.mxu0 0.0
    %5588 = vmatprep.subr.mxu0 0.0
    %5589 = vmatpush1.msra.mxu0 0.0
    %5590 = vmatprep.subr.mxu0 0.0
    %5591 = vmatpush1.msra.mxu0 0.0
    %5592 = vmatprep.subr.mxu0 0.0
    %5593 = vmatpush1.msra.mxu0 0.0
    %5594 = vmatprep.subr.mxu0 0.0
    %5595 = vmatpush1.msra.mxu0 0.0
    %5596 = vmatprep.subr.mxu0 0.0
    %5597 = vmatpush1.msra.mxu0 0.0
    %5598 = vmatprep.subr.mxu0 0.0
    %5599 = vmatpush1.msra.mxu0 0.0
    %5600 = vmatprep.subr.mxu0 0.0
    %5601 = vmatpush1.msra.mxu0 0.0
    %5602 = vmatprep.subr.mxu0 0.0
    %5603 = vmatpush1.msra.mxu0 0.0
    %5604 = vmatprep.subr.mxu0 0.0
    %5605 = vmatpush1.msra.mxu0 0.0
    %5606 = vmatprep.subr.mxu0 0.0
    %5607 = vmatpush1.msra.mxu0 0.0
    %5608 = vmatprep.subr.mxu0 0.0
    %5609 = vmatpush1.msra.mxu0 0.0
    %5610 = vmatprep.subr.mxu0 0.0
    %5611 = vmatpush1.msra.mxu0 0.0
    %5612 = vmatprep.subr.mxu0 0.0
    %5613 = vmatpush1.msra.mxu0 0.0
    %5614 = vmatprep.subr.mxu0 0.0
    %5615 = vmatpush1.msra.mxu0 0.0
    %5616 = vmatprep.mubr.f32.mxu0 0.0
    %5617 = vmatmul.mubr.f32.gmra.mrb[0].mxu0 %v5550
    %v5618 = vpop.f32.mrb[0].mxu0
    %v5619 = vadd.f32 0.0, %v5618
    %v5620 = vpop.f32.mrb[0].mxu0
    %5621 = vdwg.mxu0
    %v5622 = vadd.f32 %v5545, %v5619
    %v5623 = vld [vmem:[#allocation5] sm:$0x3]
    %v5624 = vld [vmem:[%s6 + $0xc0] sm:$0xff]
    %v5625 = vld [vmem:[%s6 + $0xc8] sm:$0xff]
    %v5627 = vsel %vm44, %v5623, 0
    %5629 = vmatprep.subr.mxu0 0.0
    %5630 = vmatpush1.msra.mxu0 %v5624
    %5631 = vmatprep.subr.mxu0 0.0
    %5632 = vmatpush1.msra.mxu0 %v5625
    %5633 = vmatprep.subr.mxu0 0.0
    %5634 = vmatpush1.msra.mxu0 0.0
    %5635 = vmatprep.subr.mxu0 0.0
    %5636 = vmatpush1.msra.mxu0 0.0
    %5637 = vmatprep.subr.mxu0 0.0
    %5638 = vmatpush1.msra.mxu0 0.0
    %5639 = vmatprep.subr.mxu0 0.0
    %5640 = vmatpush1.msra.mxu0 0.0
    %5641 = vmatprep.subr.mxu0 0.0
    %5642 = vmatpush1.msra.mxu0 0.0
    %5643 = vmatprep.subr.mxu0 0.0
    %5644 = vmatpush1.msra.mxu0 0.0
    %5645 = vmatprep.subr.mxu0 0.0
    %5646 = vmatpush1.msra.mxu0 0.0
    %5647 = vmatprep.subr.mxu0 0.0
    %5648 = vmatpush1.msra.mxu0 0.0
    %5649 = vmatprep.subr.mxu0 0.0
    %5650 = vmatpush1.msra.mxu0 0.0
    %5651 = vmatprep.subr.mxu0 0.0
    %5652 = vmatpush1.msra.mxu0 0.0
    %5653 = vmatprep.subr.mxu0 0.0
    %5654 = vmatpush1.msra.mxu0 0.0
    %5655 = vmatprep.subr.mxu0 0.0
    %5656 = vmatpush1.msra.mxu0 0.0
    %5657 = vmatprep.subr.mxu0 0.0
    %5658 = vmatpush1.msra.mxu0 0.0
    %5659 = vmatprep.subr.mxu0 0.0
    %5660 = vmatpush1.msra.mxu0 0.0
    %5661 = vmatprep.subr.mxu0 0.0
    %5662 = vmatpush1.msra.mxu0 0.0
    %5663 = vmatprep.subr.mxu0 0.0
    %5664 = vmatpush1.msra.mxu0 0.0
    %5665 = vmatprep.subr.mxu0 0.0
    %5666 = vmatpush1.msra.mxu0 0.0
    %5667 = vmatprep.subr.mxu0 0.0
    %5668 = vmatpush1.msra.mxu0 0.0
    %5669 = vmatprep.subr.mxu0 0.0
    %5670 = vmatpush1.msra.mxu0 0.0
    %5671 = vmatprep.subr.mxu0 0.0
    %5672 = vmatpush1.msra.mxu0 0.0
    %5673 = vmatprep.subr.mxu0 0.0
    %5674 = vmatpush1.msra.mxu0 0.0
    %5675 = vmatprep.subr.mxu0 0.0
    %5676 = vmatpush1.msra.mxu0 0.0
    %5677 = vmatprep.subr.mxu0 0.0
    %5678 = vmatpush1.msra.mxu0 0.0
    %5679 = vmatprep.subr.mxu0 0.0
    %5680 = vmatpush1.msra.mxu0 0.0
    %5681 = vmatprep.subr.mxu0 0.0
    %5682 = vmatpush1.msra.mxu0 0.0
    %5683 = vmatprep.subr.mxu0 0.0
    %5684 = vmatpush1.msra.mxu0 0.0
    %5685 = vmatprep.subr.mxu0 0.0
    %5686 = vmatpush1.msra.mxu0 0.0
    %5687 = vmatprep.subr.mxu0 0.0
    %5688 = vmatpush1.msra.mxu0 0.0
    %5689 = vmatprep.subr.mxu0 0.0
    %5690 = vmatpush1.msra.mxu0 0.0
    %5691 = vmatprep.subr.mxu0 0.0
    %5692 = vmatpush1.msra.mxu0 0.0
    %5693 = vmatprep.mubr.f32.mxu0 0.0
    %5694 = vmatmul.mubr.f32.gmra.mrb[0].mxu0 %v5627
    %v5695 = vpop.f32.mrb[0].mxu0
    %v5696 = vadd.f32 0.0, %v5695
    %v5697 = vpop.f32.mrb[0].mxu0
    %5698 = vdwg.mxu0
    %v5699 = vadd.f32 %v5622, %v5696
    %v5700 = vld [vmem:[#allocation5 + $0x2] sm:$0x3]
    %v5701 = vld [vmem:[%s6 + $0xd0] sm:$0xff]
    %v5702 = vld [vmem:[%s6 + $0xd8] sm:$0xff]
    %v5704 = vsel %vm44, %v5700, 0
    %5706 = vmatprep.subr.mxu0 0.0
    %5707 = vmatpush1.msra.mxu0 %v5701
    %5708 = vmatprep.subr.mxu0 0.0
    %5709 = vmatpush1.msra.mxu0 %v5702
    %5710 = vmatprep.subr.mxu0 0.0
    %5711 = vmatpush1.msra.mxu0 0.0
    %5712 = vmatprep.subr.mxu0 0.0
    %5713 = vmatpush1.msra.mxu0 0.0
    %5714 = vmatprep.subr.mxu0 0.0
    %5715 = vmatpush1.msra.mxu0 0.0
    %5716 = vmatprep.subr.mxu0 0.0
    %5717 = vmatpush1.msra.mxu0 0.0
    %5718 = vmatprep.subr.mxu0 0.0
    %5719 = vmatpush1.msra.mxu0 0.0
    %5720 = vmatprep.subr.mxu0 0.0
    %5721 = vmatpush1.msra.mxu0 0.0
    %5722 = vmatprep.subr.mxu0 0.0
    %5723 = vmatpush1.msra.mxu0 0.0
    %5724 = vmatprep.subr.mxu0 0.0
    %5725 = vmatpush1.msra.mxu0 0.0
    %5726 = vmatprep.subr.mxu0 0.0
    %5727 = vmatpush1.msra.mxu0 0.0
    %5728 = vmatprep.subr.mxu0 0.0
    %5729 = vmatpush1.msra.mxu0 0.0
    %5730 = vmatprep.subr.mxu0 0.0
    %5731 = vmatpush1.msra.mxu0 0.0
    %5732 = vmatprep.subr.mxu0 0.0
    %5733 = vmatpush1.msra.mxu0 0.0
    %5734 = vmatprep.subr.mxu0 0.0
    %5735 = vmatpush1.msra.mxu0 0.0
    %5736 = vmatprep.subr.mxu0 0.0
    %5737 = vmatpush1.msra.mxu0 0.0
    %5738 = vmatprep.subr.mxu0 0.0
    %5739 = vmatpush1.msra.mxu0 0.0
    %5740 = vmatprep.subr.mxu0 0.0
    %5741 = vmatpush1.msra.mxu0 0.0
    %5742 = vmatprep.subr.mxu0 0.0
    %5743 = vmatpush1.msra.mxu0 0.0
    %5744 = vmatprep.subr.mxu0 0.0
    %5745 = vmatpush1.msra.mxu0 0.0
    %5746 = vmatprep.subr.mxu0 0.0
    %5747 = vmatpush1.msra.mxu0 0.0
    %5748 = vmatprep.subr.mxu0 0.0
    %5749 = vmatpush1.msra.mxu0 0.0
    %5750 = vmatprep.subr.mxu0 0.0
    %5751 = vmatpush1.msra.mxu0 0.0
    %5752 = vmatprep.subr.mxu0 0.0
    %5753 = vmatpush1.msra.mxu0 0.0
    %5754 = vmatprep.subr.mxu0 0.0
    %5755 = vmatpush1.msra.mxu0 0.0
    %5756 = vmatprep.subr.mxu0 0.0
    %5757 = vmatpush1.msra.mxu0 0.0
    %5758 = vmatprep.subr.mxu0 0.0
    %5759 = vmatpush1.msra.mxu0 0.0
    %5760 = vmatprep.subr.mxu0 0.0
    %5761 = vmatpush1.msra.mxu0 0.0
    %5762 = vmatprep.subr.mxu0 0.0
    %5763 = vmatpush1.msra.mxu0 0.0
    %5764 = vmatprep.subr.mxu0 0.0
    %5765 = vmatpush1.msra.mxu0 0.0
    %5766 = vmatprep.subr.mxu0 0.0
    %5767 = vmatpush1.msra.mxu0 0.0
    %5768 = vmatprep.subr.mxu0 0.0
    %5769 = vmatpush1.msra.mxu0 0.0
    %5770 = vmatprep.mubr.f32.mxu0 0.0
    %5771 = vmatmul.mubr.f32.gmra.mrb[0].mxu0 %v5704
    %v5772 = vpop.f32.mrb[0].mxu0
    %v5773 = vadd.f32 0.0, %v5772
    %v5774 = vpop.f32.mrb[0].mxu0
    %5775 = vdwg.mxu0
    %v5776 = vadd.f32 %v5699, %v5773
    %v5777 = vld [vmem:[%s7] sm:$0x1]
    %v5779 = vlaneseq
    %v5780 = vshrl.u32 %v5779, 7
    %v5781 = vsub.s32 0, %v5780
    %v5782 = vrot.slane %v5777, %v5781
    %v5784 = vadd.f32 %v5776, %v5782
    %vm5785 = vcmp.ge.f32.partialorder %v5784, 0.0
    %v5786 = vmul.f32 %v5784, 0.01
    %v5787 = vsel %vm5785, %v5784, %v5786
    %vm5788 = vcmask 1041408
    %v5789 = vsel %vm5788, %v5787, -inf
    %v5790 = vrot.slane %v5789, 4
    %v5791 = vmax.f32 %v5789, %v5790
    %v5792 = vrot.slane %v5791, 2
    %v5793 = vmax.f32 %v5791, %v5792
    %v5794 = vrot.slane %v5793, 1
    %v5795 = vmax.f32 %v5793, %v5794
    %v5796 = vsub.f32 %v5787, %v5795
    %v5797 = vmul.f32 %v5796, 1.442695
    %v5798 = vpow.pop %v5797
    %v5799 = vsel %vm5788, %v5798, 0.0
    %v5800 = vrot.slane %v5799, 4
    %v5801 = vadd.f32 %v5799, %v5800
    %v5802 = vrot.slane %v5801, 2
    %v5803 = vadd.f32 %v5801, %v5802
    %v5804 = vrot.slane %v5803, 1
    %v5805 = vadd.f32 %v5803, %v5804
    %v5806 = vrcp.pop %v5805
    %v5807 = vmul.f32 %v5798, %v5806
    %v5808 = vlaneseq
    %v5809 = vand.u32 %v5808, 127
    %vm5810 = vcmp.eq.s32.totalorder %v5809, 15
    %v5811 = vsel %vm5810, %v5787, %v5807
    %5812 = vst [vmem:[#allocation6] sm:$0x3] %v5811
    // Predicated region
    $region34: #{forward.1} parent=1 // pred_check
      _
    $region35: #{forward.1} parent=1 // pred_check_branch
      %5814 = sbr.rel (0) target = $region37
    $region36: #{forward.1} parent=1 // pred_region
      %s5816 = ssub.s32 32, 32
      %5817 = vsyncadd [#allocation7], %s5816
      %s5819 = sshll.u32 [#allocation6], 4
      %s5820 = int_to_ptr.vmem [resolvable:$true] %s5819
      %5822 = dma.vmem_to_hbm [thread:$0]  %s5820, 32, %s8, [#allocation7]
    $region37: #{forward.1} parent=1 // pred_fallthru
      _
    // Predicated region
    $region38: #{forward.1} parent=1 // pred_check
      _
    $region39: #{forward.1} parent=1 // pred_check_branch
      %5824 = sbr.rel (0) target = $region41
    $region40: #{forward.1} parent=1 // pred_region
      %5825 = dma.done [#allocation7], 32
    $region41: #{forward.1} parent=1 // pred_fallthru
      _
    %5826 = vsyncpa [#allocation7], 1

</llo_original>
